<compile_context>
chip_gen: v7x
topology: tpu7x:2x2x1
jax: 0.10.0
libtpu: 0.0.40
codegen_flags: <defaults>
</compile_context>

<pallas_src>
import jax
import jax.numpy as jnp
from jax.experimental import pallas as pl
from jax.experimental.pallas import tpu as pltpu

# ---- small, module-consistent sizes -----------------------------------------------------
N_WORDS = 20               # generated sequence length
N_NOISE = 64               # latent dim
N_CLASS = 64               # stand-in for len(charset), kept small

L0 = N_WORDS // 4          # 5   length after fc1 view
L1 = 2 * L0                # 10  after ConvTranspose #1 (stride 2)
L2 = 2 * L1                # 20  after ConvTranspose #2 (stride 2)

C0, C1, C2, C3 = 64, 128, 256, 512

B_TILE = 8                 # samples per grid step (== sublane count, keeps reshapes layout-free)

EPS = 1e-5
LEAKY_SLOPE = 0.1


# ------------------------------------ fused kernel ---------------------------------------
def _g_kernel(x_ref, wfc_ref, wt1_ref, wt2_ref, wc3_ref, wc4_ref, out_ref,
              h0_ref, h1_ref, h2_ref):
    f32 = jnp.float32
    bf16 = jnp.bfloat16

    def leaky(v):
        return jnp.where(v >= 0, v, LEAKY_SLOPE * v)

    def dot(a, b):
        # bf16 MXU inputs, f32 accumulation.
        return jnp.dot(a.astype(bf16), b.astype(bf16), preferred_element_type=f32)

    # Zero only the conv zero-padding row-groups; data groups are fully overwritten below.
    h0_ref[0, :, :] = jnp.zeros((B_TILE, C0), f32)
    h0_ref[L0 + 1, :, :] = jnp.zeros((B_TILE, C0), f32)
    h1_ref[0, :, :] = jnp.zeros((B_TILE, C1), f32)
    h1_ref[L1 + 1, :, :] = jnp.zeros((B_TILE, C1), f32)
    h2_ref[pl.ds(0, 2), :, :] = jnp.zeros((2, B_TILE, C2), f32)
    h2_ref[pl.ds(L2 + 2, 2), :, :] = jnp.zeros((2, B_TILE, C2), f32)

    x = x_ref[...]                                             # (B_TILE, N_NOISE) f32

    # ---- fc1 (Linear, bias=False): h0[l, b, c] = sum_n x[b, n] * Wfc[c*L0 + l, n]
    # One (B_TILE, 64) @ (64, 64) dot per position, stored as a whole slab.
    for l in range(L0):
        w_l = wfc_ref[pl.ds(l * N_NOISE, N_NOISE), :]          # (N_NOISE, C0)
        h0_ref[1 + l, :, :] = dot(x, w_l)                      # (B_TILE, C0)

    # ---- ConvTranspose1d(64->128, k=4, s=2, p=1), polyphase with fused taps:
    #   out[2m]   = [h0[m],   h0[m-1]] @ [W1; W3]
    #   out[2m+1] = [h0[m+1], h0[m]  ] @ [W0; W2]
    prev0 = h0_ref[pl.ds(0, L0), :, :].reshape(L0 * B_TILE, C0)
    cur0 = h0_ref[pl.ds(1, L0), :, :].reshape(L0 * B_TILE, C0)
    nxt0 = h0_ref[pl.ds(2, L0), :, :].reshape(L0 * B_TILE, C0)
    e1 = dot(jnp.concatenate([cur0, prev0], axis=1), wt1_ref[pl.ds(0, 2 * C0), :])
    o1 = dot(jnp.concatenate([nxt0, cur0], axis=1), wt1_ref[pl.ds(2 * C0, 2 * C0), :])
    e1 = e1.reshape(L0, B_TILE, C1)
    o1 = o1.reshape(L0, B_TILE, C1)

    # InstanceNorm1d(128): biased var over the full length (2*L0), per (sample, channel).
    n1 = 2 * L0
    mean1 = (jnp.sum(e1, axis=0, keepdims=True) + jnp.sum(o1, axis=0, keepdims=True)) / n1
    var1 = (jnp.sum((e1 - mean1) ** 2, axis=0, keepdims=True)
            + jnp.sum((o1 - mean1) ** 2, axis=0, keepdims=True)) / n1
    inv1 = jax.lax.rsqrt(var1 + EPS)
    e1n = leaky((e1 - mean1) * inv1)                           # (L0, B_TILE, C1)
    o1n = leaky((o1 - mean1) * inv1)
    # Interleave phases (h1[2m] = e[m], h1[2m+1] = o[m]) with direct slab stores.
    for m in range(L0):
        h1_ref[1 + 2 * m, :, :] = e1n[m]
        h1_ref[2 + 2 * m, :, :] = o1n[m]

    # ---- ConvTranspose1d(128->256, k=4, s=2, p=1): same fused polyphase scheme (K = 256).
    prev1 = h1_ref[pl.ds(0, L1), :, :].reshape(L1 * B_TILE, C1)
    cur1 = h1_ref[pl.ds(1, L1), :, :].reshape(L1 * B_TILE, C1)
    nxt1 = h1_ref[pl.ds(2, L1), :, :].reshape(L1 * B_TILE, C1)
    e2 = dot(jnp.concatenate([cur1, prev1], axis=1), wt2_ref[pl.ds(0, 2 * C1), :])
    o2 = dot(jnp.concatenate([nxt1, cur1], axis=1), wt2_ref[pl.ds(2 * C1, 2 * C1), :])
    e2 = e2.reshape(L1, B_TILE, C2)
    o2 = o2.reshape(L1, B_TILE, C2)
    n2 = 2 * L1
    mean2 = (jnp.sum(e2, axis=0, keepdims=True) + jnp.sum(o2, axis=0, keepdims=True)) / n2
    var2 = (jnp.sum((e2 - mean2) ** 2, axis=0, keepdims=True)
            + jnp.sum((o2 - mean2) ** 2, axis=0, keepdims=True)) / n2
    inv2 = jax.lax.rsqrt(var2 + EPS)
    e2n = leaky((e2 - mean2) * inv2)                           # (L1, B_TILE, C2)
    o2n = leaky((o2 - mean2) * inv2)
    for m in range(L1):
        h2_ref[2 + 2 * m, :, :] = e2n[m]
        h2_ref[3 + 2 * m, :, :] = o2n[m]

    # ---- Conv1d(256->512, k=5, p=2): im2col along lanes (offsets are multiples of 128)
    # and ONE dot with K = 5*C2 = 1280 against the tap-major weight slab.
    wins = [h2_ref[pl.ds(k, L2), :, :].reshape(L2 * B_TILE, C2).astype(bf16)
            for k in range(5)]
    acc = jnp.dot(jnp.concatenate(wins, axis=1), wc3_ref[...],
                  preferred_element_type=f32)                  # (L2*B_TILE, C3)
    acc = acc.reshape(L2, B_TILE, C3)
    mean3 = jnp.mean(acc, axis=0, keepdims=True)
    var3 = jnp.mean((acc - mean3) ** 2, axis=0, keepdims=True)
    h3 = leaky((acc - mean3) * jax.lax.rsqrt(var3 + EPS))      # (L2, B_TILE, C3) f32

    # ---- Conv1d(512->n_class, k=1) + tanh: one (L2*B_TILE, 512) @ (512, n_class) dot.
    out_ref[...] = jnp.tanh(dot(h3.reshape(L2 * B_TILE, C3), wc4_ref[...]))


# --------------------------------------- wrapper -----------------------------------------
def g_forward(prepped, x):
    """x: (B, n_noise) f32 -> (B, n_class, n_words) f32 (PyTorch NCL convention)."""
    B = x.shape[0]
    nb = pl.cdiv(B, B_TILE)
    Bp = nb * B_TILE
    if Bp != B:                                  # pad batch to a multiple of B_TILE
        x = jnp.pad(x, ((0, Bp - B), (0, 0)))
    y = pl.pallas_call(
        _g_kernel,
        out_shape=jax.ShapeDtypeStruct((nb, L2 * B_TILE, N_CLASS), jnp.float32),
        grid=(nb,),
        in_specs=[
            pl.BlockSpec((B_TILE, N_NOISE), lambda b: (b, 0)),        # x block for this program
            pl.BlockSpec((L0 * N_NOISE, C0), lambda b: (0, 0)),       # fc1 weight (per-position slabs)
            pl.BlockSpec((4 * C0, C1), lambda b: (0, 0)),             # convT1, taps [W1;W3;W0;W2]
            pl.BlockSpec((4 * C1, C2), lambda b: (0, 0)),             # convT2, taps [W1;W3;W0;W2]
            pl.BlockSpec((5 * C2, C3), lambda b: (0, 0)),             # conv3 taps (tap-major)
            pl.BlockSpec((C3, N_CLASS), lambda b: (0, 0)),            # conv4 (1x1)
        ],
        out_specs=pl.BlockSpec((None, L2 * B_TILE, N_CLASS), lambda b: (b, 0, 0)),
        scratch_shapes=[
            pltpu.VMEM((L0 + 2, B_TILE, C0), jnp.float32),   # h0, 1 zero-pad group each side
            pltpu.VMEM((L1 + 2, B_TILE, C1), jnp.float32),   # h1, 1 zero-pad group each side
            pltpu.VMEM((L2 + 4, B_TILE, C2), jnp.float32),   # h2, 2 zero-pad groups each side
        ],
        compiler_params=pltpu.CompilerParams(dimension_semantics=("parallel",)),
    )(x, prepped["wfc"], prepped["wt1"], prepped["wt2"], prepped["wc3"], prepped["wc4"])
    # Each program's rows are ordered (position, sample-in-tile).
    y = y.reshape(nb, L2, B_TILE, N_CLASS)
    y = jnp.transpose(y, (0, 2, 3, 1)).reshape(Bp, N_CLASS, L2)   # -> (B, n_class, n_words)
    return y[:B]


# ------------------------------ parameters (PyTorch layouts) -----------------------------
def init_params(key, n_words=N_WORDS, n_class=N_CLASS, n_noise=N_NOISE):
    l0 = n_words // 4
    ks = jax.random.split(key, 5)
    s = 0.05
    return {
        "fc1_w": s * jax.random.normal(ks[0], (64 * l0, n_noise), jnp.float32),  # Linear (out, in)
        "ct1_w": s * jax.random.normal(ks[1], (64, 128, 4), jnp.float32),        # ConvT (Cin, Cout, K)
        "ct2_w": s * jax.random.normal(ks[2], (128, 256, 4), jnp.float32),       # ConvT (Cin, Cout, K)
        "c3_w": s * jax.random.normal(ks[3], (512, 256, 5), jnp.float32),        # Conv  (Cout, Cin, K)
        "c4_w": s * jax.random.normal(ks[4], (n_class, 512, 1), jnp.float32),    # Conv  (Cout, Cin, K)
    }


def prepare_params(params, n_words=N_WORDS):
    """One-time rearrangement of PyTorch-layout weights into kernel-ready bf16 slabs."""
    l0 = n_words // 4
    fc = params["fc1_w"]                                          # (64*l0, n_noise); row = c*l0 + l
    n_noise = fc.shape[1]
    wfc = fc.reshape(64, l0, n_noise).transpose(1, 2, 0).reshape(l0 * n_noise, 64)
    ct1, ct2 = params["ct1_w"], params["ct2_w"]                   # (Cin, Cout, K)
    # Fused-tap packing: even-phase rows = [W[:,:,1]; W[:,:,3]], odd-phase rows = [W[:,:,0]; W[:,:,2]].
    wt1 = jnp.concatenate([ct1[:, :, 1], ct1[:, :, 3], ct1[:, :, 0], ct1[:, :, 2]], axis=0)
    wt2 = jnp.concatenate([ct2[:, :, 1], ct2[:, :, 3], ct2[:, :, 0], ct2[:, :, 2]], axis=0)
    wc3 = params["c3_w"].transpose(2, 1, 0).reshape(5 * C2, C3)   # (K*Cin, Cout) = W[:,:,k].T stacked
    wc4 = params["c4_w"][:, :, 0].T                               # (Cin, Cout)
    cast = lambda a: a.astype(jnp.bfloat16)
    return {"wfc": cast(wfc), "wt1": cast(wt1), "wt2": cast(wt2),
            "wc3": cast(wc3), "wc4": cast(wc4)}


# --------------------------- pure-JAX (XLA, f32) reference -------------------------------
def _ref_forward(params, x, n_words=N_WORDS):
    def conv1d(h, w, pad):                       # h: (B, Cin, L), w: (Cout, Cin, K)
        B, Cin, L = h.shape
        Cout, _, K = w.shape
        hp = jnp.pad(h, ((0, 0), (0, 0), (pad, pad)))
        lout = L + 2 * pad - K + 1
        cols = jnp.stack([hp[:, :, k:k + lout] for k in range(K)], axis=-1)  # (B,Cin,Lout,K)
        return jnp.einsum("bclk,ock->bol", cols, w)

    def conv_t1d(h, w, stride, pad):             # w: (Cin, Cout, K)
        B, Cin, L = h.shape
        up = jnp.zeros((B, Cin, (L - 1) * stride + 1), h.dtype).at[:, :, ::stride].set(h)
        w_c = jnp.flip(w, axis=-1).transpose(1, 0, 2)
        return conv1d(up, w_c, pad=w.shape[-1] - 1 - pad)

    def inorm_lrelu(h):
        m = jnp.mean(h, axis=-1, keepdims=True)
        v = jnp.mean((h - m) ** 2, axis=-1, keepdims=True)
        y = (h - m) * jax.lax.rsqrt(v + EPS)
        return jnp.where(y >= 0, y, LEAKY_SLOPE * y)

    B = x.shape[0]
    h = (x @ params["fc1_w"].T).reshape(B, 64, n_words // 4)
    h = inorm_lrelu(conv_t1d(h, params["ct1_w"], 2, 1))
    h = inorm_lrelu(conv_t1d(h, params["ct2_w"], 2, 1))
    h = inorm_lrelu(conv1d(h, params["c3_w"], 2))
    h = conv1d(h, params["c4_w"], 0)
    return jnp.tanh(h)


if __name__ == "__main__":
    batch = 16                                   # 2 grid steps of B_TILE=8 (keeps both TCs busy)
    key = jax.random.PRNGKey(0)
    pkey, xkey = jax.random.split(key)
    params = init_params(pkey)
    prepped = prepare_params(params)             # one-time weight prep, outside jit
    x = jax.random.normal(xkey, (batch, N_NOISE), jnp.float32)

    fwd = jax.jit(g_forward)
    out = jax.block_until_ready(fwd(prepped, x))

    assert out.shape == (batch, N_CLASS, N_WORDS), out.shape
    assert out.dtype == jnp.float32
    assert bool(jnp.all(jnp.isfinite(out)))

    # Smoke-test against an f32 XLA reference (loose tolerance: kernel uses bf16 MXU inputs).
    ref = jax.block_until_ready(_ref_forward(params, x))
    max_err = float(jnp.max(jnp.abs(out - ref)))
    assert max_err < 0.15, f"max abs error vs reference: {max_err}"

    print("KERNEL_OK")
</pallas_src>

<mosaic_0001>
module attributes {stable_mosaic.version = 11 : i64} {
  func.func @_g_kernel(%arg0: i32, %arg1: memref<8x64xf32, #tpu.memory_space<vmem>>, %arg2: memref<320x64xbf16, #tpu.memory_space<vmem>>, %arg3: memref<256x128xbf16, #tpu.memory_space<vmem>>, %arg4: memref<512x256xbf16, #tpu.memory_space<vmem>>, %arg5: memref<1280x512xbf16, #tpu.memory_space<vmem>>, %arg6: memref<512x64xbf16, #tpu.memory_space<vmem>>, %arg7: memref<1x160x64xf32, #tpu.memory_space<vmem>>, %arg8: memref<7x8x64xf32, #tpu.memory_space<vmem>>, %arg9: memref<12x8x128xf32, #tpu.memory_space<vmem>>, %arg10: memref<24x8x256xf32, #tpu.memory_space<vmem>>) attributes {dimension_semantics = [#tpu.dimension_semantics<parallel>], iteration_bounds = array<i64: 2>, scalar_prefetch = 0 : i64, scratch_operands = 3 : i64, tpu.core_type = #tpu.core_type<tc>, window_params = [{transform_indices = @transform_0, window_bounds = array<i64: 8, 64>}, {pipeline_mode = #tpu.pipeline_mode<synchronous>, transform_indices = @transform_1, window_bounds = array<i64: 320, 64>}, {pipeline_mode = #tpu.pipeline_mode<synchronous>, transform_indices = @transform_2, window_bounds = array<i64: 256, 128>}, {pipeline_mode = #tpu.pipeline_mode<synchronous>, transform_indices = @transform_3, window_bounds = array<i64: 512, 256>}, {pipeline_mode = #tpu.pipeline_mode<synchronous>, transform_indices = @transform_4, window_bounds = array<i64: 1280, 512>}, {pipeline_mode = #tpu.pipeline_mode<synchronous>, transform_indices = @transform_5, window_bounds = array<i64: 512, 64>}, {transform_indices = @transform_6, window_bounds = array<i64: 1, 160, 64>}]} {
    %cst = arith.constant 0.000000e+00 : f32
    %0 = vector.broadcast %cst : f32 to vector<8x64xf32>
    %c0 = arith.constant 0 : index
    %c0_0 = arith.constant 0 : index
    %c0_1 = arith.constant 0 : index
    %1 = vector.load %arg8[%c0, %c0_0, %c0_1] : memref<7x8x64xf32, #tpu.memory_space<vmem>>, vector<1x8x64xf32>
    %2 = vector.shape_cast %1 : vector<1x8x64xf32> to vector<8x64xf32>
    %3 = vector.shape_cast %0 : vector<8x64xf32> to vector<1x8x64xf32>
    tpu.vector_store %arg8[%c0, %c0_0, %c0_1], %3 {strides = array<i32>} : memref<7x8x64xf32, #tpu.memory_space<vmem>>, vector<1x8x64xf32>,
    %cst_2 = arith.constant 0.000000e+00 : f32
    %4 = vector.broadcast %cst_2 : f32 to vector<8x64xf32>
    %c6 = arith.constant 6 : index
    %c0_3 = arith.constant 0 : index
    %c0_4 = arith.constant 0 : index
    %5 = vector.load %arg8[%c6, %c0_3, %c0_4] : memref<7x8x64xf32, #tpu.memory_space<vmem>>, vector<1x8x64xf32>
    %6 = vector.shape_cast %5 : vector<1x8x64xf32> to vector<8x64xf32>
    %7 = vector.shape_cast %4 : vector<8x64xf32> to vector<1x8x64xf32>
    tpu.vector_store %arg8[%c6, %c0_3, %c0_4], %7 {strides = array<i32>} : memref<7x8x64xf32, #tpu.memory_space<vmem>>, vector<1x8x64xf32>,
    %cst_5 = arith.constant 0.000000e+00 : f32
    %8 = vector.broadcast %cst_5 : f32 to vector<8x128xf32>
    %c0_6 = arith.constant 0 : index
    %c0_7 = arith.constant 0 : index
    %c0_8 = arith.constant 0 : index
    %9 = vector.load %arg9[%c0_6, %c0_7, %c0_8] : memref<12x8x128xf32, #tpu.memory_space<vmem>>, vector<1x8x128xf32>
    %10 = vector.shape_cast %9 : vector<1x8x128xf32> to vector<8x128xf32>
    %11 = vector.shape_cast %8 : vector<8x128xf32> to vector<1x8x128xf32>
    tpu.vector_store %arg9[%c0_6, %c0_7, %c0_8], %11 {strides = array<i32>} : memref<12x8x128xf32, #tpu.memory_space<vmem>>, vector<1x8x128xf32>,
    %cst_9 = arith.constant 0.000000e+00 : f32
    %12 = vector.broadcast %cst_9 : f32 to vector<8x128xf32>
    %c11 = arith.constant 11 : index
    %c0_10 = arith.constant 0 : index
    %c0_11 = arith.constant 0 : index
    %13 = vector.load %arg9[%c11, %c0_10, %c0_11] : memref<12x8x128xf32, #tpu.memory_space<vmem>>, vector<1x8x128xf32>
    %14 = vector.shape_cast %13 : vector<1x8x128xf32> to vector<8x128xf32>
    %15 = vector.shape_cast %12 : vector<8x128xf32> to vector<1x8x128xf32>
    tpu.vector_store %arg9[%c11, %c0_10, %c0_11], %15 {strides = array<i32>} : memref<12x8x128xf32, #tpu.memory_space<vmem>>, vector<1x8x128xf32>,
    %cst_12 = arith.constant 0.000000e+00 : f32
    %16 = vector.broadcast %cst_12 : f32 to vector<2x8x256xf32>
    %c0_13 = arith.constant 0 : index
    %c0_14 = arith.constant 0 : index
    %c0_15 = arith.constant 0 : index
    %17 = vector.load %arg10[%c0_13, %c0_14, %c0_15] : memref<24x8x256xf32, #tpu.memory_space<vmem>>, vector<2x8x256xf32>
    tpu.vector_store %arg10[%c0_13, %c0_14, %c0_15], %16 {strides = array<i32>} : memref<24x8x256xf32, #tpu.memory_space<vmem>>, vector<2x8x256xf32>,
    %cst_16 = arith.constant 0.000000e+00 : f32
    %18 = vector.broadcast %cst_16 : f32 to vector<2x8x256xf32>
    %c22 = arith.constant 22 : index
    %c0_17 = arith.constant 0 : index
    %c0_18 = arith.constant 0 : index
    %19 = vector.load %arg10[%c22, %c0_17, %c0_18] : memref<24x8x256xf32, #tpu.memory_space<vmem>>, vector<2x8x256xf32>
    tpu.vector_store %arg10[%c22, %c0_17, %c0_18], %18 {strides = array<i32>} : memref<24x8x256xf32, #tpu.memory_space<vmem>>, vector<2x8x256xf32>,
    %c0_19 = arith.constant 0 : index
    %c0_20 = arith.constant 0 : index
    %20 = vector.load %arg1[%c0_19, %c0_20] : memref<8x64xf32, #tpu.memory_space<vmem>>, vector<8x64xf32>
    %c0_21 = arith.constant 0 : index
    %c0_22 = arith.constant 0 : index
    %21 = vector.load %arg2[%c0_21, %c0_22] : memref<320x64xbf16, #tpu.memory_space<vmem>>, vector<64x64xbf16>
    %22 = arith.truncf %20 : vector<8x64xf32> to vector<8x64xbf16>
    %cst_23 = arith.constant dense<0.000000e+00> : vector<8x64xf32>
    %23 = tpu.matmul %22, %21, %cst_23 {dimension_numbers = #tpu.dot_dimension_numbers<[1], [0], [0], [1], [0, 0, 1, 1], [], []>} : vector<8x64xbf16>, vector<64x64xbf16>, vector<8x64xf32> -> vector<8x64xf32>
    %c1 = arith.constant 1 : index
    %c0_24 = arith.constant 0 : index
    %c0_25 = arith.constant 0 : index
    %24 = vector.load %arg8[%c1, %c0_24, %c0_25] : memref<7x8x64xf32, #tpu.memory_space<vmem>>, vector<1x8x64xf32>
    %25 = vector.shape_cast %24 : vector<1x8x64xf32> to vector<8x64xf32>
    %26 = vector.shape_cast %23 : vector<8x64xf32> to vector<1x8x64xf32>
    tpu.vector_store %arg8[%c1, %c0_24, %c0_25], %26 {strides = array<i32>} : memref<7x8x64xf32, #tpu.memory_space<vmem>>, vector<1x8x64xf32>,
    %c64 = arith.constant 64 : index
    %c0_26 = arith.constant 0 : index
    %27 = vector.load %arg2[%c64, %c0_26] : memref<320x64xbf16, #tpu.memory_space<vmem>>, vector<64x64xbf16>
    %28 = arith.truncf %20 : vector<8x64xf32> to vector<8x64xbf16>
    %cst_27 = arith.constant dense<0.000000e+00> : vector<8x64xf32>
    %29 = tpu.matmul %28, %27, %cst_27 {dimension_numbers = #tpu.dot_dimension_numbers<[1], [0], [0], [1], [0, 0, 1, 1], [], []>} : vector<8x64xbf16>, vector<64x64xbf16>, vector<8x64xf32> -> vector<8x64xf32>
    %c2 = arith.constant 2 : index
    %c0_28 = arith.constant 0 : index
    %c0_29 = arith.constant 0 : index
    %30 = vector.load %arg8[%c2, %c0_28, %c0_29] : memref<7x8x64xf32, #tpu.memory_space<vmem>>, vector<1x8x64xf32>
    %31 = vector.shape_cast %30 : vector<1x8x64xf32> to vector<8x64xf32>
    %32 = vector.shape_cast %29 : vector<8x64xf32> to vector<1x8x64xf32>
    tpu.vector_store %arg8[%c2, %c0_28, %c0_29], %32 {strides = array<i32>} : memref<7x8x64xf32, #tpu.memory_space<vmem>>, vector<1x8x64xf32>,
    %c128 = arith.constant 128 : index
    %c0_30 = arith.constant 0 : index
    %33 = vector.load %arg2[%c128, %c0_30] : memref<320x64xbf16, #tpu.memory_space<vmem>>, vector<64x64xbf16>
    %34 = arith.truncf %20 : vector<8x64xf32> to vector<8x64xbf16>
    %cst_31 = arith.constant dense<0.000000e+00> : vector<8x64xf32>
    %35 = tpu.matmul %34, %33, %cst_31 {dimension_numbers = #tpu.dot_dimension_numbers<[1], [0], [0], [1], [0, 0, 1, 1], [], []>} : vector<8x64xbf16>, vector<64x64xbf16>, vector<8x64xf32> -> vector<8x64xf32>
    %c3 = arith.constant 3 : index
    %c0_32 = arith.constant 0 : index
    %c0_33 = arith.constant 0 : index
    %36 = vector.load %arg8[%c3, %c0_32, %c0_33] : memref<7x8x64xf32, #tpu.memory_space<vmem>>, vector<1x8x64xf32>
    %37 = vector.shape_cast %36 : vector<1x8x64xf32> to vector<8x64xf32>
    %38 = vector.shape_cast %35 : vector<8x64xf32> to vector<1x8x64xf32>
    tpu.vector_store %arg8[%c3, %c0_32, %c0_33], %38 {strides = array<i32>} : memref<7x8x64xf32, #tpu.memory_space<vmem>>, vector<1x8x64xf32>,
    %c192 = arith.constant 192 : index
    %c0_34 = arith.constant 0 : index
    %39 = vector.load %arg2[%c192, %c0_34] : memref<320x64xbf16, #tpu.memory_space<vmem>>, vector<64x64xbf16>
    %40 = arith.truncf %20 : vector<8x64xf32> to vector<8x64xbf16>
    %cst_35 = arith.constant dense<0.000000e+00> : vector<8x64xf32>
    %41 = tpu.matmul %40, %39, %cst_35 {dimension_numbers = #tpu.dot_dimension_numbers<[1], [0], [0], [1], [0, 0, 1, 1], [], []>} : vector<8x64xbf16>, vector<64x64xbf16>, vector<8x64xf32> -> vector<8x64xf32>
    %c4 = arith.constant 4 : index
    %c0_36 = arith.constant 0 : index
    %c0_37 = arith.constant 0 : index
    %42 = vector.load %arg8[%c4, %c0_36, %c0_37] : memref<7x8x64xf32, #tpu.memory_space<vmem>>, vector<1x8x64xf32>
    %43 = vector.shape_cast %42 : vector<1x8x64xf32> to vector<8x64xf32>
    %44 = vector.shape_cast %41 : vector<8x64xf32> to vector<1x8x64xf32>
    tpu.vector_store %arg8[%c4, %c0_36, %c0_37], %44 {strides = array<i32>} : memref<7x8x64xf32, #tpu.memory_space<vmem>>, vector<1x8x64xf32>,
    %c256 = arith.constant 256 : index
    %c0_38 = arith.constant 0 : index
    %45 = vector.load %arg2[%c256, %c0_38] : memref<320x64xbf16, #tpu.memory_space<vmem>>, vector<64x64xbf16>
    %46 = arith.truncf %20 : vector<8x64xf32> to vector<8x64xbf16>
    %cst_39 = arith.constant dense<0.000000e+00> : vector<8x64xf32>
    %47 = tpu.matmul %46, %45, %cst_39 {dimension_numbers = #tpu.dot_dimension_numbers<[1], [0], [0], [1], [0, 0, 1, 1], [], []>} : vector<8x64xbf16>, vector<64x64xbf16>, vector<8x64xf32> -> vector<8x64xf32>
    %c5 = arith.constant 5 : index
    %c0_40 = arith.constant 0 : index
    %c0_41 = arith.constant 0 : index
    %48 = vector.load %arg8[%c5, %c0_40, %c0_41] : memref<7x8x64xf32, #tpu.memory_space<vmem>>, vector<1x8x64xf32>
    %49 = vector.shape_cast %48 : vector<1x8x64xf32> to vector<8x64xf32>
    %50 = vector.shape_cast %47 : vector<8x64xf32> to vector<1x8x64xf32>
    tpu.vector_store %arg8[%c5, %c0_40, %c0_41], %50 {strides = array<i32>} : memref<7x8x64xf32, #tpu.memory_space<vmem>>, vector<1x8x64xf32>,
    %c0_42 = arith.constant 0 : index
    %c0_43 = arith.constant 0 : index
    %c0_44 = arith.constant 0 : index
    %51 = vector.load %arg8[%c0_42, %c0_43, %c0_44] : memref<7x8x64xf32, #tpu.memory_space<vmem>>, vector<5x8x64xf32>
    %52 = vector.shape_cast %51 : vector<5x8x64xf32> to vector<40x64xf32>
    %c1_45 = arith.constant 1 : index
    %c0_46 = arith.constant 0 : index
    %c0_47 = arith.constant 0 : index
    %53 = vector.load %arg8[%c1_45, %c0_46, %c0_47] : memref<7x8x64xf32, #tpu.memory_space<vmem>>, vector<5x8x64xf32>
    %54 = vector.shape_cast %53 : vector<5x8x64xf32> to vector<40x64xf32>
    %c2_48 = arith.constant 2 : index
    %c0_49 = arith.constant 0 : index
    %c0_50 = arith.constant 0 : index
    %55 = vector.load %arg8[%c2_48, %c0_49, %c0_50] : memref<7x8x64xf32, #tpu.memory_space<vmem>>, vector<5x8x64xf32>
    %56 = vector.shape_cast %55 : vector<5x8x64xf32> to vector<40x64xf32>
    %57 = tpu.concatenate %54, %52 in 1 : vector<40x64xf32>, vector<40x64xf32> -> vector<40x128xf32>
    %c0_51 = arith.constant 0 : index
    %c0_52 = arith.constant 0 : index
    %58 = vector.load %arg3[%c0_51, %c0_52] : memref<256x128xbf16, #tpu.memory_space<vmem>>, vector<128x128xbf16>
    %59 = arith.truncf %57 : vector<40x128xf32> to vector<40x128xbf16>
    %cst_53 = arith.constant dense<0.000000e+00> : vector<40x128xf32>
    %60 = tpu.matmul %59, %58, %cst_53 {dimension_numbers = #tpu.dot_dimension_numbers<[1], [0], [0], [1], [0, 0, 1, 1], [], []>} : vector<40x128xbf16>, vector<128x128xbf16>, vector<40x128xf32> -> vector<40x128xf32>
    %61 = tpu.concatenate %56, %54 in 1 : vector<40x64xf32>, vector<40x64xf32> -> vector<40x128xf32>
    %c128_54 = arith.constant 128 : index
    %c0_55 = arith.constant 0 : index
    %62 = vector.load %arg3[%c128_54, %c0_55] : memref<256x128xbf16, #tpu.memory_space<vmem>>, vector<128x128xbf16>
    %63 = arith.truncf %61 : vector<40x128xf32> to vector<40x128xbf16>
    %cst_56 = arith.constant dense<0.000000e+00> : vector<40x128xf32>
    %64 = tpu.matmul %63, %62, %cst_56 {dimension_numbers = #tpu.dot_dimension_numbers<[1], [0], [0], [1], [0, 0, 1, 1], [], []>} : vector<40x128xbf16>, vector<128x128xbf16>, vector<40x128xf32> -> vector<40x128xf32>
    %65 = vector.shape_cast %60 : vector<40x128xf32> to vector<5x8x128xf32>
    %66 = vector.shape_cast %64 : vector<40x128xf32> to vector<5x8x128xf32>
    %cst_57 = arith.constant dense<0.000000e+00> : vector<8x128xf32>
    %67 = vector.multi_reduction <add>, %65, %cst_57 [0] : vector<5x8x128xf32> to vector<8x128xf32>
    %68 = vector.shape_cast %67 : vector<8x128xf32> to vector<1x8x128xf32>
    %cst_58 = arith.constant dense<0.000000e+00> : vector<8x128xf32>
    %69 = vector.multi_reduction <add>, %66, %cst_58 [0] : vector<5x8x128xf32> to vector<8x128xf32>
    %70 = vector.shape_cast %69 : vector<8x128xf32> to vector<1x8x128xf32>
    %71 = arith.addf %68, %70 : vector<1x8x128xf32>
    %cst_59 = arith.constant 1.000000e+01 : f32
    %72 = vector.broadcast %cst_59 : f32 to vector<1x8x128xf32>
    %73 = arith.divf %71, %72 : vector<1x8x128xf32>
    %74 = vector.broadcast %73 : vector<1x8x128xf32> to vector<5x8x128xf32>
    %75 = arith.subf %65, %74 : vector<5x8x128xf32>
    %76 = arith.mulf %75, %75 : vector<5x8x128xf32>
    %cst_60 = arith.constant dense<0.000000e+00> : vector<8x128xf32>
    %77 = vector.multi_reduction <add>, %76, %cst_60 [0] : vector<5x8x128xf32> to vector<8x128xf32>
    %78 = vector.shape_cast %77 : vector<8x128xf32> to vector<1x8x128xf32>
    %79 = vector.broadcast %73 : vector<1x8x128xf32> to vector<5x8x128xf32>
    %80 = arith.subf %66, %79 : vector<5x8x128xf32>
    %81 = arith.mulf %80, %80 : vector<5x8x128xf32>
    %cst_61 = arith.constant dense<0.000000e+00> : vector<8x128xf32>
    %82 = vector.multi_reduction <add>, %81, %cst_61 [0] : vector<5x8x128xf32> to vector<8x128xf32>
    %83 = vector.shape_cast %82 : vector<8x128xf32> to vector<1x8x128xf32>
    %84 = arith.addf %78, %83 : vector<1x8x128xf32>
    %cst_62 = arith.constant 1.000000e+01 : f32
    %85 = vector.broadcast %cst_62 : f32 to vector<1x8x128xf32>
    %86 = arith.divf %84, %85 : vector<1x8x128xf32>
    %cst_63 = arith.constant 9.99999974E-6 : f32
    %87 = vector.broadcast %cst_63 : f32 to vector<1x8x128xf32>
    %88 = arith.addf %86, %87 : vector<1x8x128xf32>
    %89 = math.rsqrt %88 : vector<1x8x128xf32>
    %90 = vector.broadcast %73 : vector<1x8x128xf32> to vector<5x8x128xf32>
    %91 = arith.subf %65, %90 : vector<5x8x128xf32>
    %92 = vector.broadcast %89 : vector<1x8x128xf32> to vector<5x8x128xf32>
    %93 = arith.mulf %91, %92 : vector<5x8x128xf32>
    %cst_64 = arith.constant 0.000000e+00 : f32
    %94 = vector.broadcast %cst_64 : f32 to vector<5x8x128xf32>
    %95 = arith.cmpf oge, %93, %94 : vector<5x8x128xf32>
    %cst_65 = arith.constant 1.000000e-01 : f32
    %96 = vector.broadcast %cst_65 : f32 to vector<5x8x128xf32>
    %97 = arith.mulf %96, %93 : vector<5x8x128xf32>
    %98 = arith.select %95, %93, %97 : vector<5x8x128xi1>, vector<5x8x128xf32>
    %99 = vector.broadcast %73 : vector<1x8x128xf32> to vector<5x8x128xf32>
    %100 = arith.subf %66, %99 : vector<5x8x128xf32>
    %101 = vector.broadcast %89 : vector<1x8x128xf32> to vector<5x8x128xf32>
    %102 = arith.mulf %100, %101 : vector<5x8x128xf32>
    %cst_66 = arith.constant 0.000000e+00 : f32
    %103 = vector.broadcast %cst_66 : f32 to vector<5x8x128xf32>
    %104 = arith.cmpf oge, %102, %103 : vector<5x8x128xf32>
    %cst_67 = arith.constant 1.000000e-01 : f32
    %105 = vector.broadcast %cst_67 : f32 to vector<5x8x128xf32>
    %106 = arith.mulf %105, %102 : vector<5x8x128xf32>
    %107 = arith.select %104, %102, %106 : vector<5x8x128xi1>, vector<5x8x128xf32>
    %108 = vector.extract_strided_slice %98 {offsets = [0, 0, 0], sizes = [1, 8, 128], strides = [1, 1, 1]} : vector<5x8x128xf32> to vector<1x8x128xf32>
    %109 = vector.shape_cast %108 : vector<1x8x128xf32> to vector<8x128xf32>
    %c1_68 = arith.constant 1 : index
    %c0_69 = arith.constant 0 : index
    %c0_70 = arith.constant 0 : index
    %110 = vector.load %arg9[%c1_68, %c0_69, %c0_70] : memref<12x8x128xf32, #tpu.memory_space<vmem>>, vector<1x8x128xf32>
    %111 = vector.shape_cast %110 : vector<1x8x128xf32> to vector<8x128xf32>
    %112 = vector.shape_cast %109 : vector<8x128xf32> to vector<1x8x128xf32>
    tpu.vector_store %arg9[%c1_68, %c0_69, %c0_70], %112 {strides = array<i32>} : memref<12x8x128xf32, #tpu.memory_space<vmem>>, vector<1x8x128xf32>,
    %113 = vector.extract_strided_slice %107 {offsets = [0, 0, 0], sizes = [1, 8, 128], strides = [1, 1, 1]} : vector<5x8x128xf32> to vector<1x8x128xf32>
    %114 = vector.shape_cast %113 : vector<1x8x128xf32> to vector<8x128xf32>
    %c2_71 = arith.constant 2 : index
    %c0_72 = arith.constant 0 : index
    %c0_73 = arith.constant 0 : index
    %115 = vector.load %arg9[%c2_71, %c0_72, %c0_73] : memref<12x8x128xf32, #tpu.memory_space<vmem>>, vector<1x8x128xf32>
    %116 = vector.shape_cast %115 : vector<1x8x128xf32> to vector<8x128xf32>
    %117 = vector.shape_cast %114 : vector<8x128xf32> to vector<1x8x128xf32>
    tpu.vector_store %arg9[%c2_71, %c0_72, %c0_73], %117 {strides = array<i32>} : memref<12x8x128xf32, #tpu.memory_space<vmem>>, vector<1x8x128xf32>,
    %118 = vector.extract_strided_slice %98 {offsets = [1, 0, 0], sizes = [1, 8, 128], strides = [1, 1, 1]} : vector<5x8x128xf32> to vector<1x8x128xf32>
    %119 = vector.shape_cast %118 : vector<1x8x128xf32> to vector<8x128xf32>
    %c3_74 = arith.constant 3 : index
    %c0_75 = arith.constant 0 : index
    %c0_76 = arith.constant 0 : index
    %120 = vector.load %arg9[%c3_74, %c0_75, %c0_76] : memref<12x8x128xf32, #tpu.memory_space<vmem>>, vector<1x8x128xf32>
    %121 = vector.shape_cast %120 : vector<1x8x128xf32> to vector<8x128xf32>
    %122 = vector.shape_cast %119 : vector<8x128xf32> to vector<1x8x128xf32>
    tpu.vector_store %arg9[%c3_74, %c0_75, %c0_76], %122 {strides = array<i32>} : memref<12x8x128xf32, #tpu.memory_space<vmem>>, vector<1x8x128xf32>,
    %123 = vector.extract_strided_slice %107 {offsets = [1, 0, 0], sizes = [1, 8, 128], strides = [1, 1, 1]} : vector<5x8x128xf32> to vector<1x8x128xf32>
    %124 = vector.shape_cast %123 : vector<1x8x128xf32> to vector<8x128xf32>
    %c4_77 = arith.constant 4 : index
    %c0_78 = arith.constant 0 : index
    %c0_79 = arith.constant 0 : index
    %125 = vector.load %arg9[%c4_77, %c0_78, %c0_79] : memref<12x8x128xf32, #tpu.memory_space<vmem>>, vector<1x8x128xf32>
    %126 = vector.shape_cast %125 : vector<1x8x128xf32> to vector<8x128xf32>
    %127 = vector.shape_cast %124 : vector<8x128xf32> to vector<1x8x128xf32>
    tpu.vector_store %arg9[%c4_77, %c0_78, %c0_79], %127 {strides = array<i32>} : memref<12x8x128xf32, #tpu.memory_space<vmem>>, vector<1x8x128xf32>,
    %128 = vector.extract_strided_slice %98 {offsets = [2, 0, 0], sizes = [1, 8, 128], strides = [1, 1, 1]} : vector<5x8x128xf32> to vector<1x8x128xf32>
    %129 = vector.shape_cast %128 : vector<1x8x128xf32> to vector<8x128xf32>
    %c5_80 = arith.constant 5 : index
    %c0_81 = arith.constant 0 : index
    %c0_82 = arith.constant 0 : index
    %130 = vector.load %arg9[%c5_80, %c0_81, %c0_82] : memref<12x8x128xf32, #tpu.memory_space<vmem>>, vector<1x8x128xf32>
    %131 = vector.shape_cast %130 : vector<1x8x128xf32> to vector<8x128xf32>
    %132 = vector.shape_cast %129 : vector<8x128xf32> to vector<1x8x128xf32>
    tpu.vector_store %arg9[%c5_80, %c0_81, %c0_82], %132 {strides = array<i32>} : memref<12x8x128xf32, #tpu.memory_space<vmem>>, vector<1x8x128xf32>,
    %133 = vector.extract_strided_slice %107 {offsets = [2, 0, 0], sizes = [1, 8, 128], strides = [1, 1, 1]} : vector<5x8x128xf32> to vector<1x8x128xf32>
    %134 = vector.shape_cast %133 : vector<1x8x128xf32> to vector<8x128xf32>
    %c6_83 = arith.constant 6 : index
    %c0_84 = arith.constant 0 : index
    %c0_85 = arith.constant 0 : index
    %135 = vector.load %arg9[%c6_83, %c0_84, %c0_85] : memref<12x8x128xf32, #tpu.memory_space<vmem>>, vector<1x8x128xf32>
    %136 = vector.shape_cast %135 : vector<1x8x128xf32> to vector<8x128xf32>
    %137 = vector.shape_cast %134 : vector<8x128xf32> to vector<1x8x128xf32>
    tpu.vector_store %arg9[%c6_83, %c0_84, %c0_85], %137 {strides = array<i32>} : memref<12x8x128xf32, #tpu.memory_space<vmem>>, vector<1x8x128xf32>,
    %138 = vector.extract_strided_slice %98 {offsets = [3, 0, 0], sizes = [1, 8, 128], strides = [1, 1, 1]} : vector<5x8x128xf32> to vector<1x8x128xf32>
    %139 = vector.shape_cast %138 : vector<1x8x128xf32> to vector<8x128xf32>
    %c7 = arith.constant 7 : index
    %c0_86 = arith.constant 0 : index
    %c0_87 = arith.constant 0 : index
    %140 = vector.load %arg9[%c7, %c0_86, %c0_87] : memref<12x8x128xf32, #tpu.memory_space<vmem>>, vector<1x8x128xf32>
    %141 = vector.shape_cast %140 : vector<1x8x128xf32> to vector<8x128xf32>
    %142 = vector.shape_cast %139 : vector<8x128xf32> to vector<1x8x128xf32>
    tpu.vector_store %arg9[%c7, %c0_86, %c0_87], %142 {strides = array<i32>} : memref<12x8x128xf32, #tpu.memory_space<vmem>>, vector<1x8x128xf32>,
    %143 = vector.extract_strided_slice %107 {offsets = [3, 0, 0], sizes = [1, 8, 128], strides = [1, 1, 1]} : vector<5x8x128xf32> to vector<1x8x128xf32>
    %144 = vector.shape_cast %143 : vector<1x8x128xf32> to vector<8x128xf32>
    %c8 = arith.constant 8 : index
    %c0_88 = arith.constant 0 : index
    %c0_89 = arith.constant 0 : index
    %145 = vector.load %arg9[%c8, %c0_88, %c0_89] : memref<12x8x128xf32, #tpu.memory_space<vmem>>, vector<1x8x128xf32>
    %146 = vector.shape_cast %145 : vector<1x8x128xf32> to vector<8x128xf32>
    %147 = vector.shape_cast %144 : vector<8x128xf32> to vector<1x8x128xf32>
    tpu.vector_store %arg9[%c8, %c0_88, %c0_89], %147 {strides = array<i32>} : memref<12x8x128xf32, #tpu.memory_space<vmem>>, vector<1x8x128xf32>,
    %148 = vector.extract_strided_slice %98 {offsets = [4, 0, 0], sizes = [1, 8, 128], strides = [1, 1, 1]} : vector<5x8x128xf32> to vector<1x8x128xf32>
    %149 = vector.shape_cast %148 : vector<1x8x128xf32> to vector<8x128xf32>
    %c9 = arith.constant 9 : index
    %c0_90 = arith.constant 0 : index
    %c0_91 = arith.constant 0 : index
    %150 = vector.load %arg9[%c9, %c0_90, %c0_91] : memref<12x8x128xf32, #tpu.memory_space<vmem>>, vector<1x8x128xf32>
    %151 = vector.shape_cast %150 : vector<1x8x128xf32> to vector<8x128xf32>
    %152 = vector.shape_cast %149 : vector<8x128xf32> to vector<1x8x128xf32>
    tpu.vector_store %arg9[%c9, %c0_90, %c0_91], %152 {strides = array<i32>} : memref<12x8x128xf32, #tpu.memory_space<vmem>>, vector<1x8x128xf32>,
    %153 = vector.extract_strided_slice %107 {offsets = [4, 0, 0], sizes = [1, 8, 128], strides = [1, 1, 1]} : vector<5x8x128xf32> to vector<1x8x128xf32>
    %154 = vector.shape_cast %153 : vector<1x8x128xf32> to vector<8x128xf32>
    %c10 = arith.constant 10 : index
    %c0_92 = arith.constant 0 : index
    %c0_93 = arith.constant 0 : index
    %155 = vector.load %arg9[%c10, %c0_92, %c0_93] : memref<12x8x128xf32, #tpu.memory_space<vmem>>, vector<1x8x128xf32>
    %156 = vector.shape_cast %155 : vector<1x8x128xf32> to vector<8x128xf32>
    %157 = vector.shape_cast %154 : vector<8x128xf32> to vector<1x8x128xf32>
    tpu.vector_store %arg9[%c10, %c0_92, %c0_93], %157 {strides = array<i32>} : memref<12x8x128xf32, #tpu.memory_space<vmem>>, vector<1x8x128xf32>,
    %c0_94 = arith.constant 0 : index
    %c0_95 = arith.constant 0 : index
    %c0_96 = arith.constant 0 : index
    %158 = vector.load %arg9[%c0_94, %c0_95, %c0_96] : memref<12x8x128xf32, #tpu.memory_space<vmem>>, vector<10x8x128xf32>
    %159 = vector.shape_cast %158 : vector<10x8x128xf32> to vector<80x128xf32>
    %c1_97 = arith.constant 1 : index
    %c0_98 = arith.constant 0 : index
    %c0_99 = arith.constant 0 : index
    %160 = vector.load %arg9[%c1_97, %c0_98, %c0_99] : memref<12x8x128xf32, #tpu.memory_space<vmem>>, vector<10x8x128xf32>
    %161 = vector.shape_cast %160 : vector<10x8x128xf32> to vector<80x128xf32>
    %c2_100 = arith.constant 2 : index
    %c0_101 = arith.constant 0 : index
    %c0_102 = arith.constant 0 : index
    %162 = vector.load %arg9[%c2_100, %c0_101, %c0_102] : memref<12x8x128xf32, #tpu.memory_space<vmem>>, vector<10x8x128xf32>
    %163 = vector.shape_cast %162 : vector<10x8x128xf32> to vector<80x128xf32>
    %164 = tpu.concatenate %161, %159 in 1 : vector<80x128xf32>, vector<80x128xf32> -> vector<80x256xf32>
    %c0_103 = arith.constant 0 : index
    %c0_104 = arith.constant 0 : index
    %165 = vector.load %arg4[%c0_103, %c0_104] : memref<512x256xbf16, #tpu.memory_space<vmem>>, vector<256x256xbf16>
    %166 = arith.truncf %164 : vector<80x256xf32> to vector<80x256xbf16>
    %cst_105 = arith.constant dense<0.000000e+00> : vector<80x256xf32>
    %167 = tpu.matmul %166, %165, %cst_105 {dimension_numbers = #tpu.dot_dimension_numbers<[1], [0], [0], [1], [0, 0, 1, 1], [], []>} : vector<80x256xbf16>, vector<256x256xbf16>, vector<80x256xf32> -> vector<80x256xf32>
    %168 = tpu.concatenate %163, %161 in 1 : vector<80x128xf32>, vector<80x128xf32> -> vector<80x256xf32>
    %c256_106 = arith.constant 256 : index
    %c0_107 = arith.constant 0 : index
    %169 = vector.load %arg4[%c256_106, %c0_107] : memref<512x256xbf16, #tpu.memory_space<vmem>>, vector<256x256xbf16>
    %170 = arith.truncf %168 : vector<80x256xf32> to vector<80x256xbf16>
    %cst_108 = arith.constant dense<0.000000e+00> : vector<80x256xf32>
    %171 = tpu.matmul %170, %169, %cst_108 {dimension_numbers = #tpu.dot_dimension_numbers<[1], [0], [0], [1], [0, 0, 1, 1], [], []>} : vector<80x256xbf16>, vector<256x256xbf16>, vector<80x256xf32> -> vector<80x256xf32>
    %172 = vector.shape_cast %167 : vector<80x256xf32> to vector<10x8x256xf32>
    %173 = vector.shape_cast %171 : vector<80x256xf32> to vector<10x8x256xf32>
    %cst_109 = arith.constant dense<0.000000e+00> : vector<8x256xf32>
    %174 = vector.multi_reduction <add>, %172, %cst_109 [0] : vector<10x8x256xf32> to vector<8x256xf32>
    %175 = vector.shape_cast %174 : vector<8x256xf32> to vector<1x8x256xf32>
    %cst_110 = arith.constant dense<0.000000e+00> : vector<8x256xf32>
    %176 = vector.multi_reduction <add>, %173, %cst_110 [0] : vector<10x8x256xf32> to vector<8x256xf32>
    %177 = vector.shape_cast %176 : vector<8x256xf32> to vector<1x8x256xf32>
    %178 = arith.addf %175, %177 : vector<1x8x256xf32>
    %cst_111 = arith.constant 2.000000e+01 : f32
    %179 = vector.broadcast %cst_111 : f32 to vector<1x8x256xf32>
    %180 = arith.divf %178, %179 : vector<1x8x256xf32>
    %181 = vector.broadcast %180 : vector<1x8x256xf32> to vector<10x8x256xf32>
    %182 = arith.subf %172, %181 : vector<10x8x256xf32>
    %183 = arith.mulf %182, %182 : vector<10x8x256xf32>
    %cst_112 = arith.constant dense<0.000000e+00> : vector<8x256xf32>
    %184 = vector.multi_reduction <add>, %183, %cst_112 [0] : vector<10x8x256xf32> to vector<8x256xf32>
    %185 = vector.shape_cast %184 : vector<8x256xf32> to vector<1x8x256xf32>
    %186 = vector.broadcast %180 : vector<1x8x256xf32> to vector<10x8x256xf32>
    %187 = arith.subf %173, %186 : vector<10x8x256xf32>
    %188 = arith.mulf %187, %187 : vector<10x8x256xf32>
    %cst_113 = arith.constant dense<0.000000e+00> : vector<8x256xf32>
    %189 = vector.multi_reduction <add>, %188, %cst_113 [0] : vector<10x8x256xf32> to vector<8x256xf32>
    %190 = vector.shape_cast %189 : vector<8x256xf32> to vector<1x8x256xf32>
    %191 = arith.addf %185, %190 : vector<1x8x256xf32>
    %cst_114 = arith.constant 2.000000e+01 : f32
    %192 = vector.broadcast %cst_114 : f32 to vector<1x8x256xf32>
    %193 = arith.divf %191, %192 : vector<1x8x256xf32>
    %cst_115 = arith.constant 9.99999974E-6 : f32
    %194 = vector.broadcast %cst_115 : f32 to vector<1x8x256xf32>
    %195 = arith.addf %193, %194 : vector<1x8x256xf32>
    %196 = math.rsqrt %195 : vector<1x8x256xf32>
    %197 = vector.broadcast %180 : vector<1x8x256xf32> to vector<10x8x256xf32>
    %198 = arith.subf %172, %197 : vector<10x8x256xf32>
    %199 = vector.broadcast %196 : vector<1x8x256xf32> to vector<10x8x256xf32>
    %200 = arith.mulf %198, %199 : vector<10x8x256xf32>
    %cst_116 = arith.constant 0.000000e+00 : f32
    %201 = vector.broadcast %cst_116 : f32 to vector<10x8x256xf32>
    %202 = arith.cmpf oge, %200, %201 : vector<10x8x256xf32>
    %cst_117 = arith.constant 1.000000e-01 : f32
    %203 = vector.broadcast %cst_117 : f32 to vector<10x8x256xf32>
    %204 = arith.mulf %203, %200 : vector<10x8x256xf32>
    %205 = arith.select %202, %200, %204 : vector<10x8x256xi1>, vector<10x8x256xf32>
    %206 = vector.broadcast %180 : vector<1x8x256xf32> to vector<10x8x256xf32>
    %207 = arith.subf %173, %206 : vector<10x8x256xf32>
    %208 = vector.broadcast %196 : vector<1x8x256xf32> to vector<10x8x256xf32>
    %209 = arith.mulf %207, %208 : vector<10x8x256xf32>
    %cst_118 = arith.constant 0.000000e+00 : f32
    %210 = vector.broadcast %cst_118 : f32 to vector<10x8x256xf32>
    %211 = arith.cmpf oge, %209, %210 : vector<10x8x256xf32>
    %cst_119 = arith.constant 1.000000e-01 : f32
    %212 = vector.broadcast %cst_119 : f32 to vector<10x8x256xf32>
    %213 = arith.mulf %212, %209 : vector<10x8x256xf32>
    %214 = arith.select %211, %209, %213 : vector<10x8x256xi1>, vector<10x8x256xf32>
    %215 = vector.extract_strided_slice %205 {offsets = [0, 0, 0], sizes = [1, 8, 256], strides = [1, 1, 1]} : vector<10x8x256xf32> to vector<1x8x256xf32>
    %216 = vector.shape_cast %215 : vector<1x8x256xf32> to vector<8x256xf32>
    %c2_120 = arith.constant 2 : index
    %c0_121 = arith.constant 0 : index
    %c0_122 = arith.constant 0 : index
    %217 = vector.load %arg10[%c2_120, %c0_121, %c0_122] : memref<24x8x256xf32, #tpu.memory_space<vmem>>, vector<1x8x256xf32>
    %218 = vector.shape_cast %217 : vector<1x8x256xf32> to vector<8x256xf32>
    %219 = vector.shape_cast %216 : vector<8x256xf32> to vector<1x8x256xf32>
    tpu.vector_store %arg10[%c2_120, %c0_121, %c0_122], %219 {strides = array<i32>} : memref<24x8x256xf32, #tpu.memory_space<vmem>>, vector<1x8x256xf32>,
    %220 = vector.extract_strided_slice %214 {offsets = [0, 0, 0], sizes = [1, 8, 256], strides = [1, 1, 1]} : vector<10x8x256xf32> to vector<1x8x256xf32>
    %221 = vector.shape_cast %220 : vector<1x8x256xf32> to vector<8x256xf32>
    %c3_123 = arith.constant 3 : index
    %c0_124 = arith.constant 0 : index
    %c0_125 = arith.constant 0 : index
    %222 = vector.load %arg10[%c3_123, %c0_124, %c0_125] : memref<24x8x256xf32, #tpu.memory_space<vmem>>, vector<1x8x256xf32>
    %223 = vector.shape_cast %222 : vector<1x8x256xf32> to vector<8x256xf32>
    %224 = vector.shape_cast %221 : vector<8x256xf32> to vector<1x8x256xf32>
    tpu.vector_store %arg10[%c3_123, %c0_124, %c0_125], %224 {strides = array<i32>} : memref<24x8x256xf32, #tpu.memory_space<vmem>>, vector<1x8x256xf32>,
    %225 = vector.extract_strided_slice %205 {offsets = [1, 0, 0], sizes = [1, 8, 256], strides = [1, 1, 1]} : vector<10x8x256xf32> to vector<1x8x256xf32>
    %226 = vector.shape_cast %225 : vector<1x8x256xf32> to vector<8x256xf32>
    %c4_126 = arith.constant 4 : index
    %c0_127 = arith.constant 0 : index
    %c0_128 = arith.constant 0 : index
    %227 = vector.load %arg10[%c4_126, %c0_127, %c0_128] : memref<24x8x256xf32, #tpu.memory_space<vmem>>, vector<1x8x256xf32>
    %228 = vector.shape_cast %227 : vector<1x8x256xf32> to vector<8x256xf32>
    %229 = vector.shape_cast %226 : vector<8x256xf32> to vector<1x8x256xf32>
    tpu.vector_store %arg10[%c4_126, %c0_127, %c0_128], %229 {strides = array<i32>} : memref<24x8x256xf32, #tpu.memory_space<vmem>>, vector<1x8x256xf32>,
    %230 = vector.extract_strided_slice %214 {offsets = [1, 0, 0], sizes = [1, 8, 256], strides = [1, 1, 1]} : vector<10x8x256xf32> to vector<1x8x256xf32>
    %231 = vector.shape_cast %230 : vector<1x8x256xf32> to vector<8x256xf32>
    %c5_129 = arith.constant 5 : index
    %c0_130 = arith.constant 0 : index
    %c0_131 = arith.constant 0 : index
    %232 = vector.load %arg10[%c5_129, %c0_130, %c0_131] : memref<24x8x256xf32, #tpu.memory_space<vmem>>, vector<1x8x256xf32>
    %233 = vector.shape_cast %232 : vector<1x8x256xf32> to vector<8x256xf32>
    %234 = vector.shape_cast %231 : vector<8x256xf32> to vector<1x8x256xf32>
    tpu.vector_store %arg10[%c5_129, %c0_130, %c0_131], %234 {strides = array<i32>} : memref<24x8x256xf32, #tpu.memory_space<vmem>>, vector<1x8x256xf32>,
    %235 = vector.extract_strided_slice %205 {offsets = [2, 0, 0], sizes = [1, 8, 256], strides = [1, 1, 1]} : vector<10x8x256xf32> to vector<1x8x256xf32>
    %236 = vector.shape_cast %235 : vector<1x8x256xf32> to vector<8x256xf32>
    %c6_132 = arith.constant 6 : index
    %c0_133 = arith.constant 0 : index
    %c0_134 = arith.constant 0 : index
    %237 = vector.load %arg10[%c6_132, %c0_133, %c0_134] : memref<24x8x256xf32, #tpu.memory_space<vmem>>, vector<1x8x256xf32>
    %238 = vector.shape_cast %237 : vector<1x8x256xf32> to vector<8x256xf32>
    %239 = vector.shape_cast %236 : vector<8x256xf32> to vector<1x8x256xf32>
    tpu.vector_store %arg10[%c6_132, %c0_133, %c0_134], %239 {strides = array<i32>} : memref<24x8x256xf32, #tpu.memory_space<vmem>>, vector<1x8x256xf32>,
    %240 = vector.extract_strided_slice %214 {offsets = [2, 0, 0], sizes = [1, 8, 256], strides = [1, 1, 1]} : vector<10x8x256xf32> to vector<1x8x256xf32>
    %241 = vector.shape_cast %240 : vector<1x8x256xf32> to vector<8x256xf32>
    %c7_135 = arith.constant 7 : index
    %c0_136 = arith.constant 0 : index
    %c0_137 = arith.constant 0 : index
    %242 = vector.load %arg10[%c7_135, %c0_136, %c0_137] : memref<24x8x256xf32, #tpu.memory_space<vmem>>, vector<1x8x256xf32>
    %243 = vector.shape_cast %242 : vector<1x8x256xf32> to vector<8x256xf32>
    %244 = vector.shape_cast %241 : vector<8x256xf32> to vector<1x8x256xf32>
    tpu.vector_store %arg10[%c7_135, %c0_136, %c0_137], %244 {strides = array<i32>} : memref<24x8x256xf32, #tpu.memory_space<vmem>>, vector<1x8x256xf32>,
    %245 = vector.extract_strided_slice %205 {offsets = [3, 0, 0], sizes = [1, 8, 256], strides = [1, 1, 1]} : vector<10x8x256xf32> to vector<1x8x256xf32>
    %246 = vector.shape_cast %245 : vector<1x8x256xf32> to vector<8x256xf32>
    %c8_138 = arith.constant 8 : index
    %c0_139 = arith.constant 0 : index
    %c0_140 = arith.constant 0 : index
    %247 = vector.load %arg10[%c8_138, %c0_139, %c0_140] : memref<24x8x256xf32, #tpu.memory_space<vmem>>, vector<1x8x256xf32>
    %248 = vector.shape_cast %247 : vector<1x8x256xf32> to vector<8x256xf32>
    %249 = vector.shape_cast %246 : vector<8x256xf32> to vector<1x8x256xf32>
    tpu.vector_store %arg10[%c8_138, %c0_139, %c0_140], %249 {strides = array<i32>} : memref<24x8x256xf32, #tpu.memory_space<vmem>>, vector<1x8x256xf32>,
    %250 = vector.extract_strided_slice %214 {offsets = [3, 0, 0], sizes = [1, 8, 256], strides = [1, 1, 1]} : vector<10x8x256xf32> to vector<1x8x256xf32>
    %251 = vector.shape_cast %250 : vector<1x8x256xf32> to vector<8x256xf32>
    %c9_141 = arith.constant 9 : index
    %c0_142 = arith.constant 0 : index
    %c0_143 = arith.constant 0 : index
    %252 = vector.load %arg10[%c9_141, %c0_142, %c0_143] : memref<24x8x256xf32, #tpu.memory_space<vmem>>, vector<1x8x256xf32>
    %253 = vector.shape_cast %252 : vector<1x8x256xf32> to vector<8x256xf32>
    %254 = vector.shape_cast %251 : vector<8x256xf32> to vector<1x8x256xf32>
    tpu.vector_store %arg10[%c9_141, %c0_142, %c0_143], %254 {strides = array<i32>} : memref<24x8x256xf32, #tpu.memory_space<vmem>>, vector<1x8x256xf32>,
    %255 = vector.extract_strided_slice %205 {offsets = [4, 0, 0], sizes = [1, 8, 256], strides = [1, 1, 1]} : vector<10x8x256xf32> to vector<1x8x256xf32>
    %256 = vector.shape_cast %255 : vector<1x8x256xf32> to vector<8x256xf32>
    %c10_144 = arith.constant 10 : index
    %c0_145 = arith.constant 0 : index
    %c0_146 = arith.constant 0 : index
    %257 = vector.load %arg10[%c10_144, %c0_145, %c0_146] : memref<24x8x256xf32, #tpu.memory_space<vmem>>, vector<1x8x256xf32>
    %258 = vector.shape_cast %257 : vector<1x8x256xf32> to vector<8x256xf32>
    %259 = vector.shape_cast %256 : vector<8x256xf32> to vector<1x8x256xf32>
    tpu.vector_store %arg10[%c10_144, %c0_145, %c0_146], %259 {strides = array<i32>} : memref<24x8x256xf32, #tpu.memory_space<vmem>>, vector<1x8x256xf32>,
    %260 = vector.extract_strided_slice %214 {offsets = [4, 0, 0], sizes = [1, 8, 256], strides = [1, 1, 1]} : vector<10x8x256xf32> to vector<1x8x256xf32>
    %261 = vector.shape_cast %260 : vector<1x8x256xf32> to vector<8x256xf32>
    %c11_147 = arith.constant 11 : index
    %c0_148 = arith.constant 0 : index
    %c0_149 = arith.constant 0 : index
    %262 = vector.load %arg10[%c11_147, %c0_148, %c0_149] : memref<24x8x256xf32, #tpu.memory_space<vmem>>, vector<1x8x256xf32>
    %263 = vector.shape_cast %262 : vector<1x8x256xf32> to vector<8x256xf32>
    %264 = vector.shape_cast %261 : vector<8x256xf32> to vector<1x8x256xf32>
    tpu.vector_store %arg10[%c11_147, %c0_148, %c0_149], %264 {strides = array<i32>} : memref<24x8x256xf32, #tpu.memory_space<vmem>>, vector<1x8x256xf32>,
    %265 = vector.extract_strided_slice %205 {offsets = [5, 0, 0], sizes = [1, 8, 256], strides = [1, 1, 1]} : vector<10x8x256xf32> to vector<1x8x256xf32>
    %266 = vector.shape_cast %265 : vector<1x8x256xf32> to vector<8x256xf32>
    %c12 = arith.constant 12 : index
    %c0_150 = arith.constant 0 : index
    %c0_151 = arith.constant 0 : index
    %267 = vector.load %arg10[%c12, %c0_150, %c0_151] : memref<24x8x256xf32, #tpu.memory_space<vmem>>, vector<1x8x256xf32>
    %268 = vector.shape_cast %267 : vector<1x8x256xf32> to vector<8x256xf32>
    %269 = vector.shape_cast %266 : vector<8x256xf32> to vector<1x8x256xf32>
    tpu.vector_store %arg10[%c12, %c0_150, %c0_151], %269 {strides = array<i32>} : memref<24x8x256xf32, #tpu.memory_space<vmem>>, vector<1x8x256xf32>,
    %270 = vector.extract_strided_slice %214 {offsets = [5, 0, 0], sizes = [1, 8, 256], strides = [1, 1, 1]} : vector<10x8x256xf32> to vector<1x8x256xf32>
    %271 = vector.shape_cast %270 : vector<1x8x256xf32> to vector<8x256xf32>
    %c13 = arith.constant 13 : index
    %c0_152 = arith.constant 0 : index
    %c0_153 = arith.constant 0 : index
    %272 = vector.load %arg10[%c13, %c0_152, %c0_153] : memref<24x8x256xf32, #tpu.memory_space<vmem>>, vector<1x8x256xf32>
    %273 = vector.shape_cast %272 : vector<1x8x256xf32> to vector<8x256xf32>
    %274 = vector.shape_cast %271 : vector<8x256xf32> to vector<1x8x256xf32>
    tpu.vector_store %arg10[%c13, %c0_152, %c0_153], %274 {strides = array<i32>} : memref<24x8x256xf32, #tpu.memory_space<vmem>>, vector<1x8x256xf32>,
    %275 = vector.extract_strided_slice %205 {offsets = [6, 0, 0], sizes = [1, 8, 256], strides = [1, 1, 1]} : vector<10x8x256xf32> to vector<1x8x256xf32>
    %276 = vector.shape_cast %275 : vector<1x8x256xf32> to vector<8x256xf32>
    %c14 = arith.constant 14 : index
    %c0_154 = arith.constant 0 : index
    %c0_155 = arith.constant 0 : index
    %277 = vector.load %arg10[%c14, %c0_154, %c0_155] : memref<24x8x256xf32, #tpu.memory_space<vmem>>, vector<1x8x256xf32>
    %278 = vector.shape_cast %277 : vector<1x8x256xf32> to vector<8x256xf32>
    %279 = vector.shape_cast %276 : vector<8x256xf32> to vector<1x8x256xf32>
    tpu.vector_store %arg10[%c14, %c0_154, %c0_155], %279 {strides = array<i32>} : memref<24x8x256xf32, #tpu.memory_space<vmem>>, vector<1x8x256xf32>,
    %280 = vector.extract_strided_slice %214 {offsets = [6, 0, 0], sizes = [1, 8, 256], strides = [1, 1, 1]} : vector<10x8x256xf32> to vector<1x8x256xf32>
    %281 = vector.shape_cast %280 : vector<1x8x256xf32> to vector<8x256xf32>
    %c15 = arith.constant 15 : index
    %c0_156 = arith.constant 0 : index
    %c0_157 = arith.constant 0 : index
    %282 = vector.load %arg10[%c15, %c0_156, %c0_157] : memref<24x8x256xf32, #tpu.memory_space<vmem>>, vector<1x8x256xf32>
    %283 = vector.shape_cast %282 : vector<1x8x256xf32> to vector<8x256xf32>
    %284 = vector.shape_cast %281 : vector<8x256xf32> to vector<1x8x256xf32>
    tpu.vector_store %arg10[%c15, %c0_156, %c0_157], %284 {strides = array<i32>} : memref<24x8x256xf32, #tpu.memory_space<vmem>>, vector<1x8x256xf32>,
    %285 = vector.extract_strided_slice %205 {offsets = [7, 0, 0], sizes = [1, 8, 256], strides = [1, 1, 1]} : vector<10x8x256xf32> to vector<1x8x256xf32>
    %286 = vector.shape_cast %285 : vector<1x8x256xf32> to vector<8x256xf32>
    %c16 = arith.constant 16 : index
    %c0_158 = arith.constant 0 : index
    %c0_159 = arith.constant 0 : index
    %287 = vector.load %arg10[%c16, %c0_158, %c0_159] : memref<24x8x256xf32, #tpu.memory_space<vmem>>, vector<1x8x256xf32>
    %288 = vector.shape_cast %287 : vector<1x8x256xf32> to vector<8x256xf32>
    %289 = vector.shape_cast %286 : vector<8x256xf32> to vector<1x8x256xf32>
    tpu.vector_store %arg10[%c16, %c0_158, %c0_159], %289 {strides = array<i32>} : memref<24x8x256xf32, #tpu.memory_space<vmem>>, vector<1x8x256xf32>,
    %290 = vector.extract_strided_slice %214 {offsets = [7, 0, 0], sizes = [1, 8, 256], strides = [1, 1, 1]} : vector<10x8x256xf32> to vector<1x8x256xf32>
    %291 = vector.shape_cast %290 : vector<1x8x256xf32> to vector<8x256xf32>
    %c17 = arith.constant 17 : index
    %c0_160 = arith.constant 0 : index
    %c0_161 = arith.constant 0 : index
    %292 = vector.load %arg10[%c17, %c0_160, %c0_161] : memref<24x8x256xf32, #tpu.memory_space<vmem>>, vector<1x8x256xf32>
    %293 = vector.shape_cast %292 : vector<1x8x256xf32> to vector<8x256xf32>
    %294 = vector.shape_cast %291 : vector<8x256xf32> to vector<1x8x256xf32>
    tpu.vector_store %arg10[%c17, %c0_160, %c0_161], %294 {strides = array<i32>} : memref<24x8x256xf32, #tpu.memory_space<vmem>>, vector<1x8x256xf32>,
    %295 = vector.extract_strided_slice %205 {offsets = [8, 0, 0], sizes = [1, 8, 256], strides = [1, 1, 1]} : vector<10x8x256xf32> to vector<1x8x256xf32>
    %296 = vector.shape_cast %295 : vector<1x8x256xf32> to vector<8x256xf32>
    %c18 = arith.constant 18 : index
    %c0_162 = arith.constant 0 : index
    %c0_163 = arith.constant 0 : index
    %297 = vector.load %arg10[%c18, %c0_162, %c0_163] : memref<24x8x256xf32, #tpu.memory_space<vmem>>, vector<1x8x256xf32>
    %298 = vector.shape_cast %297 : vector<1x8x256xf32> to vector<8x256xf32>
    %299 = vector.shape_cast %296 : vector<8x256xf32> to vector<1x8x256xf32>
    tpu.vector_store %arg10[%c18, %c0_162, %c0_163], %299 {strides = array<i32>} : memref<24x8x256xf32, #tpu.memory_space<vmem>>, vector<1x8x256xf32>,
    %300 = vector.extract_strided_slice %214 {offsets = [8, 0, 0], sizes = [1, 8, 256], strides = [1, 1, 1]} : vector<10x8x256xf32> to vector<1x8x256xf32>
    %301 = vector.shape_cast %300 : vector<1x8x256xf32> to vector<8x256xf32>
    %c19 = arith.constant 19 : index
    %c0_164 = arith.constant 0 : index
    %c0_165 = arith.constant 0 : index
    %302 = vector.load %arg10[%c19, %c0_164, %c0_165] : memref<24x8x256xf32, #tpu.memory_space<vmem>>, vector<1x8x256xf32>
    %303 = vector.shape_cast %302 : vector<1x8x256xf32> to vector<8x256xf32>
    %304 = vector.shape_cast %301 : vector<8x256xf32> to vector<1x8x256xf32>
    tpu.vector_store %arg10[%c19, %c0_164, %c0_165], %304 {strides = array<i32>} : memref<24x8x256xf32, #tpu.memory_space<vmem>>, vector<1x8x256xf32>,
    %305 = vector.extract_strided_slice %205 {offsets = [9, 0, 0], sizes = [1, 8, 256], strides = [1, 1, 1]} : vector<10x8x256xf32> to vector<1x8x256xf32>
    %306 = vector.shape_cast %305 : vector<1x8x256xf32> to vector<8x256xf32>
    %c20 = arith.constant 20 : index
    %c0_166 = arith.constant 0 : index
    %c0_167 = arith.constant 0 : index
    %307 = vector.load %arg10[%c20, %c0_166, %c0_167] : memref<24x8x256xf32, #tpu.memory_space<vmem>>, vector<1x8x256xf32>
    %308 = vector.shape_cast %307 : vector<1x8x256xf32> to vector<8x256xf32>
    %309 = vector.shape_cast %306 : vector<8x256xf32> to vector<1x8x256xf32>
    tpu.vector_store %arg10[%c20, %c0_166, %c0_167], %309 {strides = array<i32>} : memref<24x8x256xf32, #tpu.memory_space<vmem>>, vector<1x8x256xf32>,
    %310 = vector.extract_strided_slice %214 {offsets = [9, 0, 0], sizes = [1, 8, 256], strides = [1, 1, 1]} : vector<10x8x256xf32> to vector<1x8x256xf32>
    %311 = vector.shape_cast %310 : vector<1x8x256xf32> to vector<8x256xf32>
    %c21 = arith.constant 21 : index
    %c0_168 = arith.constant 0 : index
    %c0_169 = arith.constant 0 : index
    %312 = vector.load %arg10[%c21, %c0_168, %c0_169] : memref<24x8x256xf32, #tpu.memory_space<vmem>>, vector<1x8x256xf32>
    %313 = vector.shape_cast %312 : vector<1x8x256xf32> to vector<8x256xf32>
    %314 = vector.shape_cast %311 : vector<8x256xf32> to vector<1x8x256xf32>
    tpu.vector_store %arg10[%c21, %c0_168, %c0_169], %314 {strides = array<i32>} : memref<24x8x256xf32, #tpu.memory_space<vmem>>, vector<1x8x256xf32>,
    %c0_170 = arith.constant 0 : index
    %c0_171 = arith.constant 0 : index
    %c0_172 = arith.constant 0 : index
    %315 = vector.load %arg10[%c0_170, %c0_171, %c0_172] : memref<24x8x256xf32, #tpu.memory_space<vmem>>, vector<20x8x256xf32>
    %316 = vector.shape_cast %315 : vector<20x8x256xf32> to vector<160x256xf32>
    %317 = arith.truncf %316 : vector<160x256xf32> to vector<160x256xbf16>
    %c1_173 = arith.constant 1 : index
    %c0_174 = arith.constant 0 : index
    %c0_175 = arith.constant 0 : index
    %318 = vector.load %arg10[%c1_173, %c0_174, %c0_175] : memref<24x8x256xf32, #tpu.memory_space<vmem>>, vector<20x8x256xf32>
    %319 = vector.shape_cast %318 : vector<20x8x256xf32> to vector<160x256xf32>
    %320 = arith.truncf %319 : vector<160x256xf32> to vector<160x256xbf16>
    %c2_176 = arith.constant 2 : index
    %c0_177 = arith.constant 0 : index
    %c0_178 = arith.constant 0 : index
    %321 = vector.load %arg10[%c2_176, %c0_177, %c0_178] : memref<24x8x256xf32, #tpu.memory_space<vmem>>, vector<20x8x256xf32>
    %322 = vector.shape_cast %321 : vector<20x8x256xf32> to vector<160x256xf32>
    %323 = arith.truncf %322 : vector<160x256xf32> to vector<160x256xbf16>
    %c3_179 = arith.constant 3 : index
    %c0_180 = arith.constant 0 : index
    %c0_181 = arith.constant 0 : index
    %324 = vector.load %arg10[%c3_179, %c0_180, %c0_181] : memref<24x8x256xf32, #tpu.memory_space<vmem>>, vector<20x8x256xf32>
    %325 = vector.shape_cast %324 : vector<20x8x256xf32> to vector<160x256xf32>
    %326 = arith.truncf %325 : vector<160x256xf32> to vector<160x256xbf16>
    %c4_182 = arith.constant 4 : index
    %c0_183 = arith.constant 0 : index
    %c0_184 = arith.constant 0 : index
    %327 = vector.load %arg10[%c4_182, %c0_183, %c0_184] : memref<24x8x256xf32, #tpu.memory_space<vmem>>, vector<20x8x256xf32>
    %328 = vector.shape_cast %327 : vector<20x8x256xf32> to vector<160x256xf32>
    %329 = arith.truncf %328 : vector<160x256xf32> to vector<160x256xbf16>
    %330 = tpu.concatenate %317, %320, %323, %326, %329 in 1 : vector<160x256xbf16>, vector<160x256xbf16>, vector<160x256xbf16>, vector<160x256xbf16>, vector<160x256xbf16> -> vector<160x1280xbf16>
    %c0_185 = arith.constant 0 : index
    %c0_186 = arith.constant 0 : index
    %331 = vector.load %arg5[%c0_185, %c0_186] : memref<1280x512xbf16, #tpu.memory_space<vmem>>, vector<1280x512xbf16>
    %cst_187 = arith.constant dense<0.000000e+00> : vector<160x512xf32>
    %332 = tpu.matmul %330, %331, %cst_187 {dimension_numbers = #tpu.dot_dimension_numbers<[1], [0], [0], [1], [0, 0, 1, 1], [], []>} : vector<160x1280xbf16>, vector<1280x512xbf16>, vector<160x512xf32> -> vector<160x512xf32>
    %333 = vector.shape_cast %332 : vector<160x512xf32> to vector<20x8x512xf32>
    %cst_188 = arith.constant dense<0.000000e+00> : vector<8x512xf32>
    %334 = vector.multi_reduction <add>, %333, %cst_188 [0] : vector<20x8x512xf32> to vector<8x512xf32>
    %335 = vector.shape_cast %334 : vector<8x512xf32> to vector<1x8x512xf32>
    %cst_189 = arith.constant 2.000000e+01 : f32
    %336 = vector.broadcast %cst_189 : f32 to vector<1x8x512xf32>
    %337 = arith.divf %335, %336 : vector<1x8x512xf32>
    %338 = vector.broadcast %337 : vector<1x8x512xf32> to vector<20x8x512xf32>
    %339 = arith.subf %333, %338 : vector<20x8x512xf32>
    %340 = arith.mulf %339, %339 : vector<20x8x512xf32>
    %cst_190 = arith.constant dense<0.000000e+00> : vector<8x512xf32>
    %341 = vector.multi_reduction <add>, %340, %cst_190 [0] : vector<20x8x512xf32> to vector<8x512xf32>
    %342 = vector.shape_cast %341 : vector<8x512xf32> to vector<1x8x512xf32>
    %cst_191 = arith.constant 2.000000e+01 : f32
    %343 = vector.broadcast %cst_191 : f32 to vector<1x8x512xf32>
    %344 = arith.divf %342, %343 : vector<1x8x512xf32>
    %345 = vector.broadcast %337 : vector<1x8x512xf32> to vector<20x8x512xf32>
    %346 = arith.subf %333, %345 : vector<20x8x512xf32>
    %cst_192 = arith.constant 9.99999974E-6 : f32
    %347 = vector.broadcast %cst_192 : f32 to vector<1x8x512xf32>
    %348 = arith.addf %344, %347 : vector<1x8x512xf32>
    %349 = math.rsqrt %348 : vector<1x8x512xf32>
    %350 = vector.broadcast %349 : vector<1x8x512xf32> to vector<20x8x512xf32>
    %351 = arith.mulf %346, %350 : vector<20x8x512xf32>
    %cst_193 = arith.constant 0.000000e+00 : f32
    %352 = vector.broadcast %cst_193 : f32 to vector<20x8x512xf32>
    %353 = arith.cmpf oge, %351, %352 : vector<20x8x512xf32>
    %cst_194 = arith.constant 1.000000e-01 : f32
    %354 = vector.broadcast %cst_194 : f32 to vector<20x8x512xf32>
    %355 = arith.mulf %354, %351 : vector<20x8x512xf32>
    %356 = arith.select %353, %351, %355 : vector<20x8x512xi1>, vector<20x8x512xf32>
    %357 = vector.shape_cast %356 : vector<20x8x512xf32> to vector<160x512xf32>
    %c0_195 = arith.constant 0 : index
    %c0_196 = arith.constant 0 : index
    %358 = vector.load %arg6[%c0_195, %c0_196] : memref<512x64xbf16, #tpu.memory_space<vmem>>, vector<512x64xbf16>
    %359 = arith.truncf %357 : vector<160x512xf32> to vector<160x512xbf16>
    %cst_197 = arith.constant dense<0.000000e+00> : vector<160x64xf32>
    %360 = tpu.matmul %359, %358, %cst_197 {dimension_numbers = #tpu.dot_dimension_numbers<[1], [0], [0], [1], [0, 0, 1, 1], [], []>} : vector<160x512xbf16>, vector<512x64xbf16>, vector<160x64xf32> -> vector<160x64xf32>
    %361 = math.tanh %360 : vector<160x64xf32>
    %c0_198 = arith.constant 0 : index
    %c0_199 = arith.constant 0 : index
    %c0_200 = arith.constant 0 : index
    %362 = vector.load %arg7[%c0_198, %c0_199, %c0_200] : memref<1x160x64xf32, #tpu.memory_space<vmem>>, vector<1x160x64xf32>
    %363 = vector.shape_cast %362 : vector<1x160x64xf32> to vector<160x64xf32>
    %364 = vector.shape_cast %361 : vector<160x64xf32> to vector<1x160x64xf32>
    tpu.vector_store %arg7[%c0_198, %c0_199, %c0_200], %364 {strides = array<i32>} : memref<1x160x64xf32, #tpu.memory_space<vmem>>, vector<1x160x64xf32>,
    return
  }
  func.func @transform_0(%arg0: i32) -> (i32, i32) {
    %c0_i32 = arith.constant 0 : i32
    %c0_i32_0 = arith.constant 0 : i32
    return %arg0, %c0_i32 : i32, i32
  }
  func.func @transform_1(%arg0: i32) -> (i32, i32) {
    %c0_i32 = arith.constant 0 : i32
    %c0_i32_0 = arith.constant 0 : i32
    %c0_i32_1 = arith.constant 0 : i32
    return %c0_i32, %c0_i32_0 : i32, i32
  }
  func.func @transform_2(%arg0: i32) -> (i32, i32) {
    %c0_i32 = arith.constant 0 : i32
    %c0_i32_0 = arith.constant 0 : i32
    %c0_i32_1 = arith.constant 0 : i32
    return %c0_i32, %c0_i32_0 : i32, i32
  }
  func.func @transform_3(%arg0: i32) -> (i32, i32) {
    %c0_i32 = arith.constant 0 : i32
    %c0_i32_0 = arith.constant 0 : i32
    %c0_i32_1 = arith.constant 0 : i32
    return %c0_i32, %c0_i32_0 : i32, i32
  }
  func.func @transform_4(%arg0: i32) -> (i32, i32) {
    %c0_i32 = arith.constant 0 : i32
    %c0_i32_0 = arith.constant 0 : i32
    %c0_i32_1 = arith.constant 0 : i32
    return %c0_i32, %c0_i32_0 : i32, i32
  }
  func.func @transform_5(%arg0: i32) -> (i32, i32) {
    %c0_i32 = arith.constant 0 : i32
    %c0_i32_0 = arith.constant 0 : i32
    %c0_i32_1 = arith.constant 0 : i32
    return %c0_i32, %c0_i32_0 : i32, i32
  }
  func.func @transform_6(%arg0: i32) -> (i32, i32, i32) {
    %c0_i32 = arith.constant 0 : i32
    %c0_i32_0 = arith.constant 0 : i32
    %c0_i32_1 = arith.constant 0 : i32
    return %arg0, %c0_i32, %c0_i32_0 : i32, i32, i32
  }
}

</mosaic_0001>

<llo_original>
// kernel: g_forward.1
$region0: #{g_forward.1}
  #allocation0 [shape = 'u32[]', space=smem, size = 0x4, offset = 0x4, fixed_abs, tag = 'smem constant byte address 0x4 - core index']
  #allocation1 [shape = 'u32[144,128]{1,0:T(1,128)}', space=vmem, size = 0x12000, scoped, tag = 'internal scratch']
  #allocation2 [shape = 'f32[7,8,64]{2,1,0:T(8,128)}', space=vmem, size = 0x7000, scoped, tag = 'scratch operand']
  #allocation3 [shape = 'f32[12,8,128]{2,1,0:T(8,128)}', space=vmem, size = 0xc000, scoped, tag = 'scratch operand']
  #allocation4 [shape = 'f32[24,8,256]{2,1,0:T(8,128)}', space=vmem, size = 0x30000, scoped, tag = 'scratch operand']
  %s0 = inlined_call_operand.hbm [shape: f32[16,64], index: 0, kind: input, shape index: {}]
  %s1 = inlined_call_operand.vmem [shape: bf16[320,64], index: 1, kind: input, shape index: {}]
  %s2 = inlined_call_operand.hbm [shape: bf16[256,128], index: 2, kind: input, shape index: {}]
  %s3 = inlined_call_operand.hbm [shape: bf16[512,256], index: 3, kind: input, shape index: {}]
  %s4 = inlined_call_operand.hbm [shape: bf16[1280,512], index: 4, kind: input, shape index: {}]
  %s5 = inlined_call_operand.vmem [shape: bf16[512,64], index: 5, kind: input, shape index: {}]
  %s6 = inlined_call_operand.vmem [shape: f32[2,160,64], index: 6, kind: output, shape index: {}]
  %s7 = sld [smem:[#allocation0]]
  $region73: #{g_forward.1} parent=0
    _
  %s9 = ssub.s32 1, %s7
  %s10 = scalar_select 0, %s9, %s7
  $region1: #{g_forward.1} parent=0
    #allocation5 [shape = 'u8[8192]{0}', space=vmem, size = 0x2000, scoped, tag = 'input window, operand 0']
    #allocation6 [shape = 's32[2]{0}', space=sflag, size = 0x8, scoped, tag = 'scoped memory for g_forward.1']
    #allocation7 [shape = 'u8[65536]{0}', space=vmem, size = 0x10000, scoped, tag = 'input window, operand 2, single buffered']
    #allocation8 [shape = 's32[1]{0}', space=sflag, size = 0x4, scoped, tag = 'scoped memory for g_forward.1']
    #allocation9 [shape = 'u8[262144]{0}', space=vmem, size = 0x40000, scoped, tag = 'input window, operand 3, single buffered']
    #allocation10 [shape = 'u8[1310720]{0}', space=vmem, size = 0x140000, scoped, tag = 'input window, operand 4, single buffered']
    #allocation11 [shape = 's32[1]{0}', space=sflag, size = 0x4, scoped, tag = 'scoped memory for g_forward.1']
    %11 = vsyncpa [#allocation6], 0
    %s12 = scalar_lea.sflag [#allocation6], 1
    %13 = vsyncpa %s12, 0
    %14 = vsyncpa [#allocation8], 0
    %15 = vsyncpa [#allocation11], 0
    loop: start=0, step=1, limit=4
    $region2: #{g_forward.1} parent=1 // loop_pre_header
      _
    $region3: #{g_forward.1} parent=1 // loop_header
      %s17 = sphi 0, %s21
      %p18 = scmp.ge.s32.totalorder %s17, 4
      %s27 = sphi 0, %s29
      %s30 = sphi 0, %s27
      %s31 = sphi 0, %s30
      %s47 = sphi 0, %s31
      %s51 = sphi 0, %s51
      %s53 = sphi 0, %s51
      %s54 = sphi 0, %s53
      %s68 = sphi 0, %s54
      %s72 = sphi 0, %s72
      %s74 = sphi 0, %s72
      %s75 = sphi 0, %s74
      %s89 = sphi 0, %s75
      %s93 = sphi 0, %s93
      %s95 = sphi 0, %s93
      %s96 = sphi 0, %s95
      %s110 = sphi 0, %s96
      %s114 = sphi 0, %s114
      %s116 = sphi 0, %s114
      %s117 = sphi 0, %s116
      %s131 = sphi 0, %s117
      %s135 = sphi 0, %s135
      %s137 = sphi 0, %s135
      %s138 = sphi 0, %s137
      %s152 = sphi 0, %s138
      %s158 = sphi 0, %s160
      %s161 = sphi 0, %s158
      %s162 = sphi 0, %s161
      %s178 = sphi 0, %s162
    $region4: #{g_forward.1} parent=1 // loop_header_branch
      %20 = sbr.rel (%p18) target = $region8
    $region5: #{g_forward.1} parent=1 // loop_body
      %s22 = ssub.s32 %s17, 1
      %s23 = ssub.s32 %s17, 2
      %s24 = sadd.s32 %s17, 1
      %s25 = ssub.s32 %s17, %s24
      %p26 = scmp.eq.s32.totalorder %s25, 0
      %s28 = sadd.s32 %s27, 1
      %s29 = scalar_select %p26, %s27, %s28
      %p32 = pneg %p26
      %p33 = scmp.eq.s32.totalorder %s17, 1
      %p34 = por %p32, %p33
      %p35 = scmp.ne.s32.totalorder %s27, %s30
      %p36 = scmp.eq.s32.totalorder %s17, 0
      %p37 = por %p35, %p36
      %p38 = scmp.ne.s32.totalorder %s27, %s30
      %p39 = scmp.eq.s32.totalorder %s22, 1
      %p40 = por %p38, %p39
      %p41 = scmp.ne.s32.totalorder %s30, %s31
      %p42 = scmp.eq.s32.totalorder %s22, 0
      %p43 = por %p41, %p42
      %p44 = scmp.ne.s32.totalorder %s30, %s31
      %p45 = scmp.eq.s32.totalorder %s23, 1
      %p46 = por %p44, %p45
      %p48 = scmp.ne.s32.totalorder %s31, %s47
      %p49 = scmp.eq.s32.totalorder %s23, 0
      %p50 = por %p48, %p49
      %s52 = sadd.s32 %s51, 1
      %p55 = scmp.eq.s32.totalorder %s17, 1
      %p56 = scmp.ne.s32.totalorder %s51, %s53
      %p57 = scmp.eq.s32.totalorder %s17, 0
      %p58 = por %p56, %p57
      %p59 = scmp.ne.s32.totalorder %s51, %s53
      %p60 = scmp.eq.s32.totalorder %s22, 1
      %p61 = por %p59, %p60
      %p62 = scmp.ne.s32.totalorder %s53, %s54
      %p63 = scmp.eq.s32.totalorder %s22, 0
      %p64 = por %p62, %p63
      %p65 = scmp.ne.s32.totalorder %s53, %s54
      %p66 = scmp.eq.s32.totalorder %s23, 1
      %p67 = por %p65, %p66
      %p69 = scmp.ne.s32.totalorder %s54, %s68
      %p70 = scmp.eq.s32.totalorder %s23, 0
      %p71 = por %p69, %p70
      %s73 = sadd.s32 %s72, 1
      %p76 = scmp.eq.s32.totalorder %s17, 1
      %p77 = scmp.ne.s32.totalorder %s72, %s74
      %p78 = scmp.eq.s32.totalorder %s17, 0
      %p79 = por %p77, %p78
      %p80 = scmp.ne.s32.totalorder %s72, %s74
      %p81 = scmp.eq.s32.totalorder %s22, 1
      %p82 = por %p80, %p81
      %p83 = scmp.ne.s32.totalorder %s74, %s75
      %p84 = scmp.eq.s32.totalorder %s22, 0
      %p85 = por %p83, %p84
      %p86 = scmp.ne.s32.totalorder %s74, %s75
      %p87 = scmp.eq.s32.totalorder %s23, 1
      %p88 = por %p86, %p87
      %p90 = scmp.ne.s32.totalorder %s75, %s89
      %p91 = scmp.eq.s32.totalorder %s23, 0
      %p92 = por %p90, %p91
      %s94 = sadd.s32 %s93, 1
      %p97 = scmp.eq.s32.totalorder %s17, 1
      %p98 = scmp.ne.s32.totalorder %s93, %s95
      %p99 = scmp.eq.s32.totalorder %s17, 0
      %p100 = por %p98, %p99
      %p101 = scmp.ne.s32.totalorder %s93, %s95
      %p102 = scmp.eq.s32.totalorder %s22, 1
      %p103 = por %p101, %p102
      %p104 = scmp.ne.s32.totalorder %s95, %s96
      %p105 = scmp.eq.s32.totalorder %s22, 0
      %p106 = por %p104, %p105
      %p107 = scmp.ne.s32.totalorder %s95, %s96
      %p108 = scmp.eq.s32.totalorder %s23, 1
      %p109 = por %p107, %p108
      %p111 = scmp.ne.s32.totalorder %s96, %s110
      %p112 = scmp.eq.s32.totalorder %s23, 0
      %p113 = por %p111, %p112
      %s115 = sadd.s32 %s114, 1
      %p118 = scmp.eq.s32.totalorder %s17, 1
      %p119 = scmp.ne.s32.totalorder %s114, %s116
      %p120 = scmp.eq.s32.totalorder %s17, 0
      %p121 = por %p119, %p120
      %p122 = scmp.ne.s32.totalorder %s114, %s116
      %p123 = scmp.eq.s32.totalorder %s22, 1
      %p124 = por %p122, %p123
      %p125 = scmp.ne.s32.totalorder %s116, %s117
      %p126 = scmp.eq.s32.totalorder %s22, 0
      %p127 = por %p125, %p126
      %p128 = scmp.ne.s32.totalorder %s116, %s117
      %p129 = scmp.eq.s32.totalorder %s23, 1
      %p130 = por %p128, %p129
      %p132 = scmp.ne.s32.totalorder %s117, %s131
      %p133 = scmp.eq.s32.totalorder %s23, 0
      %p134 = por %p132, %p133
      %s136 = sadd.s32 %s135, 1
      %p139 = scmp.eq.s32.totalorder %s17, 1
      %p140 = scmp.ne.s32.totalorder %s135, %s137
      %p141 = scmp.eq.s32.totalorder %s17, 0
      %p142 = por %p140, %p141
      %p143 = scmp.ne.s32.totalorder %s135, %s137
      %p144 = scmp.eq.s32.totalorder %s22, 1
      %p145 = por %p143, %p144
      %p146 = scmp.ne.s32.totalorder %s137, %s138
      %p147 = scmp.eq.s32.totalorder %s22, 0
      %p148 = por %p146, %p147
      %p149 = scmp.ne.s32.totalorder %s137, %s138
      %p150 = scmp.eq.s32.totalorder %s23, 1
      %p151 = por %p149, %p150
      %p153 = scmp.ne.s32.totalorder %s138, %s152
      %p154 = scmp.eq.s32.totalorder %s23, 0
      %p155 = por %p153, %p154
      %s156 = ssub.s32 %s17, %s24
      %p157 = scmp.eq.s32.totalorder %s156, 0
      %s159 = sadd.s32 %s158, 1
      %s160 = scalar_select %p157, %s158, %s159
      %p163 = pneg %p157
      %p164 = scmp.eq.s32.totalorder %s17, 1
      %p165 = por %p163, %p164
      %p166 = scmp.ne.s32.totalorder %s158, %s161
      %p167 = scmp.eq.s32.totalorder %s17, 0
      %p168 = por %p166, %p167
      %p169 = scmp.ne.s32.totalorder %s158, %s161
      %p170 = scmp.eq.s32.totalorder %s22, 1
      %p171 = por %p169, %p170
      %p172 = scmp.ne.s32.totalorder %s161, %s162
      %p173 = scmp.eq.s32.totalorder %s22, 0
      %p174 = por %p172, %p173
      %p175 = scmp.ne.s32.totalorder %s161, %s162
      %p176 = scmp.eq.s32.totalorder %s23, 1
      %p177 = por %p175, %p176
      %p179 = scmp.ne.s32.totalorder %s162, %s178
      %p180 = scmp.eq.s32.totalorder %s23, 0
      %p181 = por %p179, %p180
      %p182 = scmp.le.s32.totalorder 1, %s17
      %p183 = scmp.lt.s32.totalorder %s17, 3
      %p184 = pnand %p182, %p183
      %p185 = pneg %p184
      // Predicated region
      $region9: #{g_forward.1} parent=5 // pred_check
        _
      $region10: #{g_forward.1} parent=5 // pred_check_branch
        %187 = sbr.rel (%p184) target = $region12
      $region11: #{g_forward.1} parent=5 // pred_region
        %s188 = ssub.s32 %s17, 1
        // Predicated region
        $region13: #{g_forward.1} parent=11 // pred_check
          %p189 = pneg %p64
        $region14: #{g_forward.1} parent=11 // pred_check_branch
          %191 = sbr.rel (%p189) target = $region16
        $region15: #{g_forward.1} parent=11 // pred_region
          _
        $region16: #{g_forward.1} parent=11 // pred_fallthru
          _
        // Predicated region
        $region17: #{g_forward.1} parent=11 // pred_check
          %p192 = pneg %p85
        $region18: #{g_forward.1} parent=11 // pred_check_branch
          %194 = sbr.rel (%p192) target = $region20
        $region19: #{g_forward.1} parent=11 // pred_region
          %s196 = ssub.s32 2048, 2048
          %197 = vsyncadd [#allocation8], %s196
          %s198 = sshll.u32 [#allocation7], 4
          %s199 = int_to_ptr.vmem [resolvable:$true] %s198
          %204 = dma.hbm_to_vmem [thread:$0]  %s2, 2048, %s199, [#allocation8], 64, 64, 4
        $region20: #{g_forward.1} parent=11 // pred_fallthru
          _
        // Predicated region
        $region21: #{g_forward.1} parent=11 // pred_check
          %p205 = pneg %p106
        $region22: #{g_forward.1} parent=11 // pred_check_branch
          %207 = sbr.rel (%p205) target = $region24
        $region23: #{g_forward.1} parent=11 // pred_region
          %s209 = ssub.s32 8192, 8192
          %210 = vsyncadd [#allocation8], %s209
          %s211 = sshll.u32 [#allocation9], 4
          %s212 = int_to_ptr.vmem [resolvable:$true] %s211
          %217 = dma.hbm_to_vmem [thread:$0]  %s3, 8192, %s212, [#allocation8], 128, 128, 8
        $region24: #{g_forward.1} parent=11 // pred_fallthru
          _
        // Predicated region
        $region25: #{g_forward.1} parent=11 // pred_check
          %p218 = pneg %p127
        $region26: #{g_forward.1} parent=11 // pred_check_branch
          %220 = sbr.rel (%p218) target = $region28
        $region27: #{g_forward.1} parent=11 // pred_region
          %s222 = ssub.s32 40960, 40960
          %223 = vsyncadd [#allocation11], %s222
          %s224 = sshll.u32 [#allocation10], 4
          %s225 = int_to_ptr.vmem [resolvable:$true] %s224
          %230 = dma.hbm_to_vmem [thread:$0]  %s4, 40960, %s225, [#allocation11], 256, 256, 16
        $region28: #{g_forward.1} parent=11 // pred_fallthru
          _
        // Predicated region
        $region29: #{g_forward.1} parent=11 // pred_check
          %p231 = pneg %p148
        $region30: #{g_forward.1} parent=11 // pred_check_branch
          %233 = sbr.rel (%p231) target = $region32
        $region31: #{g_forward.1} parent=11 // pred_region
          _
        $region32: #{g_forward.1} parent=11 // pred_fallthru
          _
      $region12: #{g_forward.1} parent=5 // pred_fallthru
        _
      %p234 = scmp.lt.s32.totalorder %s17, 2
      // Predicated region
      $region33: #{g_forward.1} parent=5 // pred_check
        %p235 = pneg %p234
      $region34: #{g_forward.1} parent=5 // pred_check_branch
        %237 = sbr.rel (%p235) target = $region36
      $region35: #{g_forward.1} parent=5 // pred_region
        // Predicated region
        $region37: #{g_forward.1} parent=35 // pred_check
          %p238 = pneg %p37
        $region38: #{g_forward.1} parent=35 // pred_check_branch
          %240 = sbr.rel (%p238) target = $region40
        $region39: #{g_forward.1} parent=35 // pred_region
          %s241 = sand.u32 %s27, 1
          %s242 = scalar_lea.sflag [#allocation6], %s241
          %s243 = sand.u32 %s27, 1
          %s244 = smul.addr %s243, 8
          %s245 = scalar_lea.vmem [#allocation5], %s244
          %s247 = ssub.s32 128, 128
          %248 = vsyncadd %s242, %s247
          %s249 = smul.addr %s17, 128
          %s250 = scalar_lea.hbm %s0, %s249
          %s252 = sshll.u32 %s245, 4
          %s253 = int_to_ptr.vmem [resolvable:$true] %s252
          %255 = dma.hbm_to_vmem [thread:$0]  %s250, 128, %s253, %s242
        $region40: #{g_forward.1} parent=35 // pred_fallthru
          _
      $region36: #{g_forward.1} parent=5 // pred_fallthru
        _
      %p256 = scmp.le.s32.totalorder 1, %s17
      %p257 = scmp.lt.s32.totalorder %s17, 3
      %p258 = pnand %p256, %p257
      %p259 = pneg %p258
      // Predicated region
      $region41: #{g_forward.1} parent=5 // pred_check
        _
      $region42: #{g_forward.1} parent=5 // pred_check_branch
        %261 = sbr.rel (%p258) target = $region44
      $region43: #{g_forward.1} parent=5 // pred_region
        %s262 = ssub.s32 %s17, 1
        %s263 = sand.u32 %s30, 1
        %s264 = scalar_lea.sflag [#allocation6], %s263
        %s265 = sand.u32 %s30, 1
        %s266 = smul.addr %s265, 8
        %s267 = scalar_lea.vmem [#allocation5], %s266
        // Predicated region
        $region45: #{g_forward.1} parent=43 // pred_check
          %p268 = pneg %p43
        $region46: #{g_forward.1} parent=43 // pred_check_branch
          %270 = sbr.rel (%p268) target = $region48
        $region47: #{g_forward.1} parent=43 // pred_region
          %271 = dma.done %s264, 128
        $region48: #{g_forward.1} parent=43 // pred_fallthru
          _
        // Predicated region
        $region49: #{g_forward.1} parent=43 // pred_check
          %p272 = pneg %p85
        $region50: #{g_forward.1} parent=43 // pred_check_branch
          %274 = sbr.rel (%p272) target = $region52
        $region51: #{g_forward.1} parent=43 // pred_region
          %275 = dma.done [#allocation8], 2048
        $region52: #{g_forward.1} parent=43 // pred_fallthru
          _
        // Predicated region
        $region53: #{g_forward.1} parent=43 // pred_check
          %p276 = pneg %p106
        $region54: #{g_forward.1} parent=43 // pred_check_branch
          %278 = sbr.rel (%p276) target = $region56
        $region55: #{g_forward.1} parent=43 // pred_region
          %279 = dma.done [#allocation8], 8192
        $region56: #{g_forward.1} parent=43 // pred_fallthru
          _
        // Predicated region
        $region57: #{g_forward.1} parent=43 // pred_check
          %p280 = pneg %p127
        $region58: #{g_forward.1} parent=43 // pred_check_branch
          %282 = sbr.rel (%p280) target = $region60
        $region59: #{g_forward.1} parent=43 // pred_region
          %283 = dma.done [#allocation11], 40960
        $region60: #{g_forward.1} parent=43 // pred_fallthru
          _
        %s284 = sand.u32 %s30, 1
        %s285 = scalar_lea.sflag [#allocation6], %s284
        %s286 = sand.u32 %s30, 1
        %s287 = smul.addr %s286, 8
        %s288 = scalar_lea.vmem [#allocation5], %s287
        %p289 = pneg %p43
        %p290 = pneg %p40
        %p291 = pneg %p64
        %p292 = pneg %p61
        %p293 = pneg %p85
        %p294 = pneg %p82
        %p295 = pneg %p106
        %p296 = pneg %p103
        %p297 = pneg %p127
        %p298 = pneg %p124
        %p299 = pneg %p148
        %p300 = pneg %p145
        %p301 = pneg %p174
        %p302 = pneg %p171
        %p303 = scmp.lt.s32.totalorder %s22, 1
        %s304 = scalar_select %p303, %s22, 1
        %s305 = smul.addr %s304, 20
        %s306 = smul.addr %s305, 8
        %s307 = scalar_lea.vmem %s6, %s306
        %p308 = scmp.lt.s32.totalorder %s22, 1
        %s309 = scalar_select %p308, %s22, 1
        %s310 = smul.addr %s309, 20
        %s311 = smul.addr %s310, 8
        %s312 = scalar_lea.vmem %s6, %s311
        %vm314 = vcmask 523264
        %315 = vst.msk [vmem:[#allocation2] sm:$0xff] %vm314, 0.0
        %s316 = scalar_lea.vmem [#allocation2], 48
        %317 = vst.msk [vmem:[%s316] sm:$0xff] %vm314, 0.0
        %318 = vst [vmem:[#allocation3] sm:$0xff] 0.0
        %s319 = scalar_lea.vmem [#allocation3], 88
        %320 = vst [vmem:[%s319] sm:$0xff] 0.0
        %321 = vst [vmem:[#allocation4] sm:$0xff] 0.0
        %322 = vst [vmem:[#allocation4 + $0x8] sm:$0xff] 0.0
        %323 = vst [vmem:[#allocation4 + $0x10] sm:$0xff] 0.0
        %324 = vst [vmem:[#allocation4 + $0x18] sm:$0xff] 0.0
        %s325 = scalar_lea.vmem [#allocation4], 352
        %326 = vst [vmem:[%s325] sm:$0xff] 0.0
        %327 = vst [vmem:[%s325 + $0x8] sm:$0xff] 0.0
        %328 = vst [vmem:[%s325 + $0x10] sm:$0xff] 0.0
        %329 = vst [vmem:[%s325 + $0x18] sm:$0xff] 0.0
        %v330 = vld [vmem:[%s267] sm:$0xff]
        %v331 = vld [vmem:[%s1] sm:$0xf]
        %v332 = vld [vmem:[%s1 + $0x4] sm:$0xf]
        %v333 = vld [vmem:[%s1 + $0x8] sm:$0xf]
        %v334 = vld [vmem:[%s1 + $0xc] sm:$0xf]
        %v335 = vld [vmem:[%s1 + $0x10] sm:$0xf]
        %v336 = vld [vmem:[%s1 + $0x14] sm:$0xf]
        %v337 = vld [vmem:[%s1 + $0x18] sm:$0xf]
        %v338 = vld [vmem:[%s1 + $0x1c] sm:$0xf]
        %v339 = vpack.c.bf16 %v330, %v330
        %v348 = vunpack.c.l.b16 %v331
        %v349 = vunpack.c.l.b16 %v332
        %v350 = vunpack.c.l.b16 %v333
        %v351 = vunpack.c.l.b16 %v334
        %v352 = vunpack.c.l.b16 %v335
        %v353 = vunpack.c.l.b16 %v336
        %v354 = vunpack.c.l.b16 %v337
        %v355 = vunpack.c.l.b16 %v338
        %v356 = vpack.c.b16 %v349, %v348
        %v357 = vpack.c.b16 %v351, %v350
        %v358 = vpack.c.b16 %v353, %v352
        %v359 = vpack.c.b16 %v355, %v354
        %v365 = vsel %vm314, %v339, 0
        %367 = vmatprep.subr.bf16.mxu0 0
        %368 = vmatpush1.bf16.msra.mxu0 %v356
        %369 = vmatprep.subr.bf16.mxu0 0
        %370 = vmatpush1.bf16.msra.mxu0 %v357
        %371 = vmatprep.subr.bf16.mxu0 0
        %372 = vmatpush1.bf16.msra.mxu0 %v358
        %373 = vmatprep.subr.bf16.mxu0 0
        %374 = vmatpush1.bf16.msra.mxu0 %v359
        %375 = vmatprep.subr.bf16.mxu0 0
        %376 = vmatpush1.bf16.msra.mxu0 0
        %377 = vmatprep.subr.bf16.mxu0 0
        %378 = vmatpush1.bf16.msra.mxu0 0
        %379 = vmatprep.subr.bf16.mxu0 0
        %380 = vmatpush1.bf16.msra.mxu0 0
        %381 = vmatprep.subr.bf16.mxu0 0
        %382 = vmatpush1.bf16.msra.mxu0 0
        %383 = vmatprep.subr.bf16.mxu0 0
        %384 = vmatpush1.bf16.msra.mxu0 0
        %385 = vmatprep.subr.bf16.mxu0 0
        %386 = vmatpush1.bf16.msra.mxu0 0
        %387 = vmatprep.subr.bf16.mxu0 0
        %388 = vmatpush1.bf16.msra.mxu0 0
        %389 = vmatprep.subr.bf16.mxu0 0
        %390 = vmatpush1.bf16.msra.mxu0 0
        %391 = vmatprep.subr.bf16.mxu0 0
        %392 = vmatpush1.bf16.msra.mxu0 0
        %393 = vmatprep.subr.bf16.mxu0 0
        %394 = vmatpush1.bf16.msra.mxu0 0
        %395 = vmatprep.subr.bf16.mxu0 0
        %396 = vmatpush1.bf16.msra.mxu0 0
        %397 = vmatprep.subr.bf16.mxu0 0
        %398 = vmatpush1.bf16.msra.mxu0 0
        %399 = vmatprep.mubr.bf16.mxu0 0
        %400 = vmatmul.mubr.bf16.gmra.mrb[0].mxu0 %v365
        %v401 = vpop.f32.mrb[0].mxu0
        %v402 = vadd.f32 0.0, %v401
        %v403 = vpop.f32.mrb[0].mxu0
        %v404 = vpop.f32.mrb[0].mxu0
        %v405 = vpop.f32.mrb[0].mxu0
        %406 = vdwg.mxu0
        %s407 = scalar_lea.vmem [#allocation2], 8
        %408 = vst.msk [vmem:[%s407] sm:$0xff] %vm314, %v402
        %v409 = vld [vmem:[%s1 + $0x20] sm:$0xf]
        %v410 = vld [vmem:[%s1 + $0x24] sm:$0xf]
        %v411 = vld [vmem:[%s1 + $0x28] sm:$0xf]
        %v412 = vld [vmem:[%s1 + $0x2c] sm:$0xf]
        %v413 = vld [vmem:[%s1 + $0x30] sm:$0xf]
        %v414 = vld [vmem:[%s1 + $0x34] sm:$0xf]
        %v415 = vld [vmem:[%s1 + $0x38] sm:$0xf]
        %v416 = vld [vmem:[%s1 + $0x3c] sm:$0xf]
        %v425 = vunpack.c.l.b16 %v409
        %v426 = vunpack.c.l.b16 %v410
        %v427 = vunpack.c.l.b16 %v411
        %v428 = vunpack.c.l.b16 %v412
        %v429 = vunpack.c.l.b16 %v413
        %v430 = vunpack.c.l.b16 %v414
        %v431 = vunpack.c.l.b16 %v415
        %v432 = vunpack.c.l.b16 %v416
        %v433 = vpack.c.b16 %v426, %v425
        %v434 = vpack.c.b16 %v428, %v427
        %v435 = vpack.c.b16 %v430, %v429
        %v436 = vpack.c.b16 %v432, %v431
        %441 = vmatprep.subr.bf16.mxu0 0
        %442 = vmatpush1.bf16.msra.mxu0 %v433
        %443 = vmatprep.subr.bf16.mxu0 0
        %444 = vmatpush1.bf16.msra.mxu0 %v434
        %445 = vmatprep.subr.bf16.mxu0 0
        %446 = vmatpush1.bf16.msra.mxu0 %v435
        %447 = vmatprep.subr.bf16.mxu0 0
        %448 = vmatpush1.bf16.msra.mxu0 %v436
        %449 = vmatprep.subr.bf16.mxu0 0
        %450 = vmatpush1.bf16.msra.mxu0 0
        %451 = vmatprep.subr.bf16.mxu0 0
        %452 = vmatpush1.bf16.msra.mxu0 0
        %453 = vmatprep.subr.bf16.mxu0 0
        %454 = vmatpush1.bf16.msra.mxu0 0
        %455 = vmatprep.subr.bf16.mxu0 0
        %456 = vmatpush1.bf16.msra.mxu0 0
        %457 = vmatprep.subr.bf16.mxu0 0
        %458 = vmatpush1.bf16.msra.mxu0 0
        %459 = vmatprep.subr.bf16.mxu0 0
        %460 = vmatpush1.bf16.msra.mxu0 0
        %461 = vmatprep.subr.bf16.mxu0 0
        %462 = vmatpush1.bf16.msra.mxu0 0
        %463 = vmatprep.subr.bf16.mxu0 0
        %464 = vmatpush1.bf16.msra.mxu0 0
        %465 = vmatprep.subr.bf16.mxu0 0
        %466 = vmatpush1.bf16.msra.mxu0 0
        %467 = vmatprep.subr.bf16.mxu0 0
        %468 = vmatpush1.bf16.msra.mxu0 0
        %469 = vmatprep.subr.bf16.mxu0 0
        %470 = vmatpush1.bf16.msra.mxu0 0
        %471 = vmatprep.subr.bf16.mxu0 0
        %472 = vmatpush1.bf16.msra.mxu0 0
        %473 = vmatprep.mubr.bf16.mxu0 0
        %474 = vmatmul.mubr.bf16.gmra.mrb[0].mxu0 %v365
        %v475 = vpop.f32.mrb[0].mxu0
        %v476 = vadd.f32 0.0, %v475
        %v477 = vpop.f32.mrb[0].mxu0
        %v478 = vpop.f32.mrb[0].mxu0
        %v479 = vpop.f32.mrb[0].mxu0
        %480 = vdwg.mxu0
        %s481 = scalar_lea.vmem [#allocation2], 16
        %482 = vst.msk [vmem:[%s481] sm:$0xff] %vm314, %v476
        %v483 = vld [vmem:[%s1 + $0x40] sm:$0xf]
        %v484 = vld [vmem:[%s1 + $0x44] sm:$0xf]
        %v485 = vld [vmem:[%s1 + $0x48] sm:$0xf]
        %v486 = vld [vmem:[%s1 + $0x4c] sm:$0xf]
        %v487 = vld [vmem:[%s1 + $0x50] sm:$0xf]
        %v488 = vld [vmem:[%s1 + $0x54] sm:$0xf]
        %v489 = vld [vmem:[%s1 + $0x58] sm:$0xf]
        %v490 = vld [vmem:[%s1 + $0x5c] sm:$0xf]
        %v499 = vunpack.c.l.b16 %v483
        %v500 = vunpack.c.l.b16 %v484
        %v501 = vunpack.c.l.b16 %v485
        %v502 = vunpack.c.l.b16 %v486
        %v503 = vunpack.c.l.b16 %v487
        %v504 = vunpack.c.l.b16 %v488
        %v505 = vunpack.c.l.b16 %v489
        %v506 = vunpack.c.l.b16 %v490
        %v507 = vpack.c.b16 %v500, %v499
        %v508 = vpack.c.b16 %v502, %v501
        %v509 = vpack.c.b16 %v504, %v503
        %v510 = vpack.c.b16 %v506, %v505
        %515 = vmatprep.subr.bf16.mxu0 0
        %516 = vmatpush1.bf16.msra.mxu0 %v507
        %517 = vmatprep.subr.bf16.mxu0 0
        %518 = vmatpush1.bf16.msra.mxu0 %v508
        %519 = vmatprep.subr.bf16.mxu0 0
        %520 = vmatpush1.bf16.msra.mxu0 %v509
        %521 = vmatprep.subr.bf16.mxu0 0
        %522 = vmatpush1.bf16.msra.mxu0 %v510
        %523 = vmatprep.subr.bf16.mxu0 0
        %524 = vmatpush1.bf16.msra.mxu0 0
        %525 = vmatprep.subr.bf16.mxu0 0
        %526 = vmatpush1.bf16.msra.mxu0 0
        %527 = vmatprep.subr.bf16.mxu0 0
        %528 = vmatpush1.bf16.msra.mxu0 0
        %529 = vmatprep.subr.bf16.mxu0 0
        %530 = vmatpush1.bf16.msra.mxu0 0
        %531 = vmatprep.subr.bf16.mxu0 0
        %532 = vmatpush1.bf16.msra.mxu0 0
        %533 = vmatprep.subr.bf16.mxu0 0
        %534 = vmatpush1.bf16.msra.mxu0 0
        %535 = vmatprep.subr.bf16.mxu0 0
        %536 = vmatpush1.bf16.msra.mxu0 0
        %537 = vmatprep.subr.bf16.mxu0 0
        %538 = vmatpush1.bf16.msra.mxu0 0
        %539 = vmatprep.subr.bf16.mxu0 0
        %540 = vmatpush1.bf16.msra.mxu0 0
        %541 = vmatprep.subr.bf16.mxu0 0
        %542 = vmatpush1.bf16.msra.mxu0 0
        %543 = vmatprep.subr.bf16.mxu0 0
        %544 = vmatpush1.bf16.msra.mxu0 0
        %545 = vmatprep.subr.bf16.mxu0 0
        %546 = vmatpush1.bf16.msra.mxu0 0
        %547 = vmatprep.mubr.bf16.mxu0 0
        %548 = vmatmul.mubr.bf16.gmra.mrb[0].mxu0 %v365
        %v549 = vpop.f32.mrb[0].mxu0
        %v550 = vadd.f32 0.0, %v549
        %v551 = vpop.f32.mrb[0].mxu0
        %v552 = vpop.f32.mrb[0].mxu0
        %v553 = vpop.f32.mrb[0].mxu0
        %554 = vdwg.mxu0
        %s555 = scalar_lea.vmem [#allocation2], 24
        %556 = vst.msk [vmem:[%s555] sm:$0xff] %vm314, %v550
        %v557 = vld [vmem:[%s1 + $0x60] sm:$0xf]
        %v558 = vld [vmem:[%s1 + $0x64] sm:$0xf]
        %v559 = vld [vmem:[%s1 + $0x68] sm:$0xf]
        %v560 = vld [vmem:[%s1 + $0x6c] sm:$0xf]
        %v561 = vld [vmem:[%s1 + $0x70] sm:$0xf]
        %v562 = vld [vmem:[%s1 + $0x74] sm:$0xf]
        %v563 = vld [vmem:[%s1 + $0x78] sm:$0xf]
        %v564 = vld [vmem:[%s1 + $0x7c] sm:$0xf]
        %v573 = vunpack.c.l.b16 %v557
        %v574 = vunpack.c.l.b16 %v558
        %v575 = vunpack.c.l.b16 %v559
        %v576 = vunpack.c.l.b16 %v560
        %v577 = vunpack.c.l.b16 %v561
        %v578 = vunpack.c.l.b16 %v562
        %v579 = vunpack.c.l.b16 %v563
        %v580 = vunpack.c.l.b16 %v564
        %v581 = vpack.c.b16 %v574, %v573
        %v582 = vpack.c.b16 %v576, %v575
        %v583 = vpack.c.b16 %v578, %v577
        %v584 = vpack.c.b16 %v580, %v579
        %589 = vmatprep.subr.bf16.mxu0 0
        %590 = vmatpush1.bf16.msra.mxu0 %v581
        %591 = vmatprep.subr.bf16.mxu0 0
        %592 = vmatpush1.bf16.msra.mxu0 %v582
        %593 = vmatprep.subr.bf16.mxu0 0
        %594 = vmatpush1.bf16.msra.mxu0 %v583
        %595 = vmatprep.subr.bf16.mxu0 0
        %596 = vmatpush1.bf16.msra.mxu0 %v584
        %597 = vmatprep.subr.bf16.mxu0 0
        %598 = vmatpush1.bf16.msra.mxu0 0
        %599 = vmatprep.subr.bf16.mxu0 0
        %600 = vmatpush1.bf16.msra.mxu0 0
        %601 = vmatprep.subr.bf16.mxu0 0
        %602 = vmatpush1.bf16.msra.mxu0 0
        %603 = vmatprep.subr.bf16.mxu0 0
        %604 = vmatpush1.bf16.msra.mxu0 0
        %605 = vmatprep.subr.bf16.mxu0 0
        %606 = vmatpush1.bf16.msra.mxu0 0
        %607 = vmatprep.subr.bf16.mxu0 0
        %608 = vmatpush1.bf16.msra.mxu0 0
        %609 = vmatprep.subr.bf16.mxu0 0
        %610 = vmatpush1.bf16.msra.mxu0 0
        %611 = vmatprep.subr.bf16.mxu0 0
        %612 = vmatpush1.bf16.msra.mxu0 0
        %613 = vmatprep.subr.bf16.mxu0 0
        %614 = vmatpush1.bf16.msra.mxu0 0
        %615 = vmatprep.subr.bf16.mxu0 0
        %616 = vmatpush1.bf16.msra.mxu0 0
        %617 = vmatprep.subr.bf16.mxu0 0
        %618 = vmatpush1.bf16.msra.mxu0 0
        %619 = vmatprep.subr.bf16.mxu0 0
        %620 = vmatpush1.bf16.msra.mxu0 0
        %621 = vmatprep.mubr.bf16.mxu0 0
        %622 = vmatmul.mubr.bf16.gmra.mrb[0].mxu0 %v365
        %v623 = vpop.f32.mrb[0].mxu0
        %v624 = vadd.f32 0.0, %v623
        %v625 = vpop.f32.mrb[0].mxu0
        %v626 = vpop.f32.mrb[0].mxu0
        %v627 = vpop.f32.mrb[0].mxu0
        %628 = vdwg.mxu0
        %s629 = scalar_lea.vmem [#allocation2], 32
        %630 = vst.msk [vmem:[%s629] sm:$0xff] %vm314, %v624
        %v631 = vld [vmem:[%s1 + $0x80] sm:$0xf]
        %v632 = vld [vmem:[%s1 + $0x84] sm:$0xf]
        %v633 = vld [vmem:[%s1 + $0x88] sm:$0xf]
        %v634 = vld [vmem:[%s1 + $0x8c] sm:$0xf]
        %v635 = vld [vmem:[%s1 + $0x90] sm:$0xf]
        %v636 = vld [vmem:[%s1 + $0x94] sm:$0xf]
        %v637 = vld [vmem:[%s1 + $0x98] sm:$0xf]
        %v638 = vld [vmem:[%s1 + $0x9c] sm:$0xf]
        %v647 = vunpack.c.l.b16 %v631
        %v648 = vunpack.c.l.b16 %v632
        %v649 = vunpack.c.l.b16 %v633
        %v650 = vunpack.c.l.b16 %v634
        %v651 = vunpack.c.l.b16 %v635
        %v652 = vunpack.c.l.b16 %v636
        %v653 = vunpack.c.l.b16 %v637
        %v654 = vunpack.c.l.b16 %v638
        %v655 = vpack.c.b16 %v648, %v647
        %v656 = vpack.c.b16 %v650, %v649
        %v657 = vpack.c.b16 %v652, %v651
        %v658 = vpack.c.b16 %v654, %v653
        %663 = vmatprep.subr.bf16.mxu0 0
        %664 = vmatpush1.bf16.msra.mxu0 %v655
        %665 = vmatprep.subr.bf16.mxu0 0
        %666 = vmatpush1.bf16.msra.mxu0 %v656
        %667 = vmatprep.subr.bf16.mxu0 0
        %668 = vmatpush1.bf16.msra.mxu0 %v657
        %669 = vmatprep.subr.bf16.mxu0 0
        %670 = vmatpush1.bf16.msra.mxu0 %v658
        %671 = vmatprep.subr.bf16.mxu0 0
        %672 = vmatpush1.bf16.msra.mxu0 0
        %673 = vmatprep.subr.bf16.mxu0 0
        %674 = vmatpush1.bf16.msra.mxu0 0
        %675 = vmatprep.subr.bf16.mxu0 0
        %676 = vmatpush1.bf16.msra.mxu0 0
        %677 = vmatprep.subr.bf16.mxu0 0
        %678 = vmatpush1.bf16.msra.mxu0 0
        %679 = vmatprep.subr.bf16.mxu0 0
        %680 = vmatpush1.bf16.msra.mxu0 0
        %681 = vmatprep.subr.bf16.mxu0 0
        %682 = vmatpush1.bf16.msra.mxu0 0
        %683 = vmatprep.subr.bf16.mxu0 0
        %684 = vmatpush1.bf16.msra.mxu0 0
        %685 = vmatprep.subr.bf16.mxu0 0
        %686 = vmatpush1.bf16.msra.mxu0 0
        %687 = vmatprep.subr.bf16.mxu0 0
        %688 = vmatpush1.bf16.msra.mxu0 0
        %689 = vmatprep.subr.bf16.mxu0 0
        %690 = vmatpush1.bf16.msra.mxu0 0
        %691 = vmatprep.subr.bf16.mxu0 0
        %692 = vmatpush1.bf16.msra.mxu0 0
        %693 = vmatprep.subr.bf16.mxu0 0
        %694 = vmatpush1.bf16.msra.mxu0 0
        %695 = vmatprep.mubr.bf16.mxu0 0
        %696 = vmatmul.mubr.bf16.gmra.mrb[0].mxu0 %v365
        %v697 = vpop.f32.mrb[0].mxu0
        %v698 = vadd.f32 0.0, %v697
        %v699 = vpop.f32.mrb[0].mxu0
        %v700 = vpop.f32.mrb[0].mxu0
        %v701 = vpop.f32.mrb[0].mxu0
        %702 = vdwg.mxu0
        %s703 = scalar_lea.vmem [#allocation2], 40
        %704 = vst.msk [vmem:[%s703] sm:$0xff] %vm314, %v698
        %v705 = vld [vmem:[#allocation2] sm:$0xff]
        %v706 = vld [vmem:[#allocation2 + $0x8] sm:$0xff]
        %v707 = vld [vmem:[#allocation2 + $0x10] sm:$0xff]
        %v708 = vld [vmem:[#allocation2 + $0x18] sm:$0xff]
        %v709 = vld [vmem:[#allocation2 + $0x20] sm:$0xff]
        %v710 = vld [vmem:[%s407] sm:$0xff]
        %v711 = vld [vmem:[%s407 + $0x8] sm:$0xff]
        %v712 = vld [vmem:[%s407 + $0x10] sm:$0xff]
        %v713 = vld [vmem:[%s407 + $0x18] sm:$0xff]
        %v714 = vld [vmem:[%s407 + $0x20] sm:$0xff]
        %v715 = vld [vmem:[%s481] sm:$0xff]
        %v716 = vld [vmem:[%s481 + $0x8] sm:$0xff]
        %v717 = vld [vmem:[%s481 + $0x10] sm:$0xff]
        %v718 = vld [vmem:[%s481 + $0x18] sm:$0xff]
        %v719 = vld [vmem:[%s481 + $0x20] sm:$0xff]
        %725 = vrot.lane.b32.xlu0 %v705, 64
        %v726 = vpop.permute.xlu0 %725
        %727 = vrot.lane.b32.xlu0 %v706, 64
        %v728 = vpop.permute.xlu0 %727
        %729 = vrot.lane.b32.xlu0 %v707, 64
        %v730 = vpop.permute.xlu0 %729
        %731 = vrot.lane.b32.xlu0 %v708, 64
        %v732 = vpop.permute.xlu0 %731
        %733 = vrot.lane.b32.xlu0 %v709, 64
        %v734 = vpop.permute.xlu0 %733
        %v740 = vsel %vm314, %v710, %v726
        %v741 = vsel %vm314, %v711, %v728
        %v742 = vsel %vm314, %v712, %v730
        %v743 = vsel %vm314, %v713, %v732
        %v744 = vsel %vm314, %v714, %v734
        %v745 = vld [vmem:[#allocation7] sm:$0xf]
        %v746 = vld [vmem:[#allocation7 + $0x4] sm:$0xf]
        %v747 = vld [vmem:[#allocation7 + $0x8] sm:$0xf]
        %v748 = vld [vmem:[#allocation7 + $0xc] sm:$0xf]
        %v749 = vld [vmem:[#allocation7 + $0x10] sm:$0xf]
        %v750 = vld [vmem:[#allocation7 + $0x14] sm:$0xf]
        %v751 = vld [vmem:[#allocation7 + $0x18] sm:$0xf]
        %v752 = vld [vmem:[#allocation7 + $0x1c] sm:$0xf]
        %v753 = vld [vmem:[#allocation7 + $0x20] sm:$0xf]
        %v754 = vld [vmem:[#allocation7 + $0x24] sm:$0xf]
        %v755 = vld [vmem:[#allocation7 + $0x28] sm:$0xf]
        %v756 = vld [vmem:[#allocation7 + $0x2c] sm:$0xf]
        %v757 = vld [vmem:[#allocation7 + $0x30] sm:$0xf]
        %v758 = vld [vmem:[#allocation7 + $0x34] sm:$0xf]
        %v759 = vld [vmem:[#allocation7 + $0x38] sm:$0xf]
        %v760 = vld [vmem:[#allocation7 + $0x3c] sm:$0xf]
        %v761 = vpack.c.bf16 %v741, %v740
        %v762 = vpack.c.bf16 %v743, %v742
        %v763 = vpack.c.bf16 %v744, %v744
        %v780 = vunpack.c.l.b16 %v745
        %v781 = vunpack.c.l.b16 %v746
        %v782 = vunpack.c.l.b16 %v747
        %v783 = vunpack.c.l.b16 %v748
        %v784 = vunpack.c.l.b16 %v749
        %v785 = vunpack.c.l.b16 %v750
        %v786 = vunpack.c.l.b16 %v751
        %v787 = vunpack.c.l.b16 %v752
        %v788 = vunpack.c.l.b16 %v753
        %v789 = vunpack.c.l.b16 %v754
        %v790 = vunpack.c.l.b16 %v755
        %v791 = vunpack.c.l.b16 %v756
        %v792 = vunpack.c.l.b16 %v757
        %v793 = vunpack.c.l.b16 %v758
        %v794 = vunpack.c.l.b16 %v759
        %v795 = vunpack.c.l.b16 %v760
        %v796 = vpack.c.b16 %v781, %v780
        %v797 = vpack.c.b16 %v783, %v782
        %v798 = vpack.c.b16 %v785, %v784
        %v799 = vpack.c.b16 %v787, %v786
        %v800 = vpack.c.b16 %v789, %v788
        %v801 = vpack.c.b16 %v791, %v790
        %v802 = vpack.c.b16 %v793, %v792
        %v803 = vpack.c.b16 %v795, %v794
        %812 = vmatprep.subr.bf16.mxu0 0
        %813 = vmatpush1.bf16.msra.mxu0 %v796
        %814 = vmatprep.subr.bf16.mxu0 0
        %815 = vmatpush1.bf16.msra.mxu0 %v797
        %816 = vmatprep.subr.bf16.mxu0 0
        %817 = vmatpush1.bf16.msra.mxu0 %v798
        %818 = vmatprep.subr.bf16.mxu0 0
        %819 = vmatpush1.bf16.msra.mxu0 %v799
        %820 = vmatprep.subr.bf16.mxu0 0
        %821 = vmatpush1.bf16.msra.mxu0 %v800
        %822 = vmatprep.subr.bf16.mxu0 0
        %823 = vmatpush1.bf16.msra.mxu0 %v801
        %824 = vmatprep.subr.bf16.mxu0 0
        %825 = vmatpush1.bf16.msra.mxu0 %v802
        %826 = vmatprep.subr.bf16.mxu0 0
        %827 = vmatpush1.bf16.msra.mxu0 %v803
        %828 = vmatprep.subr.bf16.mxu0 0
        %829 = vmatpush1.bf16.msra.mxu0 0
        %830 = vmatprep.subr.bf16.mxu0 0
        %831 = vmatpush1.bf16.msra.mxu0 0
        %832 = vmatprep.subr.bf16.mxu0 0
        %833 = vmatpush1.bf16.msra.mxu0 0
        %834 = vmatprep.subr.bf16.mxu0 0
        %835 = vmatpush1.bf16.msra.mxu0 0
        %836 = vmatprep.subr.bf16.mxu0 0
        %837 = vmatpush1.bf16.msra.mxu0 0
        %838 = vmatprep.subr.bf16.mxu0 0
        %839 = vmatpush1.bf16.msra.mxu0 0
        %840 = vmatprep.subr.bf16.mxu0 0
        %841 = vmatpush1.bf16.msra.mxu0 0
        %842 = vmatprep.subr.bf16.mxu0 0
        %843 = vmatpush1.bf16.msra.mxu0 0
        %844 = vmatprep.mubr.bf16.mxu0 0
        %845 = vmatmul.mubr.bf16.gmra.mrb[0].mxu0 %v761
        %v846 = vpop.f32.mrb[0].mxu0
        %v847 = vadd.f32 0.0, %v846
        %v848 = vpop.f32.mrb[0].mxu0
        %v849 = vpop.f32.mrb[0].mxu0
        %v850 = vadd.f32 0.0, %v849
        %v851 = vpop.f32.mrb[0].mxu0
        %852 = vmatprep.mubr.bf16.mxu0 0
        %853 = vmatmul.mubr.bf16.gmra.mrb[0].mxu0 %v762
        %v854 = vpop.f32.mrb[0].mxu0
        %v855 = vadd.f32 0.0, %v854
        %v856 = vpop.f32.mrb[0].mxu0
        %v857 = vpop.f32.mrb[0].mxu0
        %v858 = vadd.f32 0.0, %v857
        %v859 = vpop.f32.mrb[0].mxu0
        %860 = vmatprep.mubr.bf16.mxu0 0
        %861 = vmatmul.mubr.bf16.gmra.mrb[0].mxu0 %v763
        %v862 = vpop.f32.mrb[0].mxu0
        %v863 = vadd.f32 0.0, %v862
        %v864 = vpop.f32.mrb[0].mxu0
        %v865 = vpop.f32.mrb[0].mxu0
        %v866 = vpop.f32.mrb[0].mxu0
        %867 = vdwg.mxu0
        %873 = vrot.lane.b32.xlu0 %v710, 64
        %v874 = vpop.permute.xlu0 %873
        %875 = vrot.lane.b32.xlu0 %v711, 64
        %v876 = vpop.permute.xlu0 %875
        %877 = vrot.lane.b32.xlu0 %v712, 64
        %v878 = vpop.permute.xlu0 %877
        %879 = vrot.lane.b32.xlu0 %v713, 64
        %v880 = vpop.permute.xlu0 %879
        %881 = vrot.lane.b32.xlu0 %v714, 64
        %v882 = vpop.permute.xlu0 %881
        %v888 = vsel %vm314, %v715, %v874
        %v889 = vsel %vm314, %v716, %v876
        %v890 = vsel %vm314, %v717, %v878
        %v891 = vsel %vm314, %v718, %v880
        %v892 = vsel %vm314, %v719, %v882
        %v893 = vld [vmem:[#allocation7 + $0x40] sm:$0xf]
        %v894 = vld [vmem:[#allocation7 + $0x44] sm:$0xf]
        %v895 = vld [vmem:[#allocation7 + $0x48] sm:$0xf]
        %v896 = vld [vmem:[#allocation7 + $0x4c] sm:$0xf]
        %v897 = vld [vmem:[#allocation7 + $0x50] sm:$0xf]
        %v898 = vld [vmem:[#allocation7 + $0x54] sm:$0xf]
        %v899 = vld [vmem:[#allocation7 + $0x58] sm:$0xf]
        %v900 = vld [vmem:[#allocation7 + $0x5c] sm:$0xf]
        %v901 = vld [vmem:[#allocation7 + $0x60] sm:$0xf]
        %v902 = vld [vmem:[#allocation7 + $0x64] sm:$0xf]
        %v903 = vld [vmem:[#allocation7 + $0x68] sm:$0xf]
        %v904 = vld [vmem:[#allocation7 + $0x6c] sm:$0xf]
        %v905 = vld [vmem:[#allocation7 + $0x70] sm:$0xf]
        %v906 = vld [vmem:[#allocation7 + $0x74] sm:$0xf]
        %v907 = vld [vmem:[#allocation7 + $0x78] sm:$0xf]
        %v908 = vld [vmem:[#allocation7 + $0x7c] sm:$0xf]
        %v909 = vpack.c.bf16 %v889, %v888
        %v910 = vpack.c.bf16 %v891, %v890
        %v911 = vpack.c.bf16 %v892, %v892
        %v928 = vunpack.c.l.b16 %v893
        %v929 = vunpack.c.l.b16 %v894
        %v930 = vunpack.c.l.b16 %v895
        %v931 = vunpack.c.l.b16 %v896
        %v932 = vunpack.c.l.b16 %v897
        %v933 = vunpack.c.l.b16 %v898
        %v934 = vunpack.c.l.b16 %v899
        %v935 = vunpack.c.l.b16 %v900
        %v936 = vunpack.c.l.b16 %v901
        %v937 = vunpack.c.l.b16 %v902
        %v938 = vunpack.c.l.b16 %v903
        %v939 = vunpack.c.l.b16 %v904
        %v940 = vunpack.c.l.b16 %v905
        %v941 = vunpack.c.l.b16 %v906
        %v942 = vunpack.c.l.b16 %v907
        %v943 = vunpack.c.l.b16 %v908
        %v944 = vpack.c.b16 %v929, %v928
        %v945 = vpack.c.b16 %v931, %v930
        %v946 = vpack.c.b16 %v933, %v932
        %v947 = vpack.c.b16 %v935, %v934
        %v948 = vpack.c.b16 %v937, %v936
        %v949 = vpack.c.b16 %v939, %v938
        %v950 = vpack.c.b16 %v941, %v940
        %v951 = vpack.c.b16 %v943, %v942
        %960 = vmatprep.subr.bf16.mxu0 0
        %961 = vmatpush1.bf16.msra.mxu0 %v944
        %962 = vmatprep.subr.bf16.mxu0 0
        %963 = vmatpush1.bf16.msra.mxu0 %v945
        %964 = vmatprep.subr.bf16.mxu0 0
        %965 = vmatpush1.bf16.msra.mxu0 %v946
        %966 = vmatprep.subr.bf16.mxu0 0
        %967 = vmatpush1.bf16.msra.mxu0 %v947
        %968 = vmatprep.subr.bf16.mxu0 0
        %969 = vmatpush1.bf16.msra.mxu0 %v948
        %970 = vmatprep.subr.bf16.mxu0 0
        %971 = vmatpush1.bf16.msra.mxu0 %v949
        %972 = vmatprep.subr.bf16.mxu0 0
        %973 = vmatpush1.bf16.msra.mxu0 %v950
        %974 = vmatprep.subr.bf16.mxu0 0
        %975 = vmatpush1.bf16.msra.mxu0 %v951
        %976 = vmatprep.subr.bf16.mxu0 0
        %977 = vmatpush1.bf16.msra.mxu0 0
        %978 = vmatprep.subr.bf16.mxu0 0
        %979 = vmatpush1.bf16.msra.mxu0 0
        %980 = vmatprep.subr.bf16.mxu0 0
        %981 = vmatpush1.bf16.msra.mxu0 0
        %982 = vmatprep.subr.bf16.mxu0 0
        %983 = vmatpush1.bf16.msra.mxu0 0
        %984 = vmatprep.subr.bf16.mxu0 0
        %985 = vmatpush1.bf16.msra.mxu0 0
        %986 = vmatprep.subr.bf16.mxu0 0
        %987 = vmatpush1.bf16.msra.mxu0 0
        %988 = vmatprep.subr.bf16.mxu0 0
        %989 = vmatpush1.bf16.msra.mxu0 0
        %990 = vmatprep.subr.bf16.mxu0 0
        %991 = vmatpush1.bf16.msra.mxu0 0
        %992 = vmatprep.mubr.bf16.mxu0 0
        %993 = vmatmul.mubr.bf16.gmra.mrb[0].mxu0 %v909
        %v994 = vpop.f32.mrb[0].mxu0
        %v995 = vadd.f32 0.0, %v994
        %v996 = vpop.f32.mrb[0].mxu0
        %v997 = vpop.f32.mrb[0].mxu0
        %v998 = vadd.f32 0.0, %v997
        %v999 = vpop.f32.mrb[0].mxu0
        %1000 = vmatprep.mubr.bf16.mxu0 0
        %1001 = vmatmul.mubr.bf16.gmra.mrb[0].mxu0 %v910
        %v1002 = vpop.f32.mrb[0].mxu0
        %v1003 = vadd.f32 0.0, %v1002
        %v1004 = vpop.f32.mrb[0].mxu0
        %v1005 = vpop.f32.mrb[0].mxu0
        %v1006 = vadd.f32 0.0, %v1005
        %v1007 = vpop.f32.mrb[0].mxu0
        %1008 = vmatprep.mubr.bf16.mxu0 0
        %1009 = vmatmul.mubr.bf16.gmra.mrb[0].mxu0 %v911
        %v1010 = vpop.f32.mrb[0].mxu0
        %v1011 = vadd.f32 0.0, %v1010
        %v1012 = vpop.f32.mrb[0].mxu0
        %v1013 = vpop.f32.mrb[0].mxu0
        %v1014 = vpop.f32.mrb[0].mxu0
        %1015 = vdwg.mxu0
        %v1016 = vadd.f32 %v847, %v850
        %v1017 = vadd.f32 %v1016, %v855
        %v1018 = vadd.f32 %v1017, %v858
        %v1019 = vadd.f32 %v1018, %v863
        %v1020 = vadd.f32 %v995, %v998
        %v1021 = vadd.f32 %v1020, %v1003
        %v1022 = vadd.f32 %v1021, %v1006
        %v1023 = vadd.f32 %v1022, %v1011
        %v1024 = vadd.f32 %v1019, %v1023
        %v1025 = vrcp.pop 10.0
        %v1026 = vmul.f32 %v1024, %v1025
        %v1027 = vsub.f32 %v847, %v1026
        %v1028 = vsub.f32 %v850, %v1026
        %v1029 = vsub.f32 %v855, %v1026
        %v1030 = vsub.f32 %v858, %v1026
        %v1031 = vsub.f32 %v863, %v1026
        %v1032 = vmul.f32 %v1027, %v1027
        %v1033 = vmul.f32 %v1028, %v1028
        %v1034 = vmul.f32 %v1029, %v1029
        %v1035 = vmul.f32 %v1030, %v1030
        %v1036 = vmul.f32 %v1031, %v1031
        %v1037 = vadd.f32 %v1032, %v1033
        %v1038 = vadd.f32 %v1037, %v1034
        %v1039 = vadd.f32 %v1038, %v1035
        %v1040 = vadd.f32 %v1039, %v1036
        %v1041 = vsub.f32 %v995, %v1026
        %v1042 = vsub.f32 %v998, %v1026
        %v1043 = vsub.f32 %v1003, %v1026
        %v1044 = vsub.f32 %v1006, %v1026
        %v1045 = vsub.f32 %v1011, %v1026
        %v1046 = vmul.f32 %v1041, %v1041
        %v1047 = vmul.f32 %v1042, %v1042
        %v1048 = vmul.f32 %v1043, %v1043
        %v1049 = vmul.f32 %v1044, %v1044
        %v1050 = vmul.f32 %v1045, %v1045
        %v1051 = vadd.f32 %v1046, %v1047
        %v1052 = vadd.f32 %v1051, %v1048
        %v1053 = vadd.f32 %v1052, %v1049
        %v1054 = vadd.f32 %v1053, %v1050
        %v1055 = vadd.f32 %v1040, %v1054
        %v1056 = vmul.f32 %v1055, %v1025
        %v1057 = vadd.f32 %v1056, 1e-05
        %v1058 = vrsqrt.pop %v1057
        %v1059 = vmul.f32 %v1027, %v1058
        %v1060 = vmul.f32 %v1028, %v1058
        %v1061 = vmul.f32 %v1029, %v1058
        %v1062 = vmul.f32 %v1030, %v1058
        %v1063 = vmul.f32 %v1031, %v1058
        %vm1064 = vcmp.ge.f32.partialorder %v1059, 0.0
        %vm1065 = vcmp.ge.f32.partialorder %v1060, 0.0
        %vm1066 = vcmp.ge.f32.partialorder %v1061, 0.0
        %vm1067 = vcmp.ge.f32.partialorder %v1062, 0.0
        %vm1068 = vcmp.ge.f32.partialorder %v1063, 0.0
        %v1069 = vmul.f32 %v1059, 0.1
        %v1070 = vmul.f32 %v1060, 0.1
        %v1071 = vmul.f32 %v1061, 0.1
        %v1072 = vmul.f32 %v1062, 0.1
        %v1073 = vmul.f32 %v1063, 0.1
        %v1074 = vsel %vm1064, %v1059, %v1069
        %v1075 = vsel %vm1065, %v1060, %v1070
        %v1076 = vsel %vm1066, %v1061, %v1071
        %v1077 = vsel %vm1067, %v1062, %v1072
        %v1078 = vsel %vm1068, %v1063, %v1073
        %v1079 = vmul.f32 %v1041, %v1058
        %v1080 = vmul.f32 %v1042, %v1058
        %v1081 = vmul.f32 %v1043, %v1058
        %v1082 = vmul.f32 %v1044, %v1058
        %v1083 = vmul.f32 %v1045, %v1058
        %vm1084 = vcmp.ge.f32.partialorder %v1079, 0.0
        %vm1085 = vcmp.ge.f32.partialorder %v1080, 0.0
        %vm1086 = vcmp.ge.f32.partialorder %v1081, 0.0
        %vm1087 = vcmp.ge.f32.partialorder %v1082, 0.0
        %vm1088 = vcmp.ge.f32.partialorder %v1083, 0.0
        %v1089 = vmul.f32 %v1079, 0.1
        %v1090 = vmul.f32 %v1080, 0.1
        %v1091 = vmul.f32 %v1081, 0.1
        %v1092 = vmul.f32 %v1082, 0.1
        %v1093 = vmul.f32 %v1083, 0.1
        %v1094 = vsel %vm1084, %v1079, %v1089
        %v1095 = vsel %vm1085, %v1080, %v1090
        %v1096 = vsel %vm1086, %v1081, %v1091
        %v1097 = vsel %vm1087, %v1082, %v1092
        %v1098 = vsel %vm1088, %v1083, %v1093
        %s1099 = scalar_lea.vmem [#allocation3], 8
        %1100 = vst [vmem:[%s1099] sm:$0xff] %v1074
        %s1101 = scalar_lea.vmem [#allocation3], 16
        %1102 = vst [vmem:[%s1101] sm:$0xff] %v1094
        %s1103 = scalar_lea.vmem [#allocation3], 24
        %1104 = vst [vmem:[%s1103] sm:$0xff] %v1075
        %s1105 = scalar_lea.vmem [#allocation3], 32
        %1106 = vst [vmem:[%s1105] sm:$0xff] %v1095
        %s1107 = scalar_lea.vmem [#allocation3], 40
        %1108 = vst [vmem:[%s1107] sm:$0xff] %v1076
        %s1109 = scalar_lea.vmem [#allocation3], 48
        %1110 = vst [vmem:[%s1109] sm:$0xff] %v1096
        %s1111 = scalar_lea.vmem [#allocation3], 56
        %1112 = vst [vmem:[%s1111] sm:$0xff] %v1077
        %s1113 = scalar_lea.vmem [#allocation3], 64
        %1114 = vst [vmem:[%s1113] sm:$0xff] %v1097
        %s1115 = scalar_lea.vmem [#allocation3], 72
        %1116 = vst [vmem:[%s1115] sm:$0xff] %v1078
        %s1117 = scalar_lea.vmem [#allocation3], 80
        %1118 = vst [vmem:[%s1117] sm:$0xff] %v1098
        %v1119 = vld [vmem:[#allocation3] sm:$0xff]
        %v1120 = vld [vmem:[#allocation3 + $0x8] sm:$0xff]
        %v1121 = vld [vmem:[#allocation3 + $0x10] sm:$0xff]
        %v1122 = vld [vmem:[#allocation3 + $0x18] sm:$0xff]
        %v1123 = vld [vmem:[#allocation3 + $0x20] sm:$0xff]
        %v1124 = vld [vmem:[#allocation3 + $0x28] sm:$0xff]
        %v1125 = vld [vmem:[#allocation3 + $0x30] sm:$0xff]
        %v1126 = vld [vmem:[#allocation3 + $0x38] sm:$0xff]
        %v1127 = vld [vmem:[#allocation3 + $0x40] sm:$0xff]
        %v1128 = vld [vmem:[#allocation3 + $0x48] sm:$0xff]
        %v1129 = vld [vmem:[%s1099] sm:$0xff]
        %v1130 = vld [vmem:[%s1099 + $0x8] sm:$0xff]
        %v1131 = vld [vmem:[%s1099 + $0x10] sm:$0xff]
        %v1132 = vld [vmem:[%s1099 + $0x18] sm:$0xff]
        %v1133 = vld [vmem:[%s1099 + $0x20] sm:$0xff]
        %v1134 = vld [vmem:[%s1099 + $0x28] sm:$0xff]
        %v1135 = vld [vmem:[%s1099 + $0x30] sm:$0xff]
        %v1136 = vld [vmem:[%s1099 + $0x38] sm:$0xff]
        %v1137 = vld [vmem:[%s1099 + $0x40] sm:$0xff]
        %v1138 = vld [vmem:[%s1099 + $0x48] sm:$0xff]
        %v1139 = vld [vmem:[%s1101] sm:$0xff]
        %v1140 = vld [vmem:[%s1101 + $0x8] sm:$0xff]
        %v1141 = vld [vmem:[%s1101 + $0x10] sm:$0xff]
        %v1142 = vld [vmem:[%s1101 + $0x18] sm:$0xff]
        %v1143 = vld [vmem:[%s1101 + $0x20] sm:$0xff]
        %v1144 = vld [vmem:[%s1101 + $0x28] sm:$0xff]
        %v1145 = vld [vmem:[%s1101 + $0x30] sm:$0xff]
        %v1146 = vld [vmem:[%s1101 + $0x38] sm:$0xff]
        %v1147 = vld [vmem:[%s1101 + $0x40] sm:$0xff]
        %v1148 = vld [vmem:[%s1101 + $0x48] sm:$0xff]
        %v1149 = vld [vmem:[#allocation9] sm:$0xff]
        %v1150 = vld [vmem:[#allocation9 + $0x8] sm:$0xff]
        %v1151 = vld [vmem:[#allocation9 + $0x10] sm:$0xff]
        %v1152 = vld [vmem:[#allocation9 + $0x18] sm:$0xff]
        %v1153 = vld [vmem:[#allocation9 + $0x20] sm:$0xff]
        %v1154 = vld [vmem:[#allocation9 + $0x28] sm:$0xff]
        %v1155 = vld [vmem:[#allocation9 + $0x30] sm:$0xff]
        %v1156 = vld [vmem:[#allocation9 + $0x38] sm:$0xff]
        %v1157 = vld [vmem:[#allocation9 + $0x40] sm:$0xff]
        %v1158 = vld [vmem:[#allocation9 + $0x48] sm:$0xff]
        %v1159 = vld [vmem:[#allocation9 + $0x50] sm:$0xff]
        %v1160 = vld [vmem:[#allocation9 + $0x58] sm:$0xff]
        %v1161 = vld [vmem:[#allocation9 + $0x60] sm:$0xff]
        %v1162 = vld [vmem:[#allocation9 + $0x68] sm:$0xff]
        %v1163 = vld [vmem:[#allocation9 + $0x70] sm:$0xff]
        %v1164 = vld [vmem:[#allocation9 + $0x78] sm:$0xff]
        %v1165 = vld [vmem:[#allocation9 + $0x80] sm:$0xff]
        %v1166 = vld [vmem:[#allocation9 + $0x88] sm:$0xff]
        %v1167 = vld [vmem:[#allocation9 + $0x90] sm:$0xff]
        %v1168 = vld [vmem:[#allocation9 + $0x98] sm:$0xff]
        %v1169 = vld [vmem:[#allocation9 + $0xa0] sm:$0xff]
        %v1170 = vld [vmem:[#allocation9 + $0xa8] sm:$0xff]
        %v1171 = vld [vmem:[#allocation9 + $0xb0] sm:$0xff]
        %v1172 = vld [vmem:[#allocation9 + $0xb8] sm:$0xff]
        %v1173 = vld [vmem:[#allocation9 + $0xc0] sm:$0xff]
        %v1174 = vld [vmem:[#allocation9 + $0xc8] sm:$0xff]
        %v1175 = vld [vmem:[#allocation9 + $0xd0] sm:$0xff]
        %v1176 = vld [vmem:[#allocation9 + $0xd8] sm:$0xff]
        %v1177 = vld [vmem:[#allocation9 + $0xe0] sm:$0xff]
        %v1178 = vld [vmem:[#allocation9 + $0xe8] sm:$0xff]
        %v1179 = vld [vmem:[#allocation9 + $0xf0] sm:$0xff]
        %v1180 = vld [vmem:[#allocation9 + $0xf8] sm:$0xff]
        %v1181 = vpack.c.bf16 %v1130, %v1129
        %v1182 = vpack.c.bf16 %v1120, %v1119
        %v1183 = vpack.c.bf16 %v1132, %v1131
        %v1184 = vpack.c.bf16 %v1122, %v1121
        %v1185 = vpack.c.bf16 %v1134, %v1133
        %v1186 = vpack.c.bf16 %v1124, %v1123
        %v1187 = vpack.c.bf16 %v1136, %v1135
        %v1188 = vpack.c.bf16 %v1126, %v1125
        %v1189 = vpack.c.bf16 %v1138, %v1137
        %v1190 = vpack.c.bf16 %v1128, %v1127
        %v1223 = vunpack.c.l.b16 %v1149
        %v1224 = vunpack.c.h.b16 %v1149
        %v1225 = vunpack.c.l.b16 %v1150
        %v1226 = vunpack.c.h.b16 %v1150
        %v1227 = vunpack.c.l.b16 %v1151
        %v1228 = vunpack.c.h.b16 %v1151
        %v1229 = vunpack.c.l.b16 %v1152
        %v1230 = vunpack.c.h.b16 %v1152
        %v1231 = vunpack.c.l.b16 %v1153
        %v1232 = vunpack.c.h.b16 %v1153
        %v1233 = vunpack.c.l.b16 %v1154
        %v1234 = vunpack.c.h.b16 %v1154
        %v1235 = vunpack.c.l.b16 %v1155
        %v1236 = vunpack.c.h.b16 %v1155
        %v1237 = vunpack.c.l.b16 %v1156
        %v1238 = vunpack.c.h.b16 %v1156
        %v1239 = vunpack.c.l.b16 %v1157
        %v1240 = vunpack.c.h.b16 %v1157
        %v1241 = vunpack.c.l.b16 %v1158
        %v1242 = vunpack.c.h.b16 %v1158
        %v1243 = vunpack.c.l.b16 %v1159
        %v1244 = vunpack.c.h.b16 %v1159
        %v1245 = vunpack.c.l.b16 %v1160
        %v1246 = vunpack.c.h.b16 %v1160
        %v1247 = vunpack.c.l.b16 %v1161
        %v1248 = vunpack.c.h.b16 %v1161
        %v1249 = vunpack.c.l.b16 %v1162
        %v1250 = vunpack.c.h.b16 %v1162
        %v1251 = vunpack.c.l.b16 %v1163
        %v1252 = vunpack.c.h.b16 %v1163
        %v1253 = vunpack.c.l.b16 %v1164
        %v1254 = vunpack.c.h.b16 %v1164
        %v1255 = vunpack.c.l.b16 %v1165
        %v1256 = vunpack.c.h.b16 %v1165
        %v1257 = vunpack.c.l.b16 %v1166
        %v1258 = vunpack.c.h.b16 %v1166
        %v1259 = vunpack.c.l.b16 %v1167
        %v1260 = vunpack.c.h.b16 %v1167
        %v1261 = vunpack.c.l.b16 %v1168
        %v1262 = vunpack.c.h.b16 %v1168
        %v1263 = vunpack.c.l.b16 %v1169
        %v1264 = vunpack.c.h.b16 %v1169
        %v1265 = vunpack.c.l.b16 %v1170
        %v1266 = vunpack.c.h.b16 %v1170
        %v1267 = vunpack.c.l.b16 %v1171
        %v1268 = vunpack.c.h.b16 %v1171
        %v1269 = vunpack.c.l.b16 %v1172
        %v1270 = vunpack.c.h.b16 %v1172
        %v1271 = vunpack.c.l.b16 %v1173
        %v1272 = vunpack.c.h.b16 %v1173
        %v1273 = vunpack.c.l.b16 %v1174
        %v1274 = vunpack.c.h.b16 %v1174
        %v1275 = vunpack.c.l.b16 %v1175
        %v1276 = vunpack.c.h.b16 %v1175
        %v1277 = vunpack.c.l.b16 %v1176
        %v1278 = vunpack.c.h.b16 %v1176
        %v1279 = vunpack.c.l.b16 %v1177
        %v1280 = vunpack.c.h.b16 %v1177
        %v1281 = vunpack.c.l.b16 %v1178
        %v1282 = vunpack.c.h.b16 %v1178
        %v1283 = vunpack.c.l.b16 %v1179
        %v1284 = vunpack.c.h.b16 %v1179
        %v1285 = vunpack.c.l.b16 %v1180
        %v1286 = vunpack.c.h.b16 %v1180
        %v1287 = vpack.c.b16 %v1225, %v1223
        %v1288 = vpack.c.b16 %v1226, %v1224
        %v1289 = vpack.c.b16 %v1229, %v1227
        %v1290 = vpack.c.b16 %v1230, %v1228
        %v1291 = vpack.c.b16 %v1233, %v1231
        %v1292 = vpack.c.b16 %v1234, %v1232
        %v1293 = vpack.c.b16 %v1237, %v1235
        %v1294 = vpack.c.b16 %v1238, %v1236
        %v1295 = vpack.c.b16 %v1241, %v1239
        %v1296 = vpack.c.b16 %v1242, %v1240
        %v1297 = vpack.c.b16 %v1245, %v1243
        %v1298 = vpack.c.b16 %v1246, %v1244
        %v1299 = vpack.c.b16 %v1249, %v1247
        %v1300 = vpack.c.b16 %v1250, %v1248
        %v1301 = vpack.c.b16 %v1253, %v1251
        %v1302 = vpack.c.b16 %v1254, %v1252
        %v1303 = vpack.c.b16 %v1257, %v1255
        %v1304 = vpack.c.b16 %v1258, %v1256
        %v1305 = vpack.c.b16 %v1261, %v1259
        %v1306 = vpack.c.b16 %v1262, %v1260
        %v1307 = vpack.c.b16 %v1265, %v1263
        %v1308 = vpack.c.b16 %v1266, %v1264
        %v1309 = vpack.c.b16 %v1269, %v1267
        %v1310 = vpack.c.b16 %v1270, %v1268
        %v1311 = vpack.c.b16 %v1273, %v1271
        %v1312 = vpack.c.b16 %v1274, %v1272
        %v1313 = vpack.c.b16 %v1277, %v1275
        %v1314 = vpack.c.b16 %v1278, %v1276
        %v1315 = vpack.c.b16 %v1281, %v1279
        %v1316 = vpack.c.b16 %v1282, %v1280
        %v1317 = vpack.c.b16 %v1285, %v1283
        %v1318 = vpack.c.b16 %v1286, %v1284
        %1351 = vmatprep.subr.bf16.mxu0 %v1288
        %1352 = vmatpush1.bf16.msra.mxu0 %v1287
        %1353 = vmatprep.subr.bf16.mxu0 %v1290
        %1354 = vmatpush1.bf16.msra.mxu0 %v1289
        %1355 = vmatprep.subr.bf16.mxu0 %v1292
        %1356 = vmatpush1.bf16.msra.mxu0 %v1291
        %1357 = vmatprep.subr.bf16.mxu0 %v1294
        %1358 = vmatpush1.bf16.msra.mxu0 %v1293
        %1359 = vmatprep.subr.bf16.mxu0 %v1296
        %1360 = vmatpush1.bf16.msra.mxu0 %v1295
        %1361 = vmatprep.subr.bf16.mxu0 %v1298
        %1362 = vmatpush1.bf16.msra.mxu0 %v1297
        %1363 = vmatprep.subr.bf16.mxu0 %v1300
        %1364 = vmatpush1.bf16.msra.mxu0 %v1299
        %1365 = vmatprep.subr.bf16.mxu0 %v1302
        %1366 = vmatpush1.bf16.msra.mxu0 %v1301
        %1367 = vmatprep.subr.bf16.mxu0 %v1304
        %1368 = vmatpush1.bf16.msra.mxu0 %v1303
        %1369 = vmatprep.subr.bf16.mxu0 %v1306
        %1370 = vmatpush1.bf16.msra.mxu0 %v1305
        %1371 = vmatprep.subr.bf16.mxu0 %v1308
        %1372 = vmatpush1.bf16.msra.mxu0 %v1307
        %1373 = vmatprep.subr.bf16.mxu0 %v1310
        %1374 = vmatpush1.bf16.msra.mxu0 %v1309
        %1375 = vmatprep.subr.bf16.mxu0 %v1312
        %1376 = vmatpush1.bf16.msra.mxu0 %v1311
        %1377 = vmatprep.subr.bf16.mxu0 %v1314
        %1378 = vmatpush1.bf16.msra.mxu0 %v1313
        %1379 = vmatprep.subr.bf16.mxu0 %v1316
        %1380 = vmatpush1.bf16.msra.mxu0 %v1315
        %1381 = vmatprep.subr.bf16.mxu0 %v1318
        %1382 = vmatpush1.bf16.msra.mxu0 %v1317
        %1383 = vmatprep.mubr.bf16.mxu0 %v1182
        %1384 = vmatmul.mubr.bf16.gmra.mrb[0].mxu0 %v1181
        %v1385 = vpop.f32.mrb[0].mxu0
        %v1386 = vadd.f32 0.0, %v1385
        %v1387 = vpop.f32.mrb[0].mxu0
        %v1388 = vadd.f32 0.0, %v1387
        %v1389 = vpop.f32.mrb[0].mxu0
        %v1390 = vadd.f32 0.0, %v1389
        %v1391 = vpop.f32.mrb[0].mxu0
        %v1392 = vadd.f32 0.0, %v1391
        %1393 = vmatprep.mubr.bf16.mxu0 %v1184
        %1394 = vmatmul.mubr.bf16.gmra.mrb[0].mxu0 %v1183
        %v1395 = vpop.f32.mrb[0].mxu0
        %v1396 = vadd.f32 0.0, %v1395
        %v1397 = vpop.f32.mrb[0].mxu0
        %v1398 = vadd.f32 0.0, %v1397
        %v1399 = vpop.f32.mrb[0].mxu0
        %v1400 = vadd.f32 0.0, %v1399
        %v1401 = vpop.f32.mrb[0].mxu0
        %v1402 = vadd.f32 0.0, %v1401
        %1403 = vmatprep.mubr.bf16.mxu0 %v1186
        %1404 = vmatmul.mubr.bf16.gmra.mrb[0].mxu0 %v1185
        %v1405 = vpop.f32.mrb[0].mxu0
        %v1406 = vadd.f32 0.0, %v1405
        %v1407 = vpop.f32.mrb[0].mxu0
        %v1408 = vadd.f32 0.0, %v1407
        %v1409 = vpop.f32.mrb[0].mxu0
        %v1410 = vadd.f32 0.0, %v1409
        %v1411 = vpop.f32.mrb[0].mxu0
        %v1412 = vadd.f32 0.0, %v1411
        %1413 = vmatprep.mubr.bf16.mxu0 %v1188
        %1414 = vmatmul.mubr.bf16.gmra.mrb[0].mxu0 %v1187
        %v1415 = vpop.f32.mrb[0].mxu0
        %v1416 = vadd.f32 0.0, %v1415
        %v1417 = vpop.f32.mrb[0].mxu0
        %v1418 = vadd.f32 0.0, %v1417
        %v1419 = vpop.f32.mrb[0].mxu0
        %v1420 = vadd.f32 0.0, %v1419
        %v1421 = vpop.f32.mrb[0].mxu0
        %v1422 = vadd.f32 0.0, %v1421
        %1423 = vmatprep.mubr.bf16.mxu0 %v1190
        %1424 = vmatmul.mubr.bf16.gmra.mrb[0].mxu0 %v1189
        %v1425 = vpop.f32.mrb[0].mxu0
        %v1426 = vadd.f32 0.0, %v1425
        %v1427 = vpop.f32.mrb[0].mxu0
        %v1428 = vadd.f32 0.0, %v1427
        %v1429 = vpop.f32.mrb[0].mxu0
        %v1430 = vadd.f32 0.0, %v1429
        %v1431 = vpop.f32.mrb[0].mxu0
        %v1432 = vadd.f32 0.0, %v1431
        %1433 = vdwg.mxu0
        %v1434 = vld [vmem:[#allocation9 + $0x100] sm:$0xff]
        %v1435 = vld [vmem:[#allocation9 + $0x108] sm:$0xff]
        %v1436 = vld [vmem:[#allocation9 + $0x110] sm:$0xff]
        %v1437 = vld [vmem:[#allocation9 + $0x118] sm:$0xff]
        %v1438 = vld [vmem:[#allocation9 + $0x120] sm:$0xff]
        %v1439 = vld [vmem:[#allocation9 + $0x128] sm:$0xff]
        %v1440 = vld [vmem:[#allocation9 + $0x130] sm:$0xff]
        %v1441 = vld [vmem:[#allocation9 + $0x138] sm:$0xff]
        %v1442 = vld [vmem:[#allocation9 + $0x140] sm:$0xff]
        %v1443 = vld [vmem:[#allocation9 + $0x148] sm:$0xff]
        %v1444 = vld [vmem:[#allocation9 + $0x150] sm:$0xff]
        %v1445 = vld [vmem:[#allocation9 + $0x158] sm:$0xff]
        %v1446 = vld [vmem:[#allocation9 + $0x160] sm:$0xff]
        %v1447 = vld [vmem:[#allocation9 + $0x168] sm:$0xff]
        %v1448 = vld [vmem:[#allocation9 + $0x170] sm:$0xff]
        %v1449 = vld [vmem:[#allocation9 + $0x178] sm:$0xff]
        %v1450 = vld [vmem:[#allocation9 + $0x180] sm:$0xff]
        %v1451 = vld [vmem:[#allocation9 + $0x188] sm:$0xff]
        %v1452 = vld [vmem:[#allocation9 + $0x190] sm:$0xff]
        %v1453 = vld [vmem:[#allocation9 + $0x198] sm:$0xff]
        %v1454 = vld [vmem:[#allocation9 + $0x1a0] sm:$0xff]
        %v1455 = vld [vmem:[#allocation9 + $0x1a8] sm:$0xff]
        %v1456 = vld [vmem:[#allocation9 + $0x1b0] sm:$0xff]
        %v1457 = vld [vmem:[#allocation9 + $0x1b8] sm:$0xff]
        %v1458 = vld [vmem:[#allocation9 + $0x1c0] sm:$0xff]
        %v1459 = vld [vmem:[#allocation9 + $0x1c8] sm:$0xff]
        %v1460 = vld [vmem:[#allocation9 + $0x1d0] sm:$0xff]
        %v1461 = vld [vmem:[#allocation9 + $0x1d8] sm:$0xff]
        %v1462 = vld [vmem:[#allocation9 + $0x1e0] sm:$0xff]
        %v1463 = vld [vmem:[#allocation9 + $0x1e8] sm:$0xff]
        %v1464 = vld [vmem:[#allocation9 + $0x1f0] sm:$0xff]
        %v1465 = vld [vmem:[#allocation9 + $0x1f8] sm:$0xff]
        %v1466 = vpack.c.bf16 %v1140, %v1139
        %v1467 = vpack.c.bf16 %v1142, %v1141
        %v1468 = vpack.c.bf16 %v1144, %v1143
        %v1469 = vpack.c.bf16 %v1146, %v1145
        %v1470 = vpack.c.bf16 %v1148, %v1147
        %v1503 = vunpack.c.l.b16 %v1434
        %v1504 = vunpack.c.h.b16 %v1434
        %v1505 = vunpack.c.l.b16 %v1435
        %v1506 = vunpack.c.h.b16 %v1435
        %v1507 = vunpack.c.l.b16 %v1436
        %v1508 = vunpack.c.h.b16 %v1436
        %v1509 = vunpack.c.l.b16 %v1437
        %v1510 = vunpack.c.h.b16 %v1437
        %v1511 = vunpack.c.l.b16 %v1438
        %v1512 = vunpack.c.h.b16 %v1438
        %v1513 = vunpack.c.l.b16 %v1439
        %v1514 = vunpack.c.h.b16 %v1439
        %v1515 = vunpack.c.l.b16 %v1440
        %v1516 = vunpack.c.h.b16 %v1440
        %v1517 = vunpack.c.l.b16 %v1441
        %v1518 = vunpack.c.h.b16 %v1441
        %v1519 = vunpack.c.l.b16 %v1442
        %v1520 = vunpack.c.h.b16 %v1442
        %v1521 = vunpack.c.l.b16 %v1443
        %v1522 = vunpack.c.h.b16 %v1443
        %v1523 = vunpack.c.l.b16 %v1444
        %v1524 = vunpack.c.h.b16 %v1444
        %v1525 = vunpack.c.l.b16 %v1445
        %v1526 = vunpack.c.h.b16 %v1445
        %v1527 = vunpack.c.l.b16 %v1446
        %v1528 = vunpack.c.h.b16 %v1446
        %v1529 = vunpack.c.l.b16 %v1447
        %v1530 = vunpack.c.h.b16 %v1447
        %v1531 = vunpack.c.l.b16 %v1448
        %v1532 = vunpack.c.h.b16 %v1448
        %v1533 = vunpack.c.l.b16 %v1449
        %v1534 = vunpack.c.h.b16 %v1449
        %v1535 = vunpack.c.l.b16 %v1450
        %v1536 = vunpack.c.h.b16 %v1450
        %v1537 = vunpack.c.l.b16 %v1451
        %v1538 = vunpack.c.h.b16 %v1451
        %v1539 = vunpack.c.l.b16 %v1452
        %v1540 = vunpack.c.h.b16 %v1452
        %v1541 = vunpack.c.l.b16 %v1453
        %v1542 = vunpack.c.h.b16 %v1453
        %v1543 = vunpack.c.l.b16 %v1454
        %v1544 = vunpack.c.h.b16 %v1454
        %v1545 = vunpack.c.l.b16 %v1455
        %v1546 = vunpack.c.h.b16 %v1455
        %v1547 = vunpack.c.l.b16 %v1456
        %v1548 = vunpack.c.h.b16 %v1456
        %v1549 = vunpack.c.l.b16 %v1457
        %v1550 = vunpack.c.h.b16 %v1457
        %v1551 = vunpack.c.l.b16 %v1458
        %v1552 = vunpack.c.h.b16 %v1458
        %v1553 = vunpack.c.l.b16 %v1459
        %v1554 = vunpack.c.h.b16 %v1459
        %v1555 = vunpack.c.l.b16 %v1460
        %v1556 = vunpack.c.h.b16 %v1460
        %v1557 = vunpack.c.l.b16 %v1461
        %v1558 = vunpack.c.h.b16 %v1461
        %v1559 = vunpack.c.l.b16 %v1462
        %v1560 = vunpack.c.h.b16 %v1462
        %v1561 = vunpack.c.l.b16 %v1463
        %v1562 = vunpack.c.h.b16 %v1463
        %v1563 = vunpack.c.l.b16 %v1464
        %v1564 = vunpack.c.h.b16 %v1464
        %v1565 = vunpack.c.l.b16 %v1465
        %v1566 = vunpack.c.h.b16 %v1465
        %v1567 = vpack.c.b16 %v1505, %v1503
        %v1568 = vpack.c.b16 %v1506, %v1504
        %v1569 = vpack.c.b16 %v1509, %v1507
        %v1570 = vpack.c.b16 %v1510, %v1508
        %v1571 = vpack.c.b16 %v1513, %v1511
        %v1572 = vpack.c.b16 %v1514, %v1512
        %v1573 = vpack.c.b16 %v1517, %v1515
        %v1574 = vpack.c.b16 %v1518, %v1516
        %v1575 = vpack.c.b16 %v1521, %v1519
        %v1576 = vpack.c.b16 %v1522, %v1520
        %v1577 = vpack.c.b16 %v1525, %v1523
        %v1578 = vpack.c.b16 %v1526, %v1524
        %v1579 = vpack.c.b16 %v1529, %v1527
        %v1580 = vpack.c.b16 %v1530, %v1528
        %v1581 = vpack.c.b16 %v1533, %v1531
        %v1582 = vpack.c.b16 %v1534, %v1532
        %v1583 = vpack.c.b16 %v1537, %v1535
        %v1584 = vpack.c.b16 %v1538, %v1536
        %v1585 = vpack.c.b16 %v1541, %v1539
        %v1586 = vpack.c.b16 %v1542, %v1540
        %v1587 = vpack.c.b16 %v1545, %v1543
        %v1588 = vpack.c.b16 %v1546, %v1544
        %v1589 = vpack.c.b16 %v1549, %v1547
        %v1590 = vpack.c.b16 %v1550, %v1548
        %v1591 = vpack.c.b16 %v1553, %v1551
        %v1592 = vpack.c.b16 %v1554, %v1552
        %v1593 = vpack.c.b16 %v1557, %v1555
        %v1594 = vpack.c.b16 %v1558, %v1556
        %v1595 = vpack.c.b16 %v1561, %v1559
        %v1596 = vpack.c.b16 %v1562, %v1560
        %v1597 = vpack.c.b16 %v1565, %v1563
        %v1598 = vpack.c.b16 %v1566, %v1564
        %1631 = vmatprep.subr.bf16.mxu0 %v1568
        %1632 = vmatpush1.bf16.msra.mxu0 %v1567
        %1633 = vmatprep.subr.bf16.mxu0 %v1570
        %1634 = vmatpush1.bf16.msra.mxu0 %v1569
        %1635 = vmatprep.subr.bf16.mxu0 %v1572
        %1636 = vmatpush1.bf16.msra.mxu0 %v1571
        %1637 = vmatprep.subr.bf16.mxu0 %v1574
        %1638 = vmatpush1.bf16.msra.mxu0 %v1573
        %1639 = vmatprep.subr.bf16.mxu0 %v1576
        %1640 = vmatpush1.bf16.msra.mxu0 %v1575
        %1641 = vmatprep.subr.bf16.mxu0 %v1578
        %1642 = vmatpush1.bf16.msra.mxu0 %v1577
        %1643 = vmatprep.subr.bf16.mxu0 %v1580
        %1644 = vmatpush1.bf16.msra.mxu0 %v1579
        %1645 = vmatprep.subr.bf16.mxu0 %v1582
        %1646 = vmatpush1.bf16.msra.mxu0 %v1581
        %1647 = vmatprep.subr.bf16.mxu0 %v1584
        %1648 = vmatpush1.bf16.msra.mxu0 %v1583
        %1649 = vmatprep.subr.bf16.mxu0 %v1586
        %1650 = vmatpush1.bf16.msra.mxu0 %v1585
        %1651 = vmatprep.subr.bf16.mxu0 %v1588
        %1652 = vmatpush1.bf16.msra.mxu0 %v1587
        %1653 = vmatprep.subr.bf16.mxu0 %v1590
        %1654 = vmatpush1.bf16.msra.mxu0 %v1589
        %1655 = vmatprep.subr.bf16.mxu0 %v1592
        %1656 = vmatpush1.bf16.msra.mxu0 %v1591
        %1657 = vmatprep.subr.bf16.mxu0 %v1594
        %1658 = vmatpush1.bf16.msra.mxu0 %v1593
        %1659 = vmatprep.subr.bf16.mxu0 %v1596
        %1660 = vmatpush1.bf16.msra.mxu0 %v1595
        %1661 = vmatprep.subr.bf16.mxu0 %v1598
        %1662 = vmatpush1.bf16.msra.mxu0 %v1597
        %1663 = vmatprep.mubr.bf16.mxu0 %v1181
        %1664 = vmatmul.mubr.bf16.gmra.mrb[0].mxu0 %v1466
        %v1665 = vpop.f32.mrb[0].mxu0
        %v1666 = vadd.f32 0.0, %v1665
        %v1667 = vpop.f32.mrb[0].mxu0
        %v1668 = vadd.f32 0.0, %v1667
        %v1669 = vpop.f32.mrb[0].mxu0
        %v1670 = vadd.f32 0.0, %v1669
        %v1671 = vpop.f32.mrb[0].mxu0
        %v1672 = vadd.f32 0.0, %v1671
        %1673 = vmatprep.mubr.bf16.mxu0 %v1183
        %1674 = vmatmul.mubr.bf16.gmra.mrb[0].mxu0 %v1467
        %v1675 = vpop.f32.mrb[0].mxu0
        %v1676 = vadd.f32 0.0, %v1675
        %v1677 = vpop.f32.mrb[0].mxu0
        %v1678 = vadd.f32 0.0, %v1677
        %v1679 = vpop.f32.mrb[0].mxu0
        %v1680 = vadd.f32 0.0, %v1679
        %v1681 = vpop.f32.mrb[0].mxu0
        %v1682 = vadd.f32 0.0, %v1681
        %1683 = vmatprep.mubr.bf16.mxu0 %v1185
        %1684 = vmatmul.mubr.bf16.gmra.mrb[0].mxu0 %v1468
        %v1685 = vpop.f32.mrb[0].mxu0
        %v1686 = vadd.f32 0.0, %v1685
        %v1687 = vpop.f32.mrb[0].mxu0
        %v1688 = vadd.f32 0.0, %v1687
        %v1689 = vpop.f32.mrb[0].mxu0
        %v1690 = vadd.f32 0.0, %v1689
        %v1691 = vpop.f32.mrb[0].mxu0
        %v1692 = vadd.f32 0.0, %v1691
        %1693 = vmatprep.mubr.bf16.mxu0 %v1187
        %1694 = vmatmul.mubr.bf16.gmra.mrb[0].mxu0 %v1469
        %v1695 = vpop.f32.mrb[0].mxu0
        %v1696 = vadd.f32 0.0, %v1695
        %v1697 = vpop.f32.mrb[0].mxu0
        %v1698 = vadd.f32 0.0, %v1697
        %v1699 = vpop.f32.mrb[0].mxu0
        %v1700 = vadd.f32 0.0, %v1699
        %v1701 = vpop.f32.mrb[0].mxu0
        %v1702 = vadd.f32 0.0, %v1701
        %1703 = vmatprep.mubr.bf16.mxu0 %v1189
        %1704 = vmatmul.mubr.bf16.gmra.mrb[0].mxu0 %v1470
        %v1705 = vpop.f32.mrb[0].mxu0
        %v1706 = vadd.f32 0.0, %v1705
        %v1707 = vpop.f32.mrb[0].mxu0
        %v1708 = vadd.f32 0.0, %v1707
        %v1709 = vpop.f32.mrb[0].mxu0
        %v1710 = vadd.f32 0.0, %v1709
        %v1711 = vpop.f32.mrb[0].mxu0
        %v1712 = vadd.f32 0.0, %v1711
        %1713 = vdwg.mxu0
        %v1714 = vadd.f32 %v1386, %v1390
        %v1715 = vadd.f32 %v1714, %v1396
        %v1716 = vadd.f32 %v1715, %v1400
        %v1717 = vadd.f32 %v1716, %v1406
        %v1718 = vadd.f32 %v1717, %v1410
        %v1719 = vadd.f32 %v1718, %v1416
        %v1720 = vadd.f32 %v1719, %v1420
        %v1721 = vadd.f32 %v1720, %v1426
        %v1722 = vadd.f32 %v1721, %v1430
        %v1723 = vadd.f32 %v1388, %v1392
        %v1724 = vadd.f32 %v1723, %v1398
        %v1725 = vadd.f32 %v1724, %v1402
        %v1726 = vadd.f32 %v1725, %v1408
        %v1727 = vadd.f32 %v1726, %v1412
        %v1728 = vadd.f32 %v1727, %v1418
        %v1729 = vadd.f32 %v1728, %v1422
        %v1730 = vadd.f32 %v1729, %v1428
        %v1731 = vadd.f32 %v1730, %v1432
        %v1732 = vadd.f32 %v1666, %v1670
        %v1733 = vadd.f32 %v1732, %v1676
        %v1734 = vadd.f32 %v1733, %v1680
        %v1735 = vadd.f32 %v1734, %v1686
        %v1736 = vadd.f32 %v1735, %v1690
        %v1737 = vadd.f32 %v1736, %v1696
        %v1738 = vadd.f32 %v1737, %v1700
        %v1739 = vadd.f32 %v1738, %v1706
        %v1740 = vadd.f32 %v1739, %v1710
        %v1741 = vadd.f32 %v1668, %v1672
        %v1742 = vadd.f32 %v1741, %v1678
        %v1743 = vadd.f32 %v1742, %v1682
        %v1744 = vadd.f32 %v1743, %v1688
        %v1745 = vadd.f32 %v1744, %v1692
        %v1746 = vadd.f32 %v1745, %v1698
        %v1747 = vadd.f32 %v1746, %v1702
        %v1748 = vadd.f32 %v1747, %v1708
        %v1749 = vadd.f32 %v1748, %v1712
        %v1750 = vadd.f32 %v1722, %v1740
        %v1751 = vadd.f32 %v1731, %v1749
        %v1752 = vrcp.pop 20.0
        %v1753 = vmul.f32 %v1750, %v1752
        %v1754 = vmul.f32 %v1751, %v1752
        %v1755 = vsub.f32 %v1386, %v1753
        %v1756 = vsub.f32 %v1388, %v1754
        %v1757 = vsub.f32 %v1390, %v1753
        %v1758 = vsub.f32 %v1392, %v1754
        %v1759 = vsub.f32 %v1396, %v1753
        %v1760 = vsub.f32 %v1398, %v1754
        %v1761 = vsub.f32 %v1400, %v1753
        %v1762 = vsub.f32 %v1402, %v1754
        %v1763 = vsub.f32 %v1406, %v1753
        %v1764 = vsub.f32 %v1408, %v1754
        %v1765 = vsub.f32 %v1410, %v1753
        %v1766 = vsub.f32 %v1412, %v1754
        %v1767 = vsub.f32 %v1416, %v1753
        %v1768 = vsub.f32 %v1418, %v1754
        %v1769 = vsub.f32 %v1420, %v1753
        %v1770 = vsub.f32 %v1422, %v1754
        %v1771 = vsub.f32 %v1426, %v1753
        %v1772 = vsub.f32 %v1428, %v1754
        %v1773 = vsub.f32 %v1430, %v1753
        %v1774 = vsub.f32 %v1432, %v1754
        %v1775 = vmul.f32 %v1755, %v1755
        %v1776 = vmul.f32 %v1756, %v1756
        %v1777 = vmul.f32 %v1757, %v1757
        %v1778 = vmul.f32 %v1758, %v1758
        %v1779 = vmul.f32 %v1759, %v1759
        %v1780 = vmul.f32 %v1760, %v1760
        %v1781 = vmul.f32 %v1761, %v1761
        %v1782 = vmul.f32 %v1762, %v1762
        %v1783 = vmul.f32 %v1763, %v1763
        %v1784 = vmul.f32 %v1764, %v1764
        %v1785 = vmul.f32 %v1765, %v1765
        %v1786 = vmul.f32 %v1766, %v1766
        %v1787 = vmul.f32 %v1767, %v1767
        %v1788 = vmul.f32 %v1768, %v1768
        %v1789 = vmul.f32 %v1769, %v1769
        %v1790 = vmul.f32 %v1770, %v1770
        %v1791 = vmul.f32 %v1771, %v1771
        %v1792 = vmul.f32 %v1772, %v1772
        %v1793 = vmul.f32 %v1773, %v1773
        %v1794 = vmul.f32 %v1774, %v1774
        %v1795 = vadd.f32 %v1775, %v1777
        %v1796 = vadd.f32 %v1795, %v1779
        %v1797 = vadd.f32 %v1796, %v1781
        %v1798 = vadd.f32 %v1797, %v1783
        %v1799 = vadd.f32 %v1798, %v1785
        %v1800 = vadd.f32 %v1799, %v1787
        %v1801 = vadd.f32 %v1800, %v1789
        %v1802 = vadd.f32 %v1801, %v1791
        %v1803 = vadd.f32 %v1802, %v1793
        %v1804 = vadd.f32 %v1776, %v1778
        %v1805 = vadd.f32 %v1804, %v1780
        %v1806 = vadd.f32 %v1805, %v1782
        %v1807 = vadd.f32 %v1806, %v1784
        %v1808 = vadd.f32 %v1807, %v1786
        %v1809 = vadd.f32 %v1808, %v1788
        %v1810 = vadd.f32 %v1809, %v1790
        %v1811 = vadd.f32 %v1810, %v1792
        %v1812 = vadd.f32 %v1811, %v1794
        %v1813 = vsub.f32 %v1666, %v1753
        %v1814 = vsub.f32 %v1668, %v1754
        %v1815 = vsub.f32 %v1670, %v1753
        %v1816 = vsub.f32 %v1672, %v1754
        %v1817 = vsub.f32 %v1676, %v1753
        %v1818 = vsub.f32 %v1678, %v1754
        %v1819 = vsub.f32 %v1680, %v1753
        %v1820 = vsub.f32 %v1682, %v1754
        %v1821 = vsub.f32 %v1686, %v1753
        %v1822 = vsub.f32 %v1688, %v1754
        %v1823 = vsub.f32 %v1690, %v1753
        %v1824 = vsub.f32 %v1692, %v1754
        %v1825 = vsub.f32 %v1696, %v1753
        %v1826 = vsub.f32 %v1698, %v1754
        %v1827 = vsub.f32 %v1700, %v1753
        %v1828 = vsub.f32 %v1702, %v1754
        %v1829 = vsub.f32 %v1706, %v1753
        %v1830 = vsub.f32 %v1708, %v1754
        %v1831 = vsub.f32 %v1710, %v1753
        %v1832 = vsub.f32 %v1712, %v1754
        %v1833 = vmul.f32 %v1813, %v1813
        %v1834 = vmul.f32 %v1814, %v1814
        %v1835 = vmul.f32 %v1815, %v1815
        %v1836 = vmul.f32 %v1816, %v1816
        %v1837 = vmul.f32 %v1817, %v1817
        %v1838 = vmul.f32 %v1818, %v1818
        %v1839 = vmul.f32 %v1819, %v1819
        %v1840 = vmul.f32 %v1820, %v1820
        %v1841 = vmul.f32 %v1821, %v1821
        %v1842 = vmul.f32 %v1822, %v1822
        %v1843 = vmul.f32 %v1823, %v1823
        %v1844 = vmul.f32 %v1824, %v1824
        %v1845 = vmul.f32 %v1825, %v1825
        %v1846 = vmul.f32 %v1826, %v1826
        %v1847 = vmul.f32 %v1827, %v1827
        %v1848 = vmul.f32 %v1828, %v1828
        %v1849 = vmul.f32 %v1829, %v1829
        %v1850 = vmul.f32 %v1830, %v1830
        %v1851 = vmul.f32 %v1831, %v1831
        %v1852 = vmul.f32 %v1832, %v1832
        %v1853 = vadd.f32 %v1833, %v1835
        %v1854 = vadd.f32 %v1853, %v1837
        %v1855 = vadd.f32 %v1854, %v1839
        %v1856 = vadd.f32 %v1855, %v1841
        %v1857 = vadd.f32 %v1856, %v1843
        %v1858 = vadd.f32 %v1857, %v1845
        %v1859 = vadd.f32 %v1858, %v1847
        %v1860 = vadd.f32 %v1859, %v1849
        %v1861 = vadd.f32 %v1860, %v1851
        %v1862 = vadd.f32 %v1834, %v1836
        %v1863 = vadd.f32 %v1862, %v1838
        %v1864 = vadd.f32 %v1863, %v1840
        %v1865 = vadd.f32 %v1864, %v1842
        %v1866 = vadd.f32 %v1865, %v1844
        %v1867 = vadd.f32 %v1866, %v1846
        %v1868 = vadd.f32 %v1867, %v1848
        %v1869 = vadd.f32 %v1868, %v1850
        %v1870 = vadd.f32 %v1869, %v1852
        %v1871 = vadd.f32 %v1803, %v1861
        %v1872 = vadd.f32 %v1812, %v1870
        %v1873 = vmul.f32 %v1871, %v1752
        %v1874 = vmul.f32 %v1872, %v1752
        %v1875 = vadd.f32 %v1873, 1e-05
        %v1876 = vadd.f32 %v1874, 1e-05
        %v1877 = vrsqrt.pop %v1875
        %v1878 = vrsqrt.pop %v1876
        %v1879 = vmul.f32 %v1755, %v1877
        %v1880 = vmul.f32 %v1756, %v1878
        %v1881 = vmul.f32 %v1757, %v1877
        %v1882 = vmul.f32 %v1758, %v1878
        %v1883 = vmul.f32 %v1759, %v1877
        %v1884 = vmul.f32 %v1760, %v1878
        %v1885 = vmul.f32 %v1761, %v1877
        %v1886 = vmul.f32 %v1762, %v1878
        %v1887 = vmul.f32 %v1763, %v1877
        %v1888 = vmul.f32 %v1764, %v1878
        %v1889 = vmul.f32 %v1765, %v1877
        %v1890 = vmul.f32 %v1766, %v1878
        %v1891 = vmul.f32 %v1767, %v1877
        %v1892 = vmul.f32 %v1768, %v1878
        %v1893 = vmul.f32 %v1769, %v1877
        %v1894 = vmul.f32 %v1770, %v1878
        %v1895 = vmul.f32 %v1771, %v1877
        %v1896 = vmul.f32 %v1772, %v1878
        %v1897 = vmul.f32 %v1773, %v1877
        %v1898 = vmul.f32 %v1774, %v1878
        %vm1899 = vcmp.ge.f32.partialorder %v1879, 0.0
        %vm1900 = vcmp.ge.f32.partialorder %v1880, 0.0
        %vm1901 = vcmp.ge.f32.partialorder %v1881, 0.0
        %vm1902 = vcmp.ge.f32.partialorder %v1882, 0.0
        %vm1903 = vcmp.ge.f32.partialorder %v1883, 0.0
        %vm1904 = vcmp.ge.f32.partialorder %v1884, 0.0
        %vm1905 = vcmp.ge.f32.partialorder %v1885, 0.0
        %vm1906 = vcmp.ge.f32.partialorder %v1886, 0.0
        %vm1907 = vcmp.ge.f32.partialorder %v1887, 0.0
        %vm1908 = vcmp.ge.f32.partialorder %v1888, 0.0
        %vm1909 = vcmp.ge.f32.partialorder %v1889, 0.0
        %vm1910 = vcmp.ge.f32.partialorder %v1890, 0.0
        %vm1911 = vcmp.ge.f32.partialorder %v1891, 0.0
        %vm1912 = vcmp.ge.f32.partialorder %v1892, 0.0
        %vm1913 = vcmp.ge.f32.partialorder %v1893, 0.0
        %vm1914 = vcmp.ge.f32.partialorder %v1894, 0.0
        %vm1915 = vcmp.ge.f32.partialorder %v1895, 0.0
        %vm1916 = vcmp.ge.f32.partialorder %v1896, 0.0
        %vm1917 = vcmp.ge.f32.partialorder %v1897, 0.0
        %vm1918 = vcmp.ge.f32.partialorder %v1898, 0.0
        %v1919 = vmul.f32 %v1879, 0.1
        %v1920 = vmul.f32 %v1880, 0.1
        %v1921 = vmul.f32 %v1881, 0.1
        %v1922 = vmul.f32 %v1882, 0.1
        %v1923 = vmul.f32 %v1883, 0.1
        %v1924 = vmul.f32 %v1884, 0.1
        %v1925 = vmul.f32 %v1885, 0.1
        %v1926 = vmul.f32 %v1886, 0.1
        %v1927 = vmul.f32 %v1887, 0.1
        %v1928 = vmul.f32 %v1888, 0.1
        %v1929 = vmul.f32 %v1889, 0.1
        %v1930 = vmul.f32 %v1890, 0.1
        %v1931 = vmul.f32 %v1891, 0.1
        %v1932 = vmul.f32 %v1892, 0.1
        %v1933 = vmul.f32 %v1893, 0.1
        %v1934 = vmul.f32 %v1894, 0.1
        %v1935 = vmul.f32 %v1895, 0.1
        %v1936 = vmul.f32 %v1896, 0.1
        %v1937 = vmul.f32 %v1897, 0.1
        %v1938 = vmul.f32 %v1898, 0.1
        %v1939 = vsel %vm1899, %v1879, %v1919
        %v1940 = vsel %vm1900, %v1880, %v1920
        %v1941 = vsel %vm1901, %v1881, %v1921
        %v1942 = vsel %vm1902, %v1882, %v1922
        %v1943 = vsel %vm1903, %v1883, %v1923
        %v1944 = vsel %vm1904, %v1884, %v1924
        %v1945 = vsel %vm1905, %v1885, %v1925
        %v1946 = vsel %vm1906, %v1886, %v1926
        %v1947 = vsel %vm1907, %v1887, %v1927
        %v1948 = vsel %vm1908, %v1888, %v1928
        %v1949 = vsel %vm1909, %v1889, %v1929
        %v1950 = vsel %vm1910, %v1890, %v1930
        %v1951 = vsel %vm1911, %v1891, %v1931
        %v1952 = vsel %vm1912, %v1892, %v1932
        %v1953 = vsel %vm1913, %v1893, %v1933
        %v1954 = vsel %vm1914, %v1894, %v1934
        %v1955 = vsel %vm1915, %v1895, %v1935
        %v1956 = vsel %vm1916, %v1896, %v1936
        %v1957 = vsel %vm1917, %v1897, %v1937
        %v1958 = vsel %vm1918, %v1898, %v1938
        %v1959 = vmul.f32 %v1813, %v1877
        %v1960 = vmul.f32 %v1814, %v1878
        %v1961 = vmul.f32 %v1815, %v1877
        %v1962 = vmul.f32 %v1816, %v1878
        %v1963 = vmul.f32 %v1817, %v1877
        %v1964 = vmul.f32 %v1818, %v1878
        %v1965 = vmul.f32 %v1819, %v1877
        %v1966 = vmul.f32 %v1820, %v1878
        %v1967 = vmul.f32 %v1821, %v1877
        %v1968 = vmul.f32 %v1822, %v1878
        %v1969 = vmul.f32 %v1823, %v1877
        %v1970 = vmul.f32 %v1824, %v1878
        %v1971 = vmul.f32 %v1825, %v1877
        %v1972 = vmul.f32 %v1826, %v1878
        %v1973 = vmul.f32 %v1827, %v1877
        %v1974 = vmul.f32 %v1828, %v1878
        %v1975 = vmul.f32 %v1829, %v1877
        %v1976 = vmul.f32 %v1830, %v1878
        %v1977 = vmul.f32 %v1831, %v1877
        %v1978 = vmul.f32 %v1832, %v1878
        %vm1979 = vcmp.ge.f32.partialorder %v1959, 0.0
        %vm1980 = vcmp.ge.f32.partialorder %v1960, 0.0
        %vm1981 = vcmp.ge.f32.partialorder %v1961, 0.0
        %vm1982 = vcmp.ge.f32.partialorder %v1962, 0.0
        %vm1983 = vcmp.ge.f32.partialorder %v1963, 0.0
        %vm1984 = vcmp.ge.f32.partialorder %v1964, 0.0
        %vm1985 = vcmp.ge.f32.partialorder %v1965, 0.0
        %vm1986 = vcmp.ge.f32.partialorder %v1966, 0.0
        %vm1987 = vcmp.ge.f32.partialorder %v1967, 0.0
        %vm1988 = vcmp.ge.f32.partialorder %v1968, 0.0
        %vm1989 = vcmp.ge.f32.partialorder %v1969, 0.0
        %vm1990 = vcmp.ge.f32.partialorder %v1970, 0.0
        %vm1991 = vcmp.ge.f32.partialorder %v1971, 0.0
        %vm1992 = vcmp.ge.f32.partialorder %v1972, 0.0
        %vm1993 = vcmp.ge.f32.partialorder %v1973, 0.0
        %vm1994 = vcmp.ge.f32.partialorder %v1974, 0.0
        %vm1995 = vcmp.ge.f32.partialorder %v1975, 0.0
        %vm1996 = vcmp.ge.f32.partialorder %v1976, 0.0
        %vm1997 = vcmp.ge.f32.partialorder %v1977, 0.0
        %vm1998 = vcmp.ge.f32.partialorder %v1978, 0.0
        %v1999 = vmul.f32 %v1959, 0.1
        %v2000 = vmul.f32 %v1960, 0.1
        %v2001 = vmul.f32 %v1961, 0.1
        %v2002 = vmul.f32 %v1962, 0.1
        %v2003 = vmul.f32 %v1963, 0.1
        %v2004 = vmul.f32 %v1964, 0.1
        %v2005 = vmul.f32 %v1965, 0.1
        %v2006 = vmul.f32 %v1966, 0.1
        %v2007 = vmul.f32 %v1967, 0.1
        %v2008 = vmul.f32 %v1968, 0.1
        %v2009 = vmul.f32 %v1969, 0.1
        %v2010 = vmul.f32 %v1970, 0.1
        %v2011 = vmul.f32 %v1971, 0.1
        %v2012 = vmul.f32 %v1972, 0.1
        %v2013 = vmul.f32 %v1973, 0.1
        %v2014 = vmul.f32 %v1974, 0.1
        %v2015 = vmul.f32 %v1975, 0.1
        %v2016 = vmul.f32 %v1976, 0.1
        %v2017 = vmul.f32 %v1977, 0.1
        %v2018 = vmul.f32 %v1978, 0.1
        %v2019 = vsel %vm1979, %v1959, %v1999
        %v2020 = vsel %vm1980, %v1960, %v2000
        %v2021 = vsel %vm1981, %v1961, %v2001
        %v2022 = vsel %vm1982, %v1962, %v2002
        %v2023 = vsel %vm1983, %v1963, %v2003
        %v2024 = vsel %vm1984, %v1964, %v2004
        %v2025 = vsel %vm1985, %v1965, %v2005
        %v2026 = vsel %vm1986, %v1966, %v2006
        %v2027 = vsel %vm1987, %v1967, %v2007
        %v2028 = vsel %vm1988, %v1968, %v2008
        %v2029 = vsel %vm1989, %v1969, %v2009
        %v2030 = vsel %vm1990, %v1970, %v2010
        %v2031 = vsel %vm1991, %v1971, %v2011
        %v2032 = vsel %vm1992, %v1972, %v2012
        %v2033 = vsel %vm1993, %v1973, %v2013
        %v2034 = vsel %vm1994, %v1974, %v2014
        %v2035 = vsel %vm1995, %v1975, %v2015
        %v2036 = vsel %vm1996, %v1976, %v2016
        %v2037 = vsel %vm1997, %v1977, %v2017
        %v2038 = vsel %vm1998, %v1978, %v2018
        %s2039 = scalar_lea.vmem [#allocation4], 32
        %2040 = vst [vmem:[%s2039] sm:$0xff] %v1939
        %2041 = vst [vmem:[%s2039 + $0x8] sm:$0xff] %v1940
        %s2042 = scalar_lea.vmem [#allocation4], 48
        %2043 = vst [vmem:[%s2042] sm:$0xff] %v2019
        %2044 = vst [vmem:[%s2042 + $0x8] sm:$0xff] %v2020
        %s2045 = scalar_lea.vmem [#allocation4], 64
        %2046 = vst [vmem:[%s2045] sm:$0xff] %v1941
        %2047 = vst [vmem:[%s2045 + $0x8] sm:$0xff] %v1942
        %s2048 = scalar_lea.vmem [#allocation4], 80
        %2049 = vst [vmem:[%s2048] sm:$0xff] %v2021
        %2050 = vst [vmem:[%s2048 + $0x8] sm:$0xff] %v2022
        %s2051 = scalar_lea.vmem [#allocation4], 96
        %2052 = vst [vmem:[%s2051] sm:$0xff] %v1943
        %2053 = vst [vmem:[%s2051 + $0x8] sm:$0xff] %v1944
        %s2054 = scalar_lea.vmem [#allocation4], 112
        %2055 = vst [vmem:[%s2054] sm:$0xff] %v2023
        %2056 = vst [vmem:[%s2054 + $0x8] sm:$0xff] %v2024
        %s2057 = scalar_lea.vmem [#allocation4], 128
        %2058 = vst [vmem:[%s2057] sm:$0xff] %v1945
        %2059 = vst [vmem:[%s2057 + $0x8] sm:$0xff] %v1946
        %s2060 = scalar_lea.vmem [#allocation4], 144
        %2061 = vst [vmem:[%s2060] sm:$0xff] %v2025
        %2062 = vst [vmem:[%s2060 + $0x8] sm:$0xff] %v2026
        %s2063 = scalar_lea.vmem [#allocation4], 160
        %2064 = vst [vmem:[%s2063] sm:$0xff] %v1947
        %2065 = vst [vmem:[%s2063 + $0x8] sm:$0xff] %v1948
        %s2066 = scalar_lea.vmem [#allocation4], 176
        %2067 = vst [vmem:[%s2066] sm:$0xff] %v2027
        %2068 = vst [vmem:[%s2066 + $0x8] sm:$0xff] %v2028
        %s2069 = scalar_lea.vmem [#allocation4], 192
        %2070 = vst [vmem:[%s2069] sm:$0xff] %v1949
        %2071 = vst [vmem:[%s2069 + $0x8] sm:$0xff] %v1950
        %s2072 = scalar_lea.vmem [#allocation4], 208
        %2073 = vst [vmem:[%s2072] sm:$0xff] %v2029
        %2074 = vst [vmem:[%s2072 + $0x8] sm:$0xff] %v2030
        %s2075 = scalar_lea.vmem [#allocation4], 224
        %2076 = vst [vmem:[%s2075] sm:$0xff] %v1951
        %2077 = vst [vmem:[%s2075 + $0x8] sm:$0xff] %v1952
        %s2078 = scalar_lea.vmem [#allocation4], 240
        %2079 = vst [vmem:[%s2078] sm:$0xff] %v2031
        %2080 = vst [vmem:[%s2078 + $0x8] sm:$0xff] %v2032
        %s2081 = scalar_lea.vmem [#allocation4], 256
        %2082 = vst [vmem:[%s2081] sm:$0xff] %v1953
        %2083 = vst [vmem:[%s2081 + $0x8] sm:$0xff] %v1954
        %s2084 = scalar_lea.vmem [#allocation4], 272
        %2085 = vst [vmem:[%s2084] sm:$0xff] %v2033
        %2086 = vst [vmem:[%s2084 + $0x8] sm:$0xff] %v2034
        %s2087 = scalar_lea.vmem [#allocation4], 288
        %2088 = vst [vmem:[%s2087] sm:$0xff] %v1955
        %2089 = vst [vmem:[%s2087 + $0x8] sm:$0xff] %v1956
        %s2090 = scalar_lea.vmem [#allocation4], 304
        %2091 = vst [vmem:[%s2090] sm:$0xff] %v2035
        %2092 = vst [vmem:[%s2090 + $0x8] sm:$0xff] %v2036
        %s2093 = scalar_lea.vmem [#allocation4], 320
        %2094 = vst [vmem:[%s2093] sm:$0xff] %v1957
        %2095 = vst [vmem:[%s2093 + $0x8] sm:$0xff] %v1958
        %s2096 = scalar_lea.vmem [#allocation4], 336
        %2097 = vst [vmem:[%s2096] sm:$0xff] %v2037
        %2098 = vst [vmem:[%s2096 + $0x8] sm:$0xff] %v2038
        %v2099 = vld [vmem:[#allocation4] sm:$0xff]
        %v2100 = vld [vmem:[#allocation4 + $0x8] sm:$0xff]
        %v2101 = vld [vmem:[#allocation4 + $0x10] sm:$0xff]
        %v2102 = vld [vmem:[#allocation4 + $0x18] sm:$0xff]
        %v2103 = vld [vmem:[#allocation4 + $0x20] sm:$0xff]
        %v2104 = vld [vmem:[#allocation4 + $0x28] sm:$0xff]
        %v2105 = vld [vmem:[#allocation4 + $0x30] sm:$0xff]
        %v2106 = vld [vmem:[#allocation4 + $0x38] sm:$0xff]
        %v2107 = vld [vmem:[#allocation4 + $0x40] sm:$0xff]
        %v2108 = vld [vmem:[#allocation4 + $0x48] sm:$0xff]
        %v2109 = vld [vmem:[#allocation4 + $0x50] sm:$0xff]
        %v2110 = vld [vmem:[#allocation4 + $0x58] sm:$0xff]
        %v2111 = vld [vmem:[#allocation4 + $0x60] sm:$0xff]
        %v2112 = vld [vmem:[#allocation4 + $0x68] sm:$0xff]
        %v2113 = vld [vmem:[#allocation4 + $0x70] sm:$0xff]
        %v2114 = vld [vmem:[#allocation4 + $0x78] sm:$0xff]
        %v2115 = vld [vmem:[#allocation4 + $0x80] sm:$0xff]
        %v2116 = vld [vmem:[#allocation4 + $0x88] sm:$0xff]
        %v2117 = vld [vmem:[#allocation4 + $0x90] sm:$0xff]
        %v2118 = vld [vmem:[#allocation4 + $0x98] sm:$0xff]
        %v2119 = vld [vmem:[#allocation4 + $0xa0] sm:$0xff]
        %v2120 = vld [vmem:[#allocation4 + $0xa8] sm:$0xff]
        %v2121 = vld [vmem:[#allocation4 + $0xb0] sm:$0xff]
        %v2122 = vld [vmem:[#allocation4 + $0xb8] sm:$0xff]
        %v2123 = vld [vmem:[#allocation4 + $0xc0] sm:$0xff]
        %v2124 = vld [vmem:[#allocation4 + $0xc8] sm:$0xff]
        %v2125 = vld [vmem:[#allocation4 + $0xd0] sm:$0xff]
        %v2126 = vld [vmem:[#allocation4 + $0xd8] sm:$0xff]
        %v2127 = vld [vmem:[#allocation4 + $0xe0] sm:$0xff]
        %v2128 = vld [vmem:[#allocation4 + $0xe8] sm:$0xff]
        %v2129 = vld [vmem:[#allocation4 + $0xf0] sm:$0xff]
        %v2130 = vld [vmem:[#allocation4 + $0xf8] sm:$0xff]
        %v2131 = vld [vmem:[#allocation4 + $0x100] sm:$0xff]
        %v2132 = vld [vmem:[#allocation4 + $0x108] sm:$0xff]
        %v2133 = vld [vmem:[#allocation4 + $0x110] sm:$0xff]
        %v2134 = vld [vmem:[#allocation4 + $0x118] sm:$0xff]
        %v2135 = vld [vmem:[#allocation4 + $0x120] sm:$0xff]
        %v2136 = vld [vmem:[#allocation4 + $0x128] sm:$0xff]
        %v2137 = vld [vmem:[#allocation4 + $0x130] sm:$0xff]
        %v2138 = vld [vmem:[#allocation4 + $0x138] sm:$0xff]
        %v2139 = vpack.c.bf16 %v2101, %v2099
        %v2140 = vpack.c.bf16 %v2102, %v2100
        %v2141 = vpack.c.bf16 %v2105, %v2103
        %v2142 = vpack.c.bf16 %v2106, %v2104
        %v2143 = vpack.c.bf16 %v2109, %v2107
        %v2144 = vpack.c.bf16 %v2110, %v2108
        %v2145 = vpack.c.bf16 %v2113, %v2111
        %v2146 = vpack.c.bf16 %v2114, %v2112
        %v2147 = vpack.c.bf16 %v2117, %v2115
        %v2148 = vpack.c.bf16 %v2118, %v2116
        %v2149 = vpack.c.bf16 %v2121, %v2119
        %v2150 = vpack.c.bf16 %v2122, %v2120
        %v2151 = vpack.c.bf16 %v2125, %v2123
        %v2152 = vpack.c.bf16 %v2126, %v2124
        %v2153 = vpack.c.bf16 %v2129, %v2127
        %v2154 = vpack.c.bf16 %v2130, %v2128
        %v2155 = vpack.c.bf16 %v2133, %v2131
        %v2156 = vpack.c.bf16 %v2134, %v2132
        %v2157 = vpack.c.bf16 %v2137, %v2135
        %v2158 = vpack.c.bf16 %v2138, %v2136
        %s2159 = scalar_lea.vmem [#allocation4], 16
        %v2160 = vld [vmem:[%s2159] sm:$0xff]
        %v2161 = vld [vmem:[%s2159 + $0x8] sm:$0xff]
        %v2162 = vld [vmem:[%s2159 + $0x10] sm:$0xff]
        %v2163 = vld [vmem:[%s2159 + $0x18] sm:$0xff]
        %v2164 = vld [vmem:[%s2159 + $0x20] sm:$0xff]
        %v2165 = vld [vmem:[%s2159 + $0x28] sm:$0xff]
        %v2166 = vld [vmem:[%s2159 + $0x30] sm:$0xff]
        %v2167 = vld [vmem:[%s2159 + $0x38] sm:$0xff]
        %v2168 = vld [vmem:[%s2159 + $0x40] sm:$0xff]
        %v2169 = vld [vmem:[%s2159 + $0x48] sm:$0xff]
        %v2170 = vld [vmem:[%s2159 + $0x50] sm:$0xff]
        %v2171 = vld [vmem:[%s2159 + $0x58] sm:$0xff]
        %v2172 = vld [vmem:[%s2159 + $0x60] sm:$0xff]
        %v2173 = vld [vmem:[%s2159 + $0x68] sm:$0xff]
        %v2174 = vld [vmem:[%s2159 + $0x70] sm:$0xff]
        %v2175 = vld [vmem:[%s2159 + $0x78] sm:$0xff]
        %v2176 = vld [vmem:[%s2159 + $0x80] sm:$0xff]
        %v2177 = vld [vmem:[%s2159 + $0x88] sm:$0xff]
        %v2178 = vld [vmem:[%s2159 + $0x90] sm:$0xff]
        %v2179 = vld [vmem:[%s2159 + $0x98] sm:$0xff]
        %v2180 = vld [vmem:[%s2159 + $0xa0] sm:$0xff]
        %v2181 = vld [vmem:[%s2159 + $0xa8] sm:$0xff]
        %v2182 = vld [vmem:[%s2159 + $0xb0] sm:$0xff]
        %v2183 = vld [vmem:[%s2159 + $0xb8] sm:$0xff]
        %v2184 = vld [vmem:[%s2159 + $0xc0] sm:$0xff]
        %v2185 = vld [vmem:[%s2159 + $0xc8] sm:$0xff]
        %v2186 = vld [vmem:[%s2159 + $0xd0] sm:$0xff]
        %v2187 = vld [vmem:[%s2159 + $0xd8] sm:$0xff]
        %v2188 = vld [vmem:[%s2159 + $0xe0] sm:$0xff]
        %v2189 = vld [vmem:[%s2159 + $0xe8] sm:$0xff]
        %v2190 = vld [vmem:[%s2159 + $0xf0] sm:$0xff]
        %v2191 = vld [vmem:[%s2159 + $0xf8] sm:$0xff]
        %v2192 = vld [vmem:[%s2159 + $0x100] sm:$0xff]
        %v2193 = vld [vmem:[%s2159 + $0x108] sm:$0xff]
        %v2194 = vld [vmem:[%s2159 + $0x110] sm:$0xff]
        %v2195 = vld [vmem:[%s2159 + $0x118] sm:$0xff]
        %v2196 = vld [vmem:[%s2159 + $0x120] sm:$0xff]
        %v2197 = vld [vmem:[%s2159 + $0x128] sm:$0xff]
        %v2198 = vld [vmem:[%s2159 + $0x130] sm:$0xff]
        %v2199 = vld [vmem:[%s2159 + $0x138] sm:$0xff]
        %v2200 = vpack.c.bf16 %v2162, %v2160
        %v2201 = vpack.c.bf16 %v2163, %v2161
        %v2202 = vpack.c.bf16 %v2166, %v2164
        %v2203 = vpack.c.bf16 %v2167, %v2165
        %v2204 = vpack.c.bf16 %v2170, %v2168
        %v2205 = vpack.c.bf16 %v2171, %v2169
        %v2206 = vpack.c.bf16 %v2174, %v2172
        %v2207 = vpack.c.bf16 %v2175, %v2173
        %v2208 = vpack.c.bf16 %v2178, %v2176
        %v2209 = vpack.c.bf16 %v2179, %v2177
        %v2210 = vpack.c.bf16 %v2182, %v2180
        %v2211 = vpack.c.bf16 %v2183, %v2181
        %v2212 = vpack.c.bf16 %v2186, %v2184
        %v2213 = vpack.c.bf16 %v2187, %v2185
        %v2214 = vpack.c.bf16 %v2190, %v2188
        %v2215 = vpack.c.bf16 %v2191, %v2189
        %v2216 = vpack.c.bf16 %v2194, %v2192
        %v2217 = vpack.c.bf16 %v2195, %v2193
        %v2218 = vpack.c.bf16 %v2198, %v2196
        %v2219 = vpack.c.bf16 %v2199, %v2197
        %v2220 = vld [vmem:[%s2039] sm:$0xff]
        %v2221 = vld [vmem:[%s2039 + $0x8] sm:$0xff]
        %v2222 = vld [vmem:[%s2039 + $0x10] sm:$0xff]
        %v2223 = vld [vmem:[%s2039 + $0x18] sm:$0xff]
        %v2224 = vld [vmem:[%s2039 + $0x20] sm:$0xff]
        %v2225 = vld [vmem:[%s2039 + $0x28] sm:$0xff]
        %v2226 = vld [vmem:[%s2039 + $0x30] sm:$0xff]
        %v2227 = vld [vmem:[%s2039 + $0x38] sm:$0xff]
        %v2228 = vld [vmem:[%s2039 + $0x40] sm:$0xff]
        %v2229 = vld [vmem:[%s2039 + $0x48] sm:$0xff]
        %v2230 = vld [vmem:[%s2039 + $0x50] sm:$0xff]
        %v2231 = vld [vmem:[%s2039 + $0x58] sm:$0xff]
        %v2232 = vld [vmem:[%s2039 + $0x60] sm:$0xff]
        %v2233 = vld [vmem:[%s2039 + $0x68] sm:$0xff]
        %v2234 = vld [vmem:[%s2039 + $0x70] sm:$0xff]
        %v2235 = vld [vmem:[%s2039 + $0x78] sm:$0xff]
        %v2236 = vld [vmem:[%s2039 + $0x80] sm:$0xff]
        %v2237 = vld [vmem:[%s2039 + $0x88] sm:$0xff]
        %v2238 = vld [vmem:[%s2039 + $0x90] sm:$0xff]
        %v2239 = vld [vmem:[%s2039 + $0x98] sm:$0xff]
        %v2240 = vld [vmem:[%s2039 + $0xa0] sm:$0xff]
        %v2241 = vld [vmem:[%s2039 + $0xa8] sm:$0xff]
        %v2242 = vld [vmem:[%s2039 + $0xb0] sm:$0xff]
        %v2243 = vld [vmem:[%s2039 + $0xb8] sm:$0xff]
        %v2244 = vld [vmem:[%s2039 + $0xc0] sm:$0xff]
        %v2245 = vld [vmem:[%s2039 + $0xc8] sm:$0xff]
        %v2246 = vld [vmem:[%s2039 + $0xd0] sm:$0xff]
        %v2247 = vld [vmem:[%s2039 + $0xd8] sm:$0xff]
        %v2248 = vld [vmem:[%s2039 + $0xe0] sm:$0xff]
        %v2249 = vld [vmem:[%s2039 + $0xe8] sm:$0xff]
        %v2250 = vld [vmem:[%s2039 + $0xf0] sm:$0xff]
        %v2251 = vld [vmem:[%s2039 + $0xf8] sm:$0xff]
        %v2252 = vld [vmem:[%s2039 + $0x100] sm:$0xff]
        %v2253 = vld [vmem:[%s2039 + $0x108] sm:$0xff]
        %v2254 = vld [vmem:[%s2039 + $0x110] sm:$0xff]
        %v2255 = vld [vmem:[%s2039 + $0x118] sm:$0xff]
        %v2256 = vld [vmem:[%s2039 + $0x120] sm:$0xff]
        %v2257 = vld [vmem:[%s2039 + $0x128] sm:$0xff]
        %v2258 = vld [vmem:[%s2039 + $0x130] sm:$0xff]
        %v2259 = vld [vmem:[%s2039 + $0x138] sm:$0xff]
        %v2260 = vpack.c.bf16 %v2222, %v2220
        %v2261 = vpack.c.bf16 %v2223, %v2221
        %v2262 = vpack.c.bf16 %v2226, %v2224
        %v2263 = vpack.c.bf16 %v2227, %v2225
        %v2264 = vpack.c.bf16 %v2230, %v2228
        %v2265 = vpack.c.bf16 %v2231, %v2229
        %v2266 = vpack.c.bf16 %v2234, %v2232
        %v2267 = vpack.c.bf16 %v2235, %v2233
        %v2268 = vpack.c.bf16 %v2238, %v2236
        %v2269 = vpack.c.bf16 %v2239, %v2237
        %v2270 = vpack.c.bf16 %v2242, %v2240
        %v2271 = vpack.c.bf16 %v2243, %v2241
        %v2272 = vpack.c.bf16 %v2246, %v2244
        %v2273 = vpack.c.bf16 %v2247, %v2245
        %v2274 = vpack.c.bf16 %v2250, %v2248
        %v2275 = vpack.c.bf16 %v2251, %v2249
        %v2276 = vpack.c.bf16 %v2254, %v2252
        %v2277 = vpack.c.bf16 %v2255, %v2253
        %v2278 = vpack.c.bf16 %v2258, %v2256
        %v2279 = vpack.c.bf16 %v2259, %v2257
        %v2280 = vld [vmem:[%s2042] sm:$0xff]
        %v2281 = vld [vmem:[%s2042 + $0x8] sm:$0xff]
        %v2282 = vld [vmem:[%s2042 + $0x10] sm:$0xff]
        %v2283 = vld [vmem:[%s2042 + $0x18] sm:$0xff]
        %v2284 = vld [vmem:[%s2042 + $0x20] sm:$0xff]
        %v2285 = vld [vmem:[%s2042 + $0x28] sm:$0xff]
        %v2286 = vld [vmem:[%s2042 + $0x30] sm:$0xff]
        %v2287 = vld [vmem:[%s2042 + $0x38] sm:$0xff]
        %v2288 = vld [vmem:[%s2042 + $0x40] sm:$0xff]
        %v2289 = vld [vmem:[%s2042 + $0x48] sm:$0xff]
        %v2290 = vld [vmem:[%s2042 + $0x50] sm:$0xff]
        %v2291 = vld [vmem:[%s2042 + $0x58] sm:$0xff]
        %v2292 = vld [vmem:[%s2042 + $0x60] sm:$0xff]
        %v2293 = vld [vmem:[%s2042 + $0x68] sm:$0xff]
        %v2294 = vld [vmem:[%s2042 + $0x70] sm:$0xff]
        %v2295 = vld [vmem:[%s2042 + $0x78] sm:$0xff]
        %v2296 = vld [vmem:[%s2042 + $0x80] sm:$0xff]
        %v2297 = vld [vmem:[%s2042 + $0x88] sm:$0xff]
        %v2298 = vld [vmem:[%s2042 + $0x90] sm:$0xff]
        %v2299 = vld [vmem:[%s2042 + $0x98] sm:$0xff]
        %v2300 = vld [vmem:[%s2042 + $0xa0] sm:$0xff]
        %v2301 = vld [vmem:[%s2042 + $0xa8] sm:$0xff]
        %v2302 = vld [vmem:[%s2042 + $0xb0] sm:$0xff]
        %v2303 = vld [vmem:[%s2042 + $0xb8] sm:$0xff]
        %v2304 = vld [vmem:[%s2042 + $0xc0] sm:$0xff]
        %v2305 = vld [vmem:[%s2042 + $0xc8] sm:$0xff]
        %v2306 = vld [vmem:[%s2042 + $0xd0] sm:$0xff]
        %v2307 = vld [vmem:[%s2042 + $0xd8] sm:$0xff]
        %v2308 = vld [vmem:[%s2042 + $0xe0] sm:$0xff]
        %v2309 = vld [vmem:[%s2042 + $0xe8] sm:$0xff]
        %v2310 = vld [vmem:[%s2042 + $0xf0] sm:$0xff]
        %v2311 = vld [vmem:[%s2042 + $0xf8] sm:$0xff]
        %v2312 = vld [vmem:[%s2042 + $0x100] sm:$0xff]
        %v2313 = vld [vmem:[%s2042 + $0x108] sm:$0xff]
        %v2314 = vld [vmem:[%s2042 + $0x110] sm:$0xff]
        %v2315 = vld [vmem:[%s2042 + $0x118] sm:$0xff]
        %v2316 = vld [vmem:[%s2042 + $0x120] sm:$0xff]
        %v2317 = vld [vmem:[%s2042 + $0x128] sm:$0xff]
        %v2318 = vld [vmem:[%s2042 + $0x130] sm:$0xff]
        %v2319 = vld [vmem:[%s2042 + $0x138] sm:$0xff]
        %v2320 = vpack.c.bf16 %v2282, %v2280
        %v2321 = vpack.c.bf16 %v2283, %v2281
        %v2322 = vpack.c.bf16 %v2286, %v2284
        %v2323 = vpack.c.bf16 %v2287, %v2285
        %v2324 = vpack.c.bf16 %v2290, %v2288
        %v2325 = vpack.c.bf16 %v2291, %v2289
        %v2326 = vpack.c.bf16 %v2294, %v2292
        %v2327 = vpack.c.bf16 %v2295, %v2293
        %v2328 = vpack.c.bf16 %v2298, %v2296
        %v2329 = vpack.c.bf16 %v2299, %v2297
        %v2330 = vpack.c.bf16 %v2302, %v2300
        %v2331 = vpack.c.bf16 %v2303, %v2301
        %v2332 = vpack.c.bf16 %v2306, %v2304
        %v2333 = vpack.c.bf16 %v2307, %v2305
        %v2334 = vpack.c.bf16 %v2310, %v2308
        %v2335 = vpack.c.bf16 %v2311, %v2309
        %v2336 = vpack.c.bf16 %v2314, %v2312
        %v2337 = vpack.c.bf16 %v2315, %v2313
        %v2338 = vpack.c.bf16 %v2318, %v2316
        %v2339 = vpack.c.bf16 %v2319, %v2317
        %v2340 = vld [vmem:[%s2045] sm:$0xff]
        %v2341 = vld [vmem:[%s2045 + $0x8] sm:$0xff]
        %v2342 = vld [vmem:[%s2045 + $0x10] sm:$0xff]
        %v2343 = vld [vmem:[%s2045 + $0x18] sm:$0xff]
        %v2344 = vld [vmem:[%s2045 + $0x20] sm:$0xff]
        %v2345 = vld [vmem:[%s2045 + $0x28] sm:$0xff]
        %v2346 = vld [vmem:[%s2045 + $0x30] sm:$0xff]
        %v2347 = vld [vmem:[%s2045 + $0x38] sm:$0xff]
        %v2348 = vld [vmem:[%s2045 + $0x40] sm:$0xff]
        %v2349 = vld [vmem:[%s2045 + $0x48] sm:$0xff]
        %v2350 = vld [vmem:[%s2045 + $0x50] sm:$0xff]
        %v2351 = vld [vmem:[%s2045 + $0x58] sm:$0xff]
        %v2352 = vld [vmem:[%s2045 + $0x60] sm:$0xff]
        %v2353 = vld [vmem:[%s2045 + $0x68] sm:$0xff]
        %v2354 = vld [vmem:[%s2045 + $0x70] sm:$0xff]
        %v2355 = vld [vmem:[%s2045 + $0x78] sm:$0xff]
        %v2356 = vld [vmem:[%s2045 + $0x80] sm:$0xff]
        %v2357 = vld [vmem:[%s2045 + $0x88] sm:$0xff]
        %v2358 = vld [vmem:[%s2045 + $0x90] sm:$0xff]
        %v2359 = vld [vmem:[%s2045 + $0x98] sm:$0xff]
        %v2360 = vld [vmem:[%s2045 + $0xa0] sm:$0xff]
        %v2361 = vld [vmem:[%s2045 + $0xa8] sm:$0xff]
        %v2362 = vld [vmem:[%s2045 + $0xb0] sm:$0xff]
        %v2363 = vld [vmem:[%s2045 + $0xb8] sm:$0xff]
        %v2364 = vld [vmem:[%s2045 + $0xc0] sm:$0xff]
        %v2365 = vld [vmem:[%s2045 + $0xc8] sm:$0xff]
        %v2366 = vld [vmem:[%s2045 + $0xd0] sm:$0xff]
        %v2367 = vld [vmem:[%s2045 + $0xd8] sm:$0xff]
        %v2368 = vld [vmem:[%s2045 + $0xe0] sm:$0xff]
        %v2369 = vld [vmem:[%s2045 + $0xe8] sm:$0xff]
        %v2370 = vld [vmem:[%s2045 + $0xf0] sm:$0xff]
        %v2371 = vld [vmem:[%s2045 + $0xf8] sm:$0xff]
        %v2372 = vld [vmem:[%s2045 + $0x100] sm:$0xff]
        %v2373 = vld [vmem:[%s2045 + $0x108] sm:$0xff]
        %v2374 = vld [vmem:[%s2045 + $0x110] sm:$0xff]
        %v2375 = vld [vmem:[%s2045 + $0x118] sm:$0xff]
        %v2376 = vld [vmem:[%s2045 + $0x120] sm:$0xff]
        %v2377 = vld [vmem:[%s2045 + $0x128] sm:$0xff]
        %v2378 = vld [vmem:[%s2045 + $0x130] sm:$0xff]
        %v2379 = vld [vmem:[%s2045 + $0x138] sm:$0xff]
        %v2380 = vpack.c.bf16 %v2342, %v2340
        %v2381 = vpack.c.bf16 %v2343, %v2341
        %v2382 = vpack.c.bf16 %v2346, %v2344
        %v2383 = vpack.c.bf16 %v2347, %v2345
        %v2384 = vpack.c.bf16 %v2350, %v2348
        %v2385 = vpack.c.bf16 %v2351, %v2349
        %v2386 = vpack.c.bf16 %v2354, %v2352
        %v2387 = vpack.c.bf16 %v2355, %v2353
        %v2388 = vpack.c.bf16 %v2358, %v2356
        %v2389 = vpack.c.bf16 %v2359, %v2357
        %v2390 = vpack.c.bf16 %v2362, %v2360
        %v2391 = vpack.c.bf16 %v2363, %v2361
        %v2392 = vpack.c.bf16 %v2366, %v2364
        %v2393 = vpack.c.bf16 %v2367, %v2365
        %v2394 = vpack.c.bf16 %v2370, %v2368
        %v2395 = vpack.c.bf16 %v2371, %v2369
        %v2396 = vpack.c.bf16 %v2374, %v2372
        %v2397 = vpack.c.bf16 %v2375, %v2373
        %v2398 = vpack.c.bf16 %v2378, %v2376
        %v2399 = vpack.c.bf16 %v2379, %v2377
        %v2400 = vld [vmem:[#allocation10] sm:$0xff]
        %v2401 = vld [vmem:[#allocation10 + $0x8] sm:$0xff]
        %v2402 = vld [vmem:[#allocation10 + $0x10] sm:$0xff]
        %v2403 = vld [vmem:[#allocation10 + $0x18] sm:$0xff]
        %v2404 = vld [vmem:[#allocation10 + $0x20] sm:$0xff]
        %v2405 = vld [vmem:[#allocation10 + $0x28] sm:$0xff]
        %v2406 = vld [vmem:[#allocation10 + $0x30] sm:$0xff]
        %v2407 = vld [vmem:[#allocation10 + $0x38] sm:$0xff]
        %v2408 = vld [vmem:[#allocation10 + $0x40] sm:$0xff]
        %v2409 = vld [vmem:[#allocation10 + $0x48] sm:$0xff]
        %v2410 = vld [vmem:[#allocation10 + $0x50] sm:$0xff]
        %v2411 = vld [vmem:[#allocation10 + $0x58] sm:$0xff]
        %v2412 = vld [vmem:[#allocation10 + $0x60] sm:$0xff]
        %v2413 = vld [vmem:[#allocation10 + $0x68] sm:$0xff]
        %v2414 = vld [vmem:[#allocation10 + $0x70] sm:$0xff]
        %v2415 = vld [vmem:[#allocation10 + $0x78] sm:$0xff]
        %v2416 = vld [vmem:[#allocation10 + $0x80] sm:$0xff]
        %v2417 = vld [vmem:[#allocation10 + $0x88] sm:$0xff]
        %v2418 = vld [vmem:[#allocation10 + $0x90] sm:$0xff]
        %v2419 = vld [vmem:[#allocation10 + $0x98] sm:$0xff]
        %v2420 = vld [vmem:[#allocation10 + $0xa0] sm:$0xff]
        %v2421 = vld [vmem:[#allocation10 + $0xa8] sm:$0xff]
        %v2422 = vld [vmem:[#allocation10 + $0xb0] sm:$0xff]
        %v2423 = vld [vmem:[#allocation10 + $0xb8] sm:$0xff]
        %v2424 = vld [vmem:[#allocation10 + $0xc0] sm:$0xff]
        %v2425 = vld [vmem:[#allocation10 + $0xc8] sm:$0xff]
        %v2426 = vld [vmem:[#allocation10 + $0xd0] sm:$0xff]
        %v2427 = vld [vmem:[#allocation10 + $0xd8] sm:$0xff]
        %v2428 = vld [vmem:[#allocation10 + $0xe0] sm:$0xff]
        %v2429 = vld [vmem:[#allocation10 + $0xe8] sm:$0xff]
        %v2430 = vld [vmem:[#allocation10 + $0xf0] sm:$0xff]
        %v2431 = vld [vmem:[#allocation10 + $0xf8] sm:$0xff]
        %v2432 = vld [vmem:[#allocation10 + $0x100] sm:$0xff]
        %v2433 = vld [vmem:[#allocation10 + $0x108] sm:$0xff]
        %v2434 = vld [vmem:[#allocation10 + $0x110] sm:$0xff]
        %v2435 = vld [vmem:[#allocation10 + $0x118] sm:$0xff]
        %v2436 = vld [vmem:[#allocation10 + $0x120] sm:$0xff]
        %v2437 = vld [vmem:[#allocation10 + $0x128] sm:$0xff]
        %v2438 = vld [vmem:[#allocation10 + $0x130] sm:$0xff]
        %v2439 = vld [vmem:[#allocation10 + $0x138] sm:$0xff]
        %v2440 = vld [vmem:[#allocation10 + $0x140] sm:$0xff]
        %v2441 = vld [vmem:[#allocation10 + $0x148] sm:$0xff]
        %v2442 = vld [vmem:[#allocation10 + $0x150] sm:$0xff]
        %v2443 = vld [vmem:[#allocation10 + $0x158] sm:$0xff]
        %v2444 = vld [vmem:[#allocation10 + $0x160] sm:$0xff]
        %v2445 = vld [vmem:[#allocation10 + $0x168] sm:$0xff]
        %v2446 = vld [vmem:[#allocation10 + $0x170] sm:$0xff]
        %v2447 = vld [vmem:[#allocation10 + $0x178] sm:$0xff]
        %v2448 = vld [vmem:[#allocation10 + $0x180] sm:$0xff]
        %v2449 = vld [vmem:[#allocation10 + $0x188] sm:$0xff]
        %v2450 = vld [vmem:[#allocation10 + $0x190] sm:$0xff]
        %v2451 = vld [vmem:[#allocation10 + $0x198] sm:$0xff]
        %v2452 = vld [vmem:[#allocation10 + $0x1a0] sm:$0xff]
        %v2453 = vld [vmem:[#allocation10 + $0x1a8] sm:$0xff]
        %v2454 = vld [vmem:[#allocation10 + $0x1b0] sm:$0xff]
        %v2455 = vld [vmem:[#allocation10 + $0x1b8] sm:$0xff]
        %v2456 = vld [vmem:[#allocation10 + $0x1c0] sm:$0xff]
        %v2457 = vld [vmem:[#allocation10 + $0x1c8] sm:$0xff]
        %v2458 = vld [vmem:[#allocation10 + $0x1d0] sm:$0xff]
        %v2459 = vld [vmem:[#allocation10 + $0x1d8] sm:$0xff]
        %v2460 = vld [vmem:[#allocation10 + $0x1e0] sm:$0xff]
        %v2461 = vld [vmem:[#allocation10 + $0x1e8] sm:$0xff]
        %v2462 = vld [vmem:[#allocation10 + $0x1f0] sm:$0xff]
        %v2463 = vld [vmem:[#allocation10 + $0x1f8] sm:$0xff]
        %v2464 = vld [vmem:[#allocation10 + $0x200] sm:$0xff]
        %v2465 = vld [vmem:[#allocation10 + $0x208] sm:$0xff]
        %v2466 = vld [vmem:[#allocation10 + $0x210] sm:$0xff]
        %v2467 = vld [vmem:[#allocation10 + $0x218] sm:$0xff]
        %v2468 = vld [vmem:[#allocation10 + $0x220] sm:$0xff]
        %v2469 = vld [vmem:[#allocation10 + $0x228] sm:$0xff]
        %v2470 = vld [vmem:[#allocation10 + $0x230] sm:$0xff]
        %v2471 = vld [vmem:[#allocation10 + $0x238] sm:$0xff]
        %v2472 = vld [vmem:[#allocation10 + $0x240] sm:$0xff]
        %v2473 = vld [vmem:[#allocation10 + $0x248] sm:$0xff]
        %v2474 = vld [vmem:[#allocation10 + $0x250] sm:$0xff]
        %v2475 = vld [vmem:[#allocation10 + $0x258] sm:$0xff]
        %v2476 = vld [vmem:[#allocation10 + $0x260] sm:$0xff]
        %v2477 = vld [vmem:[#allocation10 + $0x268] sm:$0xff]
        %v2478 = vld [vmem:[#allocation10 + $0x270] sm:$0xff]
        %v2479 = vld [vmem:[#allocation10 + $0x278] sm:$0xff]
        %v2480 = vld [vmem:[#allocation10 + $0x280] sm:$0xff]
        %v2481 = vld [vmem:[#allocation10 + $0x288] sm:$0xff]
        %v2482 = vld [vmem:[#allocation10 + $0x290] sm:$0xff]
        %v2483 = vld [vmem:[#allocation10 + $0x298] sm:$0xff]
        %v2484 = vld [vmem:[#allocation10 + $0x2a0] sm:$0xff]
        %v2485 = vld [vmem:[#allocation10 + $0x2a8] sm:$0xff]
        %v2486 = vld [vmem:[#allocation10 + $0x2b0] sm:$0xff]
        %v2487 = vld [vmem:[#allocation10 + $0x2b8] sm:$0xff]
        %v2488 = vld [vmem:[#allocation10 + $0x2c0] sm:$0xff]
        %v2489 = vld [vmem:[#allocation10 + $0x2c8] sm:$0xff]
        %v2490 = vld [vmem:[#allocation10 + $0x2d0] sm:$0xff]
        %v2491 = vld [vmem:[#allocation10 + $0x2d8] sm:$0xff]
        %v2492 = vld [vmem:[#allocation10 + $0x2e0] sm:$0xff]
        %v2493 = vld [vmem:[#allocation10 + $0x2e8] sm:$0xff]
        %v2494 = vld [vmem:[#allocation10 + $0x2f0] sm:$0xff]
        %v2495 = vld [vmem:[#allocation10 + $0x2f8] sm:$0xff]
        %v2496 = vld [vmem:[#allocation10 + $0x300] sm:$0xff]
        %v2497 = vld [vmem:[#allocation10 + $0x308] sm:$0xff]
        %v2498 = vld [vmem:[#allocation10 + $0x310] sm:$0xff]
        %v2499 = vld [vmem:[#allocation10 + $0x318] sm:$0xff]
        %v2500 = vld [vmem:[#allocation10 + $0x320] sm:$0xff]
        %v2501 = vld [vmem:[#allocation10 + $0x328] sm:$0xff]
        %v2502 = vld [vmem:[#allocation10 + $0x330] sm:$0xff]
        %v2503 = vld [vmem:[#allocation10 + $0x338] sm:$0xff]
        %v2504 = vld [vmem:[#allocation10 + $0x340] sm:$0xff]
        %v2505 = vld [vmem:[#allocation10 + $0x348] sm:$0xff]
        %v2506 = vld [vmem:[#allocation10 + $0x350] sm:$0xff]
        %v2507 = vld [vmem:[#allocation10 + $0x358] sm:$0xff]
        %v2508 = vld [vmem:[#allocation10 + $0x360] sm:$0xff]
        %v2509 = vld [vmem:[#allocation10 + $0x368] sm:$0xff]
        %v2510 = vld [vmem:[#allocation10 + $0x370] sm:$0xff]
        %v2511 = vld [vmem:[#allocation10 + $0x378] sm:$0xff]
        %v2512 = vld [vmem:[#allocation10 + $0x380] sm:$0xff]
        %v2513 = vld [vmem:[#allocation10 + $0x388] sm:$0xff]
        %v2514 = vld [vmem:[#allocation10 + $0x390] sm:$0xff]
        %v2515 = vld [vmem:[#allocation10 + $0x398] sm:$0xff]
        %v2516 = vld [vmem:[#allocation10 + $0x3a0] sm:$0xff]
        %v2517 = vld [vmem:[#allocation10 + $0x3a8] sm:$0xff]
        %v2518 = vld [vmem:[#allocation10 + $0x3b0] sm:$0xff]
        %v2519 = vld [vmem:[#allocation10 + $0x3b8] sm:$0xff]
        %v2520 = vld [vmem:[#allocation10 + $0x3c0] sm:$0xff]
        %v2521 = vld [vmem:[#allocation10 + $0x3c8] sm:$0xff]
        %v2522 = vld [vmem:[#allocation10 + $0x3d0] sm:$0xff]
        %v2523 = vld [vmem:[#allocation10 + $0x3d8] sm:$0xff]
        %v2524 = vld [vmem:[#allocation10 + $0x3e0] sm:$0xff]
        %v2525 = vld [vmem:[#allocation10 + $0x3e8] sm:$0xff]
        %v2526 = vld [vmem:[#allocation10 + $0x3f0] sm:$0xff]
        %v2527 = vld [vmem:[#allocation10 + $0x3f8] sm:$0xff]
        %v2528 = vld [vmem:[#allocation10 + $0x400] sm:$0xff]
        %v2529 = vld [vmem:[#allocation10 + $0x408] sm:$0xff]
        %v2530 = vld [vmem:[#allocation10 + $0x410] sm:$0xff]
        %v2531 = vld [vmem:[#allocation10 + $0x418] sm:$0xff]
        %v2532 = vld [vmem:[#allocation10 + $0x420] sm:$0xff]
        %v2533 = vld [vmem:[#allocation10 + $0x428] sm:$0xff]
        %v2534 = vld [vmem:[#allocation10 + $0x430] sm:$0xff]
        %v2535 = vld [vmem:[#allocation10 + $0x438] sm:$0xff]
        %v2536 = vld [vmem:[#allocation10 + $0x440] sm:$0xff]
        %v2537 = vld [vmem:[#allocation10 + $0x448] sm:$0xff]
        %v2538 = vld [vmem:[#allocation10 + $0x450] sm:$0xff]
        %v2539 = vld [vmem:[#allocation10 + $0x458] sm:$0xff]
        %v2540 = vld [vmem:[#allocation10 + $0x460] sm:$0xff]
        %v2541 = vld [vmem:[#allocation10 + $0x468] sm:$0xff]
        %v2542 = vld [vmem:[#allocation10 + $0x470] sm:$0xff]
        %v2543 = vld [vmem:[#allocation10 + $0x478] sm:$0xff]
        %v2544 = vld [vmem:[#allocation10 + $0x480] sm:$0xff]
        %v2545 = vld [vmem:[#allocation10 + $0x488] sm:$0xff]
        %v2546 = vld [vmem:[#allocation10 + $0x490] sm:$0xff]
        %v2547 = vld [vmem:[#allocation10 + $0x498] sm:$0xff]
        %v2548 = vld [vmem:[#allocation10 + $0x4a0] sm:$0xff]
        %v2549 = vld [vmem:[#allocation10 + $0x4a8] sm:$0xff]
        %v2550 = vld [vmem:[#allocation10 + $0x4b0] sm:$0xff]
        %v2551 = vld [vmem:[#allocation10 + $0x4b8] sm:$0xff]
        %v2552 = vld [vmem:[#allocation10 + $0x4c0] sm:$0xff]
        %v2553 = vld [vmem:[#allocation10 + $0x4c8] sm:$0xff]
        %v2554 = vld [vmem:[#allocation10 + $0x4d0] sm:$0xff]
        %v2555 = vld [vmem:[#allocation10 + $0x4d8] sm:$0xff]
        %v2556 = vld [vmem:[#allocation10 + $0x4e0] sm:$0xff]
        %v2557 = vld [vmem:[#allocation10 + $0x4e8] sm:$0xff]
        %v2558 = vld [vmem:[#allocation10 + $0x4f0] sm:$0xff]
        %v2559 = vld [vmem:[#allocation10 + $0x4f8] sm:$0xff]
        %v2560 = vld [vmem:[#allocation10 + $0x500] sm:$0xff]
        %v2561 = vld [vmem:[#allocation10 + $0x508] sm:$0xff]
        %v2562 = vld [vmem:[#allocation10 + $0x510] sm:$0xff]
        %v2563 = vld [vmem:[#allocation10 + $0x518] sm:$0xff]
        %v2564 = vld [vmem:[#allocation10 + $0x520] sm:$0xff]
        %v2565 = vld [vmem:[#allocation10 + $0x528] sm:$0xff]
        %v2566 = vld [vmem:[#allocation10 + $0x530] sm:$0xff]
        %v2567 = vld [vmem:[#allocation10 + $0x538] sm:$0xff]
        %v2568 = vld [vmem:[#allocation10 + $0x540] sm:$0xff]
        %v2569 = vld [vmem:[#allocation10 + $0x548] sm:$0xff]
        %v2570 = vld [vmem:[#allocation10 + $0x550] sm:$0xff]
        %v2571 = vld [vmem:[#allocation10 + $0x558] sm:$0xff]
        %v2572 = vld [vmem:[#allocation10 + $0x560] sm:$0xff]
        %v2573 = vld [vmem:[#allocation10 + $0x568] sm:$0xff]
        %v2574 = vld [vmem:[#allocation10 + $0x570] sm:$0xff]
        %v2575 = vld [vmem:[#allocation10 + $0x578] sm:$0xff]
        %v2576 = vld [vmem:[#allocation10 + $0x580] sm:$0xff]
        %v2577 = vld [vmem:[#allocation10 + $0x588] sm:$0xff]
        %v2578 = vld [vmem:[#allocation10 + $0x590] sm:$0xff]
        %v2579 = vld [vmem:[#allocation10 + $0x598] sm:$0xff]
        %v2580 = vld [vmem:[#allocation10 + $0x5a0] sm:$0xff]
        %v2581 = vld [vmem:[#allocation10 + $0x5a8] sm:$0xff]
        %v2582 = vld [vmem:[#allocation10 + $0x5b0] sm:$0xff]
        %v2583 = vld [vmem:[#allocation10 + $0x5b8] sm:$0xff]
        %v2584 = vld [vmem:[#allocation10 + $0x5c0] sm:$0xff]
        %v2585 = vld [vmem:[#allocation10 + $0x5c8] sm:$0xff]
        %v2586 = vld [vmem:[#allocation10 + $0x5d0] sm:$0xff]
        %v2587 = vld [vmem:[#allocation10 + $0x5d8] sm:$0xff]
        %v2588 = vld [vmem:[#allocation10 + $0x5e0] sm:$0xff]
        %v2589 = vld [vmem:[#allocation10 + $0x5e8] sm:$0xff]
        %v2590 = vld [vmem:[#allocation10 + $0x5f0] sm:$0xff]
        %v2591 = vld [vmem:[#allocation10 + $0x5f8] sm:$0xff]
        %v2592 = vld [vmem:[#allocation10 + $0x600] sm:$0xff]
        %v2593 = vld [vmem:[#allocation10 + $0x608] sm:$0xff]
        %v2594 = vld [vmem:[#allocation10 + $0x610] sm:$0xff]
        %v2595 = vld [vmem:[#allocation10 + $0x618] sm:$0xff]
        %v2596 = vld [vmem:[#allocation10 + $0x620] sm:$0xff]
        %v2597 = vld [vmem:[#allocation10 + $0x628] sm:$0xff]
        %v2598 = vld [vmem:[#allocation10 + $0x630] sm:$0xff]
        %v2599 = vld [vmem:[#allocation10 + $0x638] sm:$0xff]
        %v2600 = vld [vmem:[#allocation10 + $0x640] sm:$0xff]
        %v2601 = vld [vmem:[#allocation10 + $0x648] sm:$0xff]
        %v2602 = vld [vmem:[#allocation10 + $0x650] sm:$0xff]
        %v2603 = vld [vmem:[#allocation10 + $0x658] sm:$0xff]
        %v2604 = vld [vmem:[#allocation10 + $0x660] sm:$0xff]
        %v2605 = vld [vmem:[#allocation10 + $0x668] sm:$0xff]
        %v2606 = vld [vmem:[#allocation10 + $0x670] sm:$0xff]
        %v2607 = vld [vmem:[#allocation10 + $0x678] sm:$0xff]
        %v2608 = vld [vmem:[#allocation10 + $0x680] sm:$0xff]
        %v2609 = vld [vmem:[#allocation10 + $0x688] sm:$0xff]
        %v2610 = vld [vmem:[#allocation10 + $0x690] sm:$0xff]
        %v2611 = vld [vmem:[#allocation10 + $0x698] sm:$0xff]
        %v2612 = vld [vmem:[#allocation10 + $0x6a0] sm:$0xff]
        %v2613 = vld [vmem:[#allocation10 + $0x6a8] sm:$0xff]
        %v2614 = vld [vmem:[#allocation10 + $0x6b0] sm:$0xff]
        %v2615 = vld [vmem:[#allocation10 + $0x6b8] sm:$0xff]
        %v2616 = vld [vmem:[#allocation10 + $0x6c0] sm:$0xff]
        %v2617 = vld [vmem:[#allocation10 + $0x6c8] sm:$0xff]
        %v2618 = vld [vmem:[#allocation10 + $0x6d0] sm:$0xff]
        %v2619 = vld [vmem:[#allocation10 + $0x6d8] sm:$0xff]
        %v2620 = vld [vmem:[#allocation10 + $0x6e0] sm:$0xff]
        %v2621 = vld [vmem:[#allocation10 + $0x6e8] sm:$0xff]
        %v2622 = vld [vmem:[#allocation10 + $0x6f0] sm:$0xff]
        %v2623 = vld [vmem:[#allocation10 + $0x6f8] sm:$0xff]
        %v2624 = vld [vmem:[#allocation10 + $0x700] sm:$0xff]
        %v2625 = vld [vmem:[#allocation10 + $0x708] sm:$0xff]
        %v2626 = vld [vmem:[#allocation10 + $0x710] sm:$0xff]
        %v2627 = vld [vmem:[#allocation10 + $0x718] sm:$0xff]
        %v2628 = vld [vmem:[#allocation10 + $0x720] sm:$0xff]
        %v2629 = vld [vmem:[#allocation10 + $0x728] sm:$0xff]
        %v2630 = vld [vmem:[#allocation10 + $0x730] sm:$0xff]
        %v2631 = vld [vmem:[#allocation10 + $0x738] sm:$0xff]
        %v2632 = vld [vmem:[#allocation10 + $0x740] sm:$0xff]
        %v2633 = vld [vmem:[#allocation10 + $0x748] sm:$0xff]
        %v2634 = vld [vmem:[#allocation10 + $0x750] sm:$0xff]
        %v2635 = vld [vmem:[#allocation10 + $0x758] sm:$0xff]
        %v2636 = vld [vmem:[#allocation10 + $0x760] sm:$0xff]
        %v2637 = vld [vmem:[#allocation10 + $0x768] sm:$0xff]
        %v2638 = vld [vmem:[#allocation10 + $0x770] sm:$0xff]
        %v2639 = vld [vmem:[#allocation10 + $0x778] sm:$0xff]
        %v2640 = vld [vmem:[#allocation10 + $0x780] sm:$0xff]
        %v2641 = vld [vmem:[#allocation10 + $0x788] sm:$0xff]
        %v2642 = vld [vmem:[#allocation10 + $0x790] sm:$0xff]
        %v2643 = vld [vmem:[#allocation10 + $0x798] sm:$0xff]
        %v2644 = vld [vmem:[#allocation10 + $0x7a0] sm:$0xff]
        %v2645 = vld [vmem:[#allocation10 + $0x7a8] sm:$0xff]
        %v2646 = vld [vmem:[#allocation10 + $0x7b0] sm:$0xff]
        %v2647 = vld [vmem:[#allocation10 + $0x7b8] sm:$0xff]
        %v2648 = vld [vmem:[#allocation10 + $0x7c0] sm:$0xff]
        %v2649 = vld [vmem:[#allocation10 + $0x7c8] sm:$0xff]
        %v2650 = vld [vmem:[#allocation10 + $0x7d0] sm:$0xff]
        %v2651 = vld [vmem:[#allocation10 + $0x7d8] sm:$0xff]
        %v2652 = vld [vmem:[#allocation10 + $0x7e0] sm:$0xff]
        %v2653 = vld [vmem:[#allocation10 + $0x7e8] sm:$0xff]
        %v2654 = vld [vmem:[#allocation10 + $0x7f0] sm:$0xff]
        %v2655 = vld [vmem:[#allocation10 + $0x7f8] sm:$0xff]
        %v2656 = vld [vmem:[#allocation10 + $0x800] sm:$0xff]
        %v2657 = vld [vmem:[#allocation10 + $0x808] sm:$0xff]
        %v2658 = vld [vmem:[#allocation10 + $0x810] sm:$0xff]
        %v2659 = vld [vmem:[#allocation10 + $0x818] sm:$0xff]
        %v2660 = vld [vmem:[#allocation10 + $0x820] sm:$0xff]
        %v2661 = vld [vmem:[#allocation10 + $0x828] sm:$0xff]
        %v2662 = vld [vmem:[#allocation10 + $0x830] sm:$0xff]
        %v2663 = vld [vmem:[#allocation10 + $0x838] sm:$0xff]
        %v2664 = vld [vmem:[#allocation10 + $0x840] sm:$0xff]
        %v2665 = vld [vmem:[#allocation10 + $0x848] sm:$0xff]
        %v2666 = vld [vmem:[#allocation10 + $0x850] sm:$0xff]
        %v2667 = vld [vmem:[#allocation10 + $0x858] sm:$0xff]
        %v2668 = vld [vmem:[#allocation10 + $0x860] sm:$0xff]
        %v2669 = vld [vmem:[#allocation10 + $0x868] sm:$0xff]
        %v2670 = vld [vmem:[#allocation10 + $0x870] sm:$0xff]
        %v2671 = vld [vmem:[#allocation10 + $0x878] sm:$0xff]
        %v2672 = vld [vmem:[#allocation10 + $0x880] sm:$0xff]
        %v2673 = vld [vmem:[#allocation10 + $0x888] sm:$0xff]
        %v2674 = vld [vmem:[#allocation10 + $0x890] sm:$0xff]
        %v2675 = vld [vmem:[#allocation10 + $0x898] sm:$0xff]
        %v2676 = vld [vmem:[#allocation10 + $0x8a0] sm:$0xff]
        %v2677 = vld [vmem:[#allocation10 + $0x8a8] sm:$0xff]
        %v2678 = vld [vmem:[#allocation10 + $0x8b0] sm:$0xff]
        %v2679 = vld [vmem:[#allocation10 + $0x8b8] sm:$0xff]
        %v2680 = vld [vmem:[#allocation10 + $0x8c0] sm:$0xff]
        %v2681 = vld [vmem:[#allocation10 + $0x8c8] sm:$0xff]
        %v2682 = vld [vmem:[#allocation10 + $0x8d0] sm:$0xff]
        %v2683 = vld [vmem:[#allocation10 + $0x8d8] sm:$0xff]
        %v2684 = vld [vmem:[#allocation10 + $0x8e0] sm:$0xff]
        %v2685 = vld [vmem:[#allocation10 + $0x8e8] sm:$0xff]
        %v2686 = vld [vmem:[#allocation10 + $0x8f0] sm:$0xff]
        %v2687 = vld [vmem:[#allocation10 + $0x8f8] sm:$0xff]
        %v2688 = vld [vmem:[#allocation10 + $0x900] sm:$0xff]
        %v2689 = vld [vmem:[#allocation10 + $0x908] sm:$0xff]
        %v2690 = vld [vmem:[#allocation10 + $0x910] sm:$0xff]
        %v2691 = vld [vmem:[#allocation10 + $0x918] sm:$0xff]
        %v2692 = vld [vmem:[#allocation10 + $0x920] sm:$0xff]
        %v2693 = vld [vmem:[#allocation10 + $0x928] sm:$0xff]
        %v2694 = vld [vmem:[#allocation10 + $0x930] sm:$0xff]
        %v2695 = vld [vmem:[#allocation10 + $0x938] sm:$0xff]
        %v2696 = vld [vmem:[#allocation10 + $0x940] sm:$0xff]
        %v2697 = vld [vmem:[#allocation10 + $0x948] sm:$0xff]
        %v2698 = vld [vmem:[#allocation10 + $0x950] sm:$0xff]
        %v2699 = vld [vmem:[#allocation10 + $0x958] sm:$0xff]
        %v2700 = vld [vmem:[#allocation10 + $0x960] sm:$0xff]
        %v2701 = vld [vmem:[#allocation10 + $0x968] sm:$0xff]
        %v2702 = vld [vmem:[#allocation10 + $0x970] sm:$0xff]
        %v2703 = vld [vmem:[#allocation10 + $0x978] sm:$0xff]
        %v2704 = vld [vmem:[#allocation10 + $0x980] sm:$0xff]
        %v2705 = vld [vmem:[#allocation10 + $0x988] sm:$0xff]
        %v2706 = vld [vmem:[#allocation10 + $0x990] sm:$0xff]
        %v2707 = vld [vmem:[#allocation10 + $0x998] sm:$0xff]
        %v2708 = vld [vmem:[#allocation10 + $0x9a0] sm:$0xff]
        %v2709 = vld [vmem:[#allocation10 + $0x9a8] sm:$0xff]
        %v2710 = vld [vmem:[#allocation10 + $0x9b0] sm:$0xff]
        %v2711 = vld [vmem:[#allocation10 + $0x9b8] sm:$0xff]
        %v2712 = vld [vmem:[#allocation10 + $0x9c0] sm:$0xff]
        %v2713 = vld [vmem:[#allocation10 + $0x9c8] sm:$0xff]
        %v2714 = vld [vmem:[#allocation10 + $0x9d0] sm:$0xff]
        %v2715 = vld [vmem:[#allocation10 + $0x9d8] sm:$0xff]
        %v2716 = vld [vmem:[#allocation10 + $0x9e0] sm:$0xff]
        %v2717 = vld [vmem:[#allocation10 + $0x9e8] sm:$0xff]
        %v2718 = vld [vmem:[#allocation10 + $0x9f0] sm:$0xff]
        %v2719 = vld [vmem:[#allocation10 + $0x9f8] sm:$0xff]
        %v3040 = vunpack.c.l.b16 %v2400
        %v3041 = vunpack.c.h.b16 %v2400
        %v3042 = vunpack.c.l.b16 %v2401
        %v3043 = vunpack.c.h.b16 %v2401
        %v3044 = vunpack.c.l.b16 %v2402
        %v3045 = vunpack.c.h.b16 %v2402
        %v3046 = vunpack.c.l.b16 %v2403
        %v3047 = vunpack.c.h.b16 %v2403
        %v3048 = vunpack.c.l.b16 %v2404
        %v3049 = vunpack.c.h.b16 %v2404
        %v3050 = vunpack.c.l.b16 %v2405
        %v3051 = vunpack.c.h.b16 %v2405
        %v3052 = vunpack.c.l.b16 %v2406
        %v3053 = vunpack.c.h.b16 %v2406
        %v3054 = vunpack.c.l.b16 %v2407
        %v3055 = vunpack.c.h.b16 %v2407
        %v3056 = vunpack.c.l.b16 %v2408
        %v3057 = vunpack.c.h.b16 %v2408
        %v3058 = vunpack.c.l.b16 %v2409
        %v3059 = vunpack.c.h.b16 %v2409
        %v3060 = vunpack.c.l.b16 %v2410
        %v3061 = vunpack.c.h.b16 %v2410
        %v3062 = vunpack.c.l.b16 %v2411
        %v3063 = vunpack.c.h.b16 %v2411
        %v3064 = vunpack.c.l.b16 %v2412
        %v3065 = vunpack.c.h.b16 %v2412
        %v3066 = vunpack.c.l.b16 %v2413
        %v3067 = vunpack.c.h.b16 %v2413
        %v3068 = vunpack.c.l.b16 %v2414
        %v3069 = vunpack.c.h.b16 %v2414
        %v3070 = vunpack.c.l.b16 %v2415
        %v3071 = vunpack.c.h.b16 %v2415
        %v3072 = vunpack.c.l.b16 %v2416
        %v3073 = vunpack.c.h.b16 %v2416
        %v3074 = vunpack.c.l.b16 %v2417
        %v3075 = vunpack.c.h.b16 %v2417
        %v3076 = vunpack.c.l.b16 %v2418
        %v3077 = vunpack.c.h.b16 %v2418
        %v3078 = vunpack.c.l.b16 %v2419
        %v3079 = vunpack.c.h.b16 %v2419
        %v3080 = vunpack.c.l.b16 %v2420
        %v3081 = vunpack.c.h.b16 %v2420
        %v3082 = vunpack.c.l.b16 %v2421
        %v3083 = vunpack.c.h.b16 %v2421
        %v3084 = vunpack.c.l.b16 %v2422
        %v3085 = vunpack.c.h.b16 %v2422
        %v3086 = vunpack.c.l.b16 %v2423
        %v3087 = vunpack.c.h.b16 %v2423
        %v3088 = vunpack.c.l.b16 %v2424
        %v3089 = vunpack.c.h.b16 %v2424
        %v3090 = vunpack.c.l.b16 %v2425
        %v3091 = vunpack.c.h.b16 %v2425
        %v3092 = vunpack.c.l.b16 %v2426
        %v3093 = vunpack.c.h.b16 %v2426
        %v3094 = vunpack.c.l.b16 %v2427
        %v3095 = vunpack.c.h.b16 %v2427
        %v3096 = vunpack.c.l.b16 %v2428
        %v3097 = vunpack.c.h.b16 %v2428
        %v3098 = vunpack.c.l.b16 %v2429
        %v3099 = vunpack.c.h.b16 %v2429
        %v3100 = vunpack.c.l.b16 %v2430
        %v3101 = vunpack.c.h.b16 %v2430
        %v3102 = vunpack.c.l.b16 %v2431
        %v3103 = vunpack.c.h.b16 %v2431
        %v3104 = vunpack.c.l.b16 %v2432
        %v3105 = vunpack.c.h.b16 %v2432
        %v3106 = vunpack.c.l.b16 %v2433
        %v3107 = vunpack.c.h.b16 %v2433
        %v3108 = vunpack.c.l.b16 %v2434
        %v3109 = vunpack.c.h.b16 %v2434
        %v3110 = vunpack.c.l.b16 %v2435
        %v3111 = vunpack.c.h.b16 %v2435
        %v3112 = vunpack.c.l.b16 %v2436
        %v3113 = vunpack.c.h.b16 %v2436
        %v3114 = vunpack.c.l.b16 %v2437
        %v3115 = vunpack.c.h.b16 %v2437
        %v3116 = vunpack.c.l.b16 %v2438
        %v3117 = vunpack.c.h.b16 %v2438
        %v3118 = vunpack.c.l.b16 %v2439
        %v3119 = vunpack.c.h.b16 %v2439
        %v3120 = vunpack.c.l.b16 %v2440
        %v3121 = vunpack.c.h.b16 %v2440
        %v3122 = vunpack.c.l.b16 %v2441
        %v3123 = vunpack.c.h.b16 %v2441
        %v3124 = vunpack.c.l.b16 %v2442
        %v3125 = vunpack.c.h.b16 %v2442
        %v3126 = vunpack.c.l.b16 %v2443
        %v3127 = vunpack.c.h.b16 %v2443
        %v3128 = vunpack.c.l.b16 %v2444
        %v3129 = vunpack.c.h.b16 %v2444
        %v3130 = vunpack.c.l.b16 %v2445
        %v3131 = vunpack.c.h.b16 %v2445
        %v3132 = vunpack.c.l.b16 %v2446
        %v3133 = vunpack.c.h.b16 %v2446
        %v3134 = vunpack.c.l.b16 %v2447
        %v3135 = vunpack.c.h.b16 %v2447
        %v3136 = vunpack.c.l.b16 %v2448
        %v3137 = vunpack.c.h.b16 %v2448
        %v3138 = vunpack.c.l.b16 %v2449
        %v3139 = vunpack.c.h.b16 %v2449
        %v3140 = vunpack.c.l.b16 %v2450
        %v3141 = vunpack.c.h.b16 %v2450
        %v3142 = vunpack.c.l.b16 %v2451
        %v3143 = vunpack.c.h.b16 %v2451
        %v3144 = vunpack.c.l.b16 %v2452
        %v3145 = vunpack.c.h.b16 %v2452
        %v3146 = vunpack.c.l.b16 %v2453
        %v3147 = vunpack.c.h.b16 %v2453
        %v3148 = vunpack.c.l.b16 %v2454
        %v3149 = vunpack.c.h.b16 %v2454
        %v3150 = vunpack.c.l.b16 %v2455
        %v3151 = vunpack.c.h.b16 %v2455
        %v3152 = vunpack.c.l.b16 %v2456
        %v3153 = vunpack.c.h.b16 %v2456
        %v3154 = vunpack.c.l.b16 %v2457
        %v3155 = vunpack.c.h.b16 %v2457
        %v3156 = vunpack.c.l.b16 %v2458
        %v3157 = vunpack.c.h.b16 %v2458
        %v3158 = vunpack.c.l.b16 %v2459
        %v3159 = vunpack.c.h.b16 %v2459
        %v3160 = vunpack.c.l.b16 %v2460
        %v3161 = vunpack.c.h.b16 %v2460
        %v3162 = vunpack.c.l.b16 %v2461
        %v3163 = vunpack.c.h.b16 %v2461
        %v3164 = vunpack.c.l.b16 %v2462
        %v3165 = vunpack.c.h.b16 %v2462
        %v3166 = vunpack.c.l.b16 %v2463
        %v3167 = vunpack.c.h.b16 %v2463
        %v3168 = vunpack.c.l.b16 %v2464
        %v3169 = vunpack.c.h.b16 %v2464
        %v3170 = vunpack.c.l.b16 %v2465
        %v3171 = vunpack.c.h.b16 %v2465
        %v3172 = vunpack.c.l.b16 %v2466
        %v3173 = vunpack.c.h.b16 %v2466
        %v3174 = vunpack.c.l.b16 %v2467
        %v3175 = vunpack.c.h.b16 %v2467
        %v3176 = vunpack.c.l.b16 %v2468
        %v3177 = vunpack.c.h.b16 %v2468
        %v3178 = vunpack.c.l.b16 %v2469
        %v3179 = vunpack.c.h.b16 %v2469
        %v3180 = vunpack.c.l.b16 %v2470
        %v3181 = vunpack.c.h.b16 %v2470
        %v3182 = vunpack.c.l.b16 %v2471
        %v3183 = vunpack.c.h.b16 %v2471
        %v3184 = vunpack.c.l.b16 %v2472
        %v3185 = vunpack.c.h.b16 %v2472
        %v3186 = vunpack.c.l.b16 %v2473
        %v3187 = vunpack.c.h.b16 %v2473
        %v3188 = vunpack.c.l.b16 %v2474
        %v3189 = vunpack.c.h.b16 %v2474
        %v3190 = vunpack.c.l.b16 %v2475
        %v3191 = vunpack.c.h.b16 %v2475
        %v3192 = vunpack.c.l.b16 %v2476
        %v3193 = vunpack.c.h.b16 %v2476
        %v3194 = vunpack.c.l.b16 %v2477
        %v3195 = vunpack.c.h.b16 %v2477
        %v3196 = vunpack.c.l.b16 %v2478
        %v3197 = vunpack.c.h.b16 %v2478
        %v3198 = vunpack.c.l.b16 %v2479
        %v3199 = vunpack.c.h.b16 %v2479
        %v3200 = vunpack.c.l.b16 %v2480
        %v3201 = vunpack.c.h.b16 %v2480
        %v3202 = vunpack.c.l.b16 %v2481
        %v3203 = vunpack.c.h.b16 %v2481
        %v3204 = vunpack.c.l.b16 %v2482
        %v3205 = vunpack.c.h.b16 %v2482
        %v3206 = vunpack.c.l.b16 %v2483
        %v3207 = vunpack.c.h.b16 %v2483
        %v3208 = vunpack.c.l.b16 %v2484
        %v3209 = vunpack.c.h.b16 %v2484
        %v3210 = vunpack.c.l.b16 %v2485
        %v3211 = vunpack.c.h.b16 %v2485
        %v3212 = vunpack.c.l.b16 %v2486
        %v3213 = vunpack.c.h.b16 %v2486
        %v3214 = vunpack.c.l.b16 %v2487
        %v3215 = vunpack.c.h.b16 %v2487
        %v3216 = vunpack.c.l.b16 %v2488
        %v3217 = vunpack.c.h.b16 %v2488
        %v3218 = vunpack.c.l.b16 %v2489
        %v3219 = vunpack.c.h.b16 %v2489
        %v3220 = vunpack.c.l.b16 %v2490
        %v3221 = vunpack.c.h.b16 %v2490
        %v3222 = vunpack.c.l.b16 %v2491
        %v3223 = vunpack.c.h.b16 %v2491
        %v3224 = vunpack.c.l.b16 %v2492
        %v3225 = vunpack.c.h.b16 %v2492
        %v3226 = vunpack.c.l.b16 %v2493
        %v3227 = vunpack.c.h.b16 %v2493
        %v3228 = vunpack.c.l.b16 %v2494
        %v3229 = vunpack.c.h.b16 %v2494
        %v3230 = vunpack.c.l.b16 %v2495
        %v3231 = vunpack.c.h.b16 %v2495
        %v3232 = vunpack.c.l.b16 %v2496
        %v3233 = vunpack.c.h.b16 %v2496
        %v3234 = vunpack.c.l.b16 %v2497
        %v3235 = vunpack.c.h.b16 %v2497
        %v3236 = vunpack.c.l.b16 %v2498
        %v3237 = vunpack.c.h.b16 %v2498
        %v3238 = vunpack.c.l.b16 %v2499
        %v3239 = vunpack.c.h.b16 %v2499
        %v3240 = vunpack.c.l.b16 %v2500
        %v3241 = vunpack.c.h.b16 %v2500
        %v3242 = vunpack.c.l.b16 %v2501
        %v3243 = vunpack.c.h.b16 %v2501
        %v3244 = vunpack.c.l.b16 %v2502
        %v3245 = vunpack.c.h.b16 %v2502
        %v3246 = vunpack.c.l.b16 %v2503
        %v3247 = vunpack.c.h.b16 %v2503
        %v3248 = vunpack.c.l.b16 %v2504
        %v3249 = vunpack.c.h.b16 %v2504
        %v3250 = vunpack.c.l.b16 %v2505
        %v3251 = vunpack.c.h.b16 %v2505
        %v3252 = vunpack.c.l.b16 %v2506
        %v3253 = vunpack.c.h.b16 %v2506
        %v3254 = vunpack.c.l.b16 %v2507
        %v3255 = vunpack.c.h.b16 %v2507
        %v3256 = vunpack.c.l.b16 %v2508
        %v3257 = vunpack.c.h.b16 %v2508
        %v3258 = vunpack.c.l.b16 %v2509
        %v3259 = vunpack.c.h.b16 %v2509
        %v3260 = vunpack.c.l.b16 %v2510
        %v3261 = vunpack.c.h.b16 %v2510
        %v3262 = vunpack.c.l.b16 %v2511
        %v3263 = vunpack.c.h.b16 %v2511
        %v3264 = vunpack.c.l.b16 %v2512
        %v3265 = vunpack.c.h.b16 %v2512
        %v3266 = vunpack.c.l.b16 %v2513
        %v3267 = vunpack.c.h.b16 %v2513
        %v3268 = vunpack.c.l.b16 %v2514
        %v3269 = vunpack.c.h.b16 %v2514
        %v3270 = vunpack.c.l.b16 %v2515
        %v3271 = vunpack.c.h.b16 %v2515
        %v3272 = vunpack.c.l.b16 %v2516
        %v3273 = vunpack.c.h.b16 %v2516
        %v3274 = vunpack.c.l.b16 %v2517
        %v3275 = vunpack.c.h.b16 %v2517
        %v3276 = vunpack.c.l.b16 %v2518
        %v3277 = vunpack.c.h.b16 %v2518
        %v3278 = vunpack.c.l.b16 %v2519
        %v3279 = vunpack.c.h.b16 %v2519
        %v3280 = vunpack.c.l.b16 %v2520
        %v3281 = vunpack.c.h.b16 %v2520
        %v3282 = vunpack.c.l.b16 %v2521
        %v3283 = vunpack.c.h.b16 %v2521
        %v3284 = vunpack.c.l.b16 %v2522
        %v3285 = vunpack.c.h.b16 %v2522
        %v3286 = vunpack.c.l.b16 %v2523
        %v3287 = vunpack.c.h.b16 %v2523
        %v3288 = vunpack.c.l.b16 %v2524
        %v3289 = vunpack.c.h.b16 %v2524
        %v3290 = vunpack.c.l.b16 %v2525
        %v3291 = vunpack.c.h.b16 %v2525
        %v3292 = vunpack.c.l.b16 %v2526
        %v3293 = vunpack.c.h.b16 %v2526
        %v3294 = vunpack.c.l.b16 %v2527
        %v3295 = vunpack.c.h.b16 %v2527
        %v3296 = vunpack.c.l.b16 %v2528
        %v3297 = vunpack.c.h.b16 %v2528
        %v3298 = vunpack.c.l.b16 %v2529
        %v3299 = vunpack.c.h.b16 %v2529
        %v3300 = vunpack.c.l.b16 %v2530
        %v3301 = vunpack.c.h.b16 %v2530
        %v3302 = vunpack.c.l.b16 %v2531
        %v3303 = vunpack.c.h.b16 %v2531
        %v3304 = vunpack.c.l.b16 %v2532
        %v3305 = vunpack.c.h.b16 %v2532
        %v3306 = vunpack.c.l.b16 %v2533
        %v3307 = vunpack.c.h.b16 %v2533
        %v3308 = vunpack.c.l.b16 %v2534
        %v3309 = vunpack.c.h.b16 %v2534
        %v3310 = vunpack.c.l.b16 %v2535
        %v3311 = vunpack.c.h.b16 %v2535
        %v3312 = vunpack.c.l.b16 %v2536
        %v3313 = vunpack.c.h.b16 %v2536
        %v3314 = vunpack.c.l.b16 %v2537
        %v3315 = vunpack.c.h.b16 %v2537
        %v3316 = vunpack.c.l.b16 %v2538
        %v3317 = vunpack.c.h.b16 %v2538
        %v3318 = vunpack.c.l.b16 %v2539
        %v3319 = vunpack.c.h.b16 %v2539
        %v3320 = vunpack.c.l.b16 %v2540
        %v3321 = vunpack.c.h.b16 %v2540
        %v3322 = vunpack.c.l.b16 %v2541
        %v3323 = vunpack.c.h.b16 %v2541
        %v3324 = vunpack.c.l.b16 %v2542
        %v3325 = vunpack.c.h.b16 %v2542
        %v3326 = vunpack.c.l.b16 %v2543
        %v3327 = vunpack.c.h.b16 %v2543
        %v3328 = vunpack.c.l.b16 %v2544
        %v3329 = vunpack.c.h.b16 %v2544
        %v3330 = vunpack.c.l.b16 %v2545
        %v3331 = vunpack.c.h.b16 %v2545
        %v3332 = vunpack.c.l.b16 %v2546
        %v3333 = vunpack.c.h.b16 %v2546
        %v3334 = vunpack.c.l.b16 %v2547
        %v3335 = vunpack.c.h.b16 %v2547
        %v3336 = vunpack.c.l.b16 %v2548
        %v3337 = vunpack.c.h.b16 %v2548
        %v3338 = vunpack.c.l.b16 %v2549
        %v3339 = vunpack.c.h.b16 %v2549
        %v3340 = vunpack.c.l.b16 %v2550
        %v3341 = vunpack.c.h.b16 %v2550
        %v3342 = vunpack.c.l.b16 %v2551
        %v3343 = vunpack.c.h.b16 %v2551
        %v3344 = vunpack.c.l.b16 %v2552
        %v3345 = vunpack.c.h.b16 %v2552
        %v3346 = vunpack.c.l.b16 %v2553
        %v3347 = vunpack.c.h.b16 %v2553
        %v3348 = vunpack.c.l.b16 %v2554
        %v3349 = vunpack.c.h.b16 %v2554
        %v3350 = vunpack.c.l.b16 %v2555
        %v3351 = vunpack.c.h.b16 %v2555
        %v3352 = vunpack.c.l.b16 %v2556
        %v3353 = vunpack.c.h.b16 %v2556
        %v3354 = vunpack.c.l.b16 %v2557
        %v3355 = vunpack.c.h.b16 %v2557
        %v3356 = vunpack.c.l.b16 %v2558
        %v3357 = vunpack.c.h.b16 %v2558
        %v3358 = vunpack.c.l.b16 %v2559
        %v3359 = vunpack.c.h.b16 %v2559
        %v3360 = vunpack.c.l.b16 %v2560
        %v3361 = vunpack.c.h.b16 %v2560
        %v3362 = vunpack.c.l.b16 %v2561
        %v3363 = vunpack.c.h.b16 %v2561
        %v3364 = vunpack.c.l.b16 %v2562
        %v3365 = vunpack.c.h.b16 %v2562
        %v3366 = vunpack.c.l.b16 %v2563
        %v3367 = vunpack.c.h.b16 %v2563
        %v3368 = vunpack.c.l.b16 %v2564
        %v3369 = vunpack.c.h.b16 %v2564
        %v3370 = vunpack.c.l.b16 %v2565
        %v3371 = vunpack.c.h.b16 %v2565
        %v3372 = vunpack.c.l.b16 %v2566
        %v3373 = vunpack.c.h.b16 %v2566
        %v3374 = vunpack.c.l.b16 %v2567
        %v3375 = vunpack.c.h.b16 %v2567
        %v3376 = vunpack.c.l.b16 %v2568
        %v3377 = vunpack.c.h.b16 %v2568
        %v3378 = vunpack.c.l.b16 %v2569
        %v3379 = vunpack.c.h.b16 %v2569
        %v3380 = vunpack.c.l.b16 %v2570
        %v3381 = vunpack.c.h.b16 %v2570
        %v3382 = vunpack.c.l.b16 %v2571
        %v3383 = vunpack.c.h.b16 %v2571
        %v3384 = vunpack.c.l.b16 %v2572
        %v3385 = vunpack.c.h.b16 %v2572
        %v3386 = vunpack.c.l.b16 %v2573
        %v3387 = vunpack.c.h.b16 %v2573
        %v3388 = vunpack.c.l.b16 %v2574
        %v3389 = vunpack.c.h.b16 %v2574
        %v3390 = vunpack.c.l.b16 %v2575
        %v3391 = vunpack.c.h.b16 %v2575
        %v3392 = vunpack.c.l.b16 %v2576
        %v3393 = vunpack.c.h.b16 %v2576
        %v3394 = vunpack.c.l.b16 %v2577
        %v3395 = vunpack.c.h.b16 %v2577
        %v3396 = vunpack.c.l.b16 %v2578
        %v3397 = vunpack.c.h.b16 %v2578
        %v3398 = vunpack.c.l.b16 %v2579
        %v3399 = vunpack.c.h.b16 %v2579
        %v3400 = vunpack.c.l.b16 %v2580
        %v3401 = vunpack.c.h.b16 %v2580
        %v3402 = vunpack.c.l.b16 %v2581
        %v3403 = vunpack.c.h.b16 %v2581
        %v3404 = vunpack.c.l.b16 %v2582
        %v3405 = vunpack.c.h.b16 %v2582
        %v3406 = vunpack.c.l.b16 %v2583
        %v3407 = vunpack.c.h.b16 %v2583
        %v3408 = vunpack.c.l.b16 %v2584
        %v3409 = vunpack.c.h.b16 %v2584
        %v3410 = vunpack.c.l.b16 %v2585
        %v3411 = vunpack.c.h.b16 %v2585
        %v3412 = vunpack.c.l.b16 %v2586
        %v3413 = vunpack.c.h.b16 %v2586
        %v3414 = vunpack.c.l.b16 %v2587
        %v3415 = vunpack.c.h.b16 %v2587
        %v3416 = vunpack.c.l.b16 %v2588
        %v3417 = vunpack.c.h.b16 %v2588
        %v3418 = vunpack.c.l.b16 %v2589
        %v3419 = vunpack.c.h.b16 %v2589
        %v3420 = vunpack.c.l.b16 %v2590
        %v3421 = vunpack.c.h.b16 %v2590
        %v3422 = vunpack.c.l.b16 %v2591
        %v3423 = vunpack.c.h.b16 %v2591
        %v3424 = vunpack.c.l.b16 %v2592
        %v3425 = vunpack.c.h.b16 %v2592
        %v3426 = vunpack.c.l.b16 %v2593
        %v3427 = vunpack.c.h.b16 %v2593
        %v3428 = vunpack.c.l.b16 %v2594
        %v3429 = vunpack.c.h.b16 %v2594
        %v3430 = vunpack.c.l.b16 %v2595
        %v3431 = vunpack.c.h.b16 %v2595
        %v3432 = vunpack.c.l.b16 %v2596
        %v3433 = vunpack.c.h.b16 %v2596
        %v3434 = vunpack.c.l.b16 %v2597
        %v3435 = vunpack.c.h.b16 %v2597
        %v3436 = vunpack.c.l.b16 %v2598
        %v3437 = vunpack.c.h.b16 %v2598
        %v3438 = vunpack.c.l.b16 %v2599
        %v3439 = vunpack.c.h.b16 %v2599
        %v3440 = vunpack.c.l.b16 %v2600
        %v3441 = vunpack.c.h.b16 %v2600
        %v3442 = vunpack.c.l.b16 %v2601
        %v3443 = vunpack.c.h.b16 %v2601
        %v3444 = vunpack.c.l.b16 %v2602
        %v3445 = vunpack.c.h.b16 %v2602
        %v3446 = vunpack.c.l.b16 %v2603
        %v3447 = vunpack.c.h.b16 %v2603
        %v3448 = vunpack.c.l.b16 %v2604
        %v3449 = vunpack.c.h.b16 %v2604
        %v3450 = vunpack.c.l.b16 %v2605
        %v3451 = vunpack.c.h.b16 %v2605
        %v3452 = vunpack.c.l.b16 %v2606
        %v3453 = vunpack.c.h.b16 %v2606
        %v3454 = vunpack.c.l.b16 %v2607
        %v3455 = vunpack.c.h.b16 %v2607
        %v3456 = vunpack.c.l.b16 %v2608
        %v3457 = vunpack.c.h.b16 %v2608
        %v3458 = vunpack.c.l.b16 %v2609
        %v3459 = vunpack.c.h.b16 %v2609
        %v3460 = vunpack.c.l.b16 %v2610
        %v3461 = vunpack.c.h.b16 %v2610
        %v3462 = vunpack.c.l.b16 %v2611
        %v3463 = vunpack.c.h.b16 %v2611
        %v3464 = vunpack.c.l.b16 %v2612
        %v3465 = vunpack.c.h.b16 %v2612
        %v3466 = vunpack.c.l.b16 %v2613
        %v3467 = vunpack.c.h.b16 %v2613
        %v3468 = vunpack.c.l.b16 %v2614
        %v3469 = vunpack.c.h.b16 %v2614
        %v3470 = vunpack.c.l.b16 %v2615
        %v3471 = vunpack.c.h.b16 %v2615
        %v3472 = vunpack.c.l.b16 %v2616
        %v3473 = vunpack.c.h.b16 %v2616
        %v3474 = vunpack.c.l.b16 %v2617
        %v3475 = vunpack.c.h.b16 %v2617
        %v3476 = vunpack.c.l.b16 %v2618
        %v3477 = vunpack.c.h.b16 %v2618
        %v3478 = vunpack.c.l.b16 %v2619
        %v3479 = vunpack.c.h.b16 %v2619
        %v3480 = vunpack.c.l.b16 %v2620
        %v3481 = vunpack.c.h.b16 %v2620
        %v3482 = vunpack.c.l.b16 %v2621
        %v3483 = vunpack.c.h.b16 %v2621
        %v3484 = vunpack.c.l.b16 %v2622
        %v3485 = vunpack.c.h.b16 %v2622
        %v3486 = vunpack.c.l.b16 %v2623
        %v3487 = vunpack.c.h.b16 %v2623
        %v3488 = vunpack.c.l.b16 %v2624
        %v3489 = vunpack.c.h.b16 %v2624
        %v3490 = vunpack.c.l.b16 %v2625
        %v3491 = vunpack.c.h.b16 %v2625
        %v3492 = vunpack.c.l.b16 %v2626
        %v3493 = vunpack.c.h.b16 %v2626
        %v3494 = vunpack.c.l.b16 %v2627
        %v3495 = vunpack.c.h.b16 %v2627
        %v3496 = vunpack.c.l.b16 %v2628
        %v3497 = vunpack.c.h.b16 %v2628
        %v3498 = vunpack.c.l.b16 %v2629
        %v3499 = vunpack.c.h.b16 %v2629
        %v3500 = vunpack.c.l.b16 %v2630
        %v3501 = vunpack.c.h.b16 %v2630
        %v3502 = vunpack.c.l.b16 %v2631
        %v3503 = vunpack.c.h.b16 %v2631
        %v3504 = vunpack.c.l.b16 %v2632
        %v3505 = vunpack.c.h.b16 %v2632
        %v3506 = vunpack.c.l.b16 %v2633
        %v3507 = vunpack.c.h.b16 %v2633
        %v3508 = vunpack.c.l.b16 %v2634
        %v3509 = vunpack.c.h.b16 %v2634
        %v3510 = vunpack.c.l.b16 %v2635
        %v3511 = vunpack.c.h.b16 %v2635
        %v3512 = vunpack.c.l.b16 %v2636
        %v3513 = vunpack.c.h.b16 %v2636
        %v3514 = vunpack.c.l.b16 %v2637
        %v3515 = vunpack.c.h.b16 %v2637
        %v3516 = vunpack.c.l.b16 %v2638
        %v3517 = vunpack.c.h.b16 %v2638
        %v3518 = vunpack.c.l.b16 %v2639
        %v3519 = vunpack.c.h.b16 %v2639
        %v3520 = vunpack.c.l.b16 %v2640
        %v3521 = vunpack.c.h.b16 %v2640
        %v3522 = vunpack.c.l.b16 %v2641
        %v3523 = vunpack.c.h.b16 %v2641
        %v3524 = vunpack.c.l.b16 %v2642
        %v3525 = vunpack.c.h.b16 %v2642
        %v3526 = vunpack.c.l.b16 %v2643
        %v3527 = vunpack.c.h.b16 %v2643
        %v3528 = vunpack.c.l.b16 %v2644
        %v3529 = vunpack.c.h.b16 %v2644
        %v3530 = vunpack.c.l.b16 %v2645
        %v3531 = vunpack.c.h.b16 %v2645
        %v3532 = vunpack.c.l.b16 %v2646
        %v3533 = vunpack.c.h.b16 %v2646
        %v3534 = vunpack.c.l.b16 %v2647
        %v3535 = vunpack.c.h.b16 %v2647
        %v3536 = vunpack.c.l.b16 %v2648
        %v3537 = vunpack.c.h.b16 %v2648
        %v3538 = vunpack.c.l.b16 %v2649
        %v3539 = vunpack.c.h.b16 %v2649
        %v3540 = vunpack.c.l.b16 %v2650
        %v3541 = vunpack.c.h.b16 %v2650
        %v3542 = vunpack.c.l.b16 %v2651
        %v3543 = vunpack.c.h.b16 %v2651
        %v3544 = vunpack.c.l.b16 %v2652
        %v3545 = vunpack.c.h.b16 %v2652
        %v3546 = vunpack.c.l.b16 %v2653
        %v3547 = vunpack.c.h.b16 %v2653
        %v3548 = vunpack.c.l.b16 %v2654
        %v3549 = vunpack.c.h.b16 %v2654
        %v3550 = vunpack.c.l.b16 %v2655
        %v3551 = vunpack.c.h.b16 %v2655
        %v3552 = vunpack.c.l.b16 %v2656
        %v3553 = vunpack.c.h.b16 %v2656
        %v3554 = vunpack.c.l.b16 %v2657
        %v3555 = vunpack.c.h.b16 %v2657
        %v3556 = vunpack.c.l.b16 %v2658
        %v3557 = vunpack.c.h.b16 %v2658
        %v3558 = vunpack.c.l.b16 %v2659
        %v3559 = vunpack.c.h.b16 %v2659
        %v3560 = vunpack.c.l.b16 %v2660
        %v3561 = vunpack.c.h.b16 %v2660
        %v3562 = vunpack.c.l.b16 %v2661
        %v3563 = vunpack.c.h.b16 %v2661
        %v3564 = vunpack.c.l.b16 %v2662
        %v3565 = vunpack.c.h.b16 %v2662
        %v3566 = vunpack.c.l.b16 %v2663
        %v3567 = vunpack.c.h.b16 %v2663
        %v3568 = vunpack.c.l.b16 %v2664
        %v3569 = vunpack.c.h.b16 %v2664
        %v3570 = vunpack.c.l.b16 %v2665
        %v3571 = vunpack.c.h.b16 %v2665
        %v3572 = vunpack.c.l.b16 %v2666
        %v3573 = vunpack.c.h.b16 %v2666
        %v3574 = vunpack.c.l.b16 %v2667
        %v3575 = vunpack.c.h.b16 %v2667
        %v3576 = vunpack.c.l.b16 %v2668
        %v3577 = vunpack.c.h.b16 %v2668
        %v3578 = vunpack.c.l.b16 %v2669
        %v3579 = vunpack.c.h.b16 %v2669
        %v3580 = vunpack.c.l.b16 %v2670
        %v3581 = vunpack.c.h.b16 %v2670
        %v3582 = vunpack.c.l.b16 %v2671
        %v3583 = vunpack.c.h.b16 %v2671
        %v3584 = vunpack.c.l.b16 %v2672
        %v3585 = vunpack.c.h.b16 %v2672
        %v3586 = vunpack.c.l.b16 %v2673
        %v3587 = vunpack.c.h.b16 %v2673
        %v3588 = vunpack.c.l.b16 %v2674
        %v3589 = vunpack.c.h.b16 %v2674
        %v3590 = vunpack.c.l.b16 %v2675
        %v3591 = vunpack.c.h.b16 %v2675
        %v3592 = vunpack.c.l.b16 %v2676
        %v3593 = vunpack.c.h.b16 %v2676
        %v3594 = vunpack.c.l.b16 %v2677
        %v3595 = vunpack.c.h.b16 %v2677
        %v3596 = vunpack.c.l.b16 %v2678
        %v3597 = vunpack.c.h.b16 %v2678
        %v3598 = vunpack.c.l.b16 %v2679
        %v3599 = vunpack.c.h.b16 %v2679
        %v3600 = vunpack.c.l.b16 %v2680
        %v3601 = vunpack.c.h.b16 %v2680
        %v3602 = vunpack.c.l.b16 %v2681
        %v3603 = vunpack.c.h.b16 %v2681
        %v3604 = vunpack.c.l.b16 %v2682
        %v3605 = vunpack.c.h.b16 %v2682
        %v3606 = vunpack.c.l.b16 %v2683
        %v3607 = vunpack.c.h.b16 %v2683
        %v3608 = vunpack.c.l.b16 %v2684
        %v3609 = vunpack.c.h.b16 %v2684
        %v3610 = vunpack.c.l.b16 %v2685
        %v3611 = vunpack.c.h.b16 %v2685
        %v3612 = vunpack.c.l.b16 %v2686
        %v3613 = vunpack.c.h.b16 %v2686
        %v3614 = vunpack.c.l.b16 %v2687
        %v3615 = vunpack.c.h.b16 %v2687
        %v3616 = vunpack.c.l.b16 %v2688
        %v3617 = vunpack.c.h.b16 %v2688
        %v3618 = vunpack.c.l.b16 %v2689
        %v3619 = vunpack.c.h.b16 %v2689
        %v3620 = vunpack.c.l.b16 %v2690
        %v3621 = vunpack.c.h.b16 %v2690
        %v3622 = vunpack.c.l.b16 %v2691
        %v3623 = vunpack.c.h.b16 %v2691
        %v3624 = vunpack.c.l.b16 %v2692
        %v3625 = vunpack.c.h.b16 %v2692
        %v3626 = vunpack.c.l.b16 %v2693
        %v3627 = vunpack.c.h.b16 %v2693
        %v3628 = vunpack.c.l.b16 %v2694
        %v3629 = vunpack.c.h.b16 %v2694
        %v3630 = vunpack.c.l.b16 %v2695
        %v3631 = vunpack.c.h.b16 %v2695
        %v3632 = vunpack.c.l.b16 %v2696
        %v3633 = vunpack.c.h.b16 %v2696
        %v3634 = vunpack.c.l.b16 %v2697
        %v3635 = vunpack.c.h.b16 %v2697
        %v3636 = vunpack.c.l.b16 %v2698
        %v3637 = vunpack.c.h.b16 %v2698
        %v3638 = vunpack.c.l.b16 %v2699
        %v3639 = vunpack.c.h.b16 %v2699
        %v3640 = vunpack.c.l.b16 %v2700
        %v3641 = vunpack.c.h.b16 %v2700
        %v3642 = vunpack.c.l.b16 %v2701
        %v3643 = vunpack.c.h.b16 %v2701
        %v3644 = vunpack.c.l.b16 %v2702
        %v3645 = vunpack.c.h.b16 %v2702
        %v3646 = vunpack.c.l.b16 %v2703
        %v3647 = vunpack.c.h.b16 %v2703
        %v3648 = vunpack.c.l.b16 %v2704
        %v3649 = vunpack.c.h.b16 %v2704
        %v3650 = vunpack.c.l.b16 %v2705
        %v3651 = vunpack.c.h.b16 %v2705
        %v3652 = vunpack.c.l.b16 %v2706
        %v3653 = vunpack.c.h.b16 %v2706
        %v3654 = vunpack.c.l.b16 %v2707
        %v3655 = vunpack.c.h.b16 %v2707
        %v3656 = vunpack.c.l.b16 %v2708
        %v3657 = vunpack.c.h.b16 %v2708
        %v3658 = vunpack.c.l.b16 %v2709
        %v3659 = vunpack.c.h.b16 %v2709
        %v3660 = vunpack.c.l.b16 %v2710
        %v3661 = vunpack.c.h.b16 %v2710
        %v3662 = vunpack.c.l.b16 %v2711
        %v3663 = vunpack.c.h.b16 %v2711
        %v3664 = vunpack.c.l.b16 %v2712
        %v3665 = vunpack.c.h.b16 %v2712
        %v3666 = vunpack.c.l.b16 %v2713
        %v3667 = vunpack.c.h.b16 %v2713
        %v3668 = vunpack.c.l.b16 %v2714
        %v3669 = vunpack.c.h.b16 %v2714
        %v3670 = vunpack.c.l.b16 %v2715
        %v3671 = vunpack.c.h.b16 %v2715
        %v3672 = vunpack.c.l.b16 %v2716
        %v3673 = vunpack.c.h.b16 %v2716
        %v3674 = vunpack.c.l.b16 %v2717
        %v3675 = vunpack.c.h.b16 %v2717
        %v3676 = vunpack.c.l.b16 %v2718
        %v3677 = vunpack.c.h.b16 %v2718
        %v3678 = vunpack.c.l.b16 %v2719
        %v3679 = vunpack.c.h.b16 %v2719
        %v3680 = vpack.c.b16 %v3044, %v3040
        %v3681 = vpack.c.b16 %v3045, %v3041
        %v3682 = vpack.c.b16 %v3046, %v3042
        %v3683 = vpack.c.b16 %v3047, %v3043
        %v3684 = vpack.c.b16 %v3052, %v3048
        %v3685 = vpack.c.b16 %v3053, %v3049
        %v3686 = vpack.c.b16 %v3054, %v3050
        %v3687 = vpack.c.b16 %v3055, %v3051
        %v3688 = vpack.c.b16 %v3060, %v3056
        %v3689 = vpack.c.b16 %v3061, %v3057
        %v3690 = vpack.c.b16 %v3062, %v3058
        %v3691 = vpack.c.b16 %v3063, %v3059
        %v3692 = vpack.c.b16 %v3068, %v3064
        %v3693 = vpack.c.b16 %v3069, %v3065
        %v3694 = vpack.c.b16 %v3070, %v3066
        %v3695 = vpack.c.b16 %v3071, %v3067
        %v3696 = vpack.c.b16 %v3076, %v3072
        %v3697 = vpack.c.b16 %v3077, %v3073
        %v3698 = vpack.c.b16 %v3078, %v3074
        %v3699 = vpack.c.b16 %v3079, %v3075
        %v3700 = vpack.c.b16 %v3084, %v3080
        %v3701 = vpack.c.b16 %v3085, %v3081
        %v3702 = vpack.c.b16 %v3086, %v3082
        %v3703 = vpack.c.b16 %v3087, %v3083
        %v3704 = vpack.c.b16 %v3092, %v3088
        %v3705 = vpack.c.b16 %v3093, %v3089
        %v3706 = vpack.c.b16 %v3094, %v3090
        %v3707 = vpack.c.b16 %v3095, %v3091
        %v3708 = vpack.c.b16 %v3100, %v3096
        %v3709 = vpack.c.b16 %v3101, %v3097
        %v3710 = vpack.c.b16 %v3102, %v3098
        %v3711 = vpack.c.b16 %v3103, %v3099
        %v3712 = vpack.c.b16 %v3108, %v3104
        %v3713 = vpack.c.b16 %v3109, %v3105
        %v3714 = vpack.c.b16 %v3110, %v3106
        %v3715 = vpack.c.b16 %v3111, %v3107
        %v3716 = vpack.c.b16 %v3116, %v3112
        %v3717 = vpack.c.b16 %v3117, %v3113
        %v3718 = vpack.c.b16 %v3118, %v3114
        %v3719 = vpack.c.b16 %v3119, %v3115
        %v3720 = vpack.c.b16 %v3124, %v3120
        %v3721 = vpack.c.b16 %v3125, %v3121
        %v3722 = vpack.c.b16 %v3126, %v3122
        %v3723 = vpack.c.b16 %v3127, %v3123
        %v3724 = vpack.c.b16 %v3132, %v3128
        %v3725 = vpack.c.b16 %v3133, %v3129
        %v3726 = vpack.c.b16 %v3134, %v3130
        %v3727 = vpack.c.b16 %v3135, %v3131
        %v3728 = vpack.c.b16 %v3140, %v3136
        %v3729 = vpack.c.b16 %v3141, %v3137
        %v3730 = vpack.c.b16 %v3142, %v3138
        %v3731 = vpack.c.b16 %v3143, %v3139
        %v3732 = vpack.c.b16 %v3148, %v3144
        %v3733 = vpack.c.b16 %v3149, %v3145
        %v3734 = vpack.c.b16 %v3150, %v3146
        %v3735 = vpack.c.b16 %v3151, %v3147
        %v3736 = vpack.c.b16 %v3156, %v3152
        %v3737 = vpack.c.b16 %v3157, %v3153
        %v3738 = vpack.c.b16 %v3158, %v3154
        %v3739 = vpack.c.b16 %v3159, %v3155
        %v3740 = vpack.c.b16 %v3164, %v3160
        %v3741 = vpack.c.b16 %v3165, %v3161
        %v3742 = vpack.c.b16 %v3166, %v3162
        %v3743 = vpack.c.b16 %v3167, %v3163
        %v3744 = vpack.c.b16 %v3172, %v3168
        %v3745 = vpack.c.b16 %v3173, %v3169
        %v3746 = vpack.c.b16 %v3174, %v3170
        %v3747 = vpack.c.b16 %v3175, %v3171
        %v3748 = vpack.c.b16 %v3180, %v3176
        %v3749 = vpack.c.b16 %v3181, %v3177
        %v3750 = vpack.c.b16 %v3182, %v3178
        %v3751 = vpack.c.b16 %v3183, %v3179
        %v3752 = vpack.c.b16 %v3188, %v3184
        %v3753 = vpack.c.b16 %v3189, %v3185
        %v3754 = vpack.c.b16 %v3190, %v3186
        %v3755 = vpack.c.b16 %v3191, %v3187
        %v3756 = vpack.c.b16 %v3196, %v3192
        %v3757 = vpack.c.b16 %v3197, %v3193
        %v3758 = vpack.c.b16 %v3198, %v3194
        %v3759 = vpack.c.b16 %v3199, %v3195
        %v3760 = vpack.c.b16 %v3204, %v3200
        %v3761 = vpack.c.b16 %v3205, %v3201
        %v3762 = vpack.c.b16 %v3206, %v3202
        %v3763 = vpack.c.b16 %v3207, %v3203
        %v3764 = vpack.c.b16 %v3212, %v3208
        %v3765 = vpack.c.b16 %v3213, %v3209
        %v3766 = vpack.c.b16 %v3214, %v3210
        %v3767 = vpack.c.b16 %v3215, %v3211
        %v3768 = vpack.c.b16 %v3220, %v3216
        %v3769 = vpack.c.b16 %v3221, %v3217
        %v3770 = vpack.c.b16 %v3222, %v3218
        %v3771 = vpack.c.b16 %v3223, %v3219
        %v3772 = vpack.c.b16 %v3228, %v3224
        %v3773 = vpack.c.b16 %v3229, %v3225
        %v3774 = vpack.c.b16 %v3230, %v3226
        %v3775 = vpack.c.b16 %v3231, %v3227
        %v3776 = vpack.c.b16 %v3236, %v3232
        %v3777 = vpack.c.b16 %v3237, %v3233
        %v3778 = vpack.c.b16 %v3238, %v3234
        %v3779 = vpack.c.b16 %v3239, %v3235
        %v3780 = vpack.c.b16 %v3244, %v3240
        %v3781 = vpack.c.b16 %v3245, %v3241
        %v3782 = vpack.c.b16 %v3246, %v3242
        %v3783 = vpack.c.b16 %v3247, %v3243
        %v3784 = vpack.c.b16 %v3252, %v3248
        %v3785 = vpack.c.b16 %v3253, %v3249
        %v3786 = vpack.c.b16 %v3254, %v3250
        %v3787 = vpack.c.b16 %v3255, %v3251
        %v3788 = vpack.c.b16 %v3260, %v3256
        %v3789 = vpack.c.b16 %v3261, %v3257
        %v3790 = vpack.c.b16 %v3262, %v3258
        %v3791 = vpack.c.b16 %v3263, %v3259
        %v3792 = vpack.c.b16 %v3268, %v3264
        %v3793 = vpack.c.b16 %v3269, %v3265
        %v3794 = vpack.c.b16 %v3270, %v3266
        %v3795 = vpack.c.b16 %v3271, %v3267
        %v3796 = vpack.c.b16 %v3276, %v3272
        %v3797 = vpack.c.b16 %v3277, %v3273
        %v3798 = vpack.c.b16 %v3278, %v3274
        %v3799 = vpack.c.b16 %v3279, %v3275
        %v3800 = vpack.c.b16 %v3284, %v3280
        %v3801 = vpack.c.b16 %v3285, %v3281
        %v3802 = vpack.c.b16 %v3286, %v3282
        %v3803 = vpack.c.b16 %v3287, %v3283
        %v3804 = vpack.c.b16 %v3292, %v3288
        %v3805 = vpack.c.b16 %v3293, %v3289
        %v3806 = vpack.c.b16 %v3294, %v3290
        %v3807 = vpack.c.b16 %v3295, %v3291
        %v3808 = vpack.c.b16 %v3300, %v3296
        %v3809 = vpack.c.b16 %v3301, %v3297
        %v3810 = vpack.c.b16 %v3302, %v3298
        %v3811 = vpack.c.b16 %v3303, %v3299
        %v3812 = vpack.c.b16 %v3308, %v3304
        %v3813 = vpack.c.b16 %v3309, %v3305
        %v3814 = vpack.c.b16 %v3310, %v3306
        %v3815 = vpack.c.b16 %v3311, %v3307
        %v3816 = vpack.c.b16 %v3316, %v3312
        %v3817 = vpack.c.b16 %v3317, %v3313
        %v3818 = vpack.c.b16 %v3318, %v3314
        %v3819 = vpack.c.b16 %v3319, %v3315
        %v3820 = vpack.c.b16 %v3324, %v3320
        %v3821 = vpack.c.b16 %v3325, %v3321
        %v3822 = vpack.c.b16 %v3326, %v3322
        %v3823 = vpack.c.b16 %v3327, %v3323
        %v3824 = vpack.c.b16 %v3332, %v3328
        %v3825 = vpack.c.b16 %v3333, %v3329
        %v3826 = vpack.c.b16 %v3334, %v3330
        %v3827 = vpack.c.b16 %v3335, %v3331
        %v3828 = vpack.c.b16 %v3340, %v3336
        %v3829 = vpack.c.b16 %v3341, %v3337
        %v3830 = vpack.c.b16 %v3342, %v3338
        %v3831 = vpack.c.b16 %v3343, %v3339
        %v3832 = vpack.c.b16 %v3348, %v3344
        %v3833 = vpack.c.b16 %v3349, %v3345
        %v3834 = vpack.c.b16 %v3350, %v3346
        %v3835 = vpack.c.b16 %v3351, %v3347
        %v3836 = vpack.c.b16 %v3356, %v3352
        %v3837 = vpack.c.b16 %v3357, %v3353
        %v3838 = vpack.c.b16 %v3358, %v3354
        %v3839 = vpack.c.b16 %v3359, %v3355
        %v3840 = vpack.c.b16 %v3364, %v3360
        %v3841 = vpack.c.b16 %v3365, %v3361
        %v3842 = vpack.c.b16 %v3366, %v3362
        %v3843 = vpack.c.b16 %v3367, %v3363
        %v3844 = vpack.c.b16 %v3372, %v3368
        %v3845 = vpack.c.b16 %v3373, %v3369
        %v3846 = vpack.c.b16 %v3374, %v3370
        %v3847 = vpack.c.b16 %v3375, %v3371
        %v3848 = vpack.c.b16 %v3380, %v3376
        %v3849 = vpack.c.b16 %v3381, %v3377
        %v3850 = vpack.c.b16 %v3382, %v3378
        %v3851 = vpack.c.b16 %v3383, %v3379
        %v3852 = vpack.c.b16 %v3388, %v3384
        %v3853 = vpack.c.b16 %v3389, %v3385
        %v3854 = vpack.c.b16 %v3390, %v3386
        %v3855 = vpack.c.b16 %v3391, %v3387
        %v3856 = vpack.c.b16 %v3396, %v3392
        %v3857 = vpack.c.b16 %v3397, %v3393
        %v3858 = vpack.c.b16 %v3398, %v3394
        %v3859 = vpack.c.b16 %v3399, %v3395
        %v3860 = vpack.c.b16 %v3404, %v3400
        %v3861 = vpack.c.b16 %v3405, %v3401
        %v3862 = vpack.c.b16 %v3406, %v3402
        %v3863 = vpack.c.b16 %v3407, %v3403
        %v3864 = vpack.c.b16 %v3412, %v3408
        %v3865 = vpack.c.b16 %v3413, %v3409
        %v3866 = vpack.c.b16 %v3414, %v3410
        %v3867 = vpack.c.b16 %v3415, %v3411
        %v3868 = vpack.c.b16 %v3420, %v3416
        %v3869 = vpack.c.b16 %v3421, %v3417
        %v3870 = vpack.c.b16 %v3422, %v3418
        %v3871 = vpack.c.b16 %v3423, %v3419
        %v3872 = vpack.c.b16 %v3428, %v3424
        %v3873 = vpack.c.b16 %v3429, %v3425
        %v3874 = vpack.c.b16 %v3430, %v3426
        %v3875 = vpack.c.b16 %v3431, %v3427
        %v3876 = vpack.c.b16 %v3436, %v3432
        %v3877 = vpack.c.b16 %v3437, %v3433
        %v3878 = vpack.c.b16 %v3438, %v3434
        %v3879 = vpack.c.b16 %v3439, %v3435
        %v3880 = vpack.c.b16 %v3444, %v3440
        %v3881 = vpack.c.b16 %v3445, %v3441
        %v3882 = vpack.c.b16 %v3446, %v3442
        %v3883 = vpack.c.b16 %v3447, %v3443
        %v3884 = vpack.c.b16 %v3452, %v3448
        %v3885 = vpack.c.b16 %v3453, %v3449
        %v3886 = vpack.c.b16 %v3454, %v3450
        %v3887 = vpack.c.b16 %v3455, %v3451
        %v3888 = vpack.c.b16 %v3460, %v3456
        %v3889 = vpack.c.b16 %v3461, %v3457
        %v3890 = vpack.c.b16 %v3462, %v3458
        %v3891 = vpack.c.b16 %v3463, %v3459
        %v3892 = vpack.c.b16 %v3468, %v3464
        %v3893 = vpack.c.b16 %v3469, %v3465
        %v3894 = vpack.c.b16 %v3470, %v3466
        %v3895 = vpack.c.b16 %v3471, %v3467
        %v3896 = vpack.c.b16 %v3476, %v3472
        %v3897 = vpack.c.b16 %v3477, %v3473
        %v3898 = vpack.c.b16 %v3478, %v3474
        %v3899 = vpack.c.b16 %v3479, %v3475
        %v3900 = vpack.c.b16 %v3484, %v3480
        %v3901 = vpack.c.b16 %v3485, %v3481
        %v3902 = vpack.c.b16 %v3486, %v3482
        %v3903 = vpack.c.b16 %v3487, %v3483
        %v3904 = vpack.c.b16 %v3492, %v3488
        %v3905 = vpack.c.b16 %v3493, %v3489
        %v3906 = vpack.c.b16 %v3494, %v3490
        %v3907 = vpack.c.b16 %v3495, %v3491
        %v3908 = vpack.c.b16 %v3500, %v3496
        %v3909 = vpack.c.b16 %v3501, %v3497
        %v3910 = vpack.c.b16 %v3502, %v3498
        %v3911 = vpack.c.b16 %v3503, %v3499
        %v3912 = vpack.c.b16 %v3508, %v3504
        %v3913 = vpack.c.b16 %v3509, %v3505
        %v3914 = vpack.c.b16 %v3510, %v3506
        %v3915 = vpack.c.b16 %v3511, %v3507
        %v3916 = vpack.c.b16 %v3516, %v3512
        %v3917 = vpack.c.b16 %v3517, %v3513
        %v3918 = vpack.c.b16 %v3518, %v3514
        %v3919 = vpack.c.b16 %v3519, %v3515
        %v3920 = vpack.c.b16 %v3524, %v3520
        %v3921 = vpack.c.b16 %v3525, %v3521
        %v3922 = vpack.c.b16 %v3526, %v3522
        %v3923 = vpack.c.b16 %v3527, %v3523
        %v3924 = vpack.c.b16 %v3532, %v3528
        %v3925 = vpack.c.b16 %v3533, %v3529
        %v3926 = vpack.c.b16 %v3534, %v3530
        %v3927 = vpack.c.b16 %v3535, %v3531
        %v3928 = vpack.c.b16 %v3540, %v3536
        %v3929 = vpack.c.b16 %v3541, %v3537
        %v3930 = vpack.c.b16 %v3542, %v3538
        %v3931 = vpack.c.b16 %v3543, %v3539
        %v3932 = vpack.c.b16 %v3548, %v3544
        %v3933 = vpack.c.b16 %v3549, %v3545
        %v3934 = vpack.c.b16 %v3550, %v3546
        %v3935 = vpack.c.b16 %v3551, %v3547
        %v3936 = vpack.c.b16 %v3556, %v3552
        %v3937 = vpack.c.b16 %v3557, %v3553
        %v3938 = vpack.c.b16 %v3558, %v3554
        %v3939 = vpack.c.b16 %v3559, %v3555
        %v3940 = vpack.c.b16 %v3564, %v3560
        %v3941 = vpack.c.b16 %v3565, %v3561
        %v3942 = vpack.c.b16 %v3566, %v3562
        %v3943 = vpack.c.b16 %v3567, %v3563
        %v3944 = vpack.c.b16 %v3572, %v3568
        %v3945 = vpack.c.b16 %v3573, %v3569
        %v3946 = vpack.c.b16 %v3574, %v3570
        %v3947 = vpack.c.b16 %v3575, %v3571
        %v3948 = vpack.c.b16 %v3580, %v3576
        %v3949 = vpack.c.b16 %v3581, %v3577
        %v3950 = vpack.c.b16 %v3582, %v3578
        %v3951 = vpack.c.b16 %v3583, %v3579
        %v3952 = vpack.c.b16 %v3588, %v3584
        %v3953 = vpack.c.b16 %v3589, %v3585
        %v3954 = vpack.c.b16 %v3590, %v3586
        %v3955 = vpack.c.b16 %v3591, %v3587
        %v3956 = vpack.c.b16 %v3596, %v3592
        %v3957 = vpack.c.b16 %v3597, %v3593
        %v3958 = vpack.c.b16 %v3598, %v3594
        %v3959 = vpack.c.b16 %v3599, %v3595
        %v3960 = vpack.c.b16 %v3604, %v3600
        %v3961 = vpack.c.b16 %v3605, %v3601
        %v3962 = vpack.c.b16 %v3606, %v3602
        %v3963 = vpack.c.b16 %v3607, %v3603
        %v3964 = vpack.c.b16 %v3612, %v3608
        %v3965 = vpack.c.b16 %v3613, %v3609
        %v3966 = vpack.c.b16 %v3614, %v3610
        %v3967 = vpack.c.b16 %v3615, %v3611
        %v3968 = vpack.c.b16 %v3620, %v3616
        %v3969 = vpack.c.b16 %v3621, %v3617
        %v3970 = vpack.c.b16 %v3622, %v3618
        %v3971 = vpack.c.b16 %v3623, %v3619
        %v3972 = vpack.c.b16 %v3628, %v3624
        %v3973 = vpack.c.b16 %v3629, %v3625
        %v3974 = vpack.c.b16 %v3630, %v3626
        %v3975 = vpack.c.b16 %v3631, %v3627
        %v3976 = vpack.c.b16 %v3636, %v3632
        %v3977 = vpack.c.b16 %v3637, %v3633
        %v3978 = vpack.c.b16 %v3638, %v3634
        %v3979 = vpack.c.b16 %v3639, %v3635
        %v3980 = vpack.c.b16 %v3644, %v3640
        %v3981 = vpack.c.b16 %v3645, %v3641
        %v3982 = vpack.c.b16 %v3646, %v3642
        %v3983 = vpack.c.b16 %v3647, %v3643
        %v3984 = vpack.c.b16 %v3652, %v3648
        %v3985 = vpack.c.b16 %v3653, %v3649
        %v3986 = vpack.c.b16 %v3654, %v3650
        %v3987 = vpack.c.b16 %v3655, %v3651
        %v3988 = vpack.c.b16 %v3660, %v3656
        %v3989 = vpack.c.b16 %v3661, %v3657
        %v3990 = vpack.c.b16 %v3662, %v3658
        %v3991 = vpack.c.b16 %v3663, %v3659
        %v3992 = vpack.c.b16 %v3668, %v3664
        %v3993 = vpack.c.b16 %v3669, %v3665
        %v3994 = vpack.c.b16 %v3670, %v3666
        %v3995 = vpack.c.b16 %v3671, %v3667
        %v3996 = vpack.c.b16 %v3676, %v3672
        %v3997 = vpack.c.b16 %v3677, %v3673
        %v3998 = vpack.c.b16 %v3678, %v3674
        %v3999 = vpack.c.b16 %v3679, %v3675
        %4320 = vmatprep.subr.bf16.mxu0 %v3681
        %4321 = vmatpush1.bf16.msra.mxu0 %v3680
        %4322 = vmatprep.subr.bf16.mxu0 %v3685
        %4323 = vmatpush1.bf16.msra.mxu0 %v3684
        %4324 = vmatprep.subr.bf16.mxu0 %v3689
        %4325 = vmatpush1.bf16.msra.mxu0 %v3688
        %4326 = vmatprep.subr.bf16.mxu0 %v3693
        %4327 = vmatpush1.bf16.msra.mxu0 %v3692
        %4328 = vmatprep.subr.bf16.mxu0 %v3697
        %4329 = vmatpush1.bf16.msra.mxu0 %v3696
        %4330 = vmatprep.subr.bf16.mxu0 %v3701
        %4331 = vmatpush1.bf16.msra.mxu0 %v3700
        %4332 = vmatprep.subr.bf16.mxu0 %v3705
        %4333 = vmatpush1.bf16.msra.mxu0 %v3704
        %4334 = vmatprep.subr.bf16.mxu0 %v3709
        %4335 = vmatpush1.bf16.msra.mxu0 %v3708
        %4336 = vmatprep.subr.bf16.mxu0 %v3713
        %4337 = vmatpush1.bf16.msra.mxu0 %v3712
        %4338 = vmatprep.subr.bf16.mxu0 %v3717
        %4339 = vmatpush1.bf16.msra.mxu0 %v3716
        %4340 = vmatprep.subr.bf16.mxu0 %v3721
        %4341 = vmatpush1.bf16.msra.mxu0 %v3720
        %4342 = vmatprep.subr.bf16.mxu0 %v3725
        %4343 = vmatpush1.bf16.msra.mxu0 %v3724
        %4344 = vmatprep.subr.bf16.mxu0 %v3729
        %4345 = vmatpush1.bf16.msra.mxu0 %v3728
        %4346 = vmatprep.subr.bf16.mxu0 %v3733
        %4347 = vmatpush1.bf16.msra.mxu0 %v3732
        %4348 = vmatprep.subr.bf16.mxu0 %v3737
        %4349 = vmatpush1.bf16.msra.mxu0 %v3736
        %4350 = vmatprep.subr.bf16.mxu0 %v3741
        %4351 = vmatpush1.bf16.msra.mxu0 %v3740
        %4352 = vmatprep.mubr.bf16.mxu0 %v2140
        %4353 = vmatmul.mubr.bf16.gmra.mrb[0].mxu0 %v2139
        %v4354 = vpop.f32.mrb[0].mxu0
        %v4355 = vadd.f32 0.0, %v4354
        %v4356 = vpop.f32.mrb[0].mxu0
        %v4357 = vadd.f32 0.0, %v4356
        %v4358 = vpop.f32.mrb[0].mxu0
        %v4359 = vadd.f32 0.0, %v4358
        %v4360 = vpop.f32.mrb[0].mxu0
        %v4361 = vadd.f32 0.0, %v4360
        %4362 = vmatprep.mubr.bf16.mxu0 %v2142
        %4363 = vmatmul.mubr.bf16.gmra.mrb[0].mxu0 %v2141
        %v4364 = vpop.f32.mrb[0].mxu0
        %v4365 = vadd.f32 0.0, %v4364
        %v4366 = vpop.f32.mrb[0].mxu0
        %v4367 = vadd.f32 0.0, %v4366
        %v4368 = vpop.f32.mrb[0].mxu0
        %v4369 = vadd.f32 0.0, %v4368
        %v4370 = vpop.f32.mrb[0].mxu0
        %v4371 = vadd.f32 0.0, %v4370
        %4372 = vmatprep.mubr.bf16.mxu0 %v2144
        %4373 = vmatmul.mubr.bf16.gmra.mrb[0].mxu0 %v2143
        %v4374 = vpop.f32.mrb[0].mxu0
        %v4375 = vadd.f32 0.0, %v4374
        %v4376 = vpop.f32.mrb[0].mxu0
        %v4377 = vadd.f32 0.0, %v4376
        %v4378 = vpop.f32.mrb[0].mxu0
        %v4379 = vadd.f32 0.0, %v4378
        %v4380 = vpop.f32.mrb[0].mxu0
        %v4381 = vadd.f32 0.0, %v4380
        %4382 = vmatprep.mubr.bf16.mxu0 %v2146
        %4383 = vmatmul.mubr.bf16.gmra.mrb[0].mxu0 %v2145
        %v4384 = vpop.f32.mrb[0].mxu0
        %v4385 = vadd.f32 0.0, %v4384
        %v4386 = vpop.f32.mrb[0].mxu0
        %v4387 = vadd.f32 0.0, %v4386
        %v4388 = vpop.f32.mrb[0].mxu0
        %v4389 = vadd.f32 0.0, %v4388
        %v4390 = vpop.f32.mrb[0].mxu0
        %v4391 = vadd.f32 0.0, %v4390
        %4392 = vmatprep.mubr.bf16.mxu0 %v2148
        %4393 = vmatmul.mubr.bf16.gmra.mrb[0].mxu0 %v2147
        %v4394 = vpop.f32.mrb[0].mxu0
        %v4395 = vadd.f32 0.0, %v4394
        %v4396 = vpop.f32.mrb[0].mxu0
        %v4397 = vadd.f32 0.0, %v4396
        %v4398 = vpop.f32.mrb[0].mxu0
        %v4399 = vadd.f32 0.0, %v4398
        %v4400 = vpop.f32.mrb[0].mxu0
        %v4401 = vadd.f32 0.0, %v4400
        %4402 = vmatprep.mubr.bf16.mxu0 %v2150
        %4403 = vmatmul.mubr.bf16.gmra.mrb[0].mxu0 %v2149
        %v4404 = vpop.f32.mrb[0].mxu0
        %v4405 = vadd.f32 0.0, %v4404
        %v4406 = vpop.f32.mrb[0].mxu0
        %v4407 = vadd.f32 0.0, %v4406
        %v4408 = vpop.f32.mrb[0].mxu0
        %v4409 = vadd.f32 0.0, %v4408
        %v4410 = vpop.f32.mrb[0].mxu0
        %v4411 = vadd.f32 0.0, %v4410
        %4412 = vmatprep.mubr.bf16.mxu0 %v2152
        %4413 = vmatmul.mubr.bf16.gmra.mrb[0].mxu0 %v2151
        %v4414 = vpop.f32.mrb[0].mxu0
        %v4415 = vadd.f32 0.0, %v4414
        %v4416 = vpop.f32.mrb[0].mxu0
        %v4417 = vadd.f32 0.0, %v4416
        %v4418 = vpop.f32.mrb[0].mxu0
        %v4419 = vadd.f32 0.0, %v4418
        %v4420 = vpop.f32.mrb[0].mxu0
        %v4421 = vadd.f32 0.0, %v4420
        %4422 = vmatprep.mubr.bf16.mxu0 %v2154
        %4423 = vmatmul.mubr.bf16.gmra.mrb[0].mxu0 %v2153
        %v4424 = vpop.f32.mrb[0].mxu0
        %v4425 = vadd.f32 0.0, %v4424
        %v4426 = vpop.f32.mrb[0].mxu0
        %v4427 = vadd.f32 0.0, %v4426
        %v4428 = vpop.f32.mrb[0].mxu0
        %v4429 = vadd.f32 0.0, %v4428
        %v4430 = vpop.f32.mrb[0].mxu0
        %v4431 = vadd.f32 0.0, %v4430
        %4432 = vmatprep.mubr.bf16.mxu0 %v2156
        %4433 = vmatmul.mubr.bf16.gmra.mrb[0].mxu0 %v2155
        %v4434 = vpop.f32.mrb[0].mxu0
        %v4435 = vadd.f32 0.0, %v4434
        %v4436 = vpop.f32.mrb[0].mxu0
        %v4437 = vadd.f32 0.0, %v4436
        %v4438 = vpop.f32.mrb[0].mxu0
        %v4439 = vadd.f32 0.0, %v4438
        %v4440 = vpop.f32.mrb[0].mxu0
        %v4441 = vadd.f32 0.0, %v4440
        %4442 = vmatprep.mubr.bf16.mxu0 %v2158
        %4443 = vmatmul.mubr.bf16.gmra.mrb[0].mxu0 %v2157
        %v4444 = vpop.f32.mrb[0].mxu0
        %v4445 = vadd.f32 0.0, %v4444
        %v4446 = vpop.f32.mrb[0].mxu0
        %v4447 = vadd.f32 0.0, %v4446
        %v4448 = vpop.f32.mrb[0].mxu0
        %v4449 = vadd.f32 0.0, %v4448
        %v4450 = vpop.f32.mrb[0].mxu0
        %v4451 = vadd.f32 0.0, %v4450
        %4452 = vdwg.mxu0
        %4453 = vmatprep.subr.bf16.mxu0 %v3745
        %4454 = vmatpush1.bf16.msra.mxu0 %v3744
        %4455 = vmatprep.subr.bf16.mxu0 %v3749
        %4456 = vmatpush1.bf16.msra.mxu0 %v3748
        %4457 = vmatprep.subr.bf16.mxu0 %v3753
        %4458 = vmatpush1.bf16.msra.mxu0 %v3752
        %4459 = vmatprep.subr.bf16.mxu0 %v3757
        %4460 = vmatpush1.bf16.msra.mxu0 %v3756
        %4461 = vmatprep.subr.bf16.mxu0 %v3761
        %4462 = vmatpush1.bf16.msra.mxu0 %v3760
        %4463 = vmatprep.subr.bf16.mxu0 %v3765
        %4464 = vmatpush1.bf16.msra.mxu0 %v3764
        %4465 = vmatprep.subr.bf16.mxu0 %v3769
        %4466 = vmatpush1.bf16.msra.mxu0 %v3768
        %4467 = vmatprep.subr.bf16.mxu0 %v3773
        %4468 = vmatpush1.bf16.msra.mxu0 %v3772
        %4469 = vmatprep.subr.bf16.mxu0 %v3777
        %4470 = vmatpush1.bf16.msra.mxu0 %v3776
        %4471 = vmatprep.subr.bf16.mxu0 %v3781
        %4472 = vmatpush1.bf16.msra.mxu0 %v3780
        %4473 = vmatprep.subr.bf16.mxu0 %v3785
        %4474 = vmatpush1.bf16.msra.mxu0 %v3784
        %4475 = vmatprep.subr.bf16.mxu0 %v3789
        %4476 = vmatpush1.bf16.msra.mxu0 %v3788
        %4477 = vmatprep.subr.bf16.mxu0 %v3793
        %4478 = vmatpush1.bf16.msra.mxu0 %v3792
        %4479 = vmatprep.subr.bf16.mxu0 %v3797
        %4480 = vmatpush1.bf16.msra.mxu0 %v3796
        %4481 = vmatprep.subr.bf16.mxu0 %v3801
        %4482 = vmatpush1.bf16.msra.mxu0 %v3800
        %4483 = vmatprep.subr.bf16.mxu0 %v3805
        %4484 = vmatpush1.bf16.msra.mxu0 %v3804
        %4485 = vmatprep.mubr.bf16.mxu0 %v2201
        %4486 = vmatmul.mubr.bf16.gmra.mrb[0].mxu0 %v2200
        %v4487 = vpop.f32.mrb[0].mxu0
        %v4488 = vadd.f32 %v4355, %v4487
        %v4489 = vpop.f32.mrb[0].mxu0
        %v4490 = vadd.f32 %v4357, %v4489
        %v4491 = vpop.f32.mrb[0].mxu0
        %v4492 = vadd.f32 %v4359, %v4491
        %v4493 = vpop.f32.mrb[0].mxu0
        %v4494 = vadd.f32 %v4361, %v4493
        %4495 = vmatprep.mubr.bf16.mxu0 %v2203
        %4496 = vmatmul.mubr.bf16.gmra.mrb[0].mxu0 %v2202
        %v4497 = vpop.f32.mrb[0].mxu0
        %v4498 = vadd.f32 %v4365, %v4497
        %v4499 = vpop.f32.mrb[0].mxu0
        %v4500 = vadd.f32 %v4367, %v4499
        %v4501 = vpop.f32.mrb[0].mxu0
        %v4502 = vadd.f32 %v4369, %v4501
        %v4503 = vpop.f32.mrb[0].mxu0
        %v4504 = vadd.f32 %v4371, %v4503
        %4505 = vmatprep.mubr.bf16.mxu0 %v2205
        %4506 = vmatmul.mubr.bf16.gmra.mrb[0].mxu0 %v2204
        %v4507 = vpop.f32.mrb[0].mxu0
        %v4508 = vadd.f32 %v4375, %v4507
        %v4509 = vpop.f32.mrb[0].mxu0
        %v4510 = vadd.f32 %v4377, %v4509
        %v4511 = vpop.f32.mrb[0].mxu0
        %v4512 = vadd.f32 %v4379, %v4511
        %v4513 = vpop.f32.mrb[0].mxu0
        %v4514 = vadd.f32 %v4381, %v4513
        %4515 = vmatprep.mubr.bf16.mxu0 %v2207
        %4516 = vmatmul.mubr.bf16.gmra.mrb[0].mxu0 %v2206
        %v4517 = vpop.f32.mrb[0].mxu0
        %v4518 = vadd.f32 %v4385, %v4517
        %v4519 = vpop.f32.mrb[0].mxu0
        %v4520 = vadd.f32 %v4387, %v4519
        %v4521 = vpop.f32.mrb[0].mxu0
        %v4522 = vadd.f32 %v4389, %v4521
        %v4523 = vpop.f32.mrb[0].mxu0
        %v4524 = vadd.f32 %v4391, %v4523
        %4525 = vmatprep.mubr.bf16.mxu0 %v2209
        %4526 = vmatmul.mubr.bf16.gmra.mrb[0].mxu0 %v2208
        %v4527 = vpop.f32.mrb[0].mxu0
        %v4528 = vadd.f32 %v4395, %v4527
        %v4529 = vpop.f32.mrb[0].mxu0
        %v4530 = vadd.f32 %v4397, %v4529
        %v4531 = vpop.f32.mrb[0].mxu0
        %v4532 = vadd.f32 %v4399, %v4531
        %v4533 = vpop.f32.mrb[0].mxu0
        %v4534 = vadd.f32 %v4401, %v4533
        %4535 = vmatprep.mubr.bf16.mxu0 %v2211
        %4536 = vmatmul.mubr.bf16.gmra.mrb[0].mxu0 %v2210
        %v4537 = vpop.f32.mrb[0].mxu0
        %v4538 = vadd.f32 %v4405, %v4537
        %v4539 = vpop.f32.mrb[0].mxu0
        %v4540 = vadd.f32 %v4407, %v4539
        %v4541 = vpop.f32.mrb[0].mxu0
        %v4542 = vadd.f32 %v4409, %v4541
        %v4543 = vpop.f32.mrb[0].mxu0
        %v4544 = vadd.f32 %v4411, %v4543
        %4545 = vmatprep.mubr.bf16.mxu0 %v2213
        %4546 = vmatmul.mubr.bf16.gmra.mrb[0].mxu0 %v2212
        %v4547 = vpop.f32.mrb[0].mxu0
        %v4548 = vadd.f32 %v4415, %v4547
        %v4549 = vpop.f32.mrb[0].mxu0
        %v4550 = vadd.f32 %v4417, %v4549
        %v4551 = vpop.f32.mrb[0].mxu0
        %v4552 = vadd.f32 %v4419, %v4551
        %v4553 = vpop.f32.mrb[0].mxu0
        %v4554 = vadd.f32 %v4421, %v4553
        %4555 = vmatprep.mubr.bf16.mxu0 %v2215
        %4556 = vmatmul.mubr.bf16.gmra.mrb[0].mxu0 %v2214
        %v4557 = vpop.f32.mrb[0].mxu0
        %v4558 = vadd.f32 %v4425, %v4557
        %v4559 = vpop.f32.mrb[0].mxu0
        %v4560 = vadd.f32 %v4427, %v4559
        %v4561 = vpop.f32.mrb[0].mxu0
        %v4562 = vadd.f32 %v4429, %v4561
        %v4563 = vpop.f32.mrb[0].mxu0
        %v4564 = vadd.f32 %v4431, %v4563
        %4565 = vmatprep.mubr.bf16.mxu0 %v2217
        %4566 = vmatmul.mubr.bf16.gmra.mrb[0].mxu0 %v2216
        %v4567 = vpop.f32.mrb[0].mxu0
        %v4568 = vadd.f32 %v4435, %v4567
        %v4569 = vpop.f32.mrb[0].mxu0
        %v4570 = vadd.f32 %v4437, %v4569
        %v4571 = vpop.f32.mrb[0].mxu0
        %v4572 = vadd.f32 %v4439, %v4571
        %v4573 = vpop.f32.mrb[0].mxu0
        %v4574 = vadd.f32 %v4441, %v4573
        %4575 = vmatprep.mubr.bf16.mxu0 %v2219
        %4576 = vmatmul.mubr.bf16.gmra.mrb[0].mxu0 %v2218
        %v4577 = vpop.f32.mrb[0].mxu0
        %v4578 = vadd.f32 %v4445, %v4577
        %v4579 = vpop.f32.mrb[0].mxu0
        %v4580 = vadd.f32 %v4447, %v4579
        %v4581 = vpop.f32.mrb[0].mxu0
        %v4582 = vadd.f32 %v4449, %v4581
        %v4583 = vpop.f32.mrb[0].mxu0
        %v4584 = vadd.f32 %v4451, %v4583
        %4585 = vdwg.mxu0
        %4586 = vmatprep.subr.bf16.mxu0 %v3809
        %4587 = vmatpush1.bf16.msra.mxu0 %v3808
        %4588 = vmatprep.subr.bf16.mxu0 %v3813
        %4589 = vmatpush1.bf16.msra.mxu0 %v3812
        %4590 = vmatprep.subr.bf16.mxu0 %v3817
        %4591 = vmatpush1.bf16.msra.mxu0 %v3816
        %4592 = vmatprep.subr.bf16.mxu0 %v3821
        %4593 = vmatpush1.bf16.msra.mxu0 %v3820
        %4594 = vmatprep.subr.bf16.mxu0 %v3825
        %4595 = vmatpush1.bf16.msra.mxu0 %v3824
        %4596 = vmatprep.subr.bf16.mxu0 %v3829
        %4597 = vmatpush1.bf16.msra.mxu0 %v3828
        %4598 = vmatprep.subr.bf16.mxu0 %v3833
        %4599 = vmatpush1.bf16.msra.mxu0 %v3832
        %4600 = vmatprep.subr.bf16.mxu0 %v3837
        %4601 = vmatpush1.bf16.msra.mxu0 %v3836
        %4602 = vmatprep.subr.bf16.mxu0 %v3841
        %4603 = vmatpush1.bf16.msra.mxu0 %v3840
        %4604 = vmatprep.subr.bf16.mxu0 %v3845
        %4605 = vmatpush1.bf16.msra.mxu0 %v3844
        %4606 = vmatprep.subr.bf16.mxu0 %v3849
        %4607 = vmatpush1.bf16.msra.mxu0 %v3848
        %4608 = vmatprep.subr.bf16.mxu0 %v3853
        %4609 = vmatpush1.bf16.msra.mxu0 %v3852
        %4610 = vmatprep.subr.bf16.mxu0 %v3857
        %4611 = vmatpush1.bf16.msra.mxu0 %v3856
        %4612 = vmatprep.subr.bf16.mxu0 %v3861
        %4613 = vmatpush1.bf16.msra.mxu0 %v3860
        %4614 = vmatprep.subr.bf16.mxu0 %v3865
        %4615 = vmatpush1.bf16.msra.mxu0 %v3864
        %4616 = vmatprep.subr.bf16.mxu0 %v3869
        %4617 = vmatpush1.bf16.msra.mxu0 %v3868
        %4618 = vmatprep.mubr.bf16.mxu0 %v2261
        %4619 = vmatmul.mubr.bf16.gmra.mrb[0].mxu0 %v2260
        %v4620 = vpop.f32.mrb[0].mxu0
        %v4621 = vadd.f32 %v4488, %v4620
        %v4622 = vpop.f32.mrb[0].mxu0
        %v4623 = vadd.f32 %v4490, %v4622
        %v4624 = vpop.f32.mrb[0].mxu0
        %v4625 = vadd.f32 %v4492, %v4624
        %v4626 = vpop.f32.mrb[0].mxu0
        %v4627 = vadd.f32 %v4494, %v4626
        %4628 = vmatprep.mubr.bf16.mxu0 %v2263
        %4629 = vmatmul.mubr.bf16.gmra.mrb[0].mxu0 %v2262
        %v4630 = vpop.f32.mrb[0].mxu0
        %v4631 = vadd.f32 %v4498, %v4630
        %v4632 = vpop.f32.mrb[0].mxu0
        %v4633 = vadd.f32 %v4500, %v4632
        %v4634 = vpop.f32.mrb[0].mxu0
        %v4635 = vadd.f32 %v4502, %v4634
        %v4636 = vpop.f32.mrb[0].mxu0
        %v4637 = vadd.f32 %v4504, %v4636
        %4638 = vmatprep.mubr.bf16.mxu0 %v2265
        %4639 = vmatmul.mubr.bf16.gmra.mrb[0].mxu0 %v2264
        %v4640 = vpop.f32.mrb[0].mxu0
        %v4641 = vadd.f32 %v4508, %v4640
        %v4642 = vpop.f32.mrb[0].mxu0
        %v4643 = vadd.f32 %v4510, %v4642
        %v4644 = vpop.f32.mrb[0].mxu0
        %v4645 = vadd.f32 %v4512, %v4644
        %v4646 = vpop.f32.mrb[0].mxu0
        %v4647 = vadd.f32 %v4514, %v4646
        %4648 = vmatprep.mubr.bf16.mxu0 %v2267
        %4649 = vmatmul.mubr.bf16.gmra.mrb[0].mxu0 %v2266
        %v4650 = vpop.f32.mrb[0].mxu0
        %v4651 = vadd.f32 %v4518, %v4650
        %v4652 = vpop.f32.mrb[0].mxu0
        %v4653 = vadd.f32 %v4520, %v4652
        %v4654 = vpop.f32.mrb[0].mxu0
        %v4655 = vadd.f32 %v4522, %v4654
        %v4656 = vpop.f32.mrb[0].mxu0
        %v4657 = vadd.f32 %v4524, %v4656
        %4658 = vmatprep.mubr.bf16.mxu0 %v2269
        %4659 = vmatmul.mubr.bf16.gmra.mrb[0].mxu0 %v2268
        %v4660 = vpop.f32.mrb[0].mxu0
        %v4661 = vadd.f32 %v4528, %v4660
        %v4662 = vpop.f32.mrb[0].mxu0
        %v4663 = vadd.f32 %v4530, %v4662
        %v4664 = vpop.f32.mrb[0].mxu0
        %v4665 = vadd.f32 %v4532, %v4664
        %v4666 = vpop.f32.mrb[0].mxu0
        %v4667 = vadd.f32 %v4534, %v4666
        %4668 = vmatprep.mubr.bf16.mxu0 %v2271
        %4669 = vmatmul.mubr.bf16.gmra.mrb[0].mxu0 %v2270
        %v4670 = vpop.f32.mrb[0].mxu0
        %v4671 = vadd.f32 %v4538, %v4670
        %v4672 = vpop.f32.mrb[0].mxu0
        %v4673 = vadd.f32 %v4540, %v4672
        %v4674 = vpop.f32.mrb[0].mxu0
        %v4675 = vadd.f32 %v4542, %v4674
        %v4676 = vpop.f32.mrb[0].mxu0
        %v4677 = vadd.f32 %v4544, %v4676
        %4678 = vmatprep.mubr.bf16.mxu0 %v2273
        %4679 = vmatmul.mubr.bf16.gmra.mrb[0].mxu0 %v2272
        %v4680 = vpop.f32.mrb[0].mxu0
        %v4681 = vadd.f32 %v4548, %v4680
        %v4682 = vpop.f32.mrb[0].mxu0
        %v4683 = vadd.f32 %v4550, %v4682
        %v4684 = vpop.f32.mrb[0].mxu0
        %v4685 = vadd.f32 %v4552, %v4684
        %v4686 = vpop.f32.mrb[0].mxu0
        %v4687 = vadd.f32 %v4554, %v4686
        %4688 = vmatprep.mubr.bf16.mxu0 %v2275
        %4689 = vmatmul.mubr.bf16.gmra.mrb[0].mxu0 %v2274
        %v4690 = vpop.f32.mrb[0].mxu0
        %v4691 = vadd.f32 %v4558, %v4690
        %v4692 = vpop.f32.mrb[0].mxu0
        %v4693 = vadd.f32 %v4560, %v4692
        %v4694 = vpop.f32.mrb[0].mxu0
        %v4695 = vadd.f32 %v4562, %v4694
        %v4696 = vpop.f32.mrb[0].mxu0
        %v4697 = vadd.f32 %v4564, %v4696
        %4698 = vmatprep.mubr.bf16.mxu0 %v2277
        %4699 = vmatmul.mubr.bf16.gmra.mrb[0].mxu0 %v2276
        %v4700 = vpop.f32.mrb[0].mxu0
        %v4701 = vadd.f32 %v4568, %v4700
        %v4702 = vpop.f32.mrb[0].mxu0
        %v4703 = vadd.f32 %v4570, %v4702
        %v4704 = vpop.f32.mrb[0].mxu0
        %v4705 = vadd.f32 %v4572, %v4704
        %v4706 = vpop.f32.mrb[0].mxu0
        %v4707 = vadd.f32 %v4574, %v4706
        %4708 = vmatprep.mubr.bf16.mxu0 %v2279
        %4709 = vmatmul.mubr.bf16.gmra.mrb[0].mxu0 %v2278
        %v4710 = vpop.f32.mrb[0].mxu0
        %v4711 = vadd.f32 %v4578, %v4710
        %v4712 = vpop.f32.mrb[0].mxu0
        %v4713 = vadd.f32 %v4580, %v4712
        %v4714 = vpop.f32.mrb[0].mxu0
        %v4715 = vadd.f32 %v4582, %v4714
        %v4716 = vpop.f32.mrb[0].mxu0
        %v4717 = vadd.f32 %v4584, %v4716
        %4718 = vdwg.mxu0
        %4719 = vmatprep.subr.bf16.mxu0 %v3873
        %4720 = vmatpush1.bf16.msra.mxu0 %v3872
        %4721 = vmatprep.subr.bf16.mxu0 %v3877
        %4722 = vmatpush1.bf16.msra.mxu0 %v3876
        %4723 = vmatprep.subr.bf16.mxu0 %v3881
        %4724 = vmatpush1.bf16.msra.mxu0 %v3880
        %4725 = vmatprep.subr.bf16.mxu0 %v3885
        %4726 = vmatpush1.bf16.msra.mxu0 %v3884
        %4727 = vmatprep.subr.bf16.mxu0 %v3889
        %4728 = vmatpush1.bf16.msra.mxu0 %v3888
        %4729 = vmatprep.subr.bf16.mxu0 %v3893
        %4730 = vmatpush1.bf16.msra.mxu0 %v3892
        %4731 = vmatprep.subr.bf16.mxu0 %v3897
        %4732 = vmatpush1.bf16.msra.mxu0 %v3896
        %4733 = vmatprep.subr.bf16.mxu0 %v3901
        %4734 = vmatpush1.bf16.msra.mxu0 %v3900
        %4735 = vmatprep.subr.bf16.mxu0 %v3905
        %4736 = vmatpush1.bf16.msra.mxu0 %v3904
        %4737 = vmatprep.subr.bf16.mxu0 %v3909
        %4738 = vmatpush1.bf16.msra.mxu0 %v3908
        %4739 = vmatprep.subr.bf16.mxu0 %v3913
        %4740 = vmatpush1.bf16.msra.mxu0 %v3912
        %4741 = vmatprep.subr.bf16.mxu0 %v3917
        %4742 = vmatpush1.bf16.msra.mxu0 %v3916
        %4743 = vmatprep.subr.bf16.mxu0 %v3921
        %4744 = vmatpush1.bf16.msra.mxu0 %v3920
        %4745 = vmatprep.subr.bf16.mxu0 %v3925
        %4746 = vmatpush1.bf16.msra.mxu0 %v3924
        %4747 = vmatprep.subr.bf16.mxu0 %v3929
        %4748 = vmatpush1.bf16.msra.mxu0 %v3928
        %4749 = vmatprep.subr.bf16.mxu0 %v3933
        %4750 = vmatpush1.bf16.msra.mxu0 %v3932
        %4751 = vmatprep.mubr.bf16.mxu0 %v2321
        %4752 = vmatmul.mubr.bf16.gmra.mrb[0].mxu0 %v2320
        %v4753 = vpop.f32.mrb[0].mxu0
        %v4754 = vadd.f32 %v4621, %v4753
        %v4755 = vpop.f32.mrb[0].mxu0
        %v4756 = vadd.f32 %v4623, %v4755
        %v4757 = vpop.f32.mrb[0].mxu0
        %v4758 = vadd.f32 %v4625, %v4757
        %v4759 = vpop.f32.mrb[0].mxu0
        %v4760 = vadd.f32 %v4627, %v4759
        %4761 = vmatprep.mubr.bf16.mxu0 %v2323
        %4762 = vmatmul.mubr.bf16.gmra.mrb[0].mxu0 %v2322
        %v4763 = vpop.f32.mrb[0].mxu0
        %v4764 = vadd.f32 %v4631, %v4763
        %v4765 = vpop.f32.mrb[0].mxu0
        %v4766 = vadd.f32 %v4633, %v4765
        %v4767 = vpop.f32.mrb[0].mxu0
        %v4768 = vadd.f32 %v4635, %v4767
        %v4769 = vpop.f32.mrb[0].mxu0
        %v4770 = vadd.f32 %v4637, %v4769
        %4771 = vmatprep.mubr.bf16.mxu0 %v2325
        %4772 = vmatmul.mubr.bf16.gmra.mrb[0].mxu0 %v2324
        %v4773 = vpop.f32.mrb[0].mxu0
        %v4774 = vadd.f32 %v4641, %v4773
        %v4775 = vpop.f32.mrb[0].mxu0
        %v4776 = vadd.f32 %v4643, %v4775
        %v4777 = vpop.f32.mrb[0].mxu0
        %v4778 = vadd.f32 %v4645, %v4777
        %v4779 = vpop.f32.mrb[0].mxu0
        %v4780 = vadd.f32 %v4647, %v4779
        %4781 = vmatprep.mubr.bf16.mxu0 %v2327
        %4782 = vmatmul.mubr.bf16.gmra.mrb[0].mxu0 %v2326
        %v4783 = vpop.f32.mrb[0].mxu0
        %v4784 = vadd.f32 %v4651, %v4783
        %v4785 = vpop.f32.mrb[0].mxu0
        %v4786 = vadd.f32 %v4653, %v4785
        %v4787 = vpop.f32.mrb[0].mxu0
        %v4788 = vadd.f32 %v4655, %v4787
        %v4789 = vpop.f32.mrb[0].mxu0
        %v4790 = vadd.f32 %v4657, %v4789
        %4791 = vmatprep.mubr.bf16.mxu0 %v2329
        %4792 = vmatmul.mubr.bf16.gmra.mrb[0].mxu0 %v2328
        %v4793 = vpop.f32.mrb[0].mxu0
        %v4794 = vadd.f32 %v4661, %v4793
        %v4795 = vpop.f32.mrb[0].mxu0
        %v4796 = vadd.f32 %v4663, %v4795
        %v4797 = vpop.f32.mrb[0].mxu0
        %v4798 = vadd.f32 %v4665, %v4797
        %v4799 = vpop.f32.mrb[0].mxu0
        %v4800 = vadd.f32 %v4667, %v4799
        %4801 = vmatprep.mubr.bf16.mxu0 %v2331
        %4802 = vmatmul.mubr.bf16.gmra.mrb[0].mxu0 %v2330
        %v4803 = vpop.f32.mrb[0].mxu0
        %v4804 = vadd.f32 %v4671, %v4803
        %v4805 = vpop.f32.mrb[0].mxu0
        %v4806 = vadd.f32 %v4673, %v4805
        %v4807 = vpop.f32.mrb[0].mxu0
        %v4808 = vadd.f32 %v4675, %v4807
        %v4809 = vpop.f32.mrb[0].mxu0
        %v4810 = vadd.f32 %v4677, %v4809
        %4811 = vmatprep.mubr.bf16.mxu0 %v2333
        %4812 = vmatmul.mubr.bf16.gmra.mrb[0].mxu0 %v2332
        %v4813 = vpop.f32.mrb[0].mxu0
        %v4814 = vadd.f32 %v4681, %v4813
        %v4815 = vpop.f32.mrb[0].mxu0
        %v4816 = vadd.f32 %v4683, %v4815
        %v4817 = vpop.f32.mrb[0].mxu0
        %v4818 = vadd.f32 %v4685, %v4817
        %v4819 = vpop.f32.mrb[0].mxu0
        %v4820 = vadd.f32 %v4687, %v4819
        %4821 = vmatprep.mubr.bf16.mxu0 %v2335
        %4822 = vmatmul.mubr.bf16.gmra.mrb[0].mxu0 %v2334
        %v4823 = vpop.f32.mrb[0].mxu0
        %v4824 = vadd.f32 %v4691, %v4823
        %v4825 = vpop.f32.mrb[0].mxu0
        %v4826 = vadd.f32 %v4693, %v4825
        %v4827 = vpop.f32.mrb[0].mxu0
        %v4828 = vadd.f32 %v4695, %v4827
        %v4829 = vpop.f32.mrb[0].mxu0
        %v4830 = vadd.f32 %v4697, %v4829
        %4831 = vmatprep.mubr.bf16.mxu0 %v2337
        %4832 = vmatmul.mubr.bf16.gmra.mrb[0].mxu0 %v2336
        %v4833 = vpop.f32.mrb[0].mxu0
        %v4834 = vadd.f32 %v4701, %v4833
        %v4835 = vpop.f32.mrb[0].mxu0
        %v4836 = vadd.f32 %v4703, %v4835
        %v4837 = vpop.f32.mrb[0].mxu0
        %v4838 = vadd.f32 %v4705, %v4837
        %v4839 = vpop.f32.mrb[0].mxu0
        %v4840 = vadd.f32 %v4707, %v4839
        %4841 = vmatprep.mubr.bf16.mxu0 %v2339
        %4842 = vmatmul.mubr.bf16.gmra.mrb[0].mxu0 %v2338
        %v4843 = vpop.f32.mrb[0].mxu0
        %v4844 = vadd.f32 %v4711, %v4843
        %v4845 = vpop.f32.mrb[0].mxu0
        %v4846 = vadd.f32 %v4713, %v4845
        %v4847 = vpop.f32.mrb[0].mxu0
        %v4848 = vadd.f32 %v4715, %v4847
        %v4849 = vpop.f32.mrb[0].mxu0
        %v4850 = vadd.f32 %v4717, %v4849
        %4851 = vdwg.mxu0
        %4852 = vmatprep.subr.bf16.mxu0 %v3937
        %4853 = vmatpush1.bf16.msra.mxu0 %v3936
        %4854 = vmatprep.subr.bf16.mxu0 %v3941
        %4855 = vmatpush1.bf16.msra.mxu0 %v3940
        %4856 = vmatprep.subr.bf16.mxu0 %v3945
        %4857 = vmatpush1.bf16.msra.mxu0 %v3944
        %4858 = vmatprep.subr.bf16.mxu0 %v3949
        %4859 = vmatpush1.bf16.msra.mxu0 %v3948
        %4860 = vmatprep.subr.bf16.mxu0 %v3953
        %4861 = vmatpush1.bf16.msra.mxu0 %v3952
        %4862 = vmatprep.subr.bf16.mxu0 %v3957
        %4863 = vmatpush1.bf16.msra.mxu0 %v3956
        %4864 = vmatprep.subr.bf16.mxu0 %v3961
        %4865 = vmatpush1.bf16.msra.mxu0 %v3960
        %4866 = vmatprep.subr.bf16.mxu0 %v3965
        %4867 = vmatpush1.bf16.msra.mxu0 %v3964
        %4868 = vmatprep.subr.bf16.mxu0 %v3969
        %4869 = vmatpush1.bf16.msra.mxu0 %v3968
        %4870 = vmatprep.subr.bf16.mxu0 %v3973
        %4871 = vmatpush1.bf16.msra.mxu0 %v3972
        %4872 = vmatprep.subr.bf16.mxu0 %v3977
        %4873 = vmatpush1.bf16.msra.mxu0 %v3976
        %4874 = vmatprep.subr.bf16.mxu0 %v3981
        %4875 = vmatpush1.bf16.msra.mxu0 %v3980
        %4876 = vmatprep.subr.bf16.mxu0 %v3985
        %4877 = vmatpush1.bf16.msra.mxu0 %v3984
        %4878 = vmatprep.subr.bf16.mxu0 %v3989
        %4879 = vmatpush1.bf16.msra.mxu0 %v3988
        %4880 = vmatprep.subr.bf16.mxu0 %v3993
        %4881 = vmatpush1.bf16.msra.mxu0 %v3992
        %4882 = vmatprep.subr.bf16.mxu0 %v3997
        %4883 = vmatpush1.bf16.msra.mxu0 %v3996
        %4884 = vmatprep.mubr.bf16.mxu0 %v2381
        %4885 = vmatmul.mubr.bf16.gmra.mrb[0].mxu0 %v2380
        %v4886 = vpop.f32.mrb[0].mxu0
        %v4887 = vadd.f32 %v4754, %v4886
        %v4888 = vpop.f32.mrb[0].mxu0
        %v4889 = vadd.f32 %v4756, %v4888
        %v4890 = vpop.f32.mrb[0].mxu0
        %v4891 = vadd.f32 %v4758, %v4890
        %v4892 = vpop.f32.mrb[0].mxu0
        %v4893 = vadd.f32 %v4760, %v4892
        %4894 = vmatprep.mubr.bf16.mxu0 %v2383
        %4895 = vmatmul.mubr.bf16.gmra.mrb[0].mxu0 %v2382
        %v4896 = vpop.f32.mrb[0].mxu0
        %v4897 = vadd.f32 %v4764, %v4896
        %v4898 = vpop.f32.mrb[0].mxu0
        %v4899 = vadd.f32 %v4766, %v4898
        %v4900 = vpop.f32.mrb[0].mxu0
        %v4901 = vadd.f32 %v4768, %v4900
        %v4902 = vpop.f32.mrb[0].mxu0
        %v4903 = vadd.f32 %v4770, %v4902
        %4904 = vmatprep.mubr.bf16.mxu0 %v2385
        %4905 = vmatmul.mubr.bf16.gmra.mrb[0].mxu0 %v2384
        %v4906 = vpop.f32.mrb[0].mxu0
        %v4907 = vadd.f32 %v4774, %v4906
        %v4908 = vpop.f32.mrb[0].mxu0
        %v4909 = vadd.f32 %v4776, %v4908
        %v4910 = vpop.f32.mrb[0].mxu0
        %v4911 = vadd.f32 %v4778, %v4910
        %v4912 = vpop.f32.mrb[0].mxu0
        %v4913 = vadd.f32 %v4780, %v4912
        %4914 = vmatprep.mubr.bf16.mxu0 %v2387
        %4915 = vmatmul.mubr.bf16.gmra.mrb[0].mxu0 %v2386
        %v4916 = vpop.f32.mrb[0].mxu0
        %v4917 = vadd.f32 %v4784, %v4916
        %v4918 = vpop.f32.mrb[0].mxu0
        %v4919 = vadd.f32 %v4786, %v4918
        %v4920 = vpop.f32.mrb[0].mxu0
        %v4921 = vadd.f32 %v4788, %v4920
        %v4922 = vpop.f32.mrb[0].mxu0
        %v4923 = vadd.f32 %v4790, %v4922
        %4924 = vmatprep.mubr.bf16.mxu0 %v2389
        %4925 = vmatmul.mubr.bf16.gmra.mrb[0].mxu0 %v2388
        %v4926 = vpop.f32.mrb[0].mxu0
        %v4927 = vadd.f32 %v4794, %v4926
        %v4928 = vpop.f32.mrb[0].mxu0
        %v4929 = vadd.f32 %v4796, %v4928
        %v4930 = vpop.f32.mrb[0].mxu0
        %v4931 = vadd.f32 %v4798, %v4930
        %v4932 = vpop.f32.mrb[0].mxu0
        %v4933 = vadd.f32 %v4800, %v4932
        %4934 = vmatprep.mubr.bf16.mxu0 %v2391
        %4935 = vmatmul.mubr.bf16.gmra.mrb[0].mxu0 %v2390
        %v4936 = vpop.f32.mrb[0].mxu0
        %v4937 = vadd.f32 %v4804, %v4936
        %v4938 = vpop.f32.mrb[0].mxu0
        %v4939 = vadd.f32 %v4806, %v4938
        %v4940 = vpop.f32.mrb[0].mxu0
        %v4941 = vadd.f32 %v4808, %v4940
        %v4942 = vpop.f32.mrb[0].mxu0
        %v4943 = vadd.f32 %v4810, %v4942
        %4944 = vmatprep.mubr.bf16.mxu0 %v2393
        %4945 = vmatmul.mubr.bf16.gmra.mrb[0].mxu0 %v2392
        %v4946 = vpop.f32.mrb[0].mxu0
        %v4947 = vadd.f32 %v4814, %v4946
        %v4948 = vpop.f32.mrb[0].mxu0
        %v4949 = vadd.f32 %v4816, %v4948
        %v4950 = vpop.f32.mrb[0].mxu0
        %v4951 = vadd.f32 %v4818, %v4950
        %v4952 = vpop.f32.mrb[0].mxu0
        %v4953 = vadd.f32 %v4820, %v4952
        %4954 = vmatprep.mubr.bf16.mxu0 %v2395
        %4955 = vmatmul.mubr.bf16.gmra.mrb[0].mxu0 %v2394
        %v4956 = vpop.f32.mrb[0].mxu0
        %v4957 = vadd.f32 %v4824, %v4956
        %v4958 = vpop.f32.mrb[0].mxu0
        %v4959 = vadd.f32 %v4826, %v4958
        %v4960 = vpop.f32.mrb[0].mxu0
        %v4961 = vadd.f32 %v4828, %v4960
        %v4962 = vpop.f32.mrb[0].mxu0
        %v4963 = vadd.f32 %v4830, %v4962
        %4964 = vmatprep.mubr.bf16.mxu0 %v2397
        %4965 = vmatmul.mubr.bf16.gmra.mrb[0].mxu0 %v2396
        %v4966 = vpop.f32.mrb[0].mxu0
        %v4967 = vadd.f32 %v4834, %v4966
        %v4968 = vpop.f32.mrb[0].mxu0
        %v4969 = vadd.f32 %v4836, %v4968
        %v4970 = vpop.f32.mrb[0].mxu0
        %v4971 = vadd.f32 %v4838, %v4970
        %v4972 = vpop.f32.mrb[0].mxu0
        %v4973 = vadd.f32 %v4840, %v4972
        %4974 = vmatprep.mubr.bf16.mxu0 %v2399
        %4975 = vmatmul.mubr.bf16.gmra.mrb[0].mxu0 %v2398
        %v4976 = vpop.f32.mrb[0].mxu0
        %v4977 = vadd.f32 %v4844, %v4976
        %v4978 = vpop.f32.mrb[0].mxu0
        %v4979 = vadd.f32 %v4846, %v4978
        %v4980 = vpop.f32.mrb[0].mxu0
        %v4981 = vadd.f32 %v4848, %v4980
        %v4982 = vpop.f32.mrb[0].mxu0
        %v4983 = vadd.f32 %v4850, %v4982
        %4984 = vdwg.mxu0
        %4985 = vmatprep.subr.bf16.mxu0 %v3683
        %4986 = vmatpush1.bf16.msra.mxu0 %v3682
        %4987 = vmatprep.subr.bf16.mxu0 %v3687
        %4988 = vmatpush1.bf16.msra.mxu0 %v3686
        %4989 = vmatprep.subr.bf16.mxu0 %v3691
        %4990 = vmatpush1.bf16.msra.mxu0 %v3690
        %4991 = vmatprep.subr.bf16.mxu0 %v3695
        %4992 = vmatpush1.bf16.msra.mxu0 %v3694
        %4993 = vmatprep.subr.bf16.mxu0 %v3699
        %4994 = vmatpush1.bf16.msra.mxu0 %v3698
        %4995 = vmatprep.subr.bf16.mxu0 %v3703
        %4996 = vmatpush1.bf16.msra.mxu0 %v3702
        %4997 = vmatprep.subr.bf16.mxu0 %v3707
        %4998 = vmatpush1.bf16.msra.mxu0 %v3706
        %4999 = vmatprep.subr.bf16.mxu0 %v3711
        %5000 = vmatpush1.bf16.msra.mxu0 %v3710
        %5001 = vmatprep.subr.bf16.mxu0 %v3715
        %5002 = vmatpush1.bf16.msra.mxu0 %v3714
        %5003 = vmatprep.subr.bf16.mxu0 %v3719
        %5004 = vmatpush1.bf16.msra.mxu0 %v3718
        %5005 = vmatprep.subr.bf16.mxu0 %v3723
        %5006 = vmatpush1.bf16.msra.mxu0 %v3722
        %5007 = vmatprep.subr.bf16.mxu0 %v3727
        %5008 = vmatpush1.bf16.msra.mxu0 %v3726
        %5009 = vmatprep.subr.bf16.mxu0 %v3731
        %5010 = vmatpush1.bf16.msra.mxu0 %v3730
        %5011 = vmatprep.subr.bf16.mxu0 %v3735
        %5012 = vmatpush1.bf16.msra.mxu0 %v3734
        %5013 = vmatprep.subr.bf16.mxu0 %v3739
        %5014 = vmatpush1.bf16.msra.mxu0 %v3738
        %5015 = vmatprep.subr.bf16.mxu0 %v3743
        %5016 = vmatpush1.bf16.msra.mxu0 %v3742
        %5017 = vmatprep.mubr.bf16.mxu0 %v2140
        %5018 = vmatmul.mubr.bf16.gmra.mrb[0].mxu0 %v2139
        %v5019 = vpop.f32.mrb[0].mxu0
        %v5020 = vadd.f32 0.0, %v5019
        %v5021 = vpop.f32.mrb[0].mxu0
        %v5022 = vadd.f32 0.0, %v5021
        %v5023 = vpop.f32.mrb[0].mxu0
        %v5024 = vadd.f32 0.0, %v5023
        %v5025 = vpop.f32.mrb[0].mxu0
        %v5026 = vadd.f32 0.0, %v5025
        %5027 = vmatprep.mubr.bf16.mxu0 %v2142
        %5028 = vmatmul.mubr.bf16.gmra.mrb[0].mxu0 %v2141
        %v5029 = vpop.f32.mrb[0].mxu0
        %v5030 = vadd.f32 0.0, %v5029
        %v5031 = vpop.f32.mrb[0].mxu0
        %v5032 = vadd.f32 0.0, %v5031
        %v5033 = vpop.f32.mrb[0].mxu0
        %v5034 = vadd.f32 0.0, %v5033
        %v5035 = vpop.f32.mrb[0].mxu0
        %v5036 = vadd.f32 0.0, %v5035
        %5037 = vmatprep.mubr.bf16.mxu0 %v2144
        %5038 = vmatmul.mubr.bf16.gmra.mrb[0].mxu0 %v2143
        %v5039 = vpop.f32.mrb[0].mxu0
        %v5040 = vadd.f32 0.0, %v5039
        %v5041 = vpop.f32.mrb[0].mxu0
        %v5042 = vadd.f32 0.0, %v5041
        %v5043 = vpop.f32.mrb[0].mxu0
        %v5044 = vadd.f32 0.0, %v5043
        %v5045 = vpop.f32.mrb[0].mxu0
        %v5046 = vadd.f32 0.0, %v5045
        %5047 = vmatprep.mubr.bf16.mxu0 %v2146
        %5048 = vmatmul.mubr.bf16.gmra.mrb[0].mxu0 %v2145
        %v5049 = vpop.f32.mrb[0].mxu0
        %v5050 = vadd.f32 0.0, %v5049
        %v5051 = vpop.f32.mrb[0].mxu0
        %v5052 = vadd.f32 0.0, %v5051
        %v5053 = vpop.f32.mrb[0].mxu0
        %v5054 = vadd.f32 0.0, %v5053
        %v5055 = vpop.f32.mrb[0].mxu0
        %v5056 = vadd.f32 0.0, %v5055
        %5057 = vmatprep.mubr.bf16.mxu0 %v2148
        %5058 = vmatmul.mubr.bf16.gmra.mrb[0].mxu0 %v2147
        %v5059 = vpop.f32.mrb[0].mxu0
        %v5060 = vadd.f32 0.0, %v5059
        %v5061 = vpop.f32.mrb[0].mxu0
        %v5062 = vadd.f32 0.0, %v5061
        %v5063 = vpop.f32.mrb[0].mxu0
        %v5064 = vadd.f32 0.0, %v5063
        %v5065 = vpop.f32.mrb[0].mxu0
        %v5066 = vadd.f32 0.0, %v5065
        %5067 = vmatprep.mubr.bf16.mxu0 %v2150
        %5068 = vmatmul.mubr.bf16.gmra.mrb[0].mxu0 %v2149
        %v5069 = vpop.f32.mrb[0].mxu0
        %v5070 = vadd.f32 0.0, %v5069
        %v5071 = vpop.f32.mrb[0].mxu0
        %v5072 = vadd.f32 0.0, %v5071
        %v5073 = vpop.f32.mrb[0].mxu0
        %v5074 = vadd.f32 0.0, %v5073
        %v5075 = vpop.f32.mrb[0].mxu0
        %v5076 = vadd.f32 0.0, %v5075
        %5077 = vmatprep.mubr.bf16.mxu0 %v2152
        %5078 = vmatmul.mubr.bf16.gmra.mrb[0].mxu0 %v2151
        %v5079 = vpop.f32.mrb[0].mxu0
        %v5080 = vadd.f32 0.0, %v5079
        %v5081 = vpop.f32.mrb[0].mxu0
        %v5082 = vadd.f32 0.0, %v5081
        %v5083 = vpop.f32.mrb[0].mxu0
        %v5084 = vadd.f32 0.0, %v5083
        %v5085 = vpop.f32.mrb[0].mxu0
        %v5086 = vadd.f32 0.0, %v5085
        %5087 = vmatprep.mubr.bf16.mxu0 %v2154
        %5088 = vmatmul.mubr.bf16.gmra.mrb[0].mxu0 %v2153
        %v5089 = vpop.f32.mrb[0].mxu0
        %v5090 = vadd.f32 0.0, %v5089
        %v5091 = vpop.f32.mrb[0].mxu0
        %v5092 = vadd.f32 0.0, %v5091
        %v5093 = vpop.f32.mrb[0].mxu0
        %v5094 = vadd.f32 0.0, %v5093
        %v5095 = vpop.f32.mrb[0].mxu0
        %v5096 = vadd.f32 0.0, %v5095
        %5097 = vmatprep.mubr.bf16.mxu0 %v2156
        %5098 = vmatmul.mubr.bf16.gmra.mrb[0].mxu0 %v2155
        %v5099 = vpop.f32.mrb[0].mxu0
        %v5100 = vadd.f32 0.0, %v5099
        %v5101 = vpop.f32.mrb[0].mxu0
        %v5102 = vadd.f32 0.0, %v5101
        %v5103 = vpop.f32.mrb[0].mxu0
        %v5104 = vadd.f32 0.0, %v5103
        %v5105 = vpop.f32.mrb[0].mxu0
        %v5106 = vadd.f32 0.0, %v5105
        %5107 = vmatprep.mubr.bf16.mxu0 %v2158
        %5108 = vmatmul.mubr.bf16.gmra.mrb[0].mxu0 %v2157
        %v5109 = vpop.f32.mrb[0].mxu0
        %v5110 = vadd.f32 0.0, %v5109
        %v5111 = vpop.f32.mrb[0].mxu0
        %v5112 = vadd.f32 0.0, %v5111
        %v5113 = vpop.f32.mrb[0].mxu0
        %v5114 = vadd.f32 0.0, %v5113
        %v5115 = vpop.f32.mrb[0].mxu0
        %v5116 = vadd.f32 0.0, %v5115
        %5117 = vdwg.mxu0
        %5118 = vmatprep.subr.bf16.mxu0 %v3747
        %5119 = vmatpush1.bf16.msra.mxu0 %v3746
        %5120 = vmatprep.subr.bf16.mxu0 %v3751
        %5121 = vmatpush1.bf16.msra.mxu0 %v3750
        %5122 = vmatprep.subr.bf16.mxu0 %v3755
        %5123 = vmatpush1.bf16.msra.mxu0 %v3754
        %5124 = vmatprep.subr.bf16.mxu0 %v3759
        %5125 = vmatpush1.bf16.msra.mxu0 %v3758
        %5126 = vmatprep.subr.bf16.mxu0 %v3763
        %5127 = vmatpush1.bf16.msra.mxu0 %v3762
        %5128 = vmatprep.subr.bf16.mxu0 %v3767
        %5129 = vmatpush1.bf16.msra.mxu0 %v3766
        %5130 = vmatprep.subr.bf16.mxu0 %v3771
        %5131 = vmatpush1.bf16.msra.mxu0 %v3770
        %5132 = vmatprep.subr.bf16.mxu0 %v3775
        %5133 = vmatpush1.bf16.msra.mxu0 %v3774
        %5134 = vmatprep.subr.bf16.mxu0 %v3779
        %5135 = vmatpush1.bf16.msra.mxu0 %v3778
        %5136 = vmatprep.subr.bf16.mxu0 %v3783
        %5137 = vmatpush1.bf16.msra.mxu0 %v3782
        %5138 = vmatprep.subr.bf16.mxu0 %v3787
        %5139 = vmatpush1.bf16.msra.mxu0 %v3786
        %5140 = vmatprep.subr.bf16.mxu0 %v3791
        %5141 = vmatpush1.bf16.msra.mxu0 %v3790
        %5142 = vmatprep.subr.bf16.mxu0 %v3795
        %5143 = vmatpush1.bf16.msra.mxu0 %v3794
        %5144 = vmatprep.subr.bf16.mxu0 %v3799
        %5145 = vmatpush1.bf16.msra.mxu0 %v3798
        %5146 = vmatprep.subr.bf16.mxu0 %v3803
        %5147 = vmatpush1.bf16.msra.mxu0 %v3802
        %5148 = vmatprep.subr.bf16.mxu0 %v3807
        %5149 = vmatpush1.bf16.msra.mxu0 %v3806
        %5150 = vmatprep.mubr.bf16.mxu0 %v2201
        %5151 = vmatmul.mubr.bf16.gmra.mrb[0].mxu0 %v2200
        %v5152 = vpop.f32.mrb[0].mxu0
        %v5153 = vadd.f32 %v5020, %v5152
        %v5154 = vpop.f32.mrb[0].mxu0
        %v5155 = vadd.f32 %v5022, %v5154
        %v5156 = vpop.f32.mrb[0].mxu0
        %v5157 = vadd.f32 %v5024, %v5156
        %v5158 = vpop.f32.mrb[0].mxu0
        %v5159 = vadd.f32 %v5026, %v5158
        %5160 = vmatprep.mubr.bf16.mxu0 %v2203
        %5161 = vmatmul.mubr.bf16.gmra.mrb[0].mxu0 %v2202
        %v5162 = vpop.f32.mrb[0].mxu0
        %v5163 = vadd.f32 %v5030, %v5162
        %v5164 = vpop.f32.mrb[0].mxu0
        %v5165 = vadd.f32 %v5032, %v5164
        %v5166 = vpop.f32.mrb[0].mxu0
        %v5167 = vadd.f32 %v5034, %v5166
        %v5168 = vpop.f32.mrb[0].mxu0
        %v5169 = vadd.f32 %v5036, %v5168
        %5170 = vmatprep.mubr.bf16.mxu0 %v2205
        %5171 = vmatmul.mubr.bf16.gmra.mrb[0].mxu0 %v2204
        %v5172 = vpop.f32.mrb[0].mxu0
        %v5173 = vadd.f32 %v5040, %v5172
        %v5174 = vpop.f32.mrb[0].mxu0
        %v5175 = vadd.f32 %v5042, %v5174
        %v5176 = vpop.f32.mrb[0].mxu0
        %v5177 = vadd.f32 %v5044, %v5176
        %v5178 = vpop.f32.mrb[0].mxu0
        %v5179 = vadd.f32 %v5046, %v5178
        %5180 = vmatprep.mubr.bf16.mxu0 %v2207
        %5181 = vmatmul.mubr.bf16.gmra.mrb[0].mxu0 %v2206
        %v5182 = vpop.f32.mrb[0].mxu0
        %v5183 = vadd.f32 %v5050, %v5182
        %v5184 = vpop.f32.mrb[0].mxu0
        %v5185 = vadd.f32 %v5052, %v5184
        %v5186 = vpop.f32.mrb[0].mxu0
        %v5187 = vadd.f32 %v5054, %v5186
        %v5188 = vpop.f32.mrb[0].mxu0
        %v5189 = vadd.f32 %v5056, %v5188
        %5190 = vmatprep.mubr.bf16.mxu0 %v2209
        %5191 = vmatmul.mubr.bf16.gmra.mrb[0].mxu0 %v2208
        %v5192 = vpop.f32.mrb[0].mxu0
        %v5193 = vadd.f32 %v5060, %v5192
        %v5194 = vpop.f32.mrb[0].mxu0
        %v5195 = vadd.f32 %v5062, %v5194
        %v5196 = vpop.f32.mrb[0].mxu0
        %v5197 = vadd.f32 %v5064, %v5196
        %v5198 = vpop.f32.mrb[0].mxu0
        %v5199 = vadd.f32 %v5066, %v5198
        %5200 = vmatprep.mubr.bf16.mxu0 %v2211
        %5201 = vmatmul.mubr.bf16.gmra.mrb[0].mxu0 %v2210
        %v5202 = vpop.f32.mrb[0].mxu0
        %v5203 = vadd.f32 %v5070, %v5202
        %v5204 = vpop.f32.mrb[0].mxu0
        %v5205 = vadd.f32 %v5072, %v5204
        %v5206 = vpop.f32.mrb[0].mxu0
        %v5207 = vadd.f32 %v5074, %v5206
        %v5208 = vpop.f32.mrb[0].mxu0
        %v5209 = vadd.f32 %v5076, %v5208
        %5210 = vmatprep.mubr.bf16.mxu0 %v2213
        %5211 = vmatmul.mubr.bf16.gmra.mrb[0].mxu0 %v2212
        %v5212 = vpop.f32.mrb[0].mxu0
        %v5213 = vadd.f32 %v5080, %v5212
        %v5214 = vpop.f32.mrb[0].mxu0
        %v5215 = vadd.f32 %v5082, %v5214
        %v5216 = vpop.f32.mrb[0].mxu0
        %v5217 = vadd.f32 %v5084, %v5216
        %v5218 = vpop.f32.mrb[0].mxu0
        %v5219 = vadd.f32 %v5086, %v5218
        %5220 = vmatprep.mubr.bf16.mxu0 %v2215
        %5221 = vmatmul.mubr.bf16.gmra.mrb[0].mxu0 %v2214
        %v5222 = vpop.f32.mrb[0].mxu0
        %v5223 = vadd.f32 %v5090, %v5222
        %v5224 = vpop.f32.mrb[0].mxu0
        %v5225 = vadd.f32 %v5092, %v5224
        %v5226 = vpop.f32.mrb[0].mxu0
        %v5227 = vadd.f32 %v5094, %v5226
        %v5228 = vpop.f32.mrb[0].mxu0
        %v5229 = vadd.f32 %v5096, %v5228
        %5230 = vmatprep.mubr.bf16.mxu0 %v2217
        %5231 = vmatmul.mubr.bf16.gmra.mrb[0].mxu0 %v2216
        %v5232 = vpop.f32.mrb[0].mxu0
        %v5233 = vadd.f32 %v5100, %v5232
        %v5234 = vpop.f32.mrb[0].mxu0
        %v5235 = vadd.f32 %v5102, %v5234
        %v5236 = vpop.f32.mrb[0].mxu0
        %v5237 = vadd.f32 %v5104, %v5236
        %v5238 = vpop.f32.mrb[0].mxu0
        %v5239 = vadd.f32 %v5106, %v5238
        %5240 = vmatprep.mubr.bf16.mxu0 %v2219
        %5241 = vmatmul.mubr.bf16.gmra.mrb[0].mxu0 %v2218
        %v5242 = vpop.f32.mrb[0].mxu0
        %v5243 = vadd.f32 %v5110, %v5242
        %v5244 = vpop.f32.mrb[0].mxu0
        %v5245 = vadd.f32 %v5112, %v5244
        %v5246 = vpop.f32.mrb[0].mxu0
        %v5247 = vadd.f32 %v5114, %v5246
        %v5248 = vpop.f32.mrb[0].mxu0
        %v5249 = vadd.f32 %v5116, %v5248
        %5250 = vdwg.mxu0
        %5251 = vmatprep.subr.bf16.mxu0 %v3811
        %5252 = vmatpush1.bf16.msra.mxu0 %v3810
        %5253 = vmatprep.subr.bf16.mxu0 %v3815
        %5254 = vmatpush1.bf16.msra.mxu0 %v3814
        %5255 = vmatprep.subr.bf16.mxu0 %v3819
        %5256 = vmatpush1.bf16.msra.mxu0 %v3818
        %5257 = vmatprep.subr.bf16.mxu0 %v3823
        %5258 = vmatpush1.bf16.msra.mxu0 %v3822
        %5259 = vmatprep.subr.bf16.mxu0 %v3827
        %5260 = vmatpush1.bf16.msra.mxu0 %v3826
        %5261 = vmatprep.subr.bf16.mxu0 %v3831
        %5262 = vmatpush1.bf16.msra.mxu0 %v3830
        %5263 = vmatprep.subr.bf16.mxu0 %v3835
        %5264 = vmatpush1.bf16.msra.mxu0 %v3834
        %5265 = vmatprep.subr.bf16.mxu0 %v3839
        %5266 = vmatpush1.bf16.msra.mxu0 %v3838
        %5267 = vmatprep.subr.bf16.mxu0 %v3843
        %5268 = vmatpush1.bf16.msra.mxu0 %v3842
        %5269 = vmatprep.subr.bf16.mxu0 %v3847
        %5270 = vmatpush1.bf16.msra.mxu0 %v3846
        %5271 = vmatprep.subr.bf16.mxu0 %v3851
        %5272 = vmatpush1.bf16.msra.mxu0 %v3850
        %5273 = vmatprep.subr.bf16.mxu0 %v3855
        %5274 = vmatpush1.bf16.msra.mxu0 %v3854
        %5275 = vmatprep.subr.bf16.mxu0 %v3859
        %5276 = vmatpush1.bf16.msra.mxu0 %v3858
        %5277 = vmatprep.subr.bf16.mxu0 %v3863
        %5278 = vmatpush1.bf16.msra.mxu0 %v3862
        %5279 = vmatprep.subr.bf16.mxu0 %v3867
        %5280 = vmatpush1.bf16.msra.mxu0 %v3866
        %5281 = vmatprep.subr.bf16.mxu0 %v3871
        %5282 = vmatpush1.bf16.msra.mxu0 %v3870
        %5283 = vmatprep.mubr.bf16.mxu0 %v2261
        %5284 = vmatmul.mubr.bf16.gmra.mrb[0].mxu0 %v2260
        %v5285 = vpop.f32.mrb[0].mxu0
        %v5286 = vadd.f32 %v5153, %v5285
        %v5287 = vpop.f32.mrb[0].mxu0
        %v5288 = vadd.f32 %v5155, %v5287
        %v5289 = vpop.f32.mrb[0].mxu0
        %v5290 = vadd.f32 %v5157, %v5289
        %v5291 = vpop.f32.mrb[0].mxu0
        %v5292 = vadd.f32 %v5159, %v5291
        %5293 = vmatprep.mubr.bf16.mxu0 %v2263
        %5294 = vmatmul.mubr.bf16.gmra.mrb[0].mxu0 %v2262
        %v5295 = vpop.f32.mrb[0].mxu0
        %v5296 = vadd.f32 %v5163, %v5295
        %v5297 = vpop.f32.mrb[0].mxu0
        %v5298 = vadd.f32 %v5165, %v5297
        %v5299 = vpop.f32.mrb[0].mxu0
        %v5300 = vadd.f32 %v5167, %v5299
        %v5301 = vpop.f32.mrb[0].mxu0
        %v5302 = vadd.f32 %v5169, %v5301
        %5303 = vmatprep.mubr.bf16.mxu0 %v2265
        %5304 = vmatmul.mubr.bf16.gmra.mrb[0].mxu0 %v2264
        %v5305 = vpop.f32.mrb[0].mxu0
        %v5306 = vadd.f32 %v5173, %v5305
        %v5307 = vpop.f32.mrb[0].mxu0
        %v5308 = vadd.f32 %v5175, %v5307
        %v5309 = vpop.f32.mrb[0].mxu0
        %v5310 = vadd.f32 %v5177, %v5309
        %v5311 = vpop.f32.mrb[0].mxu0
        %v5312 = vadd.f32 %v5179, %v5311
        %5313 = vmatprep.mubr.bf16.mxu0 %v2267
        %5314 = vmatmul.mubr.bf16.gmra.mrb[0].mxu0 %v2266
        %v5315 = vpop.f32.mrb[0].mxu0
        %v5316 = vadd.f32 %v5183, %v5315
        %v5317 = vpop.f32.mrb[0].mxu0
        %v5318 = vadd.f32 %v5185, %v5317
        %v5319 = vpop.f32.mrb[0].mxu0
        %v5320 = vadd.f32 %v5187, %v5319
        %v5321 = vpop.f32.mrb[0].mxu0
        %v5322 = vadd.f32 %v5189, %v5321
        %5323 = vmatprep.mubr.bf16.mxu0 %v2269
        %5324 = vmatmul.mubr.bf16.gmra.mrb[0].mxu0 %v2268
        %v5325 = vpop.f32.mrb[0].mxu0
        %v5326 = vadd.f32 %v5193, %v5325
        %v5327 = vpop.f32.mrb[0].mxu0
        %v5328 = vadd.f32 %v5195, %v5327
        %v5329 = vpop.f32.mrb[0].mxu0
        %v5330 = vadd.f32 %v5197, %v5329
        %v5331 = vpop.f32.mrb[0].mxu0
        %v5332 = vadd.f32 %v5199, %v5331
        %5333 = vmatprep.mubr.bf16.mxu0 %v2271
        %5334 = vmatmul.mubr.bf16.gmra.mrb[0].mxu0 %v2270
        %v5335 = vpop.f32.mrb[0].mxu0
        %v5336 = vadd.f32 %v5203, %v5335
        %v5337 = vpop.f32.mrb[0].mxu0
        %v5338 = vadd.f32 %v5205, %v5337
        %v5339 = vpop.f32.mrb[0].mxu0
        %v5340 = vadd.f32 %v5207, %v5339
        %v5341 = vpop.f32.mrb[0].mxu0
        %v5342 = vadd.f32 %v5209, %v5341
        %5343 = vmatprep.mubr.bf16.mxu0 %v2273
        %5344 = vmatmul.mubr.bf16.gmra.mrb[0].mxu0 %v2272
        %v5345 = vpop.f32.mrb[0].mxu0
        %v5346 = vadd.f32 %v5213, %v5345
        %v5347 = vpop.f32.mrb[0].mxu0
        %v5348 = vadd.f32 %v5215, %v5347
        %v5349 = vpop.f32.mrb[0].mxu0
        %v5350 = vadd.f32 %v5217, %v5349
        %v5351 = vpop.f32.mrb[0].mxu0
        %v5352 = vadd.f32 %v5219, %v5351
        %5353 = vmatprep.mubr.bf16.mxu0 %v2275
        %5354 = vmatmul.mubr.bf16.gmra.mrb[0].mxu0 %v2274
        %v5355 = vpop.f32.mrb[0].mxu0
        %v5356 = vadd.f32 %v5223, %v5355
        %v5357 = vpop.f32.mrb[0].mxu0
        %v5358 = vadd.f32 %v5225, %v5357
        %v5359 = vpop.f32.mrb[0].mxu0
        %v5360 = vadd.f32 %v5227, %v5359
        %v5361 = vpop.f32.mrb[0].mxu0
        %v5362 = vadd.f32 %v5229, %v5361
        %5363 = vmatprep.mubr.bf16.mxu0 %v2277
        %5364 = vmatmul.mubr.bf16.gmra.mrb[0].mxu0 %v2276
        %v5365 = vpop.f32.mrb[0].mxu0
        %v5366 = vadd.f32 %v5233, %v5365
        %v5367 = vpop.f32.mrb[0].mxu0
        %v5368 = vadd.f32 %v5235, %v5367
        %v5369 = vpop.f32.mrb[0].mxu0
        %v5370 = vadd.f32 %v5237, %v5369
        %v5371 = vpop.f32.mrb[0].mxu0
        %v5372 = vadd.f32 %v5239, %v5371
        %5373 = vmatprep.mubr.bf16.mxu0 %v2279
        %5374 = vmatmul.mubr.bf16.gmra.mrb[0].mxu0 %v2278
        %v5375 = vpop.f32.mrb[0].mxu0
        %v5376 = vadd.f32 %v5243, %v5375
        %v5377 = vpop.f32.mrb[0].mxu0
        %v5378 = vadd.f32 %v5245, %v5377
        %v5379 = vpop.f32.mrb[0].mxu0
        %v5380 = vadd.f32 %v5247, %v5379
        %v5381 = vpop.f32.mrb[0].mxu0
        %v5382 = vadd.f32 %v5249, %v5381
        %5383 = vdwg.mxu0
        %5384 = vmatprep.subr.bf16.mxu0 %v3875
        %5385 = vmatpush1.bf16.msra.mxu0 %v3874
        %5386 = vmatprep.subr.bf16.mxu0 %v3879
        %5387 = vmatpush1.bf16.msra.mxu0 %v3878
        %5388 = vmatprep.subr.bf16.mxu0 %v3883
        %5389 = vmatpush1.bf16.msra.mxu0 %v3882
        %5390 = vmatprep.subr.bf16.mxu0 %v3887
        %5391 = vmatpush1.bf16.msra.mxu0 %v3886
        %5392 = vmatprep.subr.bf16.mxu0 %v3891
        %5393 = vmatpush1.bf16.msra.mxu0 %v3890
        %5394 = vmatprep.subr.bf16.mxu0 %v3895
        %5395 = vmatpush1.bf16.msra.mxu0 %v3894
        %5396 = vmatprep.subr.bf16.mxu0 %v3899
        %5397 = vmatpush1.bf16.msra.mxu0 %v3898
        %5398 = vmatprep.subr.bf16.mxu0 %v3903
        %5399 = vmatpush1.bf16.msra.mxu0 %v3902
        %5400 = vmatprep.subr.bf16.mxu0 %v3907
        %5401 = vmatpush1.bf16.msra.mxu0 %v3906
        %5402 = vmatprep.subr.bf16.mxu0 %v3911
        %5403 = vmatpush1.bf16.msra.mxu0 %v3910
        %5404 = vmatprep.subr.bf16.mxu0 %v3915
        %5405 = vmatpush1.bf16.msra.mxu0 %v3914
        %5406 = vmatprep.subr.bf16.mxu0 %v3919
        %5407 = vmatpush1.bf16.msra.mxu0 %v3918
        %5408 = vmatprep.subr.bf16.mxu0 %v3923
        %5409 = vmatpush1.bf16.msra.mxu0 %v3922
        %5410 = vmatprep.subr.bf16.mxu0 %v3927
        %5411 = vmatpush1.bf16.msra.mxu0 %v3926
        %5412 = vmatprep.subr.bf16.mxu0 %v3931
        %5413 = vmatpush1.bf16.msra.mxu0 %v3930
        %5414 = vmatprep.subr.bf16.mxu0 %v3935
        %5415 = vmatpush1.bf16.msra.mxu0 %v3934
        %5416 = vmatprep.mubr.bf16.mxu0 %v2321
        %5417 = vmatmul.mubr.bf16.gmra.mrb[0].mxu0 %v2320
        %v5418 = vpop.f32.mrb[0].mxu0
        %v5419 = vadd.f32 %v5286, %v5418
        %v5420 = vpop.f32.mrb[0].mxu0
        %v5421 = vadd.f32 %v5288, %v5420
        %v5422 = vpop.f32.mrb[0].mxu0
        %v5423 = vadd.f32 %v5290, %v5422
        %v5424 = vpop.f32.mrb[0].mxu0
        %v5425 = vadd.f32 %v5292, %v5424
        %5426 = vmatprep.mubr.bf16.mxu0 %v2323
        %5427 = vmatmul.mubr.bf16.gmra.mrb[0].mxu0 %v2322
        %v5428 = vpop.f32.mrb[0].mxu0
        %v5429 = vadd.f32 %v5296, %v5428
        %v5430 = vpop.f32.mrb[0].mxu0
        %v5431 = vadd.f32 %v5298, %v5430
        %v5432 = vpop.f32.mrb[0].mxu0
        %v5433 = vadd.f32 %v5300, %v5432
        %v5434 = vpop.f32.mrb[0].mxu0
        %v5435 = vadd.f32 %v5302, %v5434
        %5436 = vmatprep.mubr.bf16.mxu0 %v2325
        %5437 = vmatmul.mubr.bf16.gmra.mrb[0].mxu0 %v2324
        %v5438 = vpop.f32.mrb[0].mxu0
        %v5439 = vadd.f32 %v5306, %v5438
        %v5440 = vpop.f32.mrb[0].mxu0
        %v5441 = vadd.f32 %v5308, %v5440
        %v5442 = vpop.f32.mrb[0].mxu0
        %v5443 = vadd.f32 %v5310, %v5442
        %v5444 = vpop.f32.mrb[0].mxu0
        %v5445 = vadd.f32 %v5312, %v5444
        %5446 = vmatprep.mubr.bf16.mxu0 %v2327
        %5447 = vmatmul.mubr.bf16.gmra.mrb[0].mxu0 %v2326
        %v5448 = vpop.f32.mrb[0].mxu0
        %v5449 = vadd.f32 %v5316, %v5448
        %v5450 = vpop.f32.mrb[0].mxu0
        %v5451 = vadd.f32 %v5318, %v5450
        %v5452 = vpop.f32.mrb[0].mxu0
        %v5453 = vadd.f32 %v5320, %v5452
        %v5454 = vpop.f32.mrb[0].mxu0
        %v5455 = vadd.f32 %v5322, %v5454
        %5456 = vmatprep.mubr.bf16.mxu0 %v2329
        %5457 = vmatmul.mubr.bf16.gmra.mrb[0].mxu0 %v2328
        %v5458 = vpop.f32.mrb[0].mxu0
        %v5459 = vadd.f32 %v5326, %v5458
        %v5460 = vpop.f32.mrb[0].mxu0
        %v5461 = vadd.f32 %v5328, %v5460
        %v5462 = vpop.f32.mrb[0].mxu0
        %v5463 = vadd.f32 %v5330, %v5462
        %v5464 = vpop.f32.mrb[0].mxu0
        %v5465 = vadd.f32 %v5332, %v5464
        %5466 = vmatprep.mubr.bf16.mxu0 %v2331
        %5467 = vmatmul.mubr.bf16.gmra.mrb[0].mxu0 %v2330
        %v5468 = vpop.f32.mrb[0].mxu0
        %v5469 = vadd.f32 %v5336, %v5468
        %v5470 = vpop.f32.mrb[0].mxu0
        %v5471 = vadd.f32 %v5338, %v5470
        %v5472 = vpop.f32.mrb[0].mxu0
        %v5473 = vadd.f32 %v5340, %v5472
        %v5474 = vpop.f32.mrb[0].mxu0
        %v5475 = vadd.f32 %v5342, %v5474
        %5476 = vmatprep.mubr.bf16.mxu0 %v2333
        %5477 = vmatmul.mubr.bf16.gmra.mrb[0].mxu0 %v2332
        %v5478 = vpop.f32.mrb[0].mxu0
        %v5479 = vadd.f32 %v5346, %v5478
        %v5480 = vpop.f32.mrb[0].mxu0
        %v5481 = vadd.f32 %v5348, %v5480
        %v5482 = vpop.f32.mrb[0].mxu0
        %v5483 = vadd.f32 %v5350, %v5482
        %v5484 = vpop.f32.mrb[0].mxu0
        %v5485 = vadd.f32 %v5352, %v5484
        %5486 = vmatprep.mubr.bf16.mxu0 %v2335
        %5487 = vmatmul.mubr.bf16.gmra.mrb[0].mxu0 %v2334
        %v5488 = vpop.f32.mrb[0].mxu0
        %v5489 = vadd.f32 %v5356, %v5488
        %v5490 = vpop.f32.mrb[0].mxu0
        %v5491 = vadd.f32 %v5358, %v5490
        %v5492 = vpop.f32.mrb[0].mxu0
        %v5493 = vadd.f32 %v5360, %v5492
        %v5494 = vpop.f32.mrb[0].mxu0
        %v5495 = vadd.f32 %v5362, %v5494
        %5496 = vmatprep.mubr.bf16.mxu0 %v2337
        %5497 = vmatmul.mubr.bf16.gmra.mrb[0].mxu0 %v2336
        %v5498 = vpop.f32.mrb[0].mxu0
        %v5499 = vadd.f32 %v5366, %v5498
        %v5500 = vpop.f32.mrb[0].mxu0
        %v5501 = vadd.f32 %v5368, %v5500
        %v5502 = vpop.f32.mrb[0].mxu0
        %v5503 = vadd.f32 %v5370, %v5502
        %v5504 = vpop.f32.mrb[0].mxu0
        %v5505 = vadd.f32 %v5372, %v5504
        %5506 = vmatprep.mubr.bf16.mxu0 %v2339
        %5507 = vmatmul.mubr.bf16.gmra.mrb[0].mxu0 %v2338
        %v5508 = vpop.f32.mrb[0].mxu0
        %v5509 = vadd.f32 %v5376, %v5508
        %v5510 = vpop.f32.mrb[0].mxu0
        %v5511 = vadd.f32 %v5378, %v5510
        %v5512 = vpop.f32.mrb[0].mxu0
        %v5513 = vadd.f32 %v5380, %v5512
        %v5514 = vpop.f32.mrb[0].mxu0
        %v5515 = vadd.f32 %v5382, %v5514
        %5516 = vdwg.mxu0
        %5517 = vmatprep.subr.bf16.mxu0 %v3939
        %5518 = vmatpush1.bf16.msra.mxu0 %v3938
        %5519 = vmatprep.subr.bf16.mxu0 %v3943
        %5520 = vmatpush1.bf16.msra.mxu0 %v3942
        %5521 = vmatprep.subr.bf16.mxu0 %v3947
        %5522 = vmatpush1.bf16.msra.mxu0 %v3946
        %5523 = vmatprep.subr.bf16.mxu0 %v3951
        %5524 = vmatpush1.bf16.msra.mxu0 %v3950
        %5525 = vmatprep.subr.bf16.mxu0 %v3955
        %5526 = vmatpush1.bf16.msra.mxu0 %v3954
        %5527 = vmatprep.subr.bf16.mxu0 %v3959
        %5528 = vmatpush1.bf16.msra.mxu0 %v3958
        %5529 = vmatprep.subr.bf16.mxu0 %v3963
        %5530 = vmatpush1.bf16.msra.mxu0 %v3962
        %5531 = vmatprep.subr.bf16.mxu0 %v3967
        %5532 = vmatpush1.bf16.msra.mxu0 %v3966
        %5533 = vmatprep.subr.bf16.mxu0 %v3971
        %5534 = vmatpush1.bf16.msra.mxu0 %v3970
        %5535 = vmatprep.subr.bf16.mxu0 %v3975
        %5536 = vmatpush1.bf16.msra.mxu0 %v3974
        %5537 = vmatprep.subr.bf16.mxu0 %v3979
        %5538 = vmatpush1.bf16.msra.mxu0 %v3978
        %5539 = vmatprep.subr.bf16.mxu0 %v3983
        %5540 = vmatpush1.bf16.msra.mxu0 %v3982
        %5541 = vmatprep.subr.bf16.mxu0 %v3987
        %5542 = vmatpush1.bf16.msra.mxu0 %v3986
        %5543 = vmatprep.subr.bf16.mxu0 %v3991
        %5544 = vmatpush1.bf16.msra.mxu0 %v3990
        %5545 = vmatprep.subr.bf16.mxu0 %v3995
        %5546 = vmatpush1.bf16.msra.mxu0 %v3994
        %5547 = vmatprep.subr.bf16.mxu0 %v3999
        %5548 = vmatpush1.bf16.msra.mxu0 %v3998
        %5549 = vmatprep.mubr.bf16.mxu0 %v2381
        %5550 = vmatmul.mubr.bf16.gmra.mrb[0].mxu0 %v2380
        %v5551 = vpop.f32.mrb[0].mxu0
        %v5552 = vadd.f32 %v5419, %v5551
        %v5553 = vpop.f32.mrb[0].mxu0
        %v5554 = vadd.f32 %v5421, %v5553
        %v5555 = vpop.f32.mrb[0].mxu0
        %v5556 = vadd.f32 %v5423, %v5555
        %v5557 = vpop.f32.mrb[0].mxu0
        %v5558 = vadd.f32 %v5425, %v5557
        %5559 = vmatprep.mubr.bf16.mxu0 %v2383
        %5560 = vmatmul.mubr.bf16.gmra.mrb[0].mxu0 %v2382
        %v5561 = vpop.f32.mrb[0].mxu0
        %v5562 = vadd.f32 %v5429, %v5561
        %v5563 = vpop.f32.mrb[0].mxu0
        %v5564 = vadd.f32 %v5431, %v5563
        %v5565 = vpop.f32.mrb[0].mxu0
        %v5566 = vadd.f32 %v5433, %v5565
        %v5567 = vpop.f32.mrb[0].mxu0
        %v5568 = vadd.f32 %v5435, %v5567
        %5569 = vmatprep.mubr.bf16.mxu0 %v2385
        %5570 = vmatmul.mubr.bf16.gmra.mrb[0].mxu0 %v2384
        %v5571 = vpop.f32.mrb[0].mxu0
        %v5572 = vadd.f32 %v5439, %v5571
        %v5573 = vpop.f32.mrb[0].mxu0
        %v5574 = vadd.f32 %v5441, %v5573
        %v5575 = vpop.f32.mrb[0].mxu0
        %v5576 = vadd.f32 %v5443, %v5575
        %v5577 = vpop.f32.mrb[0].mxu0
        %v5578 = vadd.f32 %v5445, %v5577
        %5579 = vmatprep.mubr.bf16.mxu0 %v2387
        %5580 = vmatmul.mubr.bf16.gmra.mrb[0].mxu0 %v2386
        %v5581 = vpop.f32.mrb[0].mxu0
        %v5582 = vadd.f32 %v5449, %v5581
        %v5583 = vpop.f32.mrb[0].mxu0
        %v5584 = vadd.f32 %v5451, %v5583
        %v5585 = vpop.f32.mrb[0].mxu0
        %v5586 = vadd.f32 %v5453, %v5585
        %v5587 = vpop.f32.mrb[0].mxu0
        %v5588 = vadd.f32 %v5455, %v5587
        %5589 = vmatprep.mubr.bf16.mxu0 %v2389
        %5590 = vmatmul.mubr.bf16.gmra.mrb[0].mxu0 %v2388
        %v5591 = vpop.f32.mrb[0].mxu0
        %v5592 = vadd.f32 %v5459, %v5591
        %v5593 = vpop.f32.mrb[0].mxu0
        %v5594 = vadd.f32 %v5461, %v5593
        %v5595 = vpop.f32.mrb[0].mxu0
        %v5596 = vadd.f32 %v5463, %v5595
        %v5597 = vpop.f32.mrb[0].mxu0
        %v5598 = vadd.f32 %v5465, %v5597
        %5599 = vmatprep.mubr.bf16.mxu0 %v2391
        %5600 = vmatmul.mubr.bf16.gmra.mrb[0].mxu0 %v2390
        %v5601 = vpop.f32.mrb[0].mxu0
        %v5602 = vadd.f32 %v5469, %v5601
        %v5603 = vpop.f32.mrb[0].mxu0
        %v5604 = vadd.f32 %v5471, %v5603
        %v5605 = vpop.f32.mrb[0].mxu0
        %v5606 = vadd.f32 %v5473, %v5605
        %v5607 = vpop.f32.mrb[0].mxu0
        %v5608 = vadd.f32 %v5475, %v5607
        %5609 = vmatprep.mubr.bf16.mxu0 %v2393
        %5610 = vmatmul.mubr.bf16.gmra.mrb[0].mxu0 %v2392
        %v5611 = vpop.f32.mrb[0].mxu0
        %v5612 = vadd.f32 %v5479, %v5611
        %v5613 = vpop.f32.mrb[0].mxu0
        %v5614 = vadd.f32 %v5481, %v5613
        %v5615 = vpop.f32.mrb[0].mxu0
        %v5616 = vadd.f32 %v5483, %v5615
        %v5617 = vpop.f32.mrb[0].mxu0
        %v5618 = vadd.f32 %v5485, %v5617
        %5619 = vmatprep.mubr.bf16.mxu0 %v2395
        %5620 = vmatmul.mubr.bf16.gmra.mrb[0].mxu0 %v2394
        %v5621 = vpop.f32.mrb[0].mxu0
        %v5622 = vadd.f32 %v5489, %v5621
        %v5623 = vpop.f32.mrb[0].mxu0
        %v5624 = vadd.f32 %v5491, %v5623
        %v5625 = vpop.f32.mrb[0].mxu0
        %v5626 = vadd.f32 %v5493, %v5625
        %v5627 = vpop.f32.mrb[0].mxu0
        %v5628 = vadd.f32 %v5495, %v5627
        %5629 = vmatprep.mubr.bf16.mxu0 %v2397
        %5630 = vmatmul.mubr.bf16.gmra.mrb[0].mxu0 %v2396
        %v5631 = vpop.f32.mrb[0].mxu0
        %v5632 = vadd.f32 %v5499, %v5631
        %v5633 = vpop.f32.mrb[0].mxu0
        %v5634 = vadd.f32 %v5501, %v5633
        %v5635 = vpop.f32.mrb[0].mxu0
        %v5636 = vadd.f32 %v5503, %v5635
        %v5637 = vpop.f32.mrb[0].mxu0
        %v5638 = vadd.f32 %v5505, %v5637
        %5639 = vmatprep.mubr.bf16.mxu0 %v2399
        %5640 = vmatmul.mubr.bf16.gmra.mrb[0].mxu0 %v2398
        %v5641 = vpop.f32.mrb[0].mxu0
        %v5642 = vadd.f32 %v5509, %v5641
        %v5643 = vpop.f32.mrb[0].mxu0
        %v5644 = vadd.f32 %v5511, %v5643
        %v5645 = vpop.f32.mrb[0].mxu0
        %v5646 = vadd.f32 %v5513, %v5645
        %v5647 = vpop.f32.mrb[0].mxu0
        %v5648 = vadd.f32 %v5515, %v5647
        %5649 = vdwg.mxu0
        %v5650 = vadd.f32 %v4887, %v4891
        %v5651 = vadd.f32 %v5650, %v4897
        %v5652 = vadd.f32 %v5651, %v4901
        %v5653 = vadd.f32 %v5652, %v4907
        %v5654 = vadd.f32 %v5653, %v4911
        %v5655 = vadd.f32 %v5654, %v4917
        %v5656 = vadd.f32 %v5655, %v4921
        %v5657 = vadd.f32 %v5656, %v4927
        %v5658 = vadd.f32 %v5657, %v4931
        %v5659 = vadd.f32 %v5658, %v4937
        %v5660 = vadd.f32 %v5659, %v4941
        %v5661 = vadd.f32 %v5660, %v4947
        %v5662 = vadd.f32 %v5661, %v4951
        %v5663 = vadd.f32 %v5662, %v4957
        %v5664 = vadd.f32 %v5663, %v4961
        %v5665 = vadd.f32 %v5664, %v4967
        %v5666 = vadd.f32 %v5665, %v4971
        %v5667 = vadd.f32 %v5666, %v4977
        %v5668 = vadd.f32 %v5667, %v4981
        %v5669 = vadd.f32 %v4889, %v4893
        %v5670 = vadd.f32 %v5669, %v4899
        %v5671 = vadd.f32 %v5670, %v4903
        %v5672 = vadd.f32 %v5671, %v4909
        %v5673 = vadd.f32 %v5672, %v4913
        %v5674 = vadd.f32 %v5673, %v4919
        %v5675 = vadd.f32 %v5674, %v4923
        %v5676 = vadd.f32 %v5675, %v4929
        %v5677 = vadd.f32 %v5676, %v4933
        %v5678 = vadd.f32 %v5677, %v4939
        %v5679 = vadd.f32 %v5678, %v4943
        %v5680 = vadd.f32 %v5679, %v4949
        %v5681 = vadd.f32 %v5680, %v4953
        %v5682 = vadd.f32 %v5681, %v4959
        %v5683 = vadd.f32 %v5682, %v4963
        %v5684 = vadd.f32 %v5683, %v4969
        %v5685 = vadd.f32 %v5684, %v4973
        %v5686 = vadd.f32 %v5685, %v4979
        %v5687 = vadd.f32 %v5686, %v4983
        %v5688 = vadd.f32 %v5552, %v5556
        %v5689 = vadd.f32 %v5688, %v5562
        %v5690 = vadd.f32 %v5689, %v5566
        %v5691 = vadd.f32 %v5690, %v5572
        %v5692 = vadd.f32 %v5691, %v5576
        %v5693 = vadd.f32 %v5692, %v5582
        %v5694 = vadd.f32 %v5693, %v5586
        %v5695 = vadd.f32 %v5694, %v5592
        %v5696 = vadd.f32 %v5695, %v5596
        %v5697 = vadd.f32 %v5696, %v5602
        %v5698 = vadd.f32 %v5697, %v5606
        %v5699 = vadd.f32 %v5698, %v5612
        %v5700 = vadd.f32 %v5699, %v5616
        %v5701 = vadd.f32 %v5700, %v5622
        %v5702 = vadd.f32 %v5701, %v5626
        %v5703 = vadd.f32 %v5702, %v5632
        %v5704 = vadd.f32 %v5703, %v5636
        %v5705 = vadd.f32 %v5704, %v5642
        %v5706 = vadd.f32 %v5705, %v5646
        %v5707 = vadd.f32 %v5554, %v5558
        %v5708 = vadd.f32 %v5707, %v5564
        %v5709 = vadd.f32 %v5708, %v5568
        %v5710 = vadd.f32 %v5709, %v5574
        %v5711 = vadd.f32 %v5710, %v5578
        %v5712 = vadd.f32 %v5711, %v5584
        %v5713 = vadd.f32 %v5712, %v5588
        %v5714 = vadd.f32 %v5713, %v5594
        %v5715 = vadd.f32 %v5714, %v5598
        %v5716 = vadd.f32 %v5715, %v5604
        %v5717 = vadd.f32 %v5716, %v5608
        %v5718 = vadd.f32 %v5717, %v5614
        %v5719 = vadd.f32 %v5718, %v5618
        %v5720 = vadd.f32 %v5719, %v5624
        %v5721 = vadd.f32 %v5720, %v5628
        %v5722 = vadd.f32 %v5721, %v5634
        %v5723 = vadd.f32 %v5722, %v5638
        %v5724 = vadd.f32 %v5723, %v5644
        %v5725 = vadd.f32 %v5724, %v5648
        %v5726 = vmul.f32 %v5668, %v1752
        %v5727 = vmul.f32 %v5687, %v1752
        %v5728 = vmul.f32 %v5706, %v1752
        %v5729 = vmul.f32 %v5725, %v1752
        %v5730 = vsub.f32 %v4887, %v5726
        %v5731 = vsub.f32 %v4889, %v5727
        %v5732 = vsub.f32 %v5552, %v5728
        %v5733 = vsub.f32 %v5554, %v5729
        %v5734 = vsub.f32 %v4891, %v5726
        %v5735 = vsub.f32 %v4893, %v5727
        %v5736 = vsub.f32 %v5556, %v5728
        %v5737 = vsub.f32 %v5558, %v5729
        %v5738 = vsub.f32 %v4897, %v5726
        %v5739 = vsub.f32 %v4899, %v5727
        %v5740 = vsub.f32 %v5562, %v5728
        %v5741 = vsub.f32 %v5564, %v5729
        %v5742 = vsub.f32 %v4901, %v5726
        %v5743 = vsub.f32 %v4903, %v5727
        %v5744 = vsub.f32 %v5566, %v5728
        %v5745 = vsub.f32 %v5568, %v5729
        %v5746 = vsub.f32 %v4907, %v5726
        %v5747 = vsub.f32 %v4909, %v5727
        %v5748 = vsub.f32 %v5572, %v5728
        %v5749 = vsub.f32 %v5574, %v5729
        %v5750 = vsub.f32 %v4911, %v5726
        %v5751 = vsub.f32 %v4913, %v5727
        %v5752 = vsub.f32 %v5576, %v5728
        %v5753 = vsub.f32 %v5578, %v5729
        %v5754 = vsub.f32 %v4917, %v5726
        %v5755 = vsub.f32 %v4919, %v5727
        %v5756 = vsub.f32 %v5582, %v5728
        %v5757 = vsub.f32 %v5584, %v5729
        %v5758 = vsub.f32 %v4921, %v5726
        %v5759 = vsub.f32 %v4923, %v5727
        %v5760 = vsub.f32 %v5586, %v5728
        %v5761 = vsub.f32 %v5588, %v5729
        %v5762 = vsub.f32 %v4927, %v5726
        %v5763 = vsub.f32 %v4929, %v5727
        %v5764 = vsub.f32 %v5592, %v5728
        %v5765 = vsub.f32 %v5594, %v5729
        %v5766 = vsub.f32 %v4931, %v5726
        %v5767 = vsub.f32 %v4933, %v5727
        %v5768 = vsub.f32 %v5596, %v5728
        %v5769 = vsub.f32 %v5598, %v5729
        %v5770 = vsub.f32 %v4937, %v5726
        %v5771 = vsub.f32 %v4939, %v5727
        %v5772 = vsub.f32 %v5602, %v5728
        %v5773 = vsub.f32 %v5604, %v5729
        %v5774 = vsub.f32 %v4941, %v5726
        %v5775 = vsub.f32 %v4943, %v5727
        %v5776 = vsub.f32 %v5606, %v5728
        %v5777 = vsub.f32 %v5608, %v5729
        %v5778 = vsub.f32 %v4947, %v5726
        %v5779 = vsub.f32 %v4949, %v5727
        %v5780 = vsub.f32 %v5612, %v5728
        %v5781 = vsub.f32 %v5614, %v5729
        %v5782 = vsub.f32 %v4951, %v5726
        %v5783 = vsub.f32 %v4953, %v5727
        %v5784 = vsub.f32 %v5616, %v5728
        %v5785 = vsub.f32 %v5618, %v5729
        %v5786 = vsub.f32 %v4957, %v5726
        %v5787 = vsub.f32 %v4959, %v5727
        %v5788 = vsub.f32 %v5622, %v5728
        %v5789 = vsub.f32 %v5624, %v5729
        %v5790 = vsub.f32 %v4961, %v5726
        %v5791 = vsub.f32 %v4963, %v5727
        %v5792 = vsub.f32 %v5626, %v5728
        %v5793 = vsub.f32 %v5628, %v5729
        %v5794 = vsub.f32 %v4967, %v5726
        %v5795 = vsub.f32 %v4969, %v5727
        %v5796 = vsub.f32 %v5632, %v5728
        %v5797 = vsub.f32 %v5634, %v5729
        %v5798 = vsub.f32 %v4971, %v5726
        %v5799 = vsub.f32 %v4973, %v5727
        %v5800 = vsub.f32 %v5636, %v5728
        %v5801 = vsub.f32 %v5638, %v5729
        %v5802 = vsub.f32 %v4977, %v5726
        %v5803 = vsub.f32 %v4979, %v5727
        %v5804 = vsub.f32 %v5642, %v5728
        %v5805 = vsub.f32 %v5644, %v5729
        %v5806 = vsub.f32 %v4981, %v5726
        %v5807 = vsub.f32 %v4983, %v5727
        %v5808 = vsub.f32 %v5646, %v5728
        %v5809 = vsub.f32 %v5648, %v5729
        %v5810 = vmul.f32 %v5730, %v5730
        %v5811 = vmul.f32 %v5731, %v5731
        %v5812 = vmul.f32 %v5732, %v5732
        %v5813 = vmul.f32 %v5733, %v5733
        %v5814 = vmul.f32 %v5734, %v5734
        %v5815 = vmul.f32 %v5735, %v5735
        %v5816 = vmul.f32 %v5736, %v5736
        %v5817 = vmul.f32 %v5737, %v5737
        %v5818 = vmul.f32 %v5738, %v5738
        %v5819 = vmul.f32 %v5739, %v5739
        %v5820 = vmul.f32 %v5740, %v5740
        %v5821 = vmul.f32 %v5741, %v5741
        %v5822 = vmul.f32 %v5742, %v5742
        %v5823 = vmul.f32 %v5743, %v5743
        %v5824 = vmul.f32 %v5744, %v5744
        %v5825 = vmul.f32 %v5745, %v5745
        %v5826 = vmul.f32 %v5746, %v5746
        %v5827 = vmul.f32 %v5747, %v5747
        %v5828 = vmul.f32 %v5748, %v5748
        %v5829 = vmul.f32 %v5749, %v5749
        %v5830 = vmul.f32 %v5750, %v5750
        %v5831 = vmul.f32 %v5751, %v5751
        %v5832 = vmul.f32 %v5752, %v5752
        %v5833 = vmul.f32 %v5753, %v5753
        %v5834 = vmul.f32 %v5754, %v5754
        %v5835 = vmul.f32 %v5755, %v5755
        %v5836 = vmul.f32 %v5756, %v5756
        %v5837 = vmul.f32 %v5757, %v5757
        %v5838 = vmul.f32 %v5758, %v5758
        %v5839 = vmul.f32 %v5759, %v5759
        %v5840 = vmul.f32 %v5760, %v5760
        %v5841 = vmul.f32 %v5761, %v5761
        %v5842 = vmul.f32 %v5762, %v5762
        %v5843 = vmul.f32 %v5763, %v5763
        %v5844 = vmul.f32 %v5764, %v5764
        %v5845 = vmul.f32 %v5765, %v5765
        %v5846 = vmul.f32 %v5766, %v5766
        %v5847 = vmul.f32 %v5767, %v5767
        %v5848 = vmul.f32 %v5768, %v5768
        %v5849 = vmul.f32 %v5769, %v5769
        %v5850 = vmul.f32 %v5770, %v5770
        %v5851 = vmul.f32 %v5771, %v5771
        %v5852 = vmul.f32 %v5772, %v5772
        %v5853 = vmul.f32 %v5773, %v5773
        %v5854 = vmul.f32 %v5774, %v5774
        %v5855 = vmul.f32 %v5775, %v5775
        %v5856 = vmul.f32 %v5776, %v5776
        %v5857 = vmul.f32 %v5777, %v5777
        %v5858 = vmul.f32 %v5778, %v5778
        %v5859 = vmul.f32 %v5779, %v5779
        %v5860 = vmul.f32 %v5780, %v5780
        %v5861 = vmul.f32 %v5781, %v5781
        %v5862 = vmul.f32 %v5782, %v5782
        %v5863 = vmul.f32 %v5783, %v5783
        %v5864 = vmul.f32 %v5784, %v5784
        %v5865 = vmul.f32 %v5785, %v5785
        %v5866 = vmul.f32 %v5786, %v5786
        %v5867 = vmul.f32 %v5787, %v5787
        %v5868 = vmul.f32 %v5788, %v5788
        %v5869 = vmul.f32 %v5789, %v5789
        %v5870 = vmul.f32 %v5790, %v5790
        %v5871 = vmul.f32 %v5791, %v5791
        %v5872 = vmul.f32 %v5792, %v5792
        %v5873 = vmul.f32 %v5793, %v5793
        %v5874 = vmul.f32 %v5794, %v5794
        %v5875 = vmul.f32 %v5795, %v5795
        %v5876 = vmul.f32 %v5796, %v5796
        %v5877 = vmul.f32 %v5797, %v5797
        %v5878 = vmul.f32 %v5798, %v5798
        %v5879 = vmul.f32 %v5799, %v5799
        %v5880 = vmul.f32 %v5800, %v5800
        %v5881 = vmul.f32 %v5801, %v5801
        %v5882 = vmul.f32 %v5802, %v5802
        %v5883 = vmul.f32 %v5803, %v5803
        %v5884 = vmul.f32 %v5804, %v5804
        %v5885 = vmul.f32 %v5805, %v5805
        %v5886 = vmul.f32 %v5806, %v5806
        %v5887 = vmul.f32 %v5807, %v5807
        %v5888 = vmul.f32 %v5808, %v5808
        %v5889 = vmul.f32 %v5809, %v5809
        %v5890 = vadd.f32 %v5810, %v5814
        %v5891 = vadd.f32 %v5890, %v5818
        %v5892 = vadd.f32 %v5891, %v5822
        %v5893 = vadd.f32 %v5892, %v5826
        %v5894 = vadd.f32 %v5893, %v5830
        %v5895 = vadd.f32 %v5894, %v5834
        %v5896 = vadd.f32 %v5895, %v5838
        %v5897 = vadd.f32 %v5896, %v5842
        %v5898 = vadd.f32 %v5897, %v5846
        %v5899 = vadd.f32 %v5898, %v5850
        %v5900 = vadd.f32 %v5899, %v5854
        %v5901 = vadd.f32 %v5900, %v5858
        %v5902 = vadd.f32 %v5901, %v5862
        %v5903 = vadd.f32 %v5902, %v5866
        %v5904 = vadd.f32 %v5903, %v5870
        %v5905 = vadd.f32 %v5904, %v5874
        %v5906 = vadd.f32 %v5905, %v5878
        %v5907 = vadd.f32 %v5906, %v5882
        %v5908 = vadd.f32 %v5907, %v5886
        %v5909 = vadd.f32 %v5811, %v5815
        %v5910 = vadd.f32 %v5909, %v5819
        %v5911 = vadd.f32 %v5910, %v5823
        %v5912 = vadd.f32 %v5911, %v5827
        %v5913 = vadd.f32 %v5912, %v5831
        %v5914 = vadd.f32 %v5913, %v5835
        %v5915 = vadd.f32 %v5914, %v5839
        %v5916 = vadd.f32 %v5915, %v5843
        %v5917 = vadd.f32 %v5916, %v5847
        %v5918 = vadd.f32 %v5917, %v5851
        %v5919 = vadd.f32 %v5918, %v5855
        %v5920 = vadd.f32 %v5919, %v5859
        %v5921 = vadd.f32 %v5920, %v5863
        %v5922 = vadd.f32 %v5921, %v5867
        %v5923 = vadd.f32 %v5922, %v5871
        %v5924 = vadd.f32 %v5923, %v5875
        %v5925 = vadd.f32 %v5924, %v5879
        %v5926 = vadd.f32 %v5925, %v5883
        %v5927 = vadd.f32 %v5926, %v5887
        %v5928 = vadd.f32 %v5812, %v5816
        %v5929 = vadd.f32 %v5928, %v5820
        %v5930 = vadd.f32 %v5929, %v5824
        %v5931 = vadd.f32 %v5930, %v5828
        %v5932 = vadd.f32 %v5931, %v5832
        %v5933 = vadd.f32 %v5932, %v5836
        %v5934 = vadd.f32 %v5933, %v5840
        %v5935 = vadd.f32 %v5934, %v5844
        %v5936 = vadd.f32 %v5935, %v5848
        %v5937 = vadd.f32 %v5936, %v5852
        %v5938 = vadd.f32 %v5937, %v5856
        %v5939 = vadd.f32 %v5938, %v5860
        %v5940 = vadd.f32 %v5939, %v5864
        %v5941 = vadd.f32 %v5940, %v5868
        %v5942 = vadd.f32 %v5941, %v5872
        %v5943 = vadd.f32 %v5942, %v5876
        %v5944 = vadd.f32 %v5943, %v5880
        %v5945 = vadd.f32 %v5944, %v5884
        %v5946 = vadd.f32 %v5945, %v5888
        %v5947 = vadd.f32 %v5813, %v5817
        %v5948 = vadd.f32 %v5947, %v5821
        %v5949 = vadd.f32 %v5948, %v5825
        %v5950 = vadd.f32 %v5949, %v5829
        %v5951 = vadd.f32 %v5950, %v5833
        %v5952 = vadd.f32 %v5951, %v5837
        %v5953 = vadd.f32 %v5952, %v5841
        %v5954 = vadd.f32 %v5953, %v5845
        %v5955 = vadd.f32 %v5954, %v5849
        %v5956 = vadd.f32 %v5955, %v5853
        %v5957 = vadd.f32 %v5956, %v5857
        %v5958 = vadd.f32 %v5957, %v5861
        %v5959 = vadd.f32 %v5958, %v5865
        %v5960 = vadd.f32 %v5959, %v5869
        %v5961 = vadd.f32 %v5960, %v5873
        %v5962 = vadd.f32 %v5961, %v5877
        %v5963 = vadd.f32 %v5962, %v5881
        %v5964 = vadd.f32 %v5963, %v5885
        %v5965 = vadd.f32 %v5964, %v5889
        %v5966 = vmul.f32 %v5908, %v1752
        %v5967 = vmul.f32 %v5927, %v1752
        %v5968 = vmul.f32 %v5946, %v1752
        %v5969 = vmul.f32 %v5965, %v1752
        %v5970 = vadd.f32 %v5966, 1e-05
        %v5971 = vadd.f32 %v5967, 1e-05
        %v5972 = vadd.f32 %v5968, 1e-05
        %v5973 = vadd.f32 %v5969, 1e-05
        %v5974 = vrsqrt.pop %v5970
        %v5975 = vrsqrt.pop %v5971
        %v5976 = vrsqrt.pop %v5972
        %v5977 = vrsqrt.pop %v5973
        %v5978 = vmul.f32 %v5730, %v5974
        %v5979 = vmul.f32 %v5731, %v5975
        %v5980 = vmul.f32 %v5732, %v5976
        %v5981 = vmul.f32 %v5733, %v5977
        %v5982 = vmul.f32 %v5734, %v5974
        %v5983 = vmul.f32 %v5735, %v5975
        %v5984 = vmul.f32 %v5736, %v5976
        %v5985 = vmul.f32 %v5737, %v5977
        %v5986 = vmul.f32 %v5738, %v5974
        %v5987 = vmul.f32 %v5739, %v5975
        %v5988 = vmul.f32 %v5740, %v5976
        %v5989 = vmul.f32 %v5741, %v5977
        %v5990 = vmul.f32 %v5742, %v5974
        %v5991 = vmul.f32 %v5743, %v5975
        %v5992 = vmul.f32 %v5744, %v5976
        %v5993 = vmul.f32 %v5745, %v5977
        %v5994 = vmul.f32 %v5746, %v5974
        %v5995 = vmul.f32 %v5747, %v5975
        %v5996 = vmul.f32 %v5748, %v5976
        %v5997 = vmul.f32 %v5749, %v5977
        %v5998 = vmul.f32 %v5750, %v5974
        %v5999 = vmul.f32 %v5751, %v5975
        %v6000 = vmul.f32 %v5752, %v5976
        %v6001 = vmul.f32 %v5753, %v5977
        %v6002 = vmul.f32 %v5754, %v5974
        %v6003 = vmul.f32 %v5755, %v5975
        %v6004 = vmul.f32 %v5756, %v5976
        %v6005 = vmul.f32 %v5757, %v5977
        %v6006 = vmul.f32 %v5758, %v5974
        %v6007 = vmul.f32 %v5759, %v5975
        %v6008 = vmul.f32 %v5760, %v5976
        %v6009 = vmul.f32 %v5761, %v5977
        %v6010 = vmul.f32 %v5762, %v5974
        %v6011 = vmul.f32 %v5763, %v5975
        %v6012 = vmul.f32 %v5764, %v5976
        %v6013 = vmul.f32 %v5765, %v5977
        %v6014 = vmul.f32 %v5766, %v5974
        %v6015 = vmul.f32 %v5767, %v5975
        %v6016 = vmul.f32 %v5768, %v5976
        %v6017 = vmul.f32 %v5769, %v5977
        %v6018 = vmul.f32 %v5770, %v5974
        %v6019 = vmul.f32 %v5771, %v5975
        %v6020 = vmul.f32 %v5772, %v5976
        %v6021 = vmul.f32 %v5773, %v5977
        %v6022 = vmul.f32 %v5774, %v5974
        %v6023 = vmul.f32 %v5775, %v5975
        %v6024 = vmul.f32 %v5776, %v5976
        %v6025 = vmul.f32 %v5777, %v5977
        %v6026 = vmul.f32 %v5778, %v5974
        %v6027 = vmul.f32 %v5779, %v5975
        %v6028 = vmul.f32 %v5780, %v5976
        %v6029 = vmul.f32 %v5781, %v5977
        %v6030 = vmul.f32 %v5782, %v5974
        %v6031 = vmul.f32 %v5783, %v5975
        %v6032 = vmul.f32 %v5784, %v5976
        %v6033 = vmul.f32 %v5785, %v5977
        %v6034 = vmul.f32 %v5786, %v5974
        %v6035 = vmul.f32 %v5787, %v5975
        %v6036 = vmul.f32 %v5788, %v5976
        %v6037 = vmul.f32 %v5789, %v5977
        %v6038 = vmul.f32 %v5790, %v5974
        %v6039 = vmul.f32 %v5791, %v5975
        %v6040 = vmul.f32 %v5792, %v5976
        %v6041 = vmul.f32 %v5793, %v5977
        %v6042 = vmul.f32 %v5794, %v5974
        %v6043 = vmul.f32 %v5795, %v5975
        %v6044 = vmul.f32 %v5796, %v5976
        %v6045 = vmul.f32 %v5797, %v5977
        %v6046 = vmul.f32 %v5798, %v5974
        %v6047 = vmul.f32 %v5799, %v5975
        %v6048 = vmul.f32 %v5800, %v5976
        %v6049 = vmul.f32 %v5801, %v5977
        %v6050 = vmul.f32 %v5802, %v5974
        %v6051 = vmul.f32 %v5803, %v5975
        %v6052 = vmul.f32 %v5804, %v5976
        %v6053 = vmul.f32 %v5805, %v5977
        %v6054 = vmul.f32 %v5806, %v5974
        %v6055 = vmul.f32 %v5807, %v5975
        %v6056 = vmul.f32 %v5808, %v5976
        %v6057 = vmul.f32 %v5809, %v5977
        %vm6058 = vcmp.ge.f32.partialorder %v5978, 0.0
        %vm6059 = vcmp.ge.f32.partialorder %v5979, 0.0
        %vm6060 = vcmp.ge.f32.partialorder %v5980, 0.0
        %vm6061 = vcmp.ge.f32.partialorder %v5981, 0.0
        %vm6062 = vcmp.ge.f32.partialorder %v5982, 0.0
        %vm6063 = vcmp.ge.f32.partialorder %v5983, 0.0
        %vm6064 = vcmp.ge.f32.partialorder %v5984, 0.0
        %vm6065 = vcmp.ge.f32.partialorder %v5985, 0.0
        %vm6066 = vcmp.ge.f32.partialorder %v5986, 0.0
        %vm6067 = vcmp.ge.f32.partialorder %v5987, 0.0
        %vm6068 = vcmp.ge.f32.partialorder %v5988, 0.0
        %vm6069 = vcmp.ge.f32.partialorder %v5989, 0.0
        %vm6070 = vcmp.ge.f32.partialorder %v5990, 0.0
        %vm6071 = vcmp.ge.f32.partialorder %v5991, 0.0
        %vm6072 = vcmp.ge.f32.partialorder %v5992, 0.0
        %vm6073 = vcmp.ge.f32.partialorder %v5993, 0.0
        %vm6074 = vcmp.ge.f32.partialorder %v5994, 0.0
        %vm6075 = vcmp.ge.f32.partialorder %v5995, 0.0
        %vm6076 = vcmp.ge.f32.partialorder %v5996, 0.0
        %vm6077 = vcmp.ge.f32.partialorder %v5997, 0.0
        %vm6078 = vcmp.ge.f32.partialorder %v5998, 0.0
        %vm6079 = vcmp.ge.f32.partialorder %v5999, 0.0
        %vm6080 = vcmp.ge.f32.partialorder %v6000, 0.0
        %vm6081 = vcmp.ge.f32.partialorder %v6001, 0.0
        %vm6082 = vcmp.ge.f32.partialorder %v6002, 0.0
        %vm6083 = vcmp.ge.f32.partialorder %v6003, 0.0
        %vm6084 = vcmp.ge.f32.partialorder %v6004, 0.0
        %vm6085 = vcmp.ge.f32.partialorder %v6005, 0.0
        %vm6086 = vcmp.ge.f32.partialorder %v6006, 0.0
        %vm6087 = vcmp.ge.f32.partialorder %v6007, 0.0
        %vm6088 = vcmp.ge.f32.partialorder %v6008, 0.0
        %vm6089 = vcmp.ge.f32.partialorder %v6009, 0.0
        %vm6090 = vcmp.ge.f32.partialorder %v6010, 0.0
        %vm6091 = vcmp.ge.f32.partialorder %v6011, 0.0
        %vm6092 = vcmp.ge.f32.partialorder %v6012, 0.0
        %vm6093 = vcmp.ge.f32.partialorder %v6013, 0.0
        %vm6094 = vcmp.ge.f32.partialorder %v6014, 0.0
        %vm6095 = vcmp.ge.f32.partialorder %v6015, 0.0
        %vm6096 = vcmp.ge.f32.partialorder %v6016, 0.0
        %vm6097 = vcmp.ge.f32.partialorder %v6017, 0.0
        %vm6098 = vcmp.ge.f32.partialorder %v6018, 0.0
        %vm6099 = vcmp.ge.f32.partialorder %v6019, 0.0
        %vm6100 = vcmp.ge.f32.partialorder %v6020, 0.0
        %vm6101 = vcmp.ge.f32.partialorder %v6021, 0.0
        %vm6102 = vcmp.ge.f32.partialorder %v6022, 0.0
        %vm6103 = vcmp.ge.f32.partialorder %v6023, 0.0
        %vm6104 = vcmp.ge.f32.partialorder %v6024, 0.0
        %vm6105 = vcmp.ge.f32.partialorder %v6025, 0.0
        %vm6106 = vcmp.ge.f32.partialorder %v6026, 0.0
        %vm6107 = vcmp.ge.f32.partialorder %v6027, 0.0
        %vm6108 = vcmp.ge.f32.partialorder %v6028, 0.0
        %vm6109 = vcmp.ge.f32.partialorder %v6029, 0.0
        %vm6110 = vcmp.ge.f32.partialorder %v6030, 0.0
        %vm6111 = vcmp.ge.f32.partialorder %v6031, 0.0
        %vm6112 = vcmp.ge.f32.partialorder %v6032, 0.0
        %vm6113 = vcmp.ge.f32.partialorder %v6033, 0.0
        %vm6114 = vcmp.ge.f32.partialorder %v6034, 0.0
        %vm6115 = vcmp.ge.f32.partialorder %v6035, 0.0
        %vm6116 = vcmp.ge.f32.partialorder %v6036, 0.0
        %vm6117 = vcmp.ge.f32.partialorder %v6037, 0.0
        %vm6118 = vcmp.ge.f32.partialorder %v6038, 0.0
        %vm6119 = vcmp.ge.f32.partialorder %v6039, 0.0
        %vm6120 = vcmp.ge.f32.partialorder %v6040, 0.0
        %vm6121 = vcmp.ge.f32.partialorder %v6041, 0.0
        %vm6122 = vcmp.ge.f32.partialorder %v6042, 0.0
        %vm6123 = vcmp.ge.f32.partialorder %v6043, 0.0
        %vm6124 = vcmp.ge.f32.partialorder %v6044, 0.0
        %vm6125 = vcmp.ge.f32.partialorder %v6045, 0.0
        %vm6126 = vcmp.ge.f32.partialorder %v6046, 0.0
        %vm6127 = vcmp.ge.f32.partialorder %v6047, 0.0
        %vm6128 = vcmp.ge.f32.partialorder %v6048, 0.0
        %vm6129 = vcmp.ge.f32.partialorder %v6049, 0.0
        %vm6130 = vcmp.ge.f32.partialorder %v6050, 0.0
        %vm6131 = vcmp.ge.f32.partialorder %v6051, 0.0
        %vm6132 = vcmp.ge.f32.partialorder %v6052, 0.0
        %vm6133 = vcmp.ge.f32.partialorder %v6053, 0.0
        %vm6134 = vcmp.ge.f32.partialorder %v6054, 0.0
        %vm6135 = vcmp.ge.f32.partialorder %v6055, 0.0
        %vm6136 = vcmp.ge.f32.partialorder %v6056, 0.0
        %vm6137 = vcmp.ge.f32.partialorder %v6057, 0.0
        %v6138 = vmul.f32 %v5978, 0.1
        %v6139 = vmul.f32 %v5979, 0.1
        %v6140 = vmul.f32 %v5980, 0.1
        %v6141 = vmul.f32 %v5981, 0.1
        %v6142 = vmul.f32 %v5982, 0.1
        %v6143 = vmul.f32 %v5983, 0.1
        %v6144 = vmul.f32 %v5984, 0.1
        %v6145 = vmul.f32 %v5985, 0.1
        %v6146 = vmul.f32 %v5986, 0.1
        %v6147 = vmul.f32 %v5987, 0.1
        %v6148 = vmul.f32 %v5988, 0.1
        %v6149 = vmul.f32 %v5989, 0.1
        %v6150 = vmul.f32 %v5990, 0.1
        %v6151 = vmul.f32 %v5991, 0.1
        %v6152 = vmul.f32 %v5992, 0.1
        %v6153 = vmul.f32 %v5993, 0.1
        %v6154 = vmul.f32 %v5994, 0.1
        %v6155 = vmul.f32 %v5995, 0.1
        %v6156 = vmul.f32 %v5996, 0.1
        %v6157 = vmul.f32 %v5997, 0.1
        %v6158 = vmul.f32 %v5998, 0.1
        %v6159 = vmul.f32 %v5999, 0.1
        %v6160 = vmul.f32 %v6000, 0.1
        %v6161 = vmul.f32 %v6001, 0.1
        %v6162 = vmul.f32 %v6002, 0.1
        %v6163 = vmul.f32 %v6003, 0.1
        %v6164 = vmul.f32 %v6004, 0.1
        %v6165 = vmul.f32 %v6005, 0.1
        %v6166 = vmul.f32 %v6006, 0.1
        %v6167 = vmul.f32 %v6007, 0.1
        %v6168 = vmul.f32 %v6008, 0.1
        %v6169 = vmul.f32 %v6009, 0.1
        %v6170 = vmul.f32 %v6010, 0.1
        %v6171 = vmul.f32 %v6011, 0.1
        %v6172 = vmul.f32 %v6012, 0.1
        %v6173 = vmul.f32 %v6013, 0.1
        %v6174 = vmul.f32 %v6014, 0.1
        %v6175 = vmul.f32 %v6015, 0.1
        %v6176 = vmul.f32 %v6016, 0.1
        %v6177 = vmul.f32 %v6017, 0.1
        %v6178 = vmul.f32 %v6018, 0.1
        %v6179 = vmul.f32 %v6019, 0.1
        %v6180 = vmul.f32 %v6020, 0.1
        %v6181 = vmul.f32 %v6021, 0.1
        %v6182 = vmul.f32 %v6022, 0.1
        %v6183 = vmul.f32 %v6023, 0.1
        %v6184 = vmul.f32 %v6024, 0.1
        %v6185 = vmul.f32 %v6025, 0.1
        %v6186 = vmul.f32 %v6026, 0.1
        %v6187 = vmul.f32 %v6027, 0.1
        %v6188 = vmul.f32 %v6028, 0.1
        %v6189 = vmul.f32 %v6029, 0.1
        %v6190 = vmul.f32 %v6030, 0.1
        %v6191 = vmul.f32 %v6031, 0.1
        %v6192 = vmul.f32 %v6032, 0.1
        %v6193 = vmul.f32 %v6033, 0.1
        %v6194 = vmul.f32 %v6034, 0.1
        %v6195 = vmul.f32 %v6035, 0.1
        %v6196 = vmul.f32 %v6036, 0.1
        %v6197 = vmul.f32 %v6037, 0.1
        %v6198 = vmul.f32 %v6038, 0.1
        %v6199 = vmul.f32 %v6039, 0.1
        %v6200 = vmul.f32 %v6040, 0.1
        %v6201 = vmul.f32 %v6041, 0.1
        %v6202 = vmul.f32 %v6042, 0.1
        %v6203 = vmul.f32 %v6043, 0.1
        %v6204 = vmul.f32 %v6044, 0.1
        %v6205 = vmul.f32 %v6045, 0.1
        %v6206 = vmul.f32 %v6046, 0.1
        %v6207 = vmul.f32 %v6047, 0.1
        %v6208 = vmul.f32 %v6048, 0.1
        %v6209 = vmul.f32 %v6049, 0.1
        %v6210 = vmul.f32 %v6050, 0.1
        %v6211 = vmul.f32 %v6051, 0.1
        %v6212 = vmul.f32 %v6052, 0.1
        %v6213 = vmul.f32 %v6053, 0.1
        %v6214 = vmul.f32 %v6054, 0.1
        %v6215 = vmul.f32 %v6055, 0.1
        %v6216 = vmul.f32 %v6056, 0.1
        %v6217 = vmul.f32 %v6057, 0.1
        %v6218 = vsel %vm6058, %v5978, %v6138
        %v6219 = vsel %vm6059, %v5979, %v6139
        %v6220 = vsel %vm6060, %v5980, %v6140
        %v6221 = vsel %vm6061, %v5981, %v6141
        %v6222 = vsel %vm6062, %v5982, %v6142
        %v6223 = vsel %vm6063, %v5983, %v6143
        %v6224 = vsel %vm6064, %v5984, %v6144
        %v6225 = vsel %vm6065, %v5985, %v6145
        %v6226 = vsel %vm6066, %v5986, %v6146
        %v6227 = vsel %vm6067, %v5987, %v6147
        %v6228 = vsel %vm6068, %v5988, %v6148
        %v6229 = vsel %vm6069, %v5989, %v6149
        %v6230 = vsel %vm6070, %v5990, %v6150
        %v6231 = vsel %vm6071, %v5991, %v6151
        %v6232 = vsel %vm6072, %v5992, %v6152
        %v6233 = vsel %vm6073, %v5993, %v6153
        %v6234 = vsel %vm6074, %v5994, %v6154
        %v6235 = vsel %vm6075, %v5995, %v6155
        %v6236 = vsel %vm6076, %v5996, %v6156
        %v6237 = vsel %vm6077, %v5997, %v6157
        %v6238 = vsel %vm6078, %v5998, %v6158
        %v6239 = vsel %vm6079, %v5999, %v6159
        %v6240 = vsel %vm6080, %v6000, %v6160
        %v6241 = vsel %vm6081, %v6001, %v6161
        %v6242 = vsel %vm6082, %v6002, %v6162
        %v6243 = vsel %vm6083, %v6003, %v6163
        %v6244 = vsel %vm6084, %v6004, %v6164
        %v6245 = vsel %vm6085, %v6005, %v6165
        %v6246 = vsel %vm6086, %v6006, %v6166
        %v6247 = vsel %vm6087, %v6007, %v6167
        %v6248 = vsel %vm6088, %v6008, %v6168
        %v6249 = vsel %vm6089, %v6009, %v6169
        %v6250 = vsel %vm6090, %v6010, %v6170
        %v6251 = vsel %vm6091, %v6011, %v6171
        %v6252 = vsel %vm6092, %v6012, %v6172
        %v6253 = vsel %vm6093, %v6013, %v6173
        %v6254 = vsel %vm6094, %v6014, %v6174
        %v6255 = vsel %vm6095, %v6015, %v6175
        %v6256 = vsel %vm6096, %v6016, %v6176
        %v6257 = vsel %vm6097, %v6017, %v6177
        %v6258 = vsel %vm6098, %v6018, %v6178
        %v6259 = vsel %vm6099, %v6019, %v6179
        %v6260 = vsel %vm6100, %v6020, %v6180
        %v6261 = vsel %vm6101, %v6021, %v6181
        %v6262 = vsel %vm6102, %v6022, %v6182
        %v6263 = vsel %vm6103, %v6023, %v6183
        %v6264 = vsel %vm6104, %v6024, %v6184
        %v6265 = vsel %vm6105, %v6025, %v6185
        %v6266 = vsel %vm6106, %v6026, %v6186
        %v6267 = vsel %vm6107, %v6027, %v6187
        %v6268 = vsel %vm6108, %v6028, %v6188
        %v6269 = vsel %vm6109, %v6029, %v6189
        %v6270 = vsel %vm6110, %v6030, %v6190
        %v6271 = vsel %vm6111, %v6031, %v6191
        %v6272 = vsel %vm6112, %v6032, %v6192
        %v6273 = vsel %vm6113, %v6033, %v6193
        %v6274 = vsel %vm6114, %v6034, %v6194
        %v6275 = vsel %vm6115, %v6035, %v6195
        %v6276 = vsel %vm6116, %v6036, %v6196
        %v6277 = vsel %vm6117, %v6037, %v6197
        %v6278 = vsel %vm6118, %v6038, %v6198
        %v6279 = vsel %vm6119, %v6039, %v6199
        %v6280 = vsel %vm6120, %v6040, %v6200
        %v6281 = vsel %vm6121, %v6041, %v6201
        %v6282 = vsel %vm6122, %v6042, %v6202
        %v6283 = vsel %vm6123, %v6043, %v6203
        %v6284 = vsel %vm6124, %v6044, %v6204
        %v6285 = vsel %vm6125, %v6045, %v6205
        %v6286 = vsel %vm6126, %v6046, %v6206
        %v6287 = vsel %vm6127, %v6047, %v6207
        %v6288 = vsel %vm6128, %v6048, %v6208
        %v6289 = vsel %vm6129, %v6049, %v6209
        %v6290 = vsel %vm6130, %v6050, %v6210
        %v6291 = vsel %vm6131, %v6051, %v6211
        %v6292 = vsel %vm6132, %v6052, %v6212
        %v6293 = vsel %vm6133, %v6053, %v6213
        %v6294 = vsel %vm6134, %v6054, %v6214
        %v6295 = vsel %vm6135, %v6055, %v6215
        %v6296 = vsel %vm6136, %v6056, %v6216
        %v6297 = vsel %vm6137, %v6057, %v6217
        %v6298 = vld [vmem:[%s5] sm:$0xf]
        %v6299 = vld [vmem:[%s5 + $0x4] sm:$0xf]
        %v6300 = vld [vmem:[%s5 + $0x8] sm:$0xf]
        %v6301 = vld [vmem:[%s5 + $0xc] sm:$0xf]
        %v6302 = vld [vmem:[%s5 + $0x10] sm:$0xf]
        %v6303 = vld [vmem:[%s5 + $0x14] sm:$0xf]
        %v6304 = vld [vmem:[%s5 + $0x18] sm:$0xf]
        %v6305 = vld [vmem:[%s5 + $0x1c] sm:$0xf]
        %v6306 = vld [vmem:[%s5 + $0x20] sm:$0xf]
        %v6307 = vld [vmem:[%s5 + $0x24] sm:$0xf]
        %v6308 = vld [vmem:[%s5 + $0x28] sm:$0xf]
        %v6309 = vld [vmem:[%s5 + $0x2c] sm:$0xf]
        %v6310 = vld [vmem:[%s5 + $0x30] sm:$0xf]
        %v6311 = vld [vmem:[%s5 + $0x34] sm:$0xf]
        %v6312 = vld [vmem:[%s5 + $0x38] sm:$0xf]
        %v6313 = vld [vmem:[%s5 + $0x3c] sm:$0xf]
        %v6314 = vld [vmem:[%s5 + $0x40] sm:$0xf]
        %v6315 = vld [vmem:[%s5 + $0x44] sm:$0xf]
        %v6316 = vld [vmem:[%s5 + $0x48] sm:$0xf]
        %v6317 = vld [vmem:[%s5 + $0x4c] sm:$0xf]
        %v6318 = vld [vmem:[%s5 + $0x50] sm:$0xf]
        %v6319 = vld [vmem:[%s5 + $0x54] sm:$0xf]
        %v6320 = vld [vmem:[%s5 + $0x58] sm:$0xf]
        %v6321 = vld [vmem:[%s5 + $0x5c] sm:$0xf]
        %v6322 = vld [vmem:[%s5 + $0x60] sm:$0xf]
        %v6323 = vld [vmem:[%s5 + $0x64] sm:$0xf]
        %v6324 = vld [vmem:[%s5 + $0x68] sm:$0xf]
        %v6325 = vld [vmem:[%s5 + $0x6c] sm:$0xf]
        %v6326 = vld [vmem:[%s5 + $0x70] sm:$0xf]
        %v6327 = vld [vmem:[%s5 + $0x74] sm:$0xf]
        %v6328 = vld [vmem:[%s5 + $0x78] sm:$0xf]
        %v6329 = vld [vmem:[%s5 + $0x7c] sm:$0xf]
        %v6330 = vld [vmem:[%s5 + $0x80] sm:$0xf]
        %v6331 = vld [vmem:[%s5 + $0x84] sm:$0xf]
        %v6332 = vld [vmem:[%s5 + $0x88] sm:$0xf]
        %v6333 = vld [vmem:[%s5 + $0x8c] sm:$0xf]
        %v6334 = vld [vmem:[%s5 + $0x90] sm:$0xf]
        %v6335 = vld [vmem:[%s5 + $0x94] sm:$0xf]
        %v6336 = vld [vmem:[%s5 + $0x98] sm:$0xf]
        %v6337 = vld [vmem:[%s5 + $0x9c] sm:$0xf]
        %v6338 = vld [vmem:[%s5 + $0xa0] sm:$0xf]
        %v6339 = vld [vmem:[%s5 + $0xa4] sm:$0xf]
        %v6340 = vld [vmem:[%s5 + $0xa8] sm:$0xf]
        %v6341 = vld [vmem:[%s5 + $0xac] sm:$0xf]
        %v6342 = vld [vmem:[%s5 + $0xb0] sm:$0xf]
        %v6343 = vld [vmem:[%s5 + $0xb4] sm:$0xf]
        %v6344 = vld [vmem:[%s5 + $0xb8] sm:$0xf]
        %v6345 = vld [vmem:[%s5 + $0xbc] sm:$0xf]
        %v6346 = vld [vmem:[%s5 + $0xc0] sm:$0xf]
        %v6347 = vld [vmem:[%s5 + $0xc4] sm:$0xf]
        %v6348 = vld [vmem:[%s5 + $0xc8] sm:$0xf]
        %v6349 = vld [vmem:[%s5 + $0xcc] sm:$0xf]
        %v6350 = vld [vmem:[%s5 + $0xd0] sm:$0xf]
        %v6351 = vld [vmem:[%s5 + $0xd4] sm:$0xf]
        %v6352 = vld [vmem:[%s5 + $0xd8] sm:$0xf]
        %v6353 = vld [vmem:[%s5 + $0xdc] sm:$0xf]
        %v6354 = vld [vmem:[%s5 + $0xe0] sm:$0xf]
        %v6355 = vld [vmem:[%s5 + $0xe4] sm:$0xf]
        %v6356 = vld [vmem:[%s5 + $0xe8] sm:$0xf]
        %v6357 = vld [vmem:[%s5 + $0xec] sm:$0xf]
        %v6358 = vld [vmem:[%s5 + $0xf0] sm:$0xf]
        %v6359 = vld [vmem:[%s5 + $0xf4] sm:$0xf]
        %v6360 = vld [vmem:[%s5 + $0xf8] sm:$0xf]
        %v6361 = vld [vmem:[%s5 + $0xfc] sm:$0xf]
        %v6362 = vpack.c.bf16 %v6222, %v6218
        %v6363 = vpack.c.bf16 %v6223, %v6219
        %v6364 = vpack.c.bf16 %v6224, %v6220
        %v6365 = vpack.c.bf16 %v6225, %v6221
        %v6366 = vpack.c.bf16 %v6230, %v6226
        %v6367 = vpack.c.bf16 %v6231, %v6227
        %v6368 = vpack.c.bf16 %v6232, %v6228
        %v6369 = vpack.c.bf16 %v6233, %v6229
        %v6370 = vpack.c.bf16 %v6238, %v6234
        %v6371 = vpack.c.bf16 %v6239, %v6235
        %v6372 = vpack.c.bf16 %v6240, %v6236
        %v6373 = vpack.c.bf16 %v6241, %v6237
        %v6374 = vpack.c.bf16 %v6246, %v6242
        %v6375 = vpack.c.bf16 %v6247, %v6243
        %v6376 = vpack.c.bf16 %v6248, %v6244
        %v6377 = vpack.c.bf16 %v6249, %v6245
        %v6378 = vpack.c.bf16 %v6254, %v6250
        %v6379 = vpack.c.bf16 %v6255, %v6251
        %v6380 = vpack.c.bf16 %v6256, %v6252
        %v6381 = vpack.c.bf16 %v6257, %v6253
        %v6382 = vpack.c.bf16 %v6262, %v6258
        %v6383 = vpack.c.bf16 %v6263, %v6259
        %v6384 = vpack.c.bf16 %v6264, %v6260
        %v6385 = vpack.c.bf16 %v6265, %v6261
        %v6386 = vpack.c.bf16 %v6270, %v6266
        %v6387 = vpack.c.bf16 %v6271, %v6267
        %v6388 = vpack.c.bf16 %v6272, %v6268
        %v6389 = vpack.c.bf16 %v6273, %v6269
        %v6390 = vpack.c.bf16 %v6278, %v6274
        %v6391 = vpack.c.bf16 %v6279, %v6275
        %v6392 = vpack.c.bf16 %v6280, %v6276
        %v6393 = vpack.c.bf16 %v6281, %v6277
        %v6394 = vpack.c.bf16 %v6286, %v6282
        %v6395 = vpack.c.bf16 %v6287, %v6283
        %v6396 = vpack.c.bf16 %v6288, %v6284
        %v6397 = vpack.c.bf16 %v6289, %v6285
        %v6398 = vpack.c.bf16 %v6294, %v6290
        %v6399 = vpack.c.bf16 %v6295, %v6291
        %v6400 = vpack.c.bf16 %v6296, %v6292
        %v6401 = vpack.c.bf16 %v6297, %v6293
        %v6466 = vunpack.c.l.b16 %v6298
        %v6467 = vunpack.c.l.b16 %v6299
        %v6468 = vunpack.c.l.b16 %v6300
        %v6469 = vunpack.c.l.b16 %v6301
        %v6470 = vunpack.c.l.b16 %v6302
        %v6471 = vunpack.c.l.b16 %v6303
        %v6472 = vunpack.c.l.b16 %v6304
        %v6473 = vunpack.c.l.b16 %v6305
        %v6474 = vunpack.c.l.b16 %v6306
        %v6475 = vunpack.c.l.b16 %v6307
        %v6476 = vunpack.c.l.b16 %v6308
        %v6477 = vunpack.c.l.b16 %v6309
        %v6478 = vunpack.c.l.b16 %v6310
        %v6479 = vunpack.c.l.b16 %v6311
        %v6480 = vunpack.c.l.b16 %v6312
        %v6481 = vunpack.c.l.b16 %v6313
        %v6482 = vunpack.c.l.b16 %v6314
        %v6483 = vunpack.c.l.b16 %v6315
        %v6484 = vunpack.c.l.b16 %v6316
        %v6485 = vunpack.c.l.b16 %v6317
        %v6486 = vunpack.c.l.b16 %v6318
        %v6487 = vunpack.c.l.b16 %v6319
        %v6488 = vunpack.c.l.b16 %v6320
        %v6489 = vunpack.c.l.b16 %v6321
        %v6490 = vunpack.c.l.b16 %v6322
        %v6491 = vunpack.c.l.b16 %v6323
        %v6492 = vunpack.c.l.b16 %v6324
        %v6493 = vunpack.c.l.b16 %v6325
        %v6494 = vunpack.c.l.b16 %v6326
        %v6495 = vunpack.c.l.b16 %v6327
        %v6496 = vunpack.c.l.b16 %v6328
        %v6497 = vunpack.c.l.b16 %v6329
        %v6498 = vunpack.c.l.b16 %v6330
        %v6499 = vunpack.c.l.b16 %v6331
        %v6500 = vunpack.c.l.b16 %v6332
        %v6501 = vunpack.c.l.b16 %v6333
        %v6502 = vunpack.c.l.b16 %v6334
        %v6503 = vunpack.c.l.b16 %v6335
        %v6504 = vunpack.c.l.b16 %v6336
        %v6505 = vunpack.c.l.b16 %v6337
        %v6506 = vunpack.c.l.b16 %v6338
        %v6507 = vunpack.c.l.b16 %v6339
        %v6508 = vunpack.c.l.b16 %v6340
        %v6509 = vunpack.c.l.b16 %v6341
        %v6510 = vunpack.c.l.b16 %v6342
        %v6511 = vunpack.c.l.b16 %v6343
        %v6512 = vunpack.c.l.b16 %v6344
        %v6513 = vunpack.c.l.b16 %v6345
        %v6514 = vunpack.c.l.b16 %v6346
        %v6515 = vunpack.c.l.b16 %v6347
        %v6516 = vunpack.c.l.b16 %v6348
        %v6517 = vunpack.c.l.b16 %v6349
        %v6518 = vunpack.c.l.b16 %v6350
        %v6519 = vunpack.c.l.b16 %v6351
        %v6520 = vunpack.c.l.b16 %v6352
        %v6521 = vunpack.c.l.b16 %v6353
        %v6522 = vunpack.c.l.b16 %v6354
        %v6523 = vunpack.c.l.b16 %v6355
        %v6524 = vunpack.c.l.b16 %v6356
        %v6525 = vunpack.c.l.b16 %v6357
        %v6526 = vunpack.c.l.b16 %v6358
        %v6527 = vunpack.c.l.b16 %v6359
        %v6528 = vunpack.c.l.b16 %v6360
        %v6529 = vunpack.c.l.b16 %v6361
        %v6530 = vpack.c.b16 %v6467, %v6466
        %v6531 = vpack.c.b16 %v6469, %v6468
        %v6532 = vpack.c.b16 %v6471, %v6470
        %v6533 = vpack.c.b16 %v6473, %v6472
        %v6534 = vpack.c.b16 %v6475, %v6474
        %v6535 = vpack.c.b16 %v6477, %v6476
        %v6536 = vpack.c.b16 %v6479, %v6478
        %v6537 = vpack.c.b16 %v6481, %v6480
        %v6538 = vpack.c.b16 %v6483, %v6482
        %v6539 = vpack.c.b16 %v6485, %v6484
        %v6540 = vpack.c.b16 %v6487, %v6486
        %v6541 = vpack.c.b16 %v6489, %v6488
        %v6542 = vpack.c.b16 %v6491, %v6490
        %v6543 = vpack.c.b16 %v6493, %v6492
        %v6544 = vpack.c.b16 %v6495, %v6494
        %v6545 = vpack.c.b16 %v6497, %v6496
        %v6546 = vpack.c.b16 %v6499, %v6498
        %v6547 = vpack.c.b16 %v6501, %v6500
        %v6548 = vpack.c.b16 %v6503, %v6502
        %v6549 = vpack.c.b16 %v6505, %v6504
        %v6550 = vpack.c.b16 %v6507, %v6506
        %v6551 = vpack.c.b16 %v6509, %v6508
        %v6552 = vpack.c.b16 %v6511, %v6510
        %v6553 = vpack.c.b16 %v6513, %v6512
        %v6554 = vpack.c.b16 %v6515, %v6514
        %v6555 = vpack.c.b16 %v6517, %v6516
        %v6556 = vpack.c.b16 %v6519, %v6518
        %v6557 = vpack.c.b16 %v6521, %v6520
        %v6558 = vpack.c.b16 %v6523, %v6522
        %v6559 = vpack.c.b16 %v6525, %v6524
        %v6560 = vpack.c.b16 %v6527, %v6526
        %v6561 = vpack.c.b16 %v6529, %v6528
        %6594 = vmatprep.subr.bf16.mxu0 0
        %6595 = vmatpush1.bf16.msra.mxu0 %v6530
        %6596 = vmatprep.subr.bf16.mxu0 0
        %6597 = vmatpush1.bf16.msra.mxu0 %v6531
        %6598 = vmatprep.subr.bf16.mxu0 0
        %6599 = vmatpush1.bf16.msra.mxu0 %v6532
        %6600 = vmatprep.subr.bf16.mxu0 0
        %6601 = vmatpush1.bf16.msra.mxu0 %v6533
        %6602 = vmatprep.subr.bf16.mxu0 0
        %6603 = vmatpush1.bf16.msra.mxu0 %v6534
        %6604 = vmatprep.subr.bf16.mxu0 0
        %6605 = vmatpush1.bf16.msra.mxu0 %v6535
        %6606 = vmatprep.subr.bf16.mxu0 0
        %6607 = vmatpush1.bf16.msra.mxu0 %v6536
        %6608 = vmatprep.subr.bf16.mxu0 0
        %6609 = vmatpush1.bf16.msra.mxu0 %v6537
        %6610 = vmatprep.subr.bf16.mxu0 0
        %6611 = vmatpush1.bf16.msra.mxu0 %v6538
        %6612 = vmatprep.subr.bf16.mxu0 0
        %6613 = vmatpush1.bf16.msra.mxu0 %v6539
        %6614 = vmatprep.subr.bf16.mxu0 0
        %6615 = vmatpush1.bf16.msra.mxu0 %v6540
        %6616 = vmatprep.subr.bf16.mxu0 0
        %6617 = vmatpush1.bf16.msra.mxu0 %v6541
        %6618 = vmatprep.subr.bf16.mxu0 0
        %6619 = vmatpush1.bf16.msra.mxu0 %v6542
        %6620 = vmatprep.subr.bf16.mxu0 0
        %6621 = vmatpush1.bf16.msra.mxu0 %v6543
        %6622 = vmatprep.subr.bf16.mxu0 0
        %6623 = vmatpush1.bf16.msra.mxu0 %v6544
        %6624 = vmatprep.subr.bf16.mxu0 0
        %6625 = vmatpush1.bf16.msra.mxu0 %v6545
        %6626 = vmatprep.mubr.bf16.mxu0 %v6363
        %6627 = vmatmul.mubr.bf16.gmra.mrb[0].mxu0 %v6362
        %v6628 = vpop.f32.mrb[0].mxu0
        %v6629 = vadd.f32 0.0, %v6628
        %v6630 = vpop.f32.mrb[0].mxu0
        %v6631 = vpop.f32.mrb[0].mxu0
        %v6632 = vadd.f32 0.0, %v6631
        %v6633 = vpop.f32.mrb[0].mxu0
        %6634 = vmatprep.mubr.bf16.mxu0 %v6367
        %6635 = vmatmul.mubr.bf16.gmra.mrb[0].mxu0 %v6366
        %v6636 = vpop.f32.mrb[0].mxu0
        %v6637 = vadd.f32 0.0, %v6636
        %v6638 = vpop.f32.mrb[0].mxu0
        %v6639 = vpop.f32.mrb[0].mxu0
        %v6640 = vadd.f32 0.0, %v6639
        %v6641 = vpop.f32.mrb[0].mxu0
        %6642 = vmatprep.mubr.bf16.mxu0 %v6371
        %6643 = vmatmul.mubr.bf16.gmra.mrb[0].mxu0 %v6370
        %v6644 = vpop.f32.mrb[0].mxu0
        %v6645 = vadd.f32 0.0, %v6644
        %v6646 = vpop.f32.mrb[0].mxu0
        %v6647 = vpop.f32.mrb[0].mxu0
        %v6648 = vadd.f32 0.0, %v6647
        %v6649 = vpop.f32.mrb[0].mxu0
        %6650 = vmatprep.mubr.bf16.mxu0 %v6375
        %6651 = vmatmul.mubr.bf16.gmra.mrb[0].mxu0 %v6374
        %v6652 = vpop.f32.mrb[0].mxu0
        %v6653 = vadd.f32 0.0, %v6652
        %v6654 = vpop.f32.mrb[0].mxu0
        %v6655 = vpop.f32.mrb[0].mxu0
        %v6656 = vadd.f32 0.0, %v6655
        %v6657 = vpop.f32.mrb[0].mxu0
        %6658 = vmatprep.mubr.bf16.mxu0 %v6379
        %6659 = vmatmul.mubr.bf16.gmra.mrb[0].mxu0 %v6378
        %v6660 = vpop.f32.mrb[0].mxu0
        %v6661 = vadd.f32 0.0, %v6660
        %v6662 = vpop.f32.mrb[0].mxu0
        %v6663 = vpop.f32.mrb[0].mxu0
        %v6664 = vadd.f32 0.0, %v6663
        %v6665 = vpop.f32.mrb[0].mxu0
        %6666 = vmatprep.mubr.bf16.mxu0 %v6383
        %6667 = vmatmul.mubr.bf16.gmra.mrb[0].mxu0 %v6382
        %v6668 = vpop.f32.mrb[0].mxu0
        %v6669 = vadd.f32 0.0, %v6668
        %v6670 = vpop.f32.mrb[0].mxu0
        %v6671 = vpop.f32.mrb[0].mxu0
        %v6672 = vadd.f32 0.0, %v6671
        %v6673 = vpop.f32.mrb[0].mxu0
        %6674 = vmatprep.mubr.bf16.mxu0 %v6387
        %6675 = vmatmul.mubr.bf16.gmra.mrb[0].mxu0 %v6386
        %v6676 = vpop.f32.mrb[0].mxu0
        %v6677 = vadd.f32 0.0, %v6676
        %v6678 = vpop.f32.mrb[0].mxu0
        %v6679 = vpop.f32.mrb[0].mxu0
        %v6680 = vadd.f32 0.0, %v6679
        %v6681 = vpop.f32.mrb[0].mxu0
        %6682 = vmatprep.mubr.bf16.mxu0 %v6391
        %6683 = vmatmul.mubr.bf16.gmra.mrb[0].mxu0 %v6390
        %v6684 = vpop.f32.mrb[0].mxu0
        %v6685 = vadd.f32 0.0, %v6684
        %v6686 = vpop.f32.mrb[0].mxu0
        %v6687 = vpop.f32.mrb[0].mxu0
        %v6688 = vadd.f32 0.0, %v6687
        %v6689 = vpop.f32.mrb[0].mxu0
        %6690 = vmatprep.mubr.bf16.mxu0 %v6395
        %6691 = vmatmul.mubr.bf16.gmra.mrb[0].mxu0 %v6394
        %v6692 = vpop.f32.mrb[0].mxu0
        %v6693 = vadd.f32 0.0, %v6692
        %v6694 = vpop.f32.mrb[0].mxu0
        %v6695 = vpop.f32.mrb[0].mxu0
        %v6696 = vadd.f32 0.0, %v6695
        %v6697 = vpop.f32.mrb[0].mxu0
        %6698 = vmatprep.mubr.bf16.mxu0 %v6399
        %6699 = vmatmul.mubr.bf16.gmra.mrb[0].mxu0 %v6398
        %v6700 = vpop.f32.mrb[0].mxu0
        %v6701 = vadd.f32 0.0, %v6700
        %v6702 = vpop.f32.mrb[0].mxu0
        %v6703 = vpop.f32.mrb[0].mxu0
        %v6704 = vadd.f32 0.0, %v6703
        %v6705 = vpop.f32.mrb[0].mxu0
        %6706 = vdwg.mxu0
        %6707 = vmatprep.subr.bf16.mxu0 0
        %6708 = vmatpush1.bf16.msra.mxu0 %v6546
        %6709 = vmatprep.subr.bf16.mxu0 0
        %6710 = vmatpush1.bf16.msra.mxu0 %v6547
        %6711 = vmatprep.subr.bf16.mxu0 0
        %6712 = vmatpush1.bf16.msra.mxu0 %v6548
        %6713 = vmatprep.subr.bf16.mxu0 0
        %6714 = vmatpush1.bf16.msra.mxu0 %v6549
        %6715 = vmatprep.subr.bf16.mxu0 0
        %6716 = vmatpush1.bf16.msra.mxu0 %v6550
        %6717 = vmatprep.subr.bf16.mxu0 0
        %6718 = vmatpush1.bf16.msra.mxu0 %v6551
        %6719 = vmatprep.subr.bf16.mxu0 0
        %6720 = vmatpush1.bf16.msra.mxu0 %v6552
        %6721 = vmatprep.subr.bf16.mxu0 0
        %6722 = vmatpush1.bf16.msra.mxu0 %v6553
        %6723 = vmatprep.subr.bf16.mxu0 0
        %6724 = vmatpush1.bf16.msra.mxu0 %v6554
        %6725 = vmatprep.subr.bf16.mxu0 0
        %6726 = vmatpush1.bf16.msra.mxu0 %v6555
        %6727 = vmatprep.subr.bf16.mxu0 0
        %6728 = vmatpush1.bf16.msra.mxu0 %v6556
        %6729 = vmatprep.subr.bf16.mxu0 0
        %6730 = vmatpush1.bf16.msra.mxu0 %v6557
        %6731 = vmatprep.subr.bf16.mxu0 0
        %6732 = vmatpush1.bf16.msra.mxu0 %v6558
        %6733 = vmatprep.subr.bf16.mxu0 0
        %6734 = vmatpush1.bf16.msra.mxu0 %v6559
        %6735 = vmatprep.subr.bf16.mxu0 0
        %6736 = vmatpush1.bf16.msra.mxu0 %v6560
        %6737 = vmatprep.subr.bf16.mxu0 0
        %6738 = vmatpush1.bf16.msra.mxu0 %v6561
        %6739 = vmatprep.mubr.bf16.mxu0 %v6365
        %6740 = vmatmul.mubr.bf16.gmra.mrb[0].mxu0 %v6364
        %v6741 = vpop.f32.mrb[0].mxu0
        %v6742 = vadd.f32 %v6629, %v6741
        %v6743 = vpop.f32.mrb[0].mxu0
        %v6744 = vpop.f32.mrb[0].mxu0
        %v6745 = vadd.f32 %v6632, %v6744
        %v6746 = vpop.f32.mrb[0].mxu0
        %6747 = vmatprep.mubr.bf16.mxu0 %v6369
        %6748 = vmatmul.mubr.bf16.gmra.mrb[0].mxu0 %v6368
        %v6749 = vpop.f32.mrb[0].mxu0
        %v6750 = vadd.f32 %v6637, %v6749
        %v6751 = vpop.f32.mrb[0].mxu0
        %v6752 = vpop.f32.mrb[0].mxu0
        %v6753 = vadd.f32 %v6640, %v6752
        %v6754 = vpop.f32.mrb[0].mxu0
        %6755 = vmatprep.mubr.bf16.mxu0 %v6373
        %6756 = vmatmul.mubr.bf16.gmra.mrb[0].mxu0 %v6372
        %v6757 = vpop.f32.mrb[0].mxu0
        %v6758 = vadd.f32 %v6645, %v6757
        %v6759 = vpop.f32.mrb[0].mxu0
        %v6760 = vpop.f32.mrb[0].mxu0
        %v6761 = vadd.f32 %v6648, %v6760
        %v6762 = vpop.f32.mrb[0].mxu0
        %6763 = vmatprep.mubr.bf16.mxu0 %v6377
        %6764 = vmatmul.mubr.bf16.gmra.mrb[0].mxu0 %v6376
        %v6765 = vpop.f32.mrb[0].mxu0
        %v6766 = vadd.f32 %v6653, %v6765
        %v6767 = vpop.f32.mrb[0].mxu0
        %v6768 = vpop.f32.mrb[0].mxu0
        %v6769 = vadd.f32 %v6656, %v6768
        %v6770 = vpop.f32.mrb[0].mxu0
        %6771 = vmatprep.mubr.bf16.mxu0 %v6381
        %6772 = vmatmul.mubr.bf16.gmra.mrb[0].mxu0 %v6380
        %v6773 = vpop.f32.mrb[0].mxu0
        %v6774 = vadd.f32 %v6661, %v6773
        %v6775 = vpop.f32.mrb[0].mxu0
        %v6776 = vpop.f32.mrb[0].mxu0
        %v6777 = vadd.f32 %v6664, %v6776
        %v6778 = vpop.f32.mrb[0].mxu0
        %6779 = vmatprep.mubr.bf16.mxu0 %v6385
        %6780 = vmatmul.mubr.bf16.gmra.mrb[0].mxu0 %v6384
        %v6781 = vpop.f32.mrb[0].mxu0
        %v6782 = vadd.f32 %v6669, %v6781
        %v6783 = vpop.f32.mrb[0].mxu0
        %v6784 = vpop.f32.mrb[0].mxu0
        %v6785 = vadd.f32 %v6672, %v6784
        %v6786 = vpop.f32.mrb[0].mxu0
        %6787 = vmatprep.mubr.bf16.mxu0 %v6389
        %6788 = vmatmul.mubr.bf16.gmra.mrb[0].mxu0 %v6388
        %v6789 = vpop.f32.mrb[0].mxu0
        %v6790 = vadd.f32 %v6677, %v6789
        %v6791 = vpop.f32.mrb[0].mxu0
        %v6792 = vpop.f32.mrb[0].mxu0
        %v6793 = vadd.f32 %v6680, %v6792
        %v6794 = vpop.f32.mrb[0].mxu0
        %6795 = vmatprep.mubr.bf16.mxu0 %v6393
        %6796 = vmatmul.mubr.bf16.gmra.mrb[0].mxu0 %v6392
        %v6797 = vpop.f32.mrb[0].mxu0
        %v6798 = vadd.f32 %v6685, %v6797
        %v6799 = vpop.f32.mrb[0].mxu0
        %v6800 = vpop.f32.mrb[0].mxu0
        %v6801 = vadd.f32 %v6688, %v6800
        %v6802 = vpop.f32.mrb[0].mxu0
        %6803 = vmatprep.mubr.bf16.mxu0 %v6397
        %6804 = vmatmul.mubr.bf16.gmra.mrb[0].mxu0 %v6396
        %v6805 = vpop.f32.mrb[0].mxu0
        %v6806 = vadd.f32 %v6693, %v6805
        %v6807 = vpop.f32.mrb[0].mxu0
        %v6808 = vpop.f32.mrb[0].mxu0
        %v6809 = vadd.f32 %v6696, %v6808
        %v6810 = vpop.f32.mrb[0].mxu0
        %6811 = vmatprep.mubr.bf16.mxu0 %v6401
        %6812 = vmatmul.mubr.bf16.gmra.mrb[0].mxu0 %v6400
        %v6813 = vpop.f32.mrb[0].mxu0
        %v6814 = vadd.f32 %v6701, %v6813
        %v6815 = vpop.f32.mrb[0].mxu0
        %v6816 = vpop.f32.mrb[0].mxu0
        %v6817 = vadd.f32 %v6704, %v6816
        %v6818 = vpop.f32.mrb[0].mxu0
        %6819 = vdwg.mxu0
        %v6820 = vtanh.pop %v6742
        %v6821 = vtanh.pop %v6745
        %v6822 = vtanh.pop %v6750
        %v6823 = vtanh.pop %v6753
        %v6824 = vtanh.pop %v6758
        %v6825 = vtanh.pop %v6761
        %v6826 = vtanh.pop %v6766
        %v6827 = vtanh.pop %v6769
        %v6828 = vtanh.pop %v6774
        %v6829 = vtanh.pop %v6777
        %v6830 = vtanh.pop %v6782
        %v6831 = vtanh.pop %v6785
        %v6832 = vtanh.pop %v6790
        %v6833 = vtanh.pop %v6793
        %v6834 = vtanh.pop %v6798
        %v6835 = vtanh.pop %v6801
        %v6836 = vtanh.pop %v6806
        %v6837 = vtanh.pop %v6809
        %v6838 = vtanh.pop %v6814
        %v6839 = vtanh.pop %v6817
        %6840 = vst.msk [vmem:[%s312] sm:$0xff] %vm314, %v6820
        %6841 = vst.msk [vmem:[%s312 + $0x8] sm:$0xff] %vm314, %v6821
        %6842 = vst.msk [vmem:[%s312 + $0x10] sm:$0xff] %vm314, %v6822
        %6843 = vst.msk [vmem:[%s312 + $0x18] sm:$0xff] %vm314, %v6823
        %6844 = vst.msk [vmem:[%s312 + $0x20] sm:$0xff] %vm314, %v6824
        %6845 = vst.msk [vmem:[%s312 + $0x28] sm:$0xff] %vm314, %v6825
        %6846 = vst.msk [vmem:[%s312 + $0x30] sm:$0xff] %vm314, %v6826
        %6847 = vst.msk [vmem:[%s312 + $0x38] sm:$0xff] %vm314, %v6827
        %6848 = vst.msk [vmem:[%s312 + $0x40] sm:$0xff] %vm314, %v6828
        %6849 = vst.msk [vmem:[%s312 + $0x48] sm:$0xff] %vm314, %v6829
        %6850 = vst.msk [vmem:[%s312 + $0x50] sm:$0xff] %vm314, %v6830
        %6851 = vst.msk [vmem:[%s312 + $0x58] sm:$0xff] %vm314, %v6831
        %6852 = vst.msk [vmem:[%s312 + $0x60] sm:$0xff] %vm314, %v6832
        %6853 = vst.msk [vmem:[%s312 + $0x68] sm:$0xff] %vm314, %v6833
        %6854 = vst.msk [vmem:[%s312 + $0x70] sm:$0xff] %vm314, %v6834
        %6855 = vst.msk [vmem:[%s312 + $0x78] sm:$0xff] %vm314, %v6835
        %6856 = vst.msk [vmem:[%s312 + $0x80] sm:$0xff] %vm314, %v6836
        %6857 = vst.msk [vmem:[%s312 + $0x88] sm:$0xff] %vm314, %v6837
        %6858 = vst.msk [vmem:[%s312 + $0x90] sm:$0xff] %vm314, %v6838
        %6859 = vst.msk [vmem:[%s312 + $0x98] sm:$0xff] %vm314, %v6839
        %p6860 = scmp.lt.s32.totalorder %s22, 1
        %s6861 = scalar_select %p6860, %s22, 1
        %s6862 = smul.addr %s6861, 20
        %s6863 = smul.addr %s6862, 8
        %s6864 = scalar_lea.vmem %s6, %s6863
        // Predicated region
        $region61: #{g_forward.1} parent=43 // pred_check
          %p6865 = pneg %p171
        $region62: #{g_forward.1} parent=43 // pred_check_branch
          %6867 = sbr.rel (%p6865) target = $region64
        $region63: #{g_forward.1} parent=43 // pred_region
          _
        $region64: #{g_forward.1} parent=43 // pred_fallthru
          _
      $region44: #{g_forward.1} parent=5 // pred_fallthru
        _
      %p6868 = scmp.le.s32.totalorder 2, %s17
      // Predicated region
      $region65: #{g_forward.1} parent=5 // pred_check
        %p6869 = pneg %p6868
      $region66: #{g_forward.1} parent=5 // pred_check_branch
        %6871 = sbr.rel (%p6869) target = $region68
      $region67: #{g_forward.1} parent=5 // pred_region
        %s6872 = ssub.s32 %s17, 2
        // Predicated region
        $region69: #{g_forward.1} parent=67 // pred_check
          %p6873 = pneg %p177
        $region70: #{g_forward.1} parent=67 // pred_check_branch
          %6875 = sbr.rel (%p6873) target = $region72
        $region71: #{g_forward.1} parent=67 // pred_region
          %p6876 = scmp.lt.s32.totalorder %s23, 1
          %s6877 = scalar_select %p6876, %s23, 1
          %s6878 = smul.addr %s6877, 20
          %s6879 = smul.addr %s6878, 8
          %s6880 = scalar_lea.vmem %s6, %s6879
        $region72: #{g_forward.1} parent=67 // pred_fallthru
          _
      $region68: #{g_forward.1} parent=5 // pred_fallthru
        _
    $region6: #{g_forward.1} parent=1 // loop_footer
      %s21 = sadd.s32 1, %s17
    $region7: #{g_forward.1} parent=1 // loop_footer_branch
      %16 = sbr.rel target = $region3
    $region8: #{g_forward.1} parent=1 // loop_exit
      _
    %6881 = vsyncpa [#allocation6], 1
    %s6882 = scalar_lea.sflag [#allocation6], 1
    %6883 = vsyncpa %s6882, 1
    %6884 = vsyncpa [#allocation8], 1
    %6885 = vsyncpa [#allocation11], 1

</llo_original>
